<compile_context>
chip_gen: v7x
topology: tpu7x:2x2x1
jax: 0.10.0
libtpu: 0.0.40
codegen_flags: <defaults>
</compile_context>

<pallas_src>
import functools

import jax
import jax.numpy as jnp
from jax import lax
from jax.experimental import pallas as pl
from jax.experimental.pallas import tpu as pltpu


def _round_up(x, m):
    return (x + m - 1) // m * m


def _dense(x2d, w_ref, b_ref, use_mxu):
    """x2d @ W + b.  MXU matmul at real widths, VPU FMAs at toy widths."""
    if use_mxu:
        return jnp.dot(x2d, w_ref[...],
                       preferred_element_type=jnp.float32) + b_ref[...]
    cin, cout = w_ref.shape
    out = jnp.broadcast_to(b_ref[...], (x2d.shape[0], cout))
    for c in range(cin):                                   # tiny widths only
        out = out + x2d[:, c:c + 1] * w_ref[c:c + 1, :]
    return out


# ------------------------------ fused kernel --------------------------------

def _replk_fused_kernel(x_ref, w1_ref, b1_ref, wdw_ref, bdw_ref, w2_ref, b2_ref,
                        o_ref, ypad_ref, *, Cin, Cdw, H, W, K, strip,
                        offc, Wpad, mxu_pw1, mxu_pw2):
    """One image per n; s indexes strips of `strip` output rows.

    x_ref   : (H, W, Cin)         input image (NHWC, batch squeezed)
    w1_ref  : (Cin, Cdw)          folded prelkb_bn + pw1 + pw1.bn
    wdw_ref : (K, K, Cdw)         reparam (27x27 + padded 5x5) depthwise weight
    w2_ref  : (Cdw, Cin)          folded pw2 + pw2.bn
    o_ref   : (strip, W, Cin)     output rows of this strip
    ypad_ref: (H+2p, Wpad, Cdw)   VMEM scratch, pw1 output at rows [p:p+H],
                                  columns [offc:offc+W] (offc sublane-aligned)
    """
    pad = K // 2
    Hpad = H + 2 * pad
    cbase = offc - pad                         # leftmost column a tap reads
    fill0 = min(strip + pad, H)                # pw1 rows produced at strip 0
    s = pl.program_id(1)

    # ---- pw1: prelkb_bn + 1x1 conv + BN + ReLU over a block of rows ---------
    def fill_pw1(row0, nrows):                 # nrows is static
        xr = x_ref[pl.ds(row0, nrows)].astype(jnp.float32)      # (nrows, W, Cin)
        y1 = _dense(xr.reshape(nrows * W, Cin), w1_ref, b1_ref, mxu_pw1)
        y1 = jnp.maximum(y1, 0.0).reshape(nrows, W, Cdw)
        ypad_ref[pl.ds(pad + row0, nrows), offc:offc + W, :] = y1

    # ---- strip 0: zero only the halo border, then the first pw1 slab --------
    @pl.when(s == 0)
    def _():
        ypad_ref[0:pad, :, :] = jnp.zeros((pad, Wpad, Cdw), jnp.float32)
        ypad_ref[pad + H:, :, :] = jnp.zeros((pad, Wpad, Cdw), jnp.float32)
        ypad_ref[pad:pad + H, 0:offc, :] = jnp.zeros((H, offc, Cdw), jnp.float32)
        ypad_ref[pad:pad + H, offc + W:, :] = (
            jnp.zeros((H, Wpad - offc - W, Cdw), jnp.float32))
        fill_pw1(0, fill0)

    # ---- later strips: incremental pw1 fill (<= strip new rows per step) ----
    if fill0 < H:                              # dead at toy sizes (H <= strip+pad)
        @pl.when(jnp.logical_and(s > 0, s * strip + pad < H))
        def _():
            row0 = jnp.minimum(s * strip + pad, H - strip)
            fill_pw1(row0, strip)              # re-writes near the bottom are
                                               # idempotent, so clamping is safe

    # ---- depthwise reparam KxK conv for this strip (rows reused) ------------
    h0 = pl.multiple_of(s * strip, strip)
    bdw_b = jnp.broadcast_to(bdw_ref[...], (W, Cdw))       # hoisted broadcast
    accs0 = tuple(bdw_b for _ in range(strip))             # vreg accumulators

    def ir_body(ir, accs):
        prow = ypad_ref[h0 + ir]                           # one load per row
        out = []
        for r in range(strip):                             # static, small
            kh = ir - r
            valid = jnp.logical_and(kh >= 0, kh < K).astype(jnp.float32)
            wrow = wdw_ref[jnp.clip(kh, 0, K - 1)] * valid  # (K, Cdw), masked
            acc = accs[r]
            for kw in range(K):                             # in-register shifts
                acc = acc + prow[cbase + kw:cbase + kw + W, :] * wrow[kw:kw + 1, :]
            out.append(acc)
        return tuple(out)

    accs = lax.fori_loop(0, K + strip - 1, ir_body, accs0)

    # ---- ReLU -> pw2 (M = strip*W rows per dot) -> residual add -------------
    y2 = jnp.maximum(jnp.concatenate(list(accs), axis=0), 0.0)   # (strip*W, Cdw)
    xres = x_ref[pl.ds(h0, strip)].astype(jnp.float32).reshape(strip * W, Cin)
    out = xres + _dense(y2, w2_ref, b2_ref, mxu_pw2)
    o_ref[...] = out.reshape(strip, W, Cin).astype(o_ref.dtype)


# --------------------------- parameter handling -----------------------------

def _bn_scale_shift(gamma, beta, mean, var, eps=1e-5):
    scale = gamma / jnp.sqrt(var + eps)
    return scale, beta - mean * scale


def init_params(key, cin, cdw, K, sk):
    ks = jax.random.split(key, 9)

    def bn(k, c):
        k1, k2, k3, k4 = jax.random.split(k, 4)
        gamma = 1.0 + 0.1 * jax.random.normal(k1, (c,), jnp.float32)
        beta = 0.1 * jax.random.normal(k2, (c,), jnp.float32)
        mean = 0.1 * jax.random.normal(k3, (c,), jnp.float32)
        var = jax.random.uniform(k4, (c,), jnp.float32, minval=0.5, maxval=1.5)
        return gamma, beta, mean, var

    return {
        "prelkb_bn": bn(ks[0], cin),
        "pw1_w": jax.random.normal(ks[1], (cdw, cin), jnp.float32) / jnp.sqrt(cin),
        "pw1_bn": bn(ks[2], cdw),
        "lk_w": jax.random.normal(ks[3], (cdw, K, K), jnp.float32) / K,
        "lk_bn": bn(ks[4], cdw),
        "sk_w": jax.random.normal(ks[5], (cdw, sk, sk), jnp.float32) / sk,
        "sk_bn": bn(ks[6], cdw),
        "pw2_w": jax.random.normal(ks[7], (cin, cdw), jnp.float32) / jnp.sqrt(cdw),
        "pw2_bn": bn(ks[8], cin),
    }


def fuse_params(p, K, sk):
    """Fold all BatchNorms (eval mode) into conv weights/biases."""
    s0, t0 = _bn_scale_shift(*p["prelkb_bn"])
    s1, t1 = _bn_scale_shift(*p["pw1_bn"])
    slk, tlk = _bn_scale_shift(*p["lk_bn"])
    ssk, tsk = _bn_scale_shift(*p["sk_bn"])
    s2, t2 = _bn_scale_shift(*p["pw2_bn"])

    # prelkb_bn + pw1(conv1x1) + pw1.bn  ->  relu(x @ W1 + b1)
    W1 = (p["pw1_w"] * s0[None, :]).T * s1[None, :]            # (Cin, Cdw)
    b1 = s1 * (p["pw1_w"] @ t0) + t1                           # (Cdw,)

    # ReparamLargeKernelConv: (27x27 dw+BN) + (5x5 dw+BN), summed.
    lk = p["lk_w"] * slk[:, None, None]                        # (Cdw, K, K)
    pad_sk = (K - sk) // 2
    sk_w = p["sk_w"] * ssk[:, None, None]
    sk_pad = jnp.pad(sk_w, ((0, 0), (pad_sk, pad_sk), (pad_sk, pad_sk)))
    Wdw = jnp.transpose(lk + sk_pad, (1, 2, 0))                # (K, K, Cdw)
    bdw = tlk + tsk                                            # (Cdw,)

    # pw2(conv1x1) + pw2.bn
    W2 = p["pw2_w"].T * s2[None, :]                            # (Cdw, Cin)
    b2 = t2                                                    # (Cin,)
    return W1, b1, Wdw, bdw, W2, b2


# ------------------------------ forward passes ------------------------------

def replk_block_forward(x_nchw, params, K, sk):
    """Fused Pallas implementation (NCHW in/out to mirror PyTorch)."""
    N, Cin, H, W = x_nchw.shape
    W1, b1, Wdw, bdw, W2, b2 = fuse_params(params, K, sk)
    Cdw = W1.shape[1]
    pad = K // 2

    # Rows per grid step; keep the strip's dw accumulators comfortably in vregs.
    strip = next(c for c in (8, 4, 2, 1) if H % c == 0)
    while strip > 1 and strip * W * Cdw * 4 > 96 * 1024:
        strip //= 2

    offc = _round_up(pad, 8)                   # sublane-aligned interior start
    Wpad = _round_up(offc + W + pad, 8)
    Hpad = H + 2 * pad

    x = jnp.transpose(x_nchw, (0, 2, 3, 1))    # NHWC (channels on lanes)

    kernel = functools.partial(
        _replk_fused_kernel, Cin=Cin, Cdw=Cdw, H=H, W=W, K=K, strip=strip,
        offc=offc, Wpad=Wpad, mxu_pw1=Cin >= 32, mxu_pw2=Cdw >= 32)

    out = pl.pallas_call(
        kernel,
        out_shape=jax.ShapeDtypeStruct((N, H, W, Cin), x.dtype),
        grid_spec=pltpu.PrefetchScalarGridSpec(
            num_scalar_prefetch=0,
            grid=(N, H // strip),
            in_specs=[
                pl.BlockSpec((None, H, W, Cin), lambda n, s: (n, 0, 0, 0)),
                pl.BlockSpec((Cin, Cdw), lambda n, s: (0, 0)),
                pl.BlockSpec((1, Cdw), lambda n, s: (0, 0)),
                pl.BlockSpec((K, K, Cdw), lambda n, s: (0, 0, 0)),
                pl.BlockSpec((1, Cdw), lambda n, s: (0, 0)),
                pl.BlockSpec((Cdw, Cin), lambda n, s: (0, 0)),
                pl.BlockSpec((1, Cin), lambda n, s: (0, 0)),
            ],
            out_specs=pl.BlockSpec((None, strip, W, Cin),
                                   lambda n, s: (n, s, 0, 0)),
            scratch_shapes=[pltpu.VMEM((Hpad, Wpad, Cdw), jnp.float32)],
        ),
        compiler_params=pltpu.CompilerParams(
            dimension_semantics=("parallel", "arbitrary"),
            vmem_limit_bytes=32 * 1024 * 1024,
        ),
    )(x, W1, b1.reshape(1, Cdw), Wdw, bdw.reshape(1, Cdw), W2, b2.reshape(1, Cin))
    return jnp.transpose(out, (0, 3, 1, 2))                    # back to NCHW


def replk_block_reference(x_nchw, params, K, sk):
    """Pure-JAX reference (same fused params) for validation."""
    N, Cin, H, W = x_nchw.shape
    W1, b1, Wdw, bdw, W2, b2 = fuse_params(params, K, sk)
    Cdw = W1.shape[1]

    x = jnp.transpose(x_nchw, (0, 2, 3, 1))
    xf = x.reshape(-1, Cin)
    y1 = jax.nn.relu(xf @ W1 + b1).reshape(N, H, W, Cdw)
    pad = K // 2
    y2 = lax.conv_general_dilated(
        y1, Wdw[:, :, None, :], window_strides=(1, 1),
        padding=[(pad, pad), (pad, pad)],
        dimension_numbers=("NHWC", "HWIO", "NHWC"),
        feature_group_count=Cdw,
    ) + bdw
    y2 = jax.nn.relu(y2)
    y3 = y2.reshape(-1, Cdw) @ W2 + b2 + xf
    return jnp.transpose(y3.reshape(N, H, W, Cin), (0, 3, 1, 2))


# ---------------------------------- main ------------------------------------

if __name__ == "__main__":
    key = jax.random.PRNGKey(0)
    kx, kp = jax.random.split(key)

    # RepLKBlock(in_channels=4, dw_channels=8, block_lk_size=27, small_kernel=5)
    N, Cin, H, W = 2, 4, 16, 16
    Cdw, K, SK = 8, 27, 5

    x = jax.random.normal(kx, (N, Cin, H, W), jnp.float32)
    params = init_params(kp, Cin, Cdw, K, SK)

    fwd = jax.jit(lambda v: replk_block_forward(v, params, K, SK))
    out = jax.block_until_ready(fwd(x))

    ref = replk_block_reference(x, params, K, SK)
    assert out.shape == (N, Cin, H, W)
    max_err = float(jnp.max(jnp.abs(out - ref)))
    assert jnp.allclose(out, ref, atol=2e-3, rtol=2e-3), max_err

    print("KERNEL_OK")
</pallas_src>

<mosaic_0001>
module attributes {stable_mosaic.version = 11 : i64} {
  func.func @_replk_fused_kernel(%arg0: i32, %arg1: i32, %arg2: memref<1x16x16x4xf32, #tpu.memory_space<vmem>>, %arg3: memref<4x8xf32, #tpu.memory_space<vmem>>, %arg4: memref<1x8xf32, #tpu.memory_space<vmem>>, %arg5: memref<27x27x8xf32, #tpu.memory_space<vmem>>, %arg6: memref<1x8xf32, #tpu.memory_space<vmem>>, %arg7: memref<8x4xf32, #tpu.memory_space<vmem>>, %arg8: memref<1x4xf32, #tpu.memory_space<vmem>>, %arg9: memref<1x8x16x4xf32, #tpu.memory_space<vmem>>, %arg10: memref<42x48x8xf32, #tpu.memory_space<vmem>>) attributes {dimension_semantics = [#tpu.dimension_semantics<parallel>, #tpu.dimension_semantics<arbitrary>], iteration_bounds = array<i64: 2, 2>, scalar_prefetch = 0 : i64, scratch_operands = 1 : i64, tpu.core_type = #tpu.core_type<tc>, window_params = [{transform_indices = @transform_0, window_bounds = array<i64: 1, 16, 16, 4>}, {pipeline_mode = #tpu.pipeline_mode<synchronous>, transform_indices = @transform_1, window_bounds = array<i64: 4, 8>}, {pipeline_mode = #tpu.pipeline_mode<synchronous>, transform_indices = @transform_2, window_bounds = array<i64: 1, 8>}, {pipeline_mode = #tpu.pipeline_mode<synchronous>, transform_indices = @transform_3, window_bounds = array<i64: 27, 27, 8>}, {pipeline_mode = #tpu.pipeline_mode<synchronous>, transform_indices = @transform_4, window_bounds = array<i64: 1, 8>}, {pipeline_mode = #tpu.pipeline_mode<synchronous>, transform_indices = @transform_5, window_bounds = array<i64: 8, 4>}, {pipeline_mode = #tpu.pipeline_mode<synchronous>, transform_indices = @transform_6, window_bounds = array<i64: 1, 4>}, {transform_indices = @transform_7, window_bounds = array<i64: 1, 8, 16, 4>}]} {
    %c0_i32 = arith.constant 0 : i32
    %0 = arith.cmpi eq, %arg1, %c0_i32 : i32
    %1 = arith.extui %0 : i1 to i32
    %c0_i32_0 = arith.constant 0 : i32
    %2 = arith.cmpi ne, %1, %c0_i32_0 : i32
    scf.if %2 {
      %cst_22 = arith.constant 0.000000e+00 : f32
      %73 = vector.broadcast %cst_22 : f32 to vector<13x48x8xf32>
      %c0_23 = arith.constant 0 : index
      %c0_24 = arith.constant 0 : index
      %c0_25 = arith.constant 0 : index
      %74 = vector.load %arg10[%c0_23, %c0_24, %c0_25] : memref<42x48x8xf32, #tpu.memory_space<vmem>>, vector<13x48x8xf32>
      tpu.vector_store %arg10[%c0_23, %c0_24, %c0_25], %73 {strides = array<i32>} : memref<42x48x8xf32, #tpu.memory_space<vmem>>, vector<13x48x8xf32>,
      %cst_26 = arith.constant 0.000000e+00 : f32
      %75 = vector.broadcast %cst_26 : f32 to vector<13x48x8xf32>
      %c29 = arith.constant 29 : index
      %c0_27 = arith.constant 0 : index
      %c0_28 = arith.constant 0 : index
      %76 = vector.load %arg10[%c29, %c0_27, %c0_28] : memref<42x48x8xf32, #tpu.memory_space<vmem>>, vector<13x48x8xf32>
      tpu.vector_store %arg10[%c29, %c0_27, %c0_28], %75 {strides = array<i32>} : memref<42x48x8xf32, #tpu.memory_space<vmem>>, vector<13x48x8xf32>,
      %cst_29 = arith.constant 0.000000e+00 : f32
      %77 = vector.broadcast %cst_29 : f32 to vector<16x16x8xf32>
      %c13 = arith.constant 13 : index
      %c0_30 = arith.constant 0 : index
      %c0_31 = arith.constant 0 : index
      %78 = vector.load %arg10[%c13, %c0_30, %c0_31] : memref<42x48x8xf32, #tpu.memory_space<vmem>>, vector<16x16x8xf32>
      tpu.vector_store %arg10[%c13, %c0_30, %c0_31], %77 {strides = array<i32>} : memref<42x48x8xf32, #tpu.memory_space<vmem>>, vector<16x16x8xf32>,
      %cst_32 = arith.constant 0.000000e+00 : f32
      %79 = vector.broadcast %cst_32 : f32 to vector<16x16x8xf32>
      %c13_33 = arith.constant 13 : index
      %c32 = arith.constant 32 : index
      %c0_34 = arith.constant 0 : index
      %80 = vector.load %arg10[%c13_33, %c32, %c0_34] : memref<42x48x8xf32, #tpu.memory_space<vmem>>, vector<16x16x8xf32>
      tpu.vector_store %arg10[%c13_33, %c32, %c0_34], %79 {strides = array<i32>} : memref<42x48x8xf32, #tpu.memory_space<vmem>>, vector<16x16x8xf32>,
      %c0_35 = arith.constant 0 : index
      %c0_36 = arith.constant 0 : index
      %c0_37 = arith.constant 0 : index
      %c0_38 = arith.constant 0 : index
      %81 = vector.load %arg2[%c0_35, %c0_36, %c0_37, %c0_38] : memref<1x16x16x4xf32, #tpu.memory_space<vmem>>, vector<1x16x16x4xf32>
      %82 = vector.shape_cast %81 : vector<1x16x16x4xf32> to vector<16x16x4xf32>
      %83 = vector.shape_cast %82 : vector<16x16x4xf32> to vector<256x4xf32>
      %c0_39 = arith.constant 0 : index
      %c0_40 = arith.constant 0 : index
      %84 = vector.load %arg4[%c0_39, %c0_40] : memref<1x8xf32, #tpu.memory_space<vmem>>, vector<1x8xf32>
      %85 = vector.shape_cast %84 : vector<1x8xf32> to vector<1x8xf32>
      %86 = vector.broadcast %85 : vector<1x8xf32> to vector<256x8xf32>
      %87 = vector.extract_strided_slice %83 {offsets = [0, 0], sizes = [256, 1], strides = [1, 1]} : vector<256x4xf32> to vector<256x1xf32>
      %c0_41 = arith.constant 0 : index
      %c0_42 = arith.constant 0 : index
      %88 = vector.load %arg3[%c0_41, %c0_42] : memref<4x8xf32, #tpu.memory_space<vmem>>, vector<1x8xf32>
      %89 = vector.broadcast %87 : vector<256x1xf32> to vector<256x8xf32>
      %90 = vector.broadcast %88 : vector<1x8xf32> to vector<256x8xf32>
      %91 = arith.mulf %89, %90 : vector<256x8xf32>
      %92 = arith.addf %86, %91 : vector<256x8xf32>
      %93 = vector.extract_strided_slice %83 {offsets = [0, 1], sizes = [256, 1], strides = [1, 1]} : vector<256x4xf32> to vector<256x1xf32>
      %c1_43 = arith.constant 1 : index
      %c0_44 = arith.constant 0 : index
      %94 = vector.load %arg3[%c1_43, %c0_44] : memref<4x8xf32, #tpu.memory_space<vmem>>, vector<1x8xf32>
      %95 = vector.broadcast %93 : vector<256x1xf32> to vector<256x8xf32>
      %96 = vector.broadcast %94 : vector<1x8xf32> to vector<256x8xf32>
      %97 = arith.mulf %95, %96 : vector<256x8xf32>
      %98 = arith.addf %92, %97 : vector<256x8xf32>
      %99 = vector.extract_strided_slice %83 {offsets = [0, 2], sizes = [256, 1], strides = [1, 1]} : vector<256x4xf32> to vector<256x1xf32>
      %c2_45 = arith.constant 2 : index
      %c0_46 = arith.constant 0 : index
      %100 = vector.load %arg3[%c2_45, %c0_46] : memref<4x8xf32, #tpu.memory_space<vmem>>, vector<1x8xf32>
      %101 = vector.broadcast %99 : vector<256x1xf32> to vector<256x8xf32>
      %102 = vector.broadcast %100 : vector<1x8xf32> to vector<256x8xf32>
      %103 = arith.mulf %101, %102 : vector<256x8xf32>
      %104 = arith.addf %98, %103 : vector<256x8xf32>
      %105 = vector.extract_strided_slice %83 {offsets = [0, 3], sizes = [256, 1], strides = [1, 1]} : vector<256x4xf32> to vector<256x1xf32>
      %c3_47 = arith.constant 3 : index
      %c0_48 = arith.constant 0 : index
      %106 = vector.load %arg3[%c3_47, %c0_48] : memref<4x8xf32, #tpu.memory_space<vmem>>, vector<1x8xf32>
      %107 = vector.broadcast %105 : vector<256x1xf32> to vector<256x8xf32>
      %108 = vector.broadcast %106 : vector<1x8xf32> to vector<256x8xf32>
      %109 = arith.mulf %107, %108 : vector<256x8xf32>
      %110 = arith.addf %104, %109 : vector<256x8xf32>
      %cst_49 = arith.constant 0.000000e+00 : f32
      %111 = vector.broadcast %cst_49 : f32 to vector<256x8xf32>
      %112 = arith.maximumf %110, %111 : vector<256x8xf32>
      %113 = vector.shape_cast %112 : vector<256x8xf32> to vector<16x16x8xf32>
      %c13_50 = arith.constant 13 : index
      %c16 = arith.constant 16 : index
      %c0_51 = arith.constant 0 : index
      %114 = vector.load %arg10[%c13_50, %c16, %c0_51] : memref<42x48x8xf32, #tpu.memory_space<vmem>>, vector<16x16x8xf32>
      tpu.vector_store %arg10[%c13_50, %c16, %c0_51], %113 {strides = array<i32>} : memref<42x48x8xf32, #tpu.memory_space<vmem>>, vector<16x16x8xf32>,
    } else {
    }
    %c8_i32 = arith.constant 8 : i32
    %3 = arith.muli %arg1, %c8_i32 : i32
    %4 = tpu.assume_multiple %3, 8 : i32
    %c0 = arith.constant 0 : index
    %c0_1 = arith.constant 0 : index
    %5 = vector.load %arg6[%c0, %c0_1] : memref<1x8xf32, #tpu.memory_space<vmem>>, vector<1x8xf32>
    %6 = vector.shape_cast %5 : vector<1x8xf32> to vector<1x8xf32>
    %7 = vector.broadcast %6 : vector<1x8xf32> to vector<16x8xf32>
    %c0_i32_2 = arith.constant 0 : i32
    %c34_i32 = arith.constant 34 : i32
    %8 = arith.addi %c0_i32_2, %c34_i32 : i32
    %c1_i32 = arith.constant 1 : i32
    %9:8 = scf.for %arg11 = %c0_i32_2 to %8 step %c1_i32 iter_args(%arg12 = %7, %arg13 = %7, %arg14 = %7, %arg15 = %7, %arg16 = %7, %arg17 = %7, %arg18 = %7, %arg19 = %7) -> (vector<16x8xf32>, vector<16x8xf32>, vector<16x8xf32>, vector<16x8xf32>, vector<16x8xf32>, vector<16x8xf32>, vector<16x8xf32>, vector<16x8xf32>)  : i32 {
      %73 = arith.addi %4, %arg11 : i32
      %74 = arith.index_cast %73 : i32 to index
      %c0_22 = arith.constant 0 : index
      %c0_23 = arith.constant 0 : index
      %75 = vector.load %arg10[%74, %c0_22, %c0_23] : memref<42x48x8xf32, #tpu.memory_space<vmem>>, vector<1x48x8xf32>
      %76 = vector.shape_cast %75 : vector<1x48x8xf32> to vector<48x8xf32>
      %c0_i32_24 = arith.constant 0 : i32
      %77 = arith.subi %arg11, %c0_i32_24 : i32
      %c0_i32_25 = arith.constant 0 : i32
      %78 = arith.cmpi sge, %77, %c0_i32_25 : i32
      %c27_i32 = arith.constant 27 : i32
      %79 = arith.cmpi slt, %77, %c27_i32 : i32
      %80 = arith.andi %78, %79 : i1
      %81 = arith.extui %80 : i1 to i32
      %82 = arith.sitofp %81 : i32 to f32
      %c0_i32_26 = arith.constant 0 : i32
      %c26_i32 = arith.constant 26 : i32
      %83 = arith.maxsi %c0_i32_26, %77 : i32
      %84 = arith.minsi %c26_i32, %83 : i32
      %85 = arith.index_cast %84 : i32 to index
      %c0_27 = arith.constant 0 : index
      %c0_28 = arith.constant 0 : index
      %86 = vector.load %arg5[%85, %c0_27, %c0_28] : memref<27x27x8xf32, #tpu.memory_space<vmem>>, vector<1x27x8xf32>
      %87 = vector.shape_cast %86 : vector<1x27x8xf32> to vector<27x8xf32>
      %88 = vector.broadcast %82 : f32 to vector<27x8xf32>
      %89 = arith.mulf %87, %88 : vector<27x8xf32>
      %90 = vector.extract_strided_slice %76 {offsets = [3, 0], sizes = [16, 8], strides = [1, 1]} : vector<48x8xf32> to vector<16x8xf32>
      %91 = vector.extract_strided_slice %89 {offsets = [0, 0], sizes = [1, 8], strides = [1, 1]} : vector<27x8xf32> to vector<1x8xf32>
      %92 = vector.broadcast %91 : vector<1x8xf32> to vector<16x8xf32>
      %93 = arith.mulf %90, %92 : vector<16x8xf32>
      %94 = arith.addf %arg12, %93 : vector<16x8xf32>
      %95 = vector.extract_strided_slice %76 {offsets = [4, 0], sizes = [16, 8], strides = [1, 1]} : vector<48x8xf32> to vector<16x8xf32>
      %96 = vector.extract_strided_slice %89 {offsets = [1, 0], sizes = [1, 8], strides = [1, 1]} : vector<27x8xf32> to vector<1x8xf32>
      %97 = vector.broadcast %96 : vector<1x8xf32> to vector<16x8xf32>
      %98 = arith.mulf %95, %97 : vector<16x8xf32>
      %99 = arith.addf %94, %98 : vector<16x8xf32>
      %100 = vector.extract_strided_slice %76 {offsets = [5, 0], sizes = [16, 8], strides = [1, 1]} : vector<48x8xf32> to vector<16x8xf32>
      %101 = vector.extract_strided_slice %89 {offsets = [2, 0], sizes = [1, 8], strides = [1, 1]} : vector<27x8xf32> to vector<1x8xf32>
      %102 = vector.broadcast %101 : vector<1x8xf32> to vector<16x8xf32>
      %103 = arith.mulf %100, %102 : vector<16x8xf32>
      %104 = arith.addf %99, %103 : vector<16x8xf32>
      %105 = vector.extract_strided_slice %76 {offsets = [6, 0], sizes = [16, 8], strides = [1, 1]} : vector<48x8xf32> to vector<16x8xf32>
      %106 = vector.extract_strided_slice %89 {offsets = [3, 0], sizes = [1, 8], strides = [1, 1]} : vector<27x8xf32> to vector<1x8xf32>
      %107 = vector.broadcast %106 : vector<1x8xf32> to vector<16x8xf32>
      %108 = arith.mulf %105, %107 : vector<16x8xf32>
      %109 = arith.addf %104, %108 : vector<16x8xf32>
      %110 = vector.extract_strided_slice %76 {offsets = [7, 0], sizes = [16, 8], strides = [1, 1]} : vector<48x8xf32> to vector<16x8xf32>
      %111 = vector.extract_strided_slice %89 {offsets = [4, 0], sizes = [1, 8], strides = [1, 1]} : vector<27x8xf32> to vector<1x8xf32>
      %112 = vector.broadcast %111 : vector<1x8xf32> to vector<16x8xf32>
      %113 = arith.mulf %110, %112 : vector<16x8xf32>
      %114 = arith.addf %109, %113 : vector<16x8xf32>
      %115 = vector.extract_strided_slice %76 {offsets = [8, 0], sizes = [16, 8], strides = [1, 1]} : vector<48x8xf32> to vector<16x8xf32>
      %116 = vector.extract_strided_slice %89 {offsets = [5, 0], sizes = [1, 8], strides = [1, 1]} : vector<27x8xf32> to vector<1x8xf32>
      %117 = vector.broadcast %116 : vector<1x8xf32> to vector<16x8xf32>
      %118 = arith.mulf %115, %117 : vector<16x8xf32>
      %119 = arith.addf %114, %118 : vector<16x8xf32>
      %120 = vector.extract_strided_slice %76 {offsets = [9, 0], sizes = [16, 8], strides = [1, 1]} : vector<48x8xf32> to vector<16x8xf32>
      %121 = vector.extract_strided_slice %89 {offsets = [6, 0], sizes = [1, 8], strides = [1, 1]} : vector<27x8xf32> to vector<1x8xf32>
      %122 = vector.broadcast %121 : vector<1x8xf32> to vector<16x8xf32>
      %123 = arith.mulf %120, %122 : vector<16x8xf32>
      %124 = arith.addf %119, %123 : vector<16x8xf32>
      %125 = vector.extract_strided_slice %76 {offsets = [10, 0], sizes = [16, 8], strides = [1, 1]} : vector<48x8xf32> to vector<16x8xf32>
      %126 = vector.extract_strided_slice %89 {offsets = [7, 0], sizes = [1, 8], strides = [1, 1]} : vector<27x8xf32> to vector<1x8xf32>
      %127 = vector.broadcast %126 : vector<1x8xf32> to vector<16x8xf32>
      %128 = arith.mulf %125, %127 : vector<16x8xf32>
      %129 = arith.addf %124, %128 : vector<16x8xf32>
      %130 = vector.extract_strided_slice %76 {offsets = [11, 0], sizes = [16, 8], strides = [1, 1]} : vector<48x8xf32> to vector<16x8xf32>
      %131 = vector.extract_strided_slice %89 {offsets = [8, 0], sizes = [1, 8], strides = [1, 1]} : vector<27x8xf32> to vector<1x8xf32>
      %132 = vector.broadcast %131 : vector<1x8xf32> to vector<16x8xf32>
      %133 = arith.mulf %130, %132 : vector<16x8xf32>
      %134 = arith.addf %129, %133 : vector<16x8xf32>
      %135 = vector.extract_strided_slice %76 {offsets = [12, 0], sizes = [16, 8], strides = [1, 1]} : vector<48x8xf32> to vector<16x8xf32>
      %136 = vector.extract_strided_slice %89 {offsets = [9, 0], sizes = [1, 8], strides = [1, 1]} : vector<27x8xf32> to vector<1x8xf32>
      %137 = vector.broadcast %136 : vector<1x8xf32> to vector<16x8xf32>
      %138 = arith.mulf %135, %137 : vector<16x8xf32>
      %139 = arith.addf %134, %138 : vector<16x8xf32>
      %140 = vector.extract_strided_slice %76 {offsets = [13, 0], sizes = [16, 8], strides = [1, 1]} : vector<48x8xf32> to vector<16x8xf32>
      %141 = vector.extract_strided_slice %89 {offsets = [10, 0], sizes = [1, 8], strides = [1, 1]} : vector<27x8xf32> to vector<1x8xf32>
      %142 = vector.broadcast %141 : vector<1x8xf32> to vector<16x8xf32>
      %143 = arith.mulf %140, %142 : vector<16x8xf32>
      %144 = arith.addf %139, %143 : vector<16x8xf32>
      %145 = vector.extract_strided_slice %76 {offsets = [14, 0], sizes = [16, 8], strides = [1, 1]} : vector<48x8xf32> to vector<16x8xf32>
      %146 = vector.extract_strided_slice %89 {offsets = [11, 0], sizes = [1, 8], strides = [1, 1]} : vector<27x8xf32> to vector<1x8xf32>
      %147 = vector.broadcast %146 : vector<1x8xf32> to vector<16x8xf32>
      %148 = arith.mulf %145, %147 : vector<16x8xf32>
      %149 = arith.addf %144, %148 : vector<16x8xf32>
      %150 = vector.extract_strided_slice %76 {offsets = [15, 0], sizes = [16, 8], strides = [1, 1]} : vector<48x8xf32> to vector<16x8xf32>
      %151 = vector.extract_strided_slice %89 {offsets = [12, 0], sizes = [1, 8], strides = [1, 1]} : vector<27x8xf32> to vector<1x8xf32>
      %152 = vector.broadcast %151 : vector<1x8xf32> to vector<16x8xf32>
      %153 = arith.mulf %150, %152 : vector<16x8xf32>
      %154 = arith.addf %149, %153 : vector<16x8xf32>
      %155 = vector.extract_strided_slice %76 {offsets = [16, 0], sizes = [16, 8], strides = [1, 1]} : vector<48x8xf32> to vector<16x8xf32>
      %156 = vector.extract_strided_slice %89 {offsets = [13, 0], sizes = [1, 8], strides = [1, 1]} : vector<27x8xf32> to vector<1x8xf32>
      %157 = vector.broadcast %156 : vector<1x8xf32> to vector<16x8xf32>
      %158 = arith.mulf %155, %157 : vector<16x8xf32>
      %159 = arith.addf %154, %158 : vector<16x8xf32>
      %160 = vector.extract_strided_slice %76 {offsets = [17, 0], sizes = [16, 8], strides = [1, 1]} : vector<48x8xf32> to vector<16x8xf32>
      %161 = vector.extract_strided_slice %89 {offsets = [14, 0], sizes = [1, 8], strides = [1, 1]} : vector<27x8xf32> to vector<1x8xf32>
      %162 = vector.broadcast %161 : vector<1x8xf32> to vector<16x8xf32>
      %163 = arith.mulf %160, %162 : vector<16x8xf32>
      %164 = arith.addf %159, %163 : vector<16x8xf32>
      %165 = vector.extract_strided_slice %76 {offsets = [18, 0], sizes = [16, 8], strides = [1, 1]} : vector<48x8xf32> to vector<16x8xf32>
      %166 = vector.extract_strided_slice %89 {offsets = [15, 0], sizes = [1, 8], strides = [1, 1]} : vector<27x8xf32> to vector<1x8xf32>
      %167 = vector.broadcast %166 : vector<1x8xf32> to vector<16x8xf32>
      %168 = arith.mulf %165, %167 : vector<16x8xf32>
      %169 = arith.addf %164, %168 : vector<16x8xf32>
      %170 = vector.extract_strided_slice %76 {offsets = [19, 0], sizes = [16, 8], strides = [1, 1]} : vector<48x8xf32> to vector<16x8xf32>
      %171 = vector.extract_strided_slice %89 {offsets = [16, 0], sizes = [1, 8], strides = [1, 1]} : vector<27x8xf32> to vector<1x8xf32>
      %172 = vector.broadcast %171 : vector<1x8xf32> to vector<16x8xf32>
      %173 = arith.mulf %170, %172 : vector<16x8xf32>
      %174 = arith.addf %169, %173 : vector<16x8xf32>
      %175 = vector.extract_strided_slice %76 {offsets = [20, 0], sizes = [16, 8], strides = [1, 1]} : vector<48x8xf32> to vector<16x8xf32>
      %176 = vector.extract_strided_slice %89 {offsets = [17, 0], sizes = [1, 8], strides = [1, 1]} : vector<27x8xf32> to vector<1x8xf32>
      %177 = vector.broadcast %176 : vector<1x8xf32> to vector<16x8xf32>
      %178 = arith.mulf %175, %177 : vector<16x8xf32>
      %179 = arith.addf %174, %178 : vector<16x8xf32>
      %180 = vector.extract_strided_slice %76 {offsets = [21, 0], sizes = [16, 8], strides = [1, 1]} : vector<48x8xf32> to vector<16x8xf32>
      %181 = vector.extract_strided_slice %89 {offsets = [18, 0], sizes = [1, 8], strides = [1, 1]} : vector<27x8xf32> to vector<1x8xf32>
      %182 = vector.broadcast %181 : vector<1x8xf32> to vector<16x8xf32>
      %183 = arith.mulf %180, %182 : vector<16x8xf32>
      %184 = arith.addf %179, %183 : vector<16x8xf32>
      %185 = vector.extract_strided_slice %76 {offsets = [22, 0], sizes = [16, 8], strides = [1, 1]} : vector<48x8xf32> to vector<16x8xf32>
      %186 = vector.extract_strided_slice %89 {offsets = [19, 0], sizes = [1, 8], strides = [1, 1]} : vector<27x8xf32> to vector<1x8xf32>
      %187 = vector.broadcast %186 : vector<1x8xf32> to vector<16x8xf32>
      %188 = arith.mulf %185, %187 : vector<16x8xf32>
      %189 = arith.addf %184, %188 : vector<16x8xf32>
      %190 = vector.extract_strided_slice %76 {offsets = [23, 0], sizes = [16, 8], strides = [1, 1]} : vector<48x8xf32> to vector<16x8xf32>
      %191 = vector.extract_strided_slice %89 {offsets = [20, 0], sizes = [1, 8], strides = [1, 1]} : vector<27x8xf32> to vector<1x8xf32>
      %192 = vector.broadcast %191 : vector<1x8xf32> to vector<16x8xf32>
      %193 = arith.mulf %190, %192 : vector<16x8xf32>
      %194 = arith.addf %189, %193 : vector<16x8xf32>
      %195 = vector.extract_strided_slice %76 {offsets = [24, 0], sizes = [16, 8], strides = [1, 1]} : vector<48x8xf32> to vector<16x8xf32>
      %196 = vector.extract_strided_slice %89 {offsets = [21, 0], sizes = [1, 8], strides = [1, 1]} : vector<27x8xf32> to vector<1x8xf32>
      %197 = vector.broadcast %196 : vector<1x8xf32> to vector<16x8xf32>
      %198 = arith.mulf %195, %197 : vector<16x8xf32>
      %199 = arith.addf %194, %198 : vector<16x8xf32>
      %200 = vector.extract_strided_slice %76 {offsets = [25, 0], sizes = [16, 8], strides = [1, 1]} : vector<48x8xf32> to vector<16x8xf32>
      %201 = vector.extract_strided_slice %89 {offsets = [22, 0], sizes = [1, 8], strides = [1, 1]} : vector<27x8xf32> to vector<1x8xf32>
      %202 = vector.broadcast %201 : vector<1x8xf32> to vector<16x8xf32>
      %203 = arith.mulf %200, %202 : vector<16x8xf32>
      %204 = arith.addf %199, %203 : vector<16x8xf32>
      %205 = vector.extract_strided_slice %76 {offsets = [26, 0], sizes = [16, 8], strides = [1, 1]} : vector<48x8xf32> to vector<16x8xf32>
      %206 = vector.extract_strided_slice %89 {offsets = [23, 0], sizes = [1, 8], strides = [1, 1]} : vector<27x8xf32> to vector<1x8xf32>
      %207 = vector.broadcast %206 : vector<1x8xf32> to vector<16x8xf32>
      %208 = arith.mulf %205, %207 : vector<16x8xf32>
      %209 = arith.addf %204, %208 : vector<16x8xf32>
      %210 = vector.extract_strided_slice %76 {offsets = [27, 0], sizes = [16, 8], strides = [1, 1]} : vector<48x8xf32> to vector<16x8xf32>
      %211 = vector.extract_strided_slice %89 {offsets = [24, 0], sizes = [1, 8], strides = [1, 1]} : vector<27x8xf32> to vector<1x8xf32>
      %212 = vector.broadcast %211 : vector<1x8xf32> to vector<16x8xf32>
      %213 = arith.mulf %210, %212 : vector<16x8xf32>
      %214 = arith.addf %209, %213 : vector<16x8xf32>
      %215 = vector.extract_strided_slice %76 {offsets = [28, 0], sizes = [16, 8], strides = [1, 1]} : vector<48x8xf32> to vector<16x8xf32>
      %216 = vector.extract_strided_slice %89 {offsets = [25, 0], sizes = [1, 8], strides = [1, 1]} : vector<27x8xf32> to vector<1x8xf32>
      %217 = vector.broadcast %216 : vector<1x8xf32> to vector<16x8xf32>
      %218 = arith.mulf %215, %217 : vector<16x8xf32>
      %219 = arith.addf %214, %218 : vector<16x8xf32>
      %220 = vector.extract_strided_slice %76 {offsets = [29, 0], sizes = [16, 8], strides = [1, 1]} : vector<48x8xf32> to vector<16x8xf32>
      %221 = vector.extract_strided_slice %89 {offsets = [26, 0], sizes = [1, 8], strides = [1, 1]} : vector<27x8xf32> to vector<1x8xf32>
      %222 = vector.broadcast %221 : vector<1x8xf32> to vector<16x8xf32>
      %223 = arith.mulf %220, %222 : vector<16x8xf32>
      %224 = arith.addf %219, %223 : vector<16x8xf32>
      %c1_i32_29 = arith.constant 1 : i32
      %225 = arith.subi %arg11, %c1_i32_29 : i32
      %c0_i32_30 = arith.constant 0 : i32
      %226 = arith.cmpi sge, %225, %c0_i32_30 : i32
      %c27_i32_31 = arith.constant 27 : i32
      %227 = arith.cmpi slt, %225, %c27_i32_31 : i32
      %228 = arith.andi %226, %227 : i1
      %229 = arith.extui %228 : i1 to i32
      %230 = arith.sitofp %229 : i32 to f32
      %c0_i32_32 = arith.constant 0 : i32
      %c26_i32_33 = arith.constant 26 : i32
      %231 = arith.maxsi %c0_i32_32, %225 : i32
      %232 = arith.minsi %c26_i32_33, %231 : i32
      %233 = arith.index_cast %232 : i32 to index
      %c0_34 = arith.constant 0 : index
      %c0_35 = arith.constant 0 : index
      %234 = vector.load %arg5[%233, %c0_34, %c0_35] : memref<27x27x8xf32, #tpu.memory_space<vmem>>, vector<1x27x8xf32>
      %235 = vector.shape_cast %234 : vector<1x27x8xf32> to vector<27x8xf32>
      %236 = vector.broadcast %230 : f32 to vector<27x8xf32>
      %237 = arith.mulf %235, %236 : vector<27x8xf32>
      %238 = vector.extract_strided_slice %76 {offsets = [3, 0], sizes = [16, 8], strides = [1, 1]} : vector<48x8xf32> to vector<16x8xf32>
      %239 = vector.extract_strided_slice %237 {offsets = [0, 0], sizes = [1, 8], strides = [1, 1]} : vector<27x8xf32> to vector<1x8xf32>
      %240 = vector.broadcast %239 : vector<1x8xf32> to vector<16x8xf32>
      %241 = arith.mulf %238, %240 : vector<16x8xf32>
      %242 = arith.addf %arg13, %241 : vector<16x8xf32>
      %243 = vector.extract_strided_slice %76 {offsets = [4, 0], sizes = [16, 8], strides = [1, 1]} : vector<48x8xf32> to vector<16x8xf32>
      %244 = vector.extract_strided_slice %237 {offsets = [1, 0], sizes = [1, 8], strides = [1, 1]} : vector<27x8xf32> to vector<1x8xf32>
      %245 = vector.broadcast %244 : vector<1x8xf32> to vector<16x8xf32>
      %246 = arith.mulf %243, %245 : vector<16x8xf32>
      %247 = arith.addf %242, %246 : vector<16x8xf32>
      %248 = vector.extract_strided_slice %76 {offsets = [5, 0], sizes = [16, 8], strides = [1, 1]} : vector<48x8xf32> to vector<16x8xf32>
      %249 = vector.extract_strided_slice %237 {offsets = [2, 0], sizes = [1, 8], strides = [1, 1]} : vector<27x8xf32> to vector<1x8xf32>
      %250 = vector.broadcast %249 : vector<1x8xf32> to vector<16x8xf32>
      %251 = arith.mulf %248, %250 : vector<16x8xf32>
      %252 = arith.addf %247, %251 : vector<16x8xf32>
      %253 = vector.extract_strided_slice %76 {offsets = [6, 0], sizes = [16, 8], strides = [1, 1]} : vector<48x8xf32> to vector<16x8xf32>
      %254 = vector.extract_strided_slice %237 {offsets = [3, 0], sizes = [1, 8], strides = [1, 1]} : vector<27x8xf32> to vector<1x8xf32>
      %255 = vector.broadcast %254 : vector<1x8xf32> to vector<16x8xf32>
      %256 = arith.mulf %253, %255 : vector<16x8xf32>
      %257 = arith.addf %252, %256 : vector<16x8xf32>
      %258 = vector.extract_strided_slice %76 {offsets = [7, 0], sizes = [16, 8], strides = [1, 1]} : vector<48x8xf32> to vector<16x8xf32>
      %259 = vector.extract_strided_slice %237 {offsets = [4, 0], sizes = [1, 8], strides = [1, 1]} : vector<27x8xf32> to vector<1x8xf32>
      %260 = vector.broadcast %259 : vector<1x8xf32> to vector<16x8xf32>
      %261 = arith.mulf %258, %260 : vector<16x8xf32>
      %262 = arith.addf %257, %261 : vector<16x8xf32>
      %263 = vector.extract_strided_slice %76 {offsets = [8, 0], sizes = [16, 8], strides = [1, 1]} : vector<48x8xf32> to vector<16x8xf32>
      %264 = vector.extract_strided_slice %237 {offsets = [5, 0], sizes = [1, 8], strides = [1, 1]} : vector<27x8xf32> to vector<1x8xf32>
      %265 = vector.broadcast %264 : vector<1x8xf32> to vector<16x8xf32>
      %266 = arith.mulf %263, %265 : vector<16x8xf32>
      %267 = arith.addf %262, %266 : vector<16x8xf32>
      %268 = vector.extract_strided_slice %76 {offsets = [9, 0], sizes = [16, 8], strides = [1, 1]} : vector<48x8xf32> to vector<16x8xf32>
      %269 = vector.extract_strided_slice %237 {offsets = [6, 0], sizes = [1, 8], strides = [1, 1]} : vector<27x8xf32> to vector<1x8xf32>
      %270 = vector.broadcast %269 : vector<1x8xf32> to vector<16x8xf32>
      %271 = arith.mulf %268, %270 : vector<16x8xf32>
      %272 = arith.addf %267, %271 : vector<16x8xf32>
      %273 = vector.extract_strided_slice %76 {offsets = [10, 0], sizes = [16, 8], strides = [1, 1]} : vector<48x8xf32> to vector<16x8xf32>
      %274 = vector.extract_strided_slice %237 {offsets = [7, 0], sizes = [1, 8], strides = [1, 1]} : vector<27x8xf32> to vector<1x8xf32>
      %275 = vector.broadcast %274 : vector<1x8xf32> to vector<16x8xf32>
      %276 = arith.mulf %273, %275 : vector<16x8xf32>
      %277 = arith.addf %272, %276 : vector<16x8xf32>
      %278 = vector.extract_strided_slice %76 {offsets = [11, 0], sizes = [16, 8], strides = [1, 1]} : vector<48x8xf32> to vector<16x8xf32>
      %279 = vector.extract_strided_slice %237 {offsets = [8, 0], sizes = [1, 8], strides = [1, 1]} : vector<27x8xf32> to vector<1x8xf32>
      %280 = vector.broadcast %279 : vector<1x8xf32> to vector<16x8xf32>
      %281 = arith.mulf %278, %280 : vector<16x8xf32>
      %282 = arith.addf %277, %281 : vector<16x8xf32>
      %283 = vector.extract_strided_slice %76 {offsets = [12, 0], sizes = [16, 8], strides = [1, 1]} : vector<48x8xf32> to vector<16x8xf32>
      %284 = vector.extract_strided_slice %237 {offsets = [9, 0], sizes = [1, 8], strides = [1, 1]} : vector<27x8xf32> to vector<1x8xf32>
      %285 = vector.broadcast %284 : vector<1x8xf32> to vector<16x8xf32>
      %286 = arith.mulf %283, %285 : vector<16x8xf32>
      %287 = arith.addf %282, %286 : vector<16x8xf32>
      %288 = vector.extract_strided_slice %76 {offsets = [13, 0], sizes = [16, 8], strides = [1, 1]} : vector<48x8xf32> to vector<16x8xf32>
      %289 = vector.extract_strided_slice %237 {offsets = [10, 0], sizes = [1, 8], strides = [1, 1]} : vector<27x8xf32> to vector<1x8xf32>
      %290 = vector.broadcast %289 : vector<1x8xf32> to vector<16x8xf32>
      %291 = arith.mulf %288, %290 : vector<16x8xf32>
      %292 = arith.addf %287, %291 : vector<16x8xf32>
      %293 = vector.extract_strided_slice %76 {offsets = [14, 0], sizes = [16, 8], strides = [1, 1]} : vector<48x8xf32> to vector<16x8xf32>
      %294 = vector.extract_strided_slice %237 {offsets = [11, 0], sizes = [1, 8], strides = [1, 1]} : vector<27x8xf32> to vector<1x8xf32>
      %295 = vector.broadcast %294 : vector<1x8xf32> to vector<16x8xf32>
      %296 = arith.mulf %293, %295 : vector<16x8xf32>
      %297 = arith.addf %292, %296 : vector<16x8xf32>
      %298 = vector.extract_strided_slice %76 {offsets = [15, 0], sizes = [16, 8], strides = [1, 1]} : vector<48x8xf32> to vector<16x8xf32>
      %299 = vector.extract_strided_slice %237 {offsets = [12, 0], sizes = [1, 8], strides = [1, 1]} : vector<27x8xf32> to vector<1x8xf32>
      %300 = vector.broadcast %299 : vector<1x8xf32> to vector<16x8xf32>
      %301 = arith.mulf %298, %300 : vector<16x8xf32>
      %302 = arith.addf %297, %301 : vector<16x8xf32>
      %303 = vector.extract_strided_slice %76 {offsets = [16, 0], sizes = [16, 8], strides = [1, 1]} : vector<48x8xf32> to vector<16x8xf32>
      %304 = vector.extract_strided_slice %237 {offsets = [13, 0], sizes = [1, 8], strides = [1, 1]} : vector<27x8xf32> to vector<1x8xf32>
      %305 = vector.broadcast %304 : vector<1x8xf32> to vector<16x8xf32>
      %306 = arith.mulf %303, %305 : vector<16x8xf32>
      %307 = arith.addf %302, %306 : vector<16x8xf32>
      %308 = vector.extract_strided_slice %76 {offsets = [17, 0], sizes = [16, 8], strides = [1, 1]} : vector<48x8xf32> to vector<16x8xf32>
      %309 = vector.extract_strided_slice %237 {offsets = [14, 0], sizes = [1, 8], strides = [1, 1]} : vector<27x8xf32> to vector<1x8xf32>
      %310 = vector.broadcast %309 : vector<1x8xf32> to vector<16x8xf32>
      %311 = arith.mulf %308, %310 : vector<16x8xf32>
      %312 = arith.addf %307, %311 : vector<16x8xf32>
      %313 = vector.extract_strided_slice %76 {offsets = [18, 0], sizes = [16, 8], strides = [1, 1]} : vector<48x8xf32> to vector<16x8xf32>
      %314 = vector.extract_strided_slice %237 {offsets = [15, 0], sizes = [1, 8], strides = [1, 1]} : vector<27x8xf32> to vector<1x8xf32>
      %315 = vector.broadcast %314 : vector<1x8xf32> to vector<16x8xf32>
      %316 = arith.mulf %313, %315 : vector<16x8xf32>
      %317 = arith.addf %312, %316 : vector<16x8xf32>
      %318 = vector.extract_strided_slice %76 {offsets = [19, 0], sizes = [16, 8], strides = [1, 1]} : vector<48x8xf32> to vector<16x8xf32>
      %319 = vector.extract_strided_slice %237 {offsets = [16, 0], sizes = [1, 8], strides = [1, 1]} : vector<27x8xf32> to vector<1x8xf32>
      %320 = vector.broadcast %319 : vector<1x8xf32> to vector<16x8xf32>
      %321 = arith.mulf %318, %320 : vector<16x8xf32>
      %322 = arith.addf %317, %321 : vector<16x8xf32>
      %323 = vector.extract_strided_slice %76 {offsets = [20, 0], sizes = [16, 8], strides = [1, 1]} : vector<48x8xf32> to vector<16x8xf32>
      %324 = vector.extract_strided_slice %237 {offsets = [17, 0], sizes = [1, 8], strides = [1, 1]} : vector<27x8xf32> to vector<1x8xf32>
      %325 = vector.broadcast %324 : vector<1x8xf32> to vector<16x8xf32>
      %326 = arith.mulf %323, %325 : vector<16x8xf32>
      %327 = arith.addf %322, %326 : vector<16x8xf32>
      %328 = vector.extract_strided_slice %76 {offsets = [21, 0], sizes = [16, 8], strides = [1, 1]} : vector<48x8xf32> to vector<16x8xf32>
      %329 = vector.extract_strided_slice %237 {offsets = [18, 0], sizes = [1, 8], strides = [1, 1]} : vector<27x8xf32> to vector<1x8xf32>
      %330 = vector.broadcast %329 : vector<1x8xf32> to vector<16x8xf32>
      %331 = arith.mulf %328, %330 : vector<16x8xf32>
      %332 = arith.addf %327, %331 : vector<16x8xf32>
      %333 = vector.extract_strided_slice %76 {offsets = [22, 0], sizes = [16, 8], strides = [1, 1]} : vector<48x8xf32> to vector<16x8xf32>
      %334 = vector.extract_strided_slice %237 {offsets = [19, 0], sizes = [1, 8], strides = [1, 1]} : vector<27x8xf32> to vector<1x8xf32>
      %335 = vector.broadcast %334 : vector<1x8xf32> to vector<16x8xf32>
      %336 = arith.mulf %333, %335 : vector<16x8xf32>
      %337 = arith.addf %332, %336 : vector<16x8xf32>
      %338 = vector.extract_strided_slice %76 {offsets = [23, 0], sizes = [16, 8], strides = [1, 1]} : vector<48x8xf32> to vector<16x8xf32>
      %339 = vector.extract_strided_slice %237 {offsets = [20, 0], sizes = [1, 8], strides = [1, 1]} : vector<27x8xf32> to vector<1x8xf32>
      %340 = vector.broadcast %339 : vector<1x8xf32> to vector<16x8xf32>
      %341 = arith.mulf %338, %340 : vector<16x8xf32>
      %342 = arith.addf %337, %341 : vector<16x8xf32>
      %343 = vector.extract_strided_slice %76 {offsets = [24, 0], sizes = [16, 8], strides = [1, 1]} : vector<48x8xf32> to vector<16x8xf32>
      %344 = vector.extract_strided_slice %237 {offsets = [21, 0], sizes = [1, 8], strides = [1, 1]} : vector<27x8xf32> to vector<1x8xf32>
      %345 = vector.broadcast %344 : vector<1x8xf32> to vector<16x8xf32>
      %346 = arith.mulf %343, %345 : vector<16x8xf32>
      %347 = arith.addf %342, %346 : vector<16x8xf32>
      %348 = vector.extract_strided_slice %76 {offsets = [25, 0], sizes = [16, 8], strides = [1, 1]} : vector<48x8xf32> to vector<16x8xf32>
      %349 = vector.extract_strided_slice %237 {offsets = [22, 0], sizes = [1, 8], strides = [1, 1]} : vector<27x8xf32> to vector<1x8xf32>
      %350 = vector.broadcast %349 : vector<1x8xf32> to vector<16x8xf32>
      %351 = arith.mulf %348, %350 : vector<16x8xf32>
      %352 = arith.addf %347, %351 : vector<16x8xf32>
      %353 = vector.extract_strided_slice %76 {offsets = [26, 0], sizes = [16, 8], strides = [1, 1]} : vector<48x8xf32> to vector<16x8xf32>
      %354 = vector.extract_strided_slice %237 {offsets = [23, 0], sizes = [1, 8], strides = [1, 1]} : vector<27x8xf32> to vector<1x8xf32>
      %355 = vector.broadcast %354 : vector<1x8xf32> to vector<16x8xf32>
      %356 = arith.mulf %353, %355 : vector<16x8xf32>
      %357 = arith.addf %352, %356 : vector<16x8xf32>
      %358 = vector.extract_strided_slice %76 {offsets = [27, 0], sizes = [16, 8], strides = [1, 1]} : vector<48x8xf32> to vector<16x8xf32>
      %359 = vector.extract_strided_slice %237 {offsets = [24, 0], sizes = [1, 8], strides = [1, 1]} : vector<27x8xf32> to vector<1x8xf32>
      %360 = vector.broadcast %359 : vector<1x8xf32> to vector<16x8xf32>
      %361 = arith.mulf %358, %360 : vector<16x8xf32>
      %362 = arith.addf %357, %361 : vector<16x8xf32>
      %363 = vector.extract_strided_slice %76 {offsets = [28, 0], sizes = [16, 8], strides = [1, 1]} : vector<48x8xf32> to vector<16x8xf32>
      %364 = vector.extract_strided_slice %237 {offsets = [25, 0], sizes = [1, 8], strides = [1, 1]} : vector<27x8xf32> to vector<1x8xf32>
      %365 = vector.broadcast %364 : vector<1x8xf32> to vector<16x8xf32>
      %366 = arith.mulf %363, %365 : vector<16x8xf32>
      %367 = arith.addf %362, %366 : vector<16x8xf32>
      %368 = vector.extract_strided_slice %76 {offsets = [29, 0], sizes = [16, 8], strides = [1, 1]} : vector<48x8xf32> to vector<16x8xf32>
      %369 = vector.extract_strided_slice %237 {offsets = [26, 0], sizes = [1, 8], strides = [1, 1]} : vector<27x8xf32> to vector<1x8xf32>
      %370 = vector.broadcast %369 : vector<1x8xf32> to vector<16x8xf32>
      %371 = arith.mulf %368, %370 : vector<16x8xf32>
      %372 = arith.addf %367, %371 : vector<16x8xf32>
      %c2_i32 = arith.constant 2 : i32
      %373 = arith.subi %arg11, %c2_i32 : i32
      %c0_i32_36 = arith.constant 0 : i32
      %374 = arith.cmpi sge, %373, %c0_i32_36 : i32
      %c27_i32_37 = arith.constant 27 : i32
      %375 = arith.cmpi slt, %373, %c27_i32_37 : i32
      %376 = arith.andi %374, %375 : i1
      %377 = arith.extui %376 : i1 to i32
      %378 = arith.sitofp %377 : i32 to f32
      %c0_i32_38 = arith.constant 0 : i32
      %c26_i32_39 = arith.constant 26 : i32
      %379 = arith.maxsi %c0_i32_38, %373 : i32
      %380 = arith.minsi %c26_i32_39, %379 : i32
      %381 = arith.index_cast %380 : i32 to index
      %c0_40 = arith.constant 0 : index
      %c0_41 = arith.constant 0 : index
      %382 = vector.load %arg5[%381, %c0_40, %c0_41] : memref<27x27x8xf32, #tpu.memory_space<vmem>>, vector<1x27x8xf32>
      %383 = vector.shape_cast %382 : vector<1x27x8xf32> to vector<27x8xf32>
      %384 = vector.broadcast %378 : f32 to vector<27x8xf32>
      %385 = arith.mulf %383, %384 : vector<27x8xf32>
      %386 = vector.extract_strided_slice %76 {offsets = [3, 0], sizes = [16, 8], strides = [1, 1]} : vector<48x8xf32> to vector<16x8xf32>
      %387 = vector.extract_strided_slice %385 {offsets = [0, 0], sizes = [1, 8], strides = [1, 1]} : vector<27x8xf32> to vector<1x8xf32>
      %388 = vector.broadcast %387 : vector<1x8xf32> to vector<16x8xf32>
      %389 = arith.mulf %386, %388 : vector<16x8xf32>
      %390 = arith.addf %arg14, %389 : vector<16x8xf32>
      %391 = vector.extract_strided_slice %76 {offsets = [4, 0], sizes = [16, 8], strides = [1, 1]} : vector<48x8xf32> to vector<16x8xf32>
      %392 = vector.extract_strided_slice %385 {offsets = [1, 0], sizes = [1, 8], strides = [1, 1]} : vector<27x8xf32> to vector<1x8xf32>
      %393 = vector.broadcast %392 : vector<1x8xf32> to vector<16x8xf32>
      %394 = arith.mulf %391, %393 : vector<16x8xf32>
      %395 = arith.addf %390, %394 : vector<16x8xf32>
      %396 = vector.extract_strided_slice %76 {offsets = [5, 0], sizes = [16, 8], strides = [1, 1]} : vector<48x8xf32> to vector<16x8xf32>
      %397 = vector.extract_strided_slice %385 {offsets = [2, 0], sizes = [1, 8], strides = [1, 1]} : vector<27x8xf32> to vector<1x8xf32>
      %398 = vector.broadcast %397 : vector<1x8xf32> to vector<16x8xf32>
      %399 = arith.mulf %396, %398 : vector<16x8xf32>
      %400 = arith.addf %395, %399 : vector<16x8xf32>
      %401 = vector.extract_strided_slice %76 {offsets = [6, 0], sizes = [16, 8], strides = [1, 1]} : vector<48x8xf32> to vector<16x8xf32>
      %402 = vector.extract_strided_slice %385 {offsets = [3, 0], sizes = [1, 8], strides = [1, 1]} : vector<27x8xf32> to vector<1x8xf32>
      %403 = vector.broadcast %402 : vector<1x8xf32> to vector<16x8xf32>
      %404 = arith.mulf %401, %403 : vector<16x8xf32>
      %405 = arith.addf %400, %404 : vector<16x8xf32>
      %406 = vector.extract_strided_slice %76 {offsets = [7, 0], sizes = [16, 8], strides = [1, 1]} : vector<48x8xf32> to vector<16x8xf32>
      %407 = vector.extract_strided_slice %385 {offsets = [4, 0], sizes = [1, 8], strides = [1, 1]} : vector<27x8xf32> to vector<1x8xf32>
      %408 = vector.broadcast %407 : vector<1x8xf32> to vector<16x8xf32>
      %409 = arith.mulf %406, %408 : vector<16x8xf32>
      %410 = arith.addf %405, %409 : vector<16x8xf32>
      %411 = vector.extract_strided_slice %76 {offsets = [8, 0], sizes = [16, 8], strides = [1, 1]} : vector<48x8xf32> to vector<16x8xf32>
      %412 = vector.extract_strided_slice %385 {offsets = [5, 0], sizes = [1, 8], strides = [1, 1]} : vector<27x8xf32> to vector<1x8xf32>
      %413 = vector.broadcast %412 : vector<1x8xf32> to vector<16x8xf32>
      %414 = arith.mulf %411, %413 : vector<16x8xf32>
      %415 = arith.addf %410, %414 : vector<16x8xf32>
      %416 = vector.extract_strided_slice %76 {offsets = [9, 0], sizes = [16, 8], strides = [1, 1]} : vector<48x8xf32> to vector<16x8xf32>
      %417 = vector.extract_strided_slice %385 {offsets = [6, 0], sizes = [1, 8], strides = [1, 1]} : vector<27x8xf32> to vector<1x8xf32>
      %418 = vector.broadcast %417 : vector<1x8xf32> to vector<16x8xf32>
      %419 = arith.mulf %416, %418 : vector<16x8xf32>
      %420 = arith.addf %415, %419 : vector<16x8xf32>
      %421 = vector.extract_strided_slice %76 {offsets = [10, 0], sizes = [16, 8], strides = [1, 1]} : vector<48x8xf32> to vector<16x8xf32>
      %422 = vector.extract_strided_slice %385 {offsets = [7, 0], sizes = [1, 8], strides = [1, 1]} : vector<27x8xf32> to vector<1x8xf32>
      %423 = vector.broadcast %422 : vector<1x8xf32> to vector<16x8xf32>
      %424 = arith.mulf %421, %423 : vector<16x8xf32>
      %425 = arith.addf %420, %424 : vector<16x8xf32>
      %426 = vector.extract_strided_slice %76 {offsets = [11, 0], sizes = [16, 8], strides = [1, 1]} : vector<48x8xf32> to vector<16x8xf32>
      %427 = vector.extract_strided_slice %385 {offsets = [8, 0], sizes = [1, 8], strides = [1, 1]} : vector<27x8xf32> to vector<1x8xf32>
      %428 = vector.broadcast %427 : vector<1x8xf32> to vector<16x8xf32>
      %429 = arith.mulf %426, %428 : vector<16x8xf32>
      %430 = arith.addf %425, %429 : vector<16x8xf32>
      %431 = vector.extract_strided_slice %76 {offsets = [12, 0], sizes = [16, 8], strides = [1, 1]} : vector<48x8xf32> to vector<16x8xf32>
      %432 = vector.extract_strided_slice %385 {offsets = [9, 0], sizes = [1, 8], strides = [1, 1]} : vector<27x8xf32> to vector<1x8xf32>
      %433 = vector.broadcast %432 : vector<1x8xf32> to vector<16x8xf32>
      %434 = arith.mulf %431, %433 : vector<16x8xf32>
      %435 = arith.addf %430, %434 : vector<16x8xf32>
      %436 = vector.extract_strided_slice %76 {offsets = [13, 0], sizes = [16, 8], strides = [1, 1]} : vector<48x8xf32> to vector<16x8xf32>
      %437 = vector.extract_strided_slice %385 {offsets = [10, 0], sizes = [1, 8], strides = [1, 1]} : vector<27x8xf32> to vector<1x8xf32>
      %438 = vector.broadcast %437 : vector<1x8xf32> to vector<16x8xf32>
      %439 = arith.mulf %436, %438 : vector<16x8xf32>
      %440 = arith.addf %435, %439 : vector<16x8xf32>
      %441 = vector.extract_strided_slice %76 {offsets = [14, 0], sizes = [16, 8], strides = [1, 1]} : vector<48x8xf32> to vector<16x8xf32>
      %442 = vector.extract_strided_slice %385 {offsets = [11, 0], sizes = [1, 8], strides = [1, 1]} : vector<27x8xf32> to vector<1x8xf32>
      %443 = vector.broadcast %442 : vector<1x8xf32> to vector<16x8xf32>
      %444 = arith.mulf %441, %443 : vector<16x8xf32>
      %445 = arith.addf %440, %444 : vector<16x8xf32>
      %446 = vector.extract_strided_slice %76 {offsets = [15, 0], sizes = [16, 8], strides = [1, 1]} : vector<48x8xf32> to vector<16x8xf32>
      %447 = vector.extract_strided_slice %385 {offsets = [12, 0], sizes = [1, 8], strides = [1, 1]} : vector<27x8xf32> to vector<1x8xf32>
      %448 = vector.broadcast %447 : vector<1x8xf32> to vector<16x8xf32>
      %449 = arith.mulf %446, %448 : vector<16x8xf32>
      %450 = arith.addf %445, %449 : vector<16x8xf32>
      %451 = vector.extract_strided_slice %76 {offsets = [16, 0], sizes = [16, 8], strides = [1, 1]} : vector<48x8xf32> to vector<16x8xf32>
      %452 = vector.extract_strided_slice %385 {offsets = [13, 0], sizes = [1, 8], strides = [1, 1]} : vector<27x8xf32> to vector<1x8xf32>
      %453 = vector.broadcast %452 : vector<1x8xf32> to vector<16x8xf32>
      %454 = arith.mulf %451, %453 : vector<16x8xf32>
      %455 = arith.addf %450, %454 : vector<16x8xf32>
      %456 = vector.extract_strided_slice %76 {offsets = [17, 0], sizes = [16, 8], strides = [1, 1]} : vector<48x8xf32> to vector<16x8xf32>
      %457 = vector.extract_strided_slice %385 {offsets = [14, 0], sizes = [1, 8], strides = [1, 1]} : vector<27x8xf32> to vector<1x8xf32>
      %458 = vector.broadcast %457 : vector<1x8xf32> to vector<16x8xf32>
      %459 = arith.mulf %456, %458 : vector<16x8xf32>
      %460 = arith.addf %455, %459 : vector<16x8xf32>
      %461 = vector.extract_strided_slice %76 {offsets = [18, 0], sizes = [16, 8], strides = [1, 1]} : vector<48x8xf32> to vector<16x8xf32>
      %462 = vector.extract_strided_slice %385 {offsets = [15, 0], sizes = [1, 8], strides = [1, 1]} : vector<27x8xf32> to vector<1x8xf32>
      %463 = vector.broadcast %462 : vector<1x8xf32> to vector<16x8xf32>
      %464 = arith.mulf %461, %463 : vector<16x8xf32>
      %465 = arith.addf %460, %464 : vector<16x8xf32>
      %466 = vector.extract_strided_slice %76 {offsets = [19, 0], sizes = [16, 8], strides = [1, 1]} : vector<48x8xf32> to vector<16x8xf32>
      %467 = vector.extract_strided_slice %385 {offsets = [16, 0], sizes = [1, 8], strides = [1, 1]} : vector<27x8xf32> to vector<1x8xf32>
      %468 = vector.broadcast %467 : vector<1x8xf32> to vector<16x8xf32>
      %469 = arith.mulf %466, %468 : vector<16x8xf32>
      %470 = arith.addf %465, %469 : vector<16x8xf32>
      %471 = vector.extract_strided_slice %76 {offsets = [20, 0], sizes = [16, 8], strides = [1, 1]} : vector<48x8xf32> to vector<16x8xf32>
      %472 = vector.extract_strided_slice %385 {offsets = [17, 0], sizes = [1, 8], strides = [1, 1]} : vector<27x8xf32> to vector<1x8xf32>
      %473 = vector.broadcast %472 : vector<1x8xf32> to vector<16x8xf32>
      %474 = arith.mulf %471, %473 : vector<16x8xf32>
      %475 = arith.addf %470, %474 : vector<16x8xf32>
      %476 = vector.extract_strided_slice %76 {offsets = [21, 0], sizes = [16, 8], strides = [1, 1]} : vector<48x8xf32> to vector<16x8xf32>
      %477 = vector.extract_strided_slice %385 {offsets = [18, 0], sizes = [1, 8], strides = [1, 1]} : vector<27x8xf32> to vector<1x8xf32>
      %478 = vector.broadcast %477 : vector<1x8xf32> to vector<16x8xf32>
      %479 = arith.mulf %476, %478 : vector<16x8xf32>
      %480 = arith.addf %475, %479 : vector<16x8xf32>
      %481 = vector.extract_strided_slice %76 {offsets = [22, 0], sizes = [16, 8], strides = [1, 1]} : vector<48x8xf32> to vector<16x8xf32>
      %482 = vector.extract_strided_slice %385 {offsets = [19, 0], sizes = [1, 8], strides = [1, 1]} : vector<27x8xf32> to vector<1x8xf32>
      %483 = vector.broadcast %482 : vector<1x8xf32> to vector<16x8xf32>
      %484 = arith.mulf %481, %483 : vector<16x8xf32>
      %485 = arith.addf %480, %484 : vector<16x8xf32>
      %486 = vector.extract_strided_slice %76 {offsets = [23, 0], sizes = [16, 8], strides = [1, 1]} : vector<48x8xf32> to vector<16x8xf32>
      %487 = vector.extract_strided_slice %385 {offsets = [20, 0], sizes = [1, 8], strides = [1, 1]} : vector<27x8xf32> to vector<1x8xf32>
      %488 = vector.broadcast %487 : vector<1x8xf32> to vector<16x8xf32>
      %489 = arith.mulf %486, %488 : vector<16x8xf32>
      %490 = arith.addf %485, %489 : vector<16x8xf32>
      %491 = vector.extract_strided_slice %76 {offsets = [24, 0], sizes = [16, 8], strides = [1, 1]} : vector<48x8xf32> to vector<16x8xf32>
      %492 = vector.extract_strided_slice %385 {offsets = [21, 0], sizes = [1, 8], strides = [1, 1]} : vector<27x8xf32> to vector<1x8xf32>
      %493 = vector.broadcast %492 : vector<1x8xf32> to vector<16x8xf32>
      %494 = arith.mulf %491, %493 : vector<16x8xf32>
      %495 = arith.addf %490, %494 : vector<16x8xf32>
      %496 = vector.extract_strided_slice %76 {offsets = [25, 0], sizes = [16, 8], strides = [1, 1]} : vector<48x8xf32> to vector<16x8xf32>
      %497 = vector.extract_strided_slice %385 {offsets = [22, 0], sizes = [1, 8], strides = [1, 1]} : vector<27x8xf32> to vector<1x8xf32>
      %498 = vector.broadcast %497 : vector<1x8xf32> to vector<16x8xf32>
      %499 = arith.mulf %496, %498 : vector<16x8xf32>
      %500 = arith.addf %495, %499 : vector<16x8xf32>
      %501 = vector.extract_strided_slice %76 {offsets = [26, 0], sizes = [16, 8], strides = [1, 1]} : vector<48x8xf32> to vector<16x8xf32>
      %502 = vector.extract_strided_slice %385 {offsets = [23, 0], sizes = [1, 8], strides = [1, 1]} : vector<27x8xf32> to vector<1x8xf32>
      %503 = vector.broadcast %502 : vector<1x8xf32> to vector<16x8xf32>
      %504 = arith.mulf %501, %503 : vector<16x8xf32>
      %505 = arith.addf %500, %504 : vector<16x8xf32>
      %506 = vector.extract_strided_slice %76 {offsets = [27, 0], sizes = [16, 8], strides = [1, 1]} : vector<48x8xf32> to vector<16x8xf32>
      %507 = vector.extract_strided_slice %385 {offsets = [24, 0], sizes = [1, 8], strides = [1, 1]} : vector<27x8xf32> to vector<1x8xf32>
      %508 = vector.broadcast %507 : vector<1x8xf32> to vector<16x8xf32>
      %509 = arith.mulf %506, %508 : vector<16x8xf32>
      %510 = arith.addf %505, %509 : vector<16x8xf32>
      %511 = vector.extract_strided_slice %76 {offsets = [28, 0], sizes = [16, 8], strides = [1, 1]} : vector<48x8xf32> to vector<16x8xf32>
      %512 = vector.extract_strided_slice %385 {offsets = [25, 0], sizes = [1, 8], strides = [1, 1]} : vector<27x8xf32> to vector<1x8xf32>
      %513 = vector.broadcast %512 : vector<1x8xf32> to vector<16x8xf32>
      %514 = arith.mulf %511, %513 : vector<16x8xf32>
      %515 = arith.addf %510, %514 : vector<16x8xf32>
      %516 = vector.extract_strided_slice %76 {offsets = [29, 0], sizes = [16, 8], strides = [1, 1]} : vector<48x8xf32> to vector<16x8xf32>
      %517 = vector.extract_strided_slice %385 {offsets = [26, 0], sizes = [1, 8], strides = [1, 1]} : vector<27x8xf32> to vector<1x8xf32>
      %518 = vector.broadcast %517 : vector<1x8xf32> to vector<16x8xf32>
      %519 = arith.mulf %516, %518 : vector<16x8xf32>
      %520 = arith.addf %515, %519 : vector<16x8xf32>
      %c3_i32 = arith.constant 3 : i32
      %521 = arith.subi %arg11, %c3_i32 : i32
      %c0_i32_42 = arith.constant 0 : i32
      %522 = arith.cmpi sge, %521, %c0_i32_42 : i32
      %c27_i32_43 = arith.constant 27 : i32
      %523 = arith.cmpi slt, %521, %c27_i32_43 : i32
      %524 = arith.andi %522, %523 : i1
      %525 = arith.extui %524 : i1 to i32
      %526 = arith.sitofp %525 : i32 to f32
      %c0_i32_44 = arith.constant 0 : i32
      %c26_i32_45 = arith.constant 26 : i32
      %527 = arith.maxsi %c0_i32_44, %521 : i32
      %528 = arith.minsi %c26_i32_45, %527 : i32
      %529 = arith.index_cast %528 : i32 to index
      %c0_46 = arith.constant 0 : index
      %c0_47 = arith.constant 0 : index
      %530 = vector.load %arg5[%529, %c0_46, %c0_47] : memref<27x27x8xf32, #tpu.memory_space<vmem>>, vector<1x27x8xf32>
      %531 = vector.shape_cast %530 : vector<1x27x8xf32> to vector<27x8xf32>
      %532 = vector.broadcast %526 : f32 to vector<27x8xf32>
      %533 = arith.mulf %531, %532 : vector<27x8xf32>
      %534 = vector.extract_strided_slice %76 {offsets = [3, 0], sizes = [16, 8], strides = [1, 1]} : vector<48x8xf32> to vector<16x8xf32>
      %535 = vector.extract_strided_slice %533 {offsets = [0, 0], sizes = [1, 8], strides = [1, 1]} : vector<27x8xf32> to vector<1x8xf32>
      %536 = vector.broadcast %535 : vector<1x8xf32> to vector<16x8xf32>
      %537 = arith.mulf %534, %536 : vector<16x8xf32>
      %538 = arith.addf %arg15, %537 : vector<16x8xf32>
      %539 = vector.extract_strided_slice %76 {offsets = [4, 0], sizes = [16, 8], strides = [1, 1]} : vector<48x8xf32> to vector<16x8xf32>
      %540 = vector.extract_strided_slice %533 {offsets = [1, 0], sizes = [1, 8], strides = [1, 1]} : vector<27x8xf32> to vector<1x8xf32>
      %541 = vector.broadcast %540 : vector<1x8xf32> to vector<16x8xf32>
      %542 = arith.mulf %539, %541 : vector<16x8xf32>
      %543 = arith.addf %538, %542 : vector<16x8xf32>
      %544 = vector.extract_strided_slice %76 {offsets = [5, 0], sizes = [16, 8], strides = [1, 1]} : vector<48x8xf32> to vector<16x8xf32>
      %545 = vector.extract_strided_slice %533 {offsets = [2, 0], sizes = [1, 8], strides = [1, 1]} : vector<27x8xf32> to vector<1x8xf32>
      %546 = vector.broadcast %545 : vector<1x8xf32> to vector<16x8xf32>
      %547 = arith.mulf %544, %546 : vector<16x8xf32>
      %548 = arith.addf %543, %547 : vector<16x8xf32>
      %549 = vector.extract_strided_slice %76 {offsets = [6, 0], sizes = [16, 8], strides = [1, 1]} : vector<48x8xf32> to vector<16x8xf32>
      %550 = vector.extract_strided_slice %533 {offsets = [3, 0], sizes = [1, 8], strides = [1, 1]} : vector<27x8xf32> to vector<1x8xf32>
      %551 = vector.broadcast %550 : vector<1x8xf32> to vector<16x8xf32>
      %552 = arith.mulf %549, %551 : vector<16x8xf32>
      %553 = arith.addf %548, %552 : vector<16x8xf32>
      %554 = vector.extract_strided_slice %76 {offsets = [7, 0], sizes = [16, 8], strides = [1, 1]} : vector<48x8xf32> to vector<16x8xf32>
      %555 = vector.extract_strided_slice %533 {offsets = [4, 0], sizes = [1, 8], strides = [1, 1]} : vector<27x8xf32> to vector<1x8xf32>
      %556 = vector.broadcast %555 : vector<1x8xf32> to vector<16x8xf32>
      %557 = arith.mulf %554, %556 : vector<16x8xf32>
      %558 = arith.addf %553, %557 : vector<16x8xf32>
      %559 = vector.extract_strided_slice %76 {offsets = [8, 0], sizes = [16, 8], strides = [1, 1]} : vector<48x8xf32> to vector<16x8xf32>
      %560 = vector.extract_strided_slice %533 {offsets = [5, 0], sizes = [1, 8], strides = [1, 1]} : vector<27x8xf32> to vector<1x8xf32>
      %561 = vector.broadcast %560 : vector<1x8xf32> to vector<16x8xf32>
      %562 = arith.mulf %559, %561 : vector<16x8xf32>
      %563 = arith.addf %558, %562 : vector<16x8xf32>
      %564 = vector.extract_strided_slice %76 {offsets = [9, 0], sizes = [16, 8], strides = [1, 1]} : vector<48x8xf32> to vector<16x8xf32>
      %565 = vector.extract_strided_slice %533 {offsets = [6, 0], sizes = [1, 8], strides = [1, 1]} : vector<27x8xf32> to vector<1x8xf32>
      %566 = vector.broadcast %565 : vector<1x8xf32> to vector<16x8xf32>
      %567 = arith.mulf %564, %566 : vector<16x8xf32>
      %568 = arith.addf %563, %567 : vector<16x8xf32>
      %569 = vector.extract_strided_slice %76 {offsets = [10, 0], sizes = [16, 8], strides = [1, 1]} : vector<48x8xf32> to vector<16x8xf32>
      %570 = vector.extract_strided_slice %533 {offsets = [7, 0], sizes = [1, 8], strides = [1, 1]} : vector<27x8xf32> to vector<1x8xf32>
      %571 = vector.broadcast %570 : vector<1x8xf32> to vector<16x8xf32>
      %572 = arith.mulf %569, %571 : vector<16x8xf32>
      %573 = arith.addf %568, %572 : vector<16x8xf32>
      %574 = vector.extract_strided_slice %76 {offsets = [11, 0], sizes = [16, 8], strides = [1, 1]} : vector<48x8xf32> to vector<16x8xf32>
      %575 = vector.extract_strided_slice %533 {offsets = [8, 0], sizes = [1, 8], strides = [1, 1]} : vector<27x8xf32> to vector<1x8xf32>
      %576 = vector.broadcast %575 : vector<1x8xf32> to vector<16x8xf32>
      %577 = arith.mulf %574, %576 : vector<16x8xf32>
      %578 = arith.addf %573, %577 : vector<16x8xf32>
      %579 = vector.extract_strided_slice %76 {offsets = [12, 0], sizes = [16, 8], strides = [1, 1]} : vector<48x8xf32> to vector<16x8xf32>
      %580 = vector.extract_strided_slice %533 {offsets = [9, 0], sizes = [1, 8], strides = [1, 1]} : vector<27x8xf32> to vector<1x8xf32>
      %581 = vector.broadcast %580 : vector<1x8xf32> to vector<16x8xf32>
      %582 = arith.mulf %579, %581 : vector<16x8xf32>
      %583 = arith.addf %578, %582 : vector<16x8xf32>
      %584 = vector.extract_strided_slice %76 {offsets = [13, 0], sizes = [16, 8], strides = [1, 1]} : vector<48x8xf32> to vector<16x8xf32>
      %585 = vector.extract_strided_slice %533 {offsets = [10, 0], sizes = [1, 8], strides = [1, 1]} : vector<27x8xf32> to vector<1x8xf32>
      %586 = vector.broadcast %585 : vector<1x8xf32> to vector<16x8xf32>
      %587 = arith.mulf %584, %586 : vector<16x8xf32>
      %588 = arith.addf %583, %587 : vector<16x8xf32>
      %589 = vector.extract_strided_slice %76 {offsets = [14, 0], sizes = [16, 8], strides = [1, 1]} : vector<48x8xf32> to vector<16x8xf32>
      %590 = vector.extract_strided_slice %533 {offsets = [11, 0], sizes = [1, 8], strides = [1, 1]} : vector<27x8xf32> to vector<1x8xf32>
      %591 = vector.broadcast %590 : vector<1x8xf32> to vector<16x8xf32>
      %592 = arith.mulf %589, %591 : vector<16x8xf32>
      %593 = arith.addf %588, %592 : vector<16x8xf32>
      %594 = vector.extract_strided_slice %76 {offsets = [15, 0], sizes = [16, 8], strides = [1, 1]} : vector<48x8xf32> to vector<16x8xf32>
      %595 = vector.extract_strided_slice %533 {offsets = [12, 0], sizes = [1, 8], strides = [1, 1]} : vector<27x8xf32> to vector<1x8xf32>
      %596 = vector.broadcast %595 : vector<1x8xf32> to vector<16x8xf32>
      %597 = arith.mulf %594, %596 : vector<16x8xf32>
      %598 = arith.addf %593, %597 : vector<16x8xf32>
      %599 = vector.extract_strided_slice %76 {offsets = [16, 0], sizes = [16, 8], strides = [1, 1]} : vector<48x8xf32> to vector<16x8xf32>
      %600 = vector.extract_strided_slice %533 {offsets = [13, 0], sizes = [1, 8], strides = [1, 1]} : vector<27x8xf32> to vector<1x8xf32>
      %601 = vector.broadcast %600 : vector<1x8xf32> to vector<16x8xf32>
      %602 = arith.mulf %599, %601 : vector<16x8xf32>
      %603 = arith.addf %598, %602 : vector<16x8xf32>
      %604 = vector.extract_strided_slice %76 {offsets = [17, 0], sizes = [16, 8], strides = [1, 1]} : vector<48x8xf32> to vector<16x8xf32>
      %605 = vector.extract_strided_slice %533 {offsets = [14, 0], sizes = [1, 8], strides = [1, 1]} : vector<27x8xf32> to vector<1x8xf32>
      %606 = vector.broadcast %605 : vector<1x8xf32> to vector<16x8xf32>
      %607 = arith.mulf %604, %606 : vector<16x8xf32>
      %608 = arith.addf %603, %607 : vector<16x8xf32>
      %609 = vector.extract_strided_slice %76 {offsets = [18, 0], sizes = [16, 8], strides = [1, 1]} : vector<48x8xf32> to vector<16x8xf32>
      %610 = vector.extract_strided_slice %533 {offsets = [15, 0], sizes = [1, 8], strides = [1, 1]} : vector<27x8xf32> to vector<1x8xf32>
      %611 = vector.broadcast %610 : vector<1x8xf32> to vector<16x8xf32>
      %612 = arith.mulf %609, %611 : vector<16x8xf32>
      %613 = arith.addf %608, %612 : vector<16x8xf32>
      %614 = vector.extract_strided_slice %76 {offsets = [19, 0], sizes = [16, 8], strides = [1, 1]} : vector<48x8xf32> to vector<16x8xf32>
      %615 = vector.extract_strided_slice %533 {offsets = [16, 0], sizes = [1, 8], strides = [1, 1]} : vector<27x8xf32> to vector<1x8xf32>
      %616 = vector.broadcast %615 : vector<1x8xf32> to vector<16x8xf32>
      %617 = arith.mulf %614, %616 : vector<16x8xf32>
      %618 = arith.addf %613, %617 : vector<16x8xf32>
      %619 = vector.extract_strided_slice %76 {offsets = [20, 0], sizes = [16, 8], strides = [1, 1]} : vector<48x8xf32> to vector<16x8xf32>
      %620 = vector.extract_strided_slice %533 {offsets = [17, 0], sizes = [1, 8], strides = [1, 1]} : vector<27x8xf32> to vector<1x8xf32>
      %621 = vector.broadcast %620 : vector<1x8xf32> to vector<16x8xf32>
      %622 = arith.mulf %619, %621 : vector<16x8xf32>
      %623 = arith.addf %618, %622 : vector<16x8xf32>
      %624 = vector.extract_strided_slice %76 {offsets = [21, 0], sizes = [16, 8], strides = [1, 1]} : vector<48x8xf32> to vector<16x8xf32>
      %625 = vector.extract_strided_slice %533 {offsets = [18, 0], sizes = [1, 8], strides = [1, 1]} : vector<27x8xf32> to vector<1x8xf32>
      %626 = vector.broadcast %625 : vector<1x8xf32> to vector<16x8xf32>
      %627 = arith.mulf %624, %626 : vector<16x8xf32>
      %628 = arith.addf %623, %627 : vector<16x8xf32>
      %629 = vector.extract_strided_slice %76 {offsets = [22, 0], sizes = [16, 8], strides = [1, 1]} : vector<48x8xf32> to vector<16x8xf32>
      %630 = vector.extract_strided_slice %533 {offsets = [19, 0], sizes = [1, 8], strides = [1, 1]} : vector<27x8xf32> to vector<1x8xf32>
      %631 = vector.broadcast %630 : vector<1x8xf32> to vector<16x8xf32>
      %632 = arith.mulf %629, %631 : vector<16x8xf32>
      %633 = arith.addf %628, %632 : vector<16x8xf32>
      %634 = vector.extract_strided_slice %76 {offsets = [23, 0], sizes = [16, 8], strides = [1, 1]} : vector<48x8xf32> to vector<16x8xf32>
      %635 = vector.extract_strided_slice %533 {offsets = [20, 0], sizes = [1, 8], strides = [1, 1]} : vector<27x8xf32> to vector<1x8xf32>
      %636 = vector.broadcast %635 : vector<1x8xf32> to vector<16x8xf32>
      %637 = arith.mulf %634, %636 : vector<16x8xf32>
      %638 = arith.addf %633, %637 : vector<16x8xf32>
      %639 = vector.extract_strided_slice %76 {offsets = [24, 0], sizes = [16, 8], strides = [1, 1]} : vector<48x8xf32> to vector<16x8xf32>
      %640 = vector.extract_strided_slice %533 {offsets = [21, 0], sizes = [1, 8], strides = [1, 1]} : vector<27x8xf32> to vector<1x8xf32>
      %641 = vector.broadcast %640 : vector<1x8xf32> to vector<16x8xf32>
      %642 = arith.mulf %639, %641 : vector<16x8xf32>
      %643 = arith.addf %638, %642 : vector<16x8xf32>
      %644 = vector.extract_strided_slice %76 {offsets = [25, 0], sizes = [16, 8], strides = [1, 1]} : vector<48x8xf32> to vector<16x8xf32>
      %645 = vector.extract_strided_slice %533 {offsets = [22, 0], sizes = [1, 8], strides = [1, 1]} : vector<27x8xf32> to vector<1x8xf32>
      %646 = vector.broadcast %645 : vector<1x8xf32> to vector<16x8xf32>
      %647 = arith.mulf %644, %646 : vector<16x8xf32>
      %648 = arith.addf %643, %647 : vector<16x8xf32>
      %649 = vector.extract_strided_slice %76 {offsets = [26, 0], sizes = [16, 8], strides = [1, 1]} : vector<48x8xf32> to vector<16x8xf32>
      %650 = vector.extract_strided_slice %533 {offsets = [23, 0], sizes = [1, 8], strides = [1, 1]} : vector<27x8xf32> to vector<1x8xf32>
      %651 = vector.broadcast %650 : vector<1x8xf32> to vector<16x8xf32>
      %652 = arith.mulf %649, %651 : vector<16x8xf32>
      %653 = arith.addf %648, %652 : vector<16x8xf32>
      %654 = vector.extract_strided_slice %76 {offsets = [27, 0], sizes = [16, 8], strides = [1, 1]} : vector<48x8xf32> to vector<16x8xf32>
      %655 = vector.extract_strided_slice %533 {offsets = [24, 0], sizes = [1, 8], strides = [1, 1]} : vector<27x8xf32> to vector<1x8xf32>
      %656 = vector.broadcast %655 : vector<1x8xf32> to vector<16x8xf32>
      %657 = arith.mulf %654, %656 : vector<16x8xf32>
      %658 = arith.addf %653, %657 : vector<16x8xf32>
      %659 = vector.extract_strided_slice %76 {offsets = [28, 0], sizes = [16, 8], strides = [1, 1]} : vector<48x8xf32> to vector<16x8xf32>
      %660 = vector.extract_strided_slice %533 {offsets = [25, 0], sizes = [1, 8], strides = [1, 1]} : vector<27x8xf32> to vector<1x8xf32>
      %661 = vector.broadcast %660 : vector<1x8xf32> to vector<16x8xf32>
      %662 = arith.mulf %659, %661 : vector<16x8xf32>
      %663 = arith.addf %658, %662 : vector<16x8xf32>
      %664 = vector.extract_strided_slice %76 {offsets = [29, 0], sizes = [16, 8], strides = [1, 1]} : vector<48x8xf32> to vector<16x8xf32>
      %665 = vector.extract_strided_slice %533 {offsets = [26, 0], sizes = [1, 8], strides = [1, 1]} : vector<27x8xf32> to vector<1x8xf32>
      %666 = vector.broadcast %665 : vector<1x8xf32> to vector<16x8xf32>
      %667 = arith.mulf %664, %666 : vector<16x8xf32>
      %668 = arith.addf %663, %667 : vector<16x8xf32>
      %c4_i32 = arith.constant 4 : i32
      %669 = arith.subi %arg11, %c4_i32 : i32
      %c0_i32_48 = arith.constant 0 : i32
      %670 = arith.cmpi sge, %669, %c0_i32_48 : i32
      %c27_i32_49 = arith.constant 27 : i32
      %671 = arith.cmpi slt, %669, %c27_i32_49 : i32
      %672 = arith.andi %670, %671 : i1
      %673 = arith.extui %672 : i1 to i32
      %674 = arith.sitofp %673 : i32 to f32
      %c0_i32_50 = arith.constant 0 : i32
      %c26_i32_51 = arith.constant 26 : i32
      %675 = arith.maxsi %c0_i32_50, %669 : i32
      %676 = arith.minsi %c26_i32_51, %675 : i32
      %677 = arith.index_cast %676 : i32 to index
      %c0_52 = arith.constant 0 : index
      %c0_53 = arith.constant 0 : index
      %678 = vector.load %arg5[%677, %c0_52, %c0_53] : memref<27x27x8xf32, #tpu.memory_space<vmem>>, vector<1x27x8xf32>
      %679 = vector.shape_cast %678 : vector<1x27x8xf32> to vector<27x8xf32>
      %680 = vector.broadcast %674 : f32 to vector<27x8xf32>
      %681 = arith.mulf %679, %680 : vector<27x8xf32>
      %682 = vector.extract_strided_slice %76 {offsets = [3, 0], sizes = [16, 8], strides = [1, 1]} : vector<48x8xf32> to vector<16x8xf32>
      %683 = vector.extract_strided_slice %681 {offsets = [0, 0], sizes = [1, 8], strides = [1, 1]} : vector<27x8xf32> to vector<1x8xf32>
      %684 = vector.broadcast %683 : vector<1x8xf32> to vector<16x8xf32>
      %685 = arith.mulf %682, %684 : vector<16x8xf32>
      %686 = arith.addf %arg16, %685 : vector<16x8xf32>
      %687 = vector.extract_strided_slice %76 {offsets = [4, 0], sizes = [16, 8], strides = [1, 1]} : vector<48x8xf32> to vector<16x8xf32>
      %688 = vector.extract_strided_slice %681 {offsets = [1, 0], sizes = [1, 8], strides = [1, 1]} : vector<27x8xf32> to vector<1x8xf32>
      %689 = vector.broadcast %688 : vector<1x8xf32> to vector<16x8xf32>
      %690 = arith.mulf %687, %689 : vector<16x8xf32>
      %691 = arith.addf %686, %690 : vector<16x8xf32>
      %692 = vector.extract_strided_slice %76 {offsets = [5, 0], sizes = [16, 8], strides = [1, 1]} : vector<48x8xf32> to vector<16x8xf32>
      %693 = vector.extract_strided_slice %681 {offsets = [2, 0], sizes = [1, 8], strides = [1, 1]} : vector<27x8xf32> to vector<1x8xf32>
      %694 = vector.broadcast %693 : vector<1x8xf32> to vector<16x8xf32>
      %695 = arith.mulf %692, %694 : vector<16x8xf32>
      %696 = arith.addf %691, %695 : vector<16x8xf32>
      %697 = vector.extract_strided_slice %76 {offsets = [6, 0], sizes = [16, 8], strides = [1, 1]} : vector<48x8xf32> to vector<16x8xf32>
      %698 = vector.extract_strided_slice %681 {offsets = [3, 0], sizes = [1, 8], strides = [1, 1]} : vector<27x8xf32> to vector<1x8xf32>
      %699 = vector.broadcast %698 : vector<1x8xf32> to vector<16x8xf32>
      %700 = arith.mulf %697, %699 : vector<16x8xf32>
      %701 = arith.addf %696, %700 : vector<16x8xf32>
      %702 = vector.extract_strided_slice %76 {offsets = [7, 0], sizes = [16, 8], strides = [1, 1]} : vector<48x8xf32> to vector<16x8xf32>
      %703 = vector.extract_strided_slice %681 {offsets = [4, 0], sizes = [1, 8], strides = [1, 1]} : vector<27x8xf32> to vector<1x8xf32>
      %704 = vector.broadcast %703 : vector<1x8xf32> to vector<16x8xf32>
      %705 = arith.mulf %702, %704 : vector<16x8xf32>
      %706 = arith.addf %701, %705 : vector<16x8xf32>
      %707 = vector.extract_strided_slice %76 {offsets = [8, 0], sizes = [16, 8], strides = [1, 1]} : vector<48x8xf32> to vector<16x8xf32>
      %708 = vector.extract_strided_slice %681 {offsets = [5, 0], sizes = [1, 8], strides = [1, 1]} : vector<27x8xf32> to vector<1x8xf32>
      %709 = vector.broadcast %708 : vector<1x8xf32> to vector<16x8xf32>
      %710 = arith.mulf %707, %709 : vector<16x8xf32>
      %711 = arith.addf %706, %710 : vector<16x8xf32>
      %712 = vector.extract_strided_slice %76 {offsets = [9, 0], sizes = [16, 8], strides = [1, 1]} : vector<48x8xf32> to vector<16x8xf32>
      %713 = vector.extract_strided_slice %681 {offsets = [6, 0], sizes = [1, 8], strides = [1, 1]} : vector<27x8xf32> to vector<1x8xf32>
      %714 = vector.broadcast %713 : vector<1x8xf32> to vector<16x8xf32>
      %715 = arith.mulf %712, %714 : vector<16x8xf32>
      %716 = arith.addf %711, %715 : vector<16x8xf32>
      %717 = vector.extract_strided_slice %76 {offsets = [10, 0], sizes = [16, 8], strides = [1, 1]} : vector<48x8xf32> to vector<16x8xf32>
      %718 = vector.extract_strided_slice %681 {offsets = [7, 0], sizes = [1, 8], strides = [1, 1]} : vector<27x8xf32> to vector<1x8xf32>
      %719 = vector.broadcast %718 : vector<1x8xf32> to vector<16x8xf32>
      %720 = arith.mulf %717, %719 : vector<16x8xf32>
      %721 = arith.addf %716, %720 : vector<16x8xf32>
      %722 = vector.extract_strided_slice %76 {offsets = [11, 0], sizes = [16, 8], strides = [1, 1]} : vector<48x8xf32> to vector<16x8xf32>
      %723 = vector.extract_strided_slice %681 {offsets = [8, 0], sizes = [1, 8], strides = [1, 1]} : vector<27x8xf32> to vector<1x8xf32>
      %724 = vector.broadcast %723 : vector<1x8xf32> to vector<16x8xf32>
      %725 = arith.mulf %722, %724 : vector<16x8xf32>
      %726 = arith.addf %721, %725 : vector<16x8xf32>
      %727 = vector.extract_strided_slice %76 {offsets = [12, 0], sizes = [16, 8], strides = [1, 1]} : vector<48x8xf32> to vector<16x8xf32>
      %728 = vector.extract_strided_slice %681 {offsets = [9, 0], sizes = [1, 8], strides = [1, 1]} : vector<27x8xf32> to vector<1x8xf32>
      %729 = vector.broadcast %728 : vector<1x8xf32> to vector<16x8xf32>
      %730 = arith.mulf %727, %729 : vector<16x8xf32>
      %731 = arith.addf %726, %730 : vector<16x8xf32>
      %732 = vector.extract_strided_slice %76 {offsets = [13, 0], sizes = [16, 8], strides = [1, 1]} : vector<48x8xf32> to vector<16x8xf32>
      %733 = vector.extract_strided_slice %681 {offsets = [10, 0], sizes = [1, 8], strides = [1, 1]} : vector<27x8xf32> to vector<1x8xf32>
      %734 = vector.broadcast %733 : vector<1x8xf32> to vector<16x8xf32>
      %735 = arith.mulf %732, %734 : vector<16x8xf32>
      %736 = arith.addf %731, %735 : vector<16x8xf32>
      %737 = vector.extract_strided_slice %76 {offsets = [14, 0], sizes = [16, 8], strides = [1, 1]} : vector<48x8xf32> to vector<16x8xf32>
      %738 = vector.extract_strided_slice %681 {offsets = [11, 0], sizes = [1, 8], strides = [1, 1]} : vector<27x8xf32> to vector<1x8xf32>
      %739 = vector.broadcast %738 : vector<1x8xf32> to vector<16x8xf32>
      %740 = arith.mulf %737, %739 : vector<16x8xf32>
      %741 = arith.addf %736, %740 : vector<16x8xf32>
      %742 = vector.extract_strided_slice %76 {offsets = [15, 0], sizes = [16, 8], strides = [1, 1]} : vector<48x8xf32> to vector<16x8xf32>
      %743 = vector.extract_strided_slice %681 {offsets = [12, 0], sizes = [1, 8], strides = [1, 1]} : vector<27x8xf32> to vector<1x8xf32>
      %744 = vector.broadcast %743 : vector<1x8xf32> to vector<16x8xf32>
      %745 = arith.mulf %742, %744 : vector<16x8xf32>
      %746 = arith.addf %741, %745 : vector<16x8xf32>
      %747 = vector.extract_strided_slice %76 {offsets = [16, 0], sizes = [16, 8], strides = [1, 1]} : vector<48x8xf32> to vector<16x8xf32>
      %748 = vector.extract_strided_slice %681 {offsets = [13, 0], sizes = [1, 8], strides = [1, 1]} : vector<27x8xf32> to vector<1x8xf32>
      %749 = vector.broadcast %748 : vector<1x8xf32> to vector<16x8xf32>
      %750 = arith.mulf %747, %749 : vector<16x8xf32>
      %751 = arith.addf %746, %750 : vector<16x8xf32>
      %752 = vector.extract_strided_slice %76 {offsets = [17, 0], sizes = [16, 8], strides = [1, 1]} : vector<48x8xf32> to vector<16x8xf32>
      %753 = vector.extract_strided_slice %681 {offsets = [14, 0], sizes = [1, 8], strides = [1, 1]} : vector<27x8xf32> to vector<1x8xf32>
      %754 = vector.broadcast %753 : vector<1x8xf32> to vector<16x8xf32>
      %755 = arith.mulf %752, %754 : vector<16x8xf32>
      %756 = arith.addf %751, %755 : vector<16x8xf32>
      %757 = vector.extract_strided_slice %76 {offsets = [18, 0], sizes = [16, 8], strides = [1, 1]} : vector<48x8xf32> to vector<16x8xf32>
      %758 = vector.extract_strided_slice %681 {offsets = [15, 0], sizes = [1, 8], strides = [1, 1]} : vector<27x8xf32> to vector<1x8xf32>
      %759 = vector.broadcast %758 : vector<1x8xf32> to vector<16x8xf32>
      %760 = arith.mulf %757, %759 : vector<16x8xf32>
      %761 = arith.addf %756, %760 : vector<16x8xf32>
      %762 = vector.extract_strided_slice %76 {offsets = [19, 0], sizes = [16, 8], strides = [1, 1]} : vector<48x8xf32> to vector<16x8xf32>
      %763 = vector.extract_strided_slice %681 {offsets = [16, 0], sizes = [1, 8], strides = [1, 1]} : vector<27x8xf32> to vector<1x8xf32>
      %764 = vector.broadcast %763 : vector<1x8xf32> to vector<16x8xf32>
      %765 = arith.mulf %762, %764 : vector<16x8xf32>
      %766 = arith.addf %761, %765 : vector<16x8xf32>
      %767 = vector.extract_strided_slice %76 {offsets = [20, 0], sizes = [16, 8], strides = [1, 1]} : vector<48x8xf32> to vector<16x8xf32>
      %768 = vector.extract_strided_slice %681 {offsets = [17, 0], sizes = [1, 8], strides = [1, 1]} : vector<27x8xf32> to vector<1x8xf32>
      %769 = vector.broadcast %768 : vector<1x8xf32> to vector<16x8xf32>
      %770 = arith.mulf %767, %769 : vector<16x8xf32>
      %771 = arith.addf %766, %770 : vector<16x8xf32>
      %772 = vector.extract_strided_slice %76 {offsets = [21, 0], sizes = [16, 8], strides = [1, 1]} : vector<48x8xf32> to vector<16x8xf32>
      %773 = vector.extract_strided_slice %681 {offsets = [18, 0], sizes = [1, 8], strides = [1, 1]} : vector<27x8xf32> to vector<1x8xf32>
      %774 = vector.broadcast %773 : vector<1x8xf32> to vector<16x8xf32>
      %775 = arith.mulf %772, %774 : vector<16x8xf32>
      %776 = arith.addf %771, %775 : vector<16x8xf32>
      %777 = vector.extract_strided_slice %76 {offsets = [22, 0], sizes = [16, 8], strides = [1, 1]} : vector<48x8xf32> to vector<16x8xf32>
      %778 = vector.extract_strided_slice %681 {offsets = [19, 0], sizes = [1, 8], strides = [1, 1]} : vector<27x8xf32> to vector<1x8xf32>
      %779 = vector.broadcast %778 : vector<1x8xf32> to vector<16x8xf32>
      %780 = arith.mulf %777, %779 : vector<16x8xf32>
      %781 = arith.addf %776, %780 : vector<16x8xf32>
      %782 = vector.extract_strided_slice %76 {offsets = [23, 0], sizes = [16, 8], strides = [1, 1]} : vector<48x8xf32> to vector<16x8xf32>
      %783 = vector.extract_strided_slice %681 {offsets = [20, 0], sizes = [1, 8], strides = [1, 1]} : vector<27x8xf32> to vector<1x8xf32>
      %784 = vector.broadcast %783 : vector<1x8xf32> to vector<16x8xf32>
      %785 = arith.mulf %782, %784 : vector<16x8xf32>
      %786 = arith.addf %781, %785 : vector<16x8xf32>
      %787 = vector.extract_strided_slice %76 {offsets = [24, 0], sizes = [16, 8], strides = [1, 1]} : vector<48x8xf32> to vector<16x8xf32>
      %788 = vector.extract_strided_slice %681 {offsets = [21, 0], sizes = [1, 8], strides = [1, 1]} : vector<27x8xf32> to vector<1x8xf32>
      %789 = vector.broadcast %788 : vector<1x8xf32> to vector<16x8xf32>
      %790 = arith.mulf %787, %789 : vector<16x8xf32>
      %791 = arith.addf %786, %790 : vector<16x8xf32>
      %792 = vector.extract_strided_slice %76 {offsets = [25, 0], sizes = [16, 8], strides = [1, 1]} : vector<48x8xf32> to vector<16x8xf32>
      %793 = vector.extract_strided_slice %681 {offsets = [22, 0], sizes = [1, 8], strides = [1, 1]} : vector<27x8xf32> to vector<1x8xf32>
      %794 = vector.broadcast %793 : vector<1x8xf32> to vector<16x8xf32>
      %795 = arith.mulf %792, %794 : vector<16x8xf32>
      %796 = arith.addf %791, %795 : vector<16x8xf32>
      %797 = vector.extract_strided_slice %76 {offsets = [26, 0], sizes = [16, 8], strides = [1, 1]} : vector<48x8xf32> to vector<16x8xf32>
      %798 = vector.extract_strided_slice %681 {offsets = [23, 0], sizes = [1, 8], strides = [1, 1]} : vector<27x8xf32> to vector<1x8xf32>
      %799 = vector.broadcast %798 : vector<1x8xf32> to vector<16x8xf32>
      %800 = arith.mulf %797, %799 : vector<16x8xf32>
      %801 = arith.addf %796, %800 : vector<16x8xf32>
      %802 = vector.extract_strided_slice %76 {offsets = [27, 0], sizes = [16, 8], strides = [1, 1]} : vector<48x8xf32> to vector<16x8xf32>
      %803 = vector.extract_strided_slice %681 {offsets = [24, 0], sizes = [1, 8], strides = [1, 1]} : vector<27x8xf32> to vector<1x8xf32>
      %804 = vector.broadcast %803 : vector<1x8xf32> to vector<16x8xf32>
      %805 = arith.mulf %802, %804 : vector<16x8xf32>
      %806 = arith.addf %801, %805 : vector<16x8xf32>
      %807 = vector.extract_strided_slice %76 {offsets = [28, 0], sizes = [16, 8], strides = [1, 1]} : vector<48x8xf32> to vector<16x8xf32>
      %808 = vector.extract_strided_slice %681 {offsets = [25, 0], sizes = [1, 8], strides = [1, 1]} : vector<27x8xf32> to vector<1x8xf32>
      %809 = vector.broadcast %808 : vector<1x8xf32> to vector<16x8xf32>
      %810 = arith.mulf %807, %809 : vector<16x8xf32>
      %811 = arith.addf %806, %810 : vector<16x8xf32>
      %812 = vector.extract_strided_slice %76 {offsets = [29, 0], sizes = [16, 8], strides = [1, 1]} : vector<48x8xf32> to vector<16x8xf32>
      %813 = vector.extract_strided_slice %681 {offsets = [26, 0], sizes = [1, 8], strides = [1, 1]} : vector<27x8xf32> to vector<1x8xf32>
      %814 = vector.broadcast %813 : vector<1x8xf32> to vector<16x8xf32>
      %815 = arith.mulf %812, %814 : vector<16x8xf32>
      %816 = arith.addf %811, %815 : vector<16x8xf32>
      %c5_i32 = arith.constant 5 : i32
      %817 = arith.subi %arg11, %c5_i32 : i32
      %c0_i32_54 = arith.constant 0 : i32
      %818 = arith.cmpi sge, %817, %c0_i32_54 : i32
      %c27_i32_55 = arith.constant 27 : i32
      %819 = arith.cmpi slt, %817, %c27_i32_55 : i32
      %820 = arith.andi %818, %819 : i1
      %821 = arith.extui %820 : i1 to i32
      %822 = arith.sitofp %821 : i32 to f32
      %c0_i32_56 = arith.constant 0 : i32
      %c26_i32_57 = arith.constant 26 : i32
      %823 = arith.maxsi %c0_i32_56, %817 : i32
      %824 = arith.minsi %c26_i32_57, %823 : i32
      %825 = arith.index_cast %824 : i32 to index
      %c0_58 = arith.constant 0 : index
      %c0_59 = arith.constant 0 : index
      %826 = vector.load %arg5[%825, %c0_58, %c0_59] : memref<27x27x8xf32, #tpu.memory_space<vmem>>, vector<1x27x8xf32>
      %827 = vector.shape_cast %826 : vector<1x27x8xf32> to vector<27x8xf32>
      %828 = vector.broadcast %822 : f32 to vector<27x8xf32>
      %829 = arith.mulf %827, %828 : vector<27x8xf32>
      %830 = vector.extract_strided_slice %76 {offsets = [3, 0], sizes = [16, 8], strides = [1, 1]} : vector<48x8xf32> to vector<16x8xf32>
      %831 = vector.extract_strided_slice %829 {offsets = [0, 0], sizes = [1, 8], strides = [1, 1]} : vector<27x8xf32> to vector<1x8xf32>
      %832 = vector.broadcast %831 : vector<1x8xf32> to vector<16x8xf32>
      %833 = arith.mulf %830, %832 : vector<16x8xf32>
      %834 = arith.addf %arg17, %833 : vector<16x8xf32>
      %835 = vector.extract_strided_slice %76 {offsets = [4, 0], sizes = [16, 8], strides = [1, 1]} : vector<48x8xf32> to vector<16x8xf32>
      %836 = vector.extract_strided_slice %829 {offsets = [1, 0], sizes = [1, 8], strides = [1, 1]} : vector<27x8xf32> to vector<1x8xf32>
      %837 = vector.broadcast %836 : vector<1x8xf32> to vector<16x8xf32>
      %838 = arith.mulf %835, %837 : vector<16x8xf32>
      %839 = arith.addf %834, %838 : vector<16x8xf32>
      %840 = vector.extract_strided_slice %76 {offsets = [5, 0], sizes = [16, 8], strides = [1, 1]} : vector<48x8xf32> to vector<16x8xf32>
      %841 = vector.extract_strided_slice %829 {offsets = [2, 0], sizes = [1, 8], strides = [1, 1]} : vector<27x8xf32> to vector<1x8xf32>
      %842 = vector.broadcast %841 : vector<1x8xf32> to vector<16x8xf32>
      %843 = arith.mulf %840, %842 : vector<16x8xf32>
      %844 = arith.addf %839, %843 : vector<16x8xf32>
      %845 = vector.extract_strided_slice %76 {offsets = [6, 0], sizes = [16, 8], strides = [1, 1]} : vector<48x8xf32> to vector<16x8xf32>
      %846 = vector.extract_strided_slice %829 {offsets = [3, 0], sizes = [1, 8], strides = [1, 1]} : vector<27x8xf32> to vector<1x8xf32>
      %847 = vector.broadcast %846 : vector<1x8xf32> to vector<16x8xf32>
      %848 = arith.mulf %845, %847 : vector<16x8xf32>
      %849 = arith.addf %844, %848 : vector<16x8xf32>
      %850 = vector.extract_strided_slice %76 {offsets = [7, 0], sizes = [16, 8], strides = [1, 1]} : vector<48x8xf32> to vector<16x8xf32>
      %851 = vector.extract_strided_slice %829 {offsets = [4, 0], sizes = [1, 8], strides = [1, 1]} : vector<27x8xf32> to vector<1x8xf32>
      %852 = vector.broadcast %851 : vector<1x8xf32> to vector<16x8xf32>
      %853 = arith.mulf %850, %852 : vector<16x8xf32>
      %854 = arith.addf %849, %853 : vector<16x8xf32>
      %855 = vector.extract_strided_slice %76 {offsets = [8, 0], sizes = [16, 8], strides = [1, 1]} : vector<48x8xf32> to vector<16x8xf32>
      %856 = vector.extract_strided_slice %829 {offsets = [5, 0], sizes = [1, 8], strides = [1, 1]} : vector<27x8xf32> to vector<1x8xf32>
      %857 = vector.broadcast %856 : vector<1x8xf32> to vector<16x8xf32>
      %858 = arith.mulf %855, %857 : vector<16x8xf32>
      %859 = arith.addf %854, %858 : vector<16x8xf32>
      %860 = vector.extract_strided_slice %76 {offsets = [9, 0], sizes = [16, 8], strides = [1, 1]} : vector<48x8xf32> to vector<16x8xf32>
      %861 = vector.extract_strided_slice %829 {offsets = [6, 0], sizes = [1, 8], strides = [1, 1]} : vector<27x8xf32> to vector<1x8xf32>
      %862 = vector.broadcast %861 : vector<1x8xf32> to vector<16x8xf32>
      %863 = arith.mulf %860, %862 : vector<16x8xf32>
      %864 = arith.addf %859, %863 : vector<16x8xf32>
      %865 = vector.extract_strided_slice %76 {offsets = [10, 0], sizes = [16, 8], strides = [1, 1]} : vector<48x8xf32> to vector<16x8xf32>
      %866 = vector.extract_strided_slice %829 {offsets = [7, 0], sizes = [1, 8], strides = [1, 1]} : vector<27x8xf32> to vector<1x8xf32>
      %867 = vector.broadcast %866 : vector<1x8xf32> to vector<16x8xf32>
      %868 = arith.mulf %865, %867 : vector<16x8xf32>
      %869 = arith.addf %864, %868 : vector<16x8xf32>
      %870 = vector.extract_strided_slice %76 {offsets = [11, 0], sizes = [16, 8], strides = [1, 1]} : vector<48x8xf32> to vector<16x8xf32>
      %871 = vector.extract_strided_slice %829 {offsets = [8, 0], sizes = [1, 8], strides = [1, 1]} : vector<27x8xf32> to vector<1x8xf32>
      %872 = vector.broadcast %871 : vector<1x8xf32> to vector<16x8xf32>
      %873 = arith.mulf %870, %872 : vector<16x8xf32>
      %874 = arith.addf %869, %873 : vector<16x8xf32>
      %875 = vector.extract_strided_slice %76 {offsets = [12, 0], sizes = [16, 8], strides = [1, 1]} : vector<48x8xf32> to vector<16x8xf32>
      %876 = vector.extract_strided_slice %829 {offsets = [9, 0], sizes = [1, 8], strides = [1, 1]} : vector<27x8xf32> to vector<1x8xf32>
      %877 = vector.broadcast %876 : vector<1x8xf32> to vector<16x8xf32>
      %878 = arith.mulf %875, %877 : vector<16x8xf32>
      %879 = arith.addf %874, %878 : vector<16x8xf32>
      %880 = vector.extract_strided_slice %76 {offsets = [13, 0], sizes = [16, 8], strides = [1, 1]} : vector<48x8xf32> to vector<16x8xf32>
      %881 = vector.extract_strided_slice %829 {offsets = [10, 0], sizes = [1, 8], strides = [1, 1]} : vector<27x8xf32> to vector<1x8xf32>
      %882 = vector.broadcast %881 : vector<1x8xf32> to vector<16x8xf32>
      %883 = arith.mulf %880, %882 : vector<16x8xf32>
      %884 = arith.addf %879, %883 : vector<16x8xf32>
      %885 = vector.extract_strided_slice %76 {offsets = [14, 0], sizes = [16, 8], strides = [1, 1]} : vector<48x8xf32> to vector<16x8xf32>
      %886 = vector.extract_strided_slice %829 {offsets = [11, 0], sizes = [1, 8], strides = [1, 1]} : vector<27x8xf32> to vector<1x8xf32>
      %887 = vector.broadcast %886 : vector<1x8xf32> to vector<16x8xf32>
      %888 = arith.mulf %885, %887 : vector<16x8xf32>
      %889 = arith.addf %884, %888 : vector<16x8xf32>
      %890 = vector.extract_strided_slice %76 {offsets = [15, 0], sizes = [16, 8], strides = [1, 1]} : vector<48x8xf32> to vector<16x8xf32>
      %891 = vector.extract_strided_slice %829 {offsets = [12, 0], sizes = [1, 8], strides = [1, 1]} : vector<27x8xf32> to vector<1x8xf32>
      %892 = vector.broadcast %891 : vector<1x8xf32> to vector<16x8xf32>
      %893 = arith.mulf %890, %892 : vector<16x8xf32>
      %894 = arith.addf %889, %893 : vector<16x8xf32>
      %895 = vector.extract_strided_slice %76 {offsets = [16, 0], sizes = [16, 8], strides = [1, 1]} : vector<48x8xf32> to vector<16x8xf32>
      %896 = vector.extract_strided_slice %829 {offsets = [13, 0], sizes = [1, 8], strides = [1, 1]} : vector<27x8xf32> to vector<1x8xf32>
      %897 = vector.broadcast %896 : vector<1x8xf32> to vector<16x8xf32>
      %898 = arith.mulf %895, %897 : vector<16x8xf32>
      %899 = arith.addf %894, %898 : vector<16x8xf32>
      %900 = vector.extract_strided_slice %76 {offsets = [17, 0], sizes = [16, 8], strides = [1, 1]} : vector<48x8xf32> to vector<16x8xf32>
      %901 = vector.extract_strided_slice %829 {offsets = [14, 0], sizes = [1, 8], strides = [1, 1]} : vector<27x8xf32> to vector<1x8xf32>
      %902 = vector.broadcast %901 : vector<1x8xf32> to vector<16x8xf32>
      %903 = arith.mulf %900, %902 : vector<16x8xf32>
      %904 = arith.addf %899, %903 : vector<16x8xf32>
      %905 = vector.extract_strided_slice %76 {offsets = [18, 0], sizes = [16, 8], strides = [1, 1]} : vector<48x8xf32> to vector<16x8xf32>
      %906 = vector.extract_strided_slice %829 {offsets = [15, 0], sizes = [1, 8], strides = [1, 1]} : vector<27x8xf32> to vector<1x8xf32>
      %907 = vector.broadcast %906 : vector<1x8xf32> to vector<16x8xf32>
      %908 = arith.mulf %905, %907 : vector<16x8xf32>
      %909 = arith.addf %904, %908 : vector<16x8xf32>
      %910 = vector.extract_strided_slice %76 {offsets = [19, 0], sizes = [16, 8], strides = [1, 1]} : vector<48x8xf32> to vector<16x8xf32>
      %911 = vector.extract_strided_slice %829 {offsets = [16, 0], sizes = [1, 8], strides = [1, 1]} : vector<27x8xf32> to vector<1x8xf32>
      %912 = vector.broadcast %911 : vector<1x8xf32> to vector<16x8xf32>
      %913 = arith.mulf %910, %912 : vector<16x8xf32>
      %914 = arith.addf %909, %913 : vector<16x8xf32>
      %915 = vector.extract_strided_slice %76 {offsets = [20, 0], sizes = [16, 8], strides = [1, 1]} : vector<48x8xf32> to vector<16x8xf32>
      %916 = vector.extract_strided_slice %829 {offsets = [17, 0], sizes = [1, 8], strides = [1, 1]} : vector<27x8xf32> to vector<1x8xf32>
      %917 = vector.broadcast %916 : vector<1x8xf32> to vector<16x8xf32>
      %918 = arith.mulf %915, %917 : vector<16x8xf32>
      %919 = arith.addf %914, %918 : vector<16x8xf32>
      %920 = vector.extract_strided_slice %76 {offsets = [21, 0], sizes = [16, 8], strides = [1, 1]} : vector<48x8xf32> to vector<16x8xf32>
      %921 = vector.extract_strided_slice %829 {offsets = [18, 0], sizes = [1, 8], strides = [1, 1]} : vector<27x8xf32> to vector<1x8xf32>
      %922 = vector.broadcast %921 : vector<1x8xf32> to vector<16x8xf32>
      %923 = arith.mulf %920, %922 : vector<16x8xf32>
      %924 = arith.addf %919, %923 : vector<16x8xf32>
      %925 = vector.extract_strided_slice %76 {offsets = [22, 0], sizes = [16, 8], strides = [1, 1]} : vector<48x8xf32> to vector<16x8xf32>
      %926 = vector.extract_strided_slice %829 {offsets = [19, 0], sizes = [1, 8], strides = [1, 1]} : vector<27x8xf32> to vector<1x8xf32>
      %927 = vector.broadcast %926 : vector<1x8xf32> to vector<16x8xf32>
      %928 = arith.mulf %925, %927 : vector<16x8xf32>
      %929 = arith.addf %924, %928 : vector<16x8xf32>
      %930 = vector.extract_strided_slice %76 {offsets = [23, 0], sizes = [16, 8], strides = [1, 1]} : vector<48x8xf32> to vector<16x8xf32>
      %931 = vector.extract_strided_slice %829 {offsets = [20, 0], sizes = [1, 8], strides = [1, 1]} : vector<27x8xf32> to vector<1x8xf32>
      %932 = vector.broadcast %931 : vector<1x8xf32> to vector<16x8xf32>
      %933 = arith.mulf %930, %932 : vector<16x8xf32>
      %934 = arith.addf %929, %933 : vector<16x8xf32>
      %935 = vector.extract_strided_slice %76 {offsets = [24, 0], sizes = [16, 8], strides = [1, 1]} : vector<48x8xf32> to vector<16x8xf32>
      %936 = vector.extract_strided_slice %829 {offsets = [21, 0], sizes = [1, 8], strides = [1, 1]} : vector<27x8xf32> to vector<1x8xf32>
      %937 = vector.broadcast %936 : vector<1x8xf32> to vector<16x8xf32>
      %938 = arith.mulf %935, %937 : vector<16x8xf32>
      %939 = arith.addf %934, %938 : vector<16x8xf32>
      %940 = vector.extract_strided_slice %76 {offsets = [25, 0], sizes = [16, 8], strides = [1, 1]} : vector<48x8xf32> to vector<16x8xf32>
      %941 = vector.extract_strided_slice %829 {offsets = [22, 0], sizes = [1, 8], strides = [1, 1]} : vector<27x8xf32> to vector<1x8xf32>
      %942 = vector.broadcast %941 : vector<1x8xf32> to vector<16x8xf32>
      %943 = arith.mulf %940, %942 : vector<16x8xf32>
      %944 = arith.addf %939, %943 : vector<16x8xf32>
      %945 = vector.extract_strided_slice %76 {offsets = [26, 0], sizes = [16, 8], strides = [1, 1]} : vector<48x8xf32> to vector<16x8xf32>
      %946 = vector.extract_strided_slice %829 {offsets = [23, 0], sizes = [1, 8], strides = [1, 1]} : vector<27x8xf32> to vector<1x8xf32>
      %947 = vector.broadcast %946 : vector<1x8xf32> to vector<16x8xf32>
      %948 = arith.mulf %945, %947 : vector<16x8xf32>
      %949 = arith.addf %944, %948 : vector<16x8xf32>
      %950 = vector.extract_strided_slice %76 {offsets = [27, 0], sizes = [16, 8], strides = [1, 1]} : vector<48x8xf32> to vector<16x8xf32>
      %951 = vector.extract_strided_slice %829 {offsets = [24, 0], sizes = [1, 8], strides = [1, 1]} : vector<27x8xf32> to vector<1x8xf32>
      %952 = vector.broadcast %951 : vector<1x8xf32> to vector<16x8xf32>
      %953 = arith.mulf %950, %952 : vector<16x8xf32>
      %954 = arith.addf %949, %953 : vector<16x8xf32>
      %955 = vector.extract_strided_slice %76 {offsets = [28, 0], sizes = [16, 8], strides = [1, 1]} : vector<48x8xf32> to vector<16x8xf32>
      %956 = vector.extract_strided_slice %829 {offsets = [25, 0], sizes = [1, 8], strides = [1, 1]} : vector<27x8xf32> to vector<1x8xf32>
      %957 = vector.broadcast %956 : vector<1x8xf32> to vector<16x8xf32>
      %958 = arith.mulf %955, %957 : vector<16x8xf32>
      %959 = arith.addf %954, %958 : vector<16x8xf32>
      %960 = vector.extract_strided_slice %76 {offsets = [29, 0], sizes = [16, 8], strides = [1, 1]} : vector<48x8xf32> to vector<16x8xf32>
      %961 = vector.extract_strided_slice %829 {offsets = [26, 0], sizes = [1, 8], strides = [1, 1]} : vector<27x8xf32> to vector<1x8xf32>
      %962 = vector.broadcast %961 : vector<1x8xf32> to vector<16x8xf32>
      %963 = arith.mulf %960, %962 : vector<16x8xf32>
      %964 = arith.addf %959, %963 : vector<16x8xf32>
      %c6_i32 = arith.constant 6 : i32
      %965 = arith.subi %arg11, %c6_i32 : i32
      %c0_i32_60 = arith.constant 0 : i32
      %966 = arith.cmpi sge, %965, %c0_i32_60 : i32
      %c27_i32_61 = arith.constant 27 : i32
      %967 = arith.cmpi slt, %965, %c27_i32_61 : i32
      %968 = arith.andi %966, %967 : i1
      %969 = arith.extui %968 : i1 to i32
      %970 = arith.sitofp %969 : i32 to f32
      %c0_i32_62 = arith.constant 0 : i32
      %c26_i32_63 = arith.constant 26 : i32
      %971 = arith.maxsi %c0_i32_62, %965 : i32
      %972 = arith.minsi %c26_i32_63, %971 : i32
      %973 = arith.index_cast %972 : i32 to index
      %c0_64 = arith.constant 0 : index
      %c0_65 = arith.constant 0 : index
      %974 = vector.load %arg5[%973, %c0_64, %c0_65] : memref<27x27x8xf32, #tpu.memory_space<vmem>>, vector<1x27x8xf32>
      %975 = vector.shape_cast %974 : vector<1x27x8xf32> to vector<27x8xf32>
      %976 = vector.broadcast %970 : f32 to vector<27x8xf32>
      %977 = arith.mulf %975, %976 : vector<27x8xf32>
      %978 = vector.extract_strided_slice %76 {offsets = [3, 0], sizes = [16, 8], strides = [1, 1]} : vector<48x8xf32> to vector<16x8xf32>
      %979 = vector.extract_strided_slice %977 {offsets = [0, 0], sizes = [1, 8], strides = [1, 1]} : vector<27x8xf32> to vector<1x8xf32>
      %980 = vector.broadcast %979 : vector<1x8xf32> to vector<16x8xf32>
      %981 = arith.mulf %978, %980 : vector<16x8xf32>
      %982 = arith.addf %arg18, %981 : vector<16x8xf32>
      %983 = vector.extract_strided_slice %76 {offsets = [4, 0], sizes = [16, 8], strides = [1, 1]} : vector<48x8xf32> to vector<16x8xf32>
      %984 = vector.extract_strided_slice %977 {offsets = [1, 0], sizes = [1, 8], strides = [1, 1]} : vector<27x8xf32> to vector<1x8xf32>
      %985 = vector.broadcast %984 : vector<1x8xf32> to vector<16x8xf32>
      %986 = arith.mulf %983, %985 : vector<16x8xf32>
      %987 = arith.addf %982, %986 : vector<16x8xf32>
      %988 = vector.extract_strided_slice %76 {offsets = [5, 0], sizes = [16, 8], strides = [1, 1]} : vector<48x8xf32> to vector<16x8xf32>
      %989 = vector.extract_strided_slice %977 {offsets = [2, 0], sizes = [1, 8], strides = [1, 1]} : vector<27x8xf32> to vector<1x8xf32>
      %990 = vector.broadcast %989 : vector<1x8xf32> to vector<16x8xf32>
      %991 = arith.mulf %988, %990 : vector<16x8xf32>
      %992 = arith.addf %987, %991 : vector<16x8xf32>
      %993 = vector.extract_strided_slice %76 {offsets = [6, 0], sizes = [16, 8], strides = [1, 1]} : vector<48x8xf32> to vector<16x8xf32>
      %994 = vector.extract_strided_slice %977 {offsets = [3, 0], sizes = [1, 8], strides = [1, 1]} : vector<27x8xf32> to vector<1x8xf32>
      %995 = vector.broadcast %994 : vector<1x8xf32> to vector<16x8xf32>
      %996 = arith.mulf %993, %995 : vector<16x8xf32>
      %997 = arith.addf %992, %996 : vector<16x8xf32>
      %998 = vector.extract_strided_slice %76 {offsets = [7, 0], sizes = [16, 8], strides = [1, 1]} : vector<48x8xf32> to vector<16x8xf32>
      %999 = vector.extract_strided_slice %977 {offsets = [4, 0], sizes = [1, 8], strides = [1, 1]} : vector<27x8xf32> to vector<1x8xf32>
      %1000 = vector.broadcast %999 : vector<1x8xf32> to vector<16x8xf32>
      %1001 = arith.mulf %998, %1000 : vector<16x8xf32>
      %1002 = arith.addf %997, %1001 : vector<16x8xf32>
      %1003 = vector.extract_strided_slice %76 {offsets = [8, 0], sizes = [16, 8], strides = [1, 1]} : vector<48x8xf32> to vector<16x8xf32>
      %1004 = vector.extract_strided_slice %977 {offsets = [5, 0], sizes = [1, 8], strides = [1, 1]} : vector<27x8xf32> to vector<1x8xf32>
      %1005 = vector.broadcast %1004 : vector<1x8xf32> to vector<16x8xf32>
      %1006 = arith.mulf %1003, %1005 : vector<16x8xf32>
      %1007 = arith.addf %1002, %1006 : vector<16x8xf32>
      %1008 = vector.extract_strided_slice %76 {offsets = [9, 0], sizes = [16, 8], strides = [1, 1]} : vector<48x8xf32> to vector<16x8xf32>
      %1009 = vector.extract_strided_slice %977 {offsets = [6, 0], sizes = [1, 8], strides = [1, 1]} : vector<27x8xf32> to vector<1x8xf32>
      %1010 = vector.broadcast %1009 : vector<1x8xf32> to vector<16x8xf32>
      %1011 = arith.mulf %1008, %1010 : vector<16x8xf32>
      %1012 = arith.addf %1007, %1011 : vector<16x8xf32>
      %1013 = vector.extract_strided_slice %76 {offsets = [10, 0], sizes = [16, 8], strides = [1, 1]} : vector<48x8xf32> to vector<16x8xf32>
      %1014 = vector.extract_strided_slice %977 {offsets = [7, 0], sizes = [1, 8], strides = [1, 1]} : vector<27x8xf32> to vector<1x8xf32>
      %1015 = vector.broadcast %1014 : vector<1x8xf32> to vector<16x8xf32>
      %1016 = arith.mulf %1013, %1015 : vector<16x8xf32>
      %1017 = arith.addf %1012, %1016 : vector<16x8xf32>
      %1018 = vector.extract_strided_slice %76 {offsets = [11, 0], sizes = [16, 8], strides = [1, 1]} : vector<48x8xf32> to vector<16x8xf32>
      %1019 = vector.extract_strided_slice %977 {offsets = [8, 0], sizes = [1, 8], strides = [1, 1]} : vector<27x8xf32> to vector<1x8xf32>
      %1020 = vector.broadcast %1019 : vector<1x8xf32> to vector<16x8xf32>
      %1021 = arith.mulf %1018, %1020 : vector<16x8xf32>
      %1022 = arith.addf %1017, %1021 : vector<16x8xf32>
      %1023 = vector.extract_strided_slice %76 {offsets = [12, 0], sizes = [16, 8], strides = [1, 1]} : vector<48x8xf32> to vector<16x8xf32>
      %1024 = vector.extract_strided_slice %977 {offsets = [9, 0], sizes = [1, 8], strides = [1, 1]} : vector<27x8xf32> to vector<1x8xf32>
      %1025 = vector.broadcast %1024 : vector<1x8xf32> to vector<16x8xf32>
      %1026 = arith.mulf %1023, %1025 : vector<16x8xf32>
      %1027 = arith.addf %1022, %1026 : vector<16x8xf32>
      %1028 = vector.extract_strided_slice %76 {offsets = [13, 0], sizes = [16, 8], strides = [1, 1]} : vector<48x8xf32> to vector<16x8xf32>
      %1029 = vector.extract_strided_slice %977 {offsets = [10, 0], sizes = [1, 8], strides = [1, 1]} : vector<27x8xf32> to vector<1x8xf32>
      %1030 = vector.broadcast %1029 : vector<1x8xf32> to vector<16x8xf32>
      %1031 = arith.mulf %1028, %1030 : vector<16x8xf32>
      %1032 = arith.addf %1027, %1031 : vector<16x8xf32>
      %1033 = vector.extract_strided_slice %76 {offsets = [14, 0], sizes = [16, 8], strides = [1, 1]} : vector<48x8xf32> to vector<16x8xf32>
      %1034 = vector.extract_strided_slice %977 {offsets = [11, 0], sizes = [1, 8], strides = [1, 1]} : vector<27x8xf32> to vector<1x8xf32>
      %1035 = vector.broadcast %1034 : vector<1x8xf32> to vector<16x8xf32>
      %1036 = arith.mulf %1033, %1035 : vector<16x8xf32>
      %1037 = arith.addf %1032, %1036 : vector<16x8xf32>
      %1038 = vector.extract_strided_slice %76 {offsets = [15, 0], sizes = [16, 8], strides = [1, 1]} : vector<48x8xf32> to vector<16x8xf32>
      %1039 = vector.extract_strided_slice %977 {offsets = [12, 0], sizes = [1, 8], strides = [1, 1]} : vector<27x8xf32> to vector<1x8xf32>
      %1040 = vector.broadcast %1039 : vector<1x8xf32> to vector<16x8xf32>
      %1041 = arith.mulf %1038, %1040 : vector<16x8xf32>
      %1042 = arith.addf %1037, %1041 : vector<16x8xf32>
      %1043 = vector.extract_strided_slice %76 {offsets = [16, 0], sizes = [16, 8], strides = [1, 1]} : vector<48x8xf32> to vector<16x8xf32>
      %1044 = vector.extract_strided_slice %977 {offsets = [13, 0], sizes = [1, 8], strides = [1, 1]} : vector<27x8xf32> to vector<1x8xf32>
      %1045 = vector.broadcast %1044 : vector<1x8xf32> to vector<16x8xf32>
      %1046 = arith.mulf %1043, %1045 : vector<16x8xf32>
      %1047 = arith.addf %1042, %1046 : vector<16x8xf32>
      %1048 = vector.extract_strided_slice %76 {offsets = [17, 0], sizes = [16, 8], strides = [1, 1]} : vector<48x8xf32> to vector<16x8xf32>
      %1049 = vector.extract_strided_slice %977 {offsets = [14, 0], sizes = [1, 8], strides = [1, 1]} : vector<27x8xf32> to vector<1x8xf32>
      %1050 = vector.broadcast %1049 : vector<1x8xf32> to vector<16x8xf32>
      %1051 = arith.mulf %1048, %1050 : vector<16x8xf32>
      %1052 = arith.addf %1047, %1051 : vector<16x8xf32>
      %1053 = vector.extract_strided_slice %76 {offsets = [18, 0], sizes = [16, 8], strides = [1, 1]} : vector<48x8xf32> to vector<16x8xf32>
      %1054 = vector.extract_strided_slice %977 {offsets = [15, 0], sizes = [1, 8], strides = [1, 1]} : vector<27x8xf32> to vector<1x8xf32>
      %1055 = vector.broadcast %1054 : vector<1x8xf32> to vector<16x8xf32>
      %1056 = arith.mulf %1053, %1055 : vector<16x8xf32>
      %1057 = arith.addf %1052, %1056 : vector<16x8xf32>
      %1058 = vector.extract_strided_slice %76 {offsets = [19, 0], sizes = [16, 8], strides = [1, 1]} : vector<48x8xf32> to vector<16x8xf32>
      %1059 = vector.extract_strided_slice %977 {offsets = [16, 0], sizes = [1, 8], strides = [1, 1]} : vector<27x8xf32> to vector<1x8xf32>
      %1060 = vector.broadcast %1059 : vector<1x8xf32> to vector<16x8xf32>
      %1061 = arith.mulf %1058, %1060 : vector<16x8xf32>
      %1062 = arith.addf %1057, %1061 : vector<16x8xf32>
      %1063 = vector.extract_strided_slice %76 {offsets = [20, 0], sizes = [16, 8], strides = [1, 1]} : vector<48x8xf32> to vector<16x8xf32>
      %1064 = vector.extract_strided_slice %977 {offsets = [17, 0], sizes = [1, 8], strides = [1, 1]} : vector<27x8xf32> to vector<1x8xf32>
      %1065 = vector.broadcast %1064 : vector<1x8xf32> to vector<16x8xf32>
      %1066 = arith.mulf %1063, %1065 : vector<16x8xf32>
      %1067 = arith.addf %1062, %1066 : vector<16x8xf32>
      %1068 = vector.extract_strided_slice %76 {offsets = [21, 0], sizes = [16, 8], strides = [1, 1]} : vector<48x8xf32> to vector<16x8xf32>
      %1069 = vector.extract_strided_slice %977 {offsets = [18, 0], sizes = [1, 8], strides = [1, 1]} : vector<27x8xf32> to vector<1x8xf32>
      %1070 = vector.broadcast %1069 : vector<1x8xf32> to vector<16x8xf32>
      %1071 = arith.mulf %1068, %1070 : vector<16x8xf32>
      %1072 = arith.addf %1067, %1071 : vector<16x8xf32>
      %1073 = vector.extract_strided_slice %76 {offsets = [22, 0], sizes = [16, 8], strides = [1, 1]} : vector<48x8xf32> to vector<16x8xf32>
      %1074 = vector.extract_strided_slice %977 {offsets = [19, 0], sizes = [1, 8], strides = [1, 1]} : vector<27x8xf32> to vector<1x8xf32>
      %1075 = vector.broadcast %1074 : vector<1x8xf32> to vector<16x8xf32>
      %1076 = arith.mulf %1073, %1075 : vector<16x8xf32>
      %1077 = arith.addf %1072, %1076 : vector<16x8xf32>
      %1078 = vector.extract_strided_slice %76 {offsets = [23, 0], sizes = [16, 8], strides = [1, 1]} : vector<48x8xf32> to vector<16x8xf32>
      %1079 = vector.extract_strided_slice %977 {offsets = [20, 0], sizes = [1, 8], strides = [1, 1]} : vector<27x8xf32> to vector<1x8xf32>
      %1080 = vector.broadcast %1079 : vector<1x8xf32> to vector<16x8xf32>
      %1081 = arith.mulf %1078, %1080 : vector<16x8xf32>
      %1082 = arith.addf %1077, %1081 : vector<16x8xf32>
      %1083 = vector.extract_strided_slice %76 {offsets = [24, 0], sizes = [16, 8], strides = [1, 1]} : vector<48x8xf32> to vector<16x8xf32>
      %1084 = vector.extract_strided_slice %977 {offsets = [21, 0], sizes = [1, 8], strides = [1, 1]} : vector<27x8xf32> to vector<1x8xf32>
      %1085 = vector.broadcast %1084 : vector<1x8xf32> to vector<16x8xf32>
      %1086 = arith.mulf %1083, %1085 : vector<16x8xf32>
      %1087 = arith.addf %1082, %1086 : vector<16x8xf32>
      %1088 = vector.extract_strided_slice %76 {offsets = [25, 0], sizes = [16, 8], strides = [1, 1]} : vector<48x8xf32> to vector<16x8xf32>
      %1089 = vector.extract_strided_slice %977 {offsets = [22, 0], sizes = [1, 8], strides = [1, 1]} : vector<27x8xf32> to vector<1x8xf32>
      %1090 = vector.broadcast %1089 : vector<1x8xf32> to vector<16x8xf32>
      %1091 = arith.mulf %1088, %1090 : vector<16x8xf32>
      %1092 = arith.addf %1087, %1091 : vector<16x8xf32>
      %1093 = vector.extract_strided_slice %76 {offsets = [26, 0], sizes = [16, 8], strides = [1, 1]} : vector<48x8xf32> to vector<16x8xf32>
      %1094 = vector.extract_strided_slice %977 {offsets = [23, 0], sizes = [1, 8], strides = [1, 1]} : vector<27x8xf32> to vector<1x8xf32>
      %1095 = vector.broadcast %1094 : vector<1x8xf32> to vector<16x8xf32>
      %1096 = arith.mulf %1093, %1095 : vector<16x8xf32>
      %1097 = arith.addf %1092, %1096 : vector<16x8xf32>
      %1098 = vector.extract_strided_slice %76 {offsets = [27, 0], sizes = [16, 8], strides = [1, 1]} : vector<48x8xf32> to vector<16x8xf32>
      %1099 = vector.extract_strided_slice %977 {offsets = [24, 0], sizes = [1, 8], strides = [1, 1]} : vector<27x8xf32> to vector<1x8xf32>
      %1100 = vector.broadcast %1099 : vector<1x8xf32> to vector<16x8xf32>
      %1101 = arith.mulf %1098, %1100 : vector<16x8xf32>
      %1102 = arith.addf %1097, %1101 : vector<16x8xf32>
      %1103 = vector.extract_strided_slice %76 {offsets = [28, 0], sizes = [16, 8], strides = [1, 1]} : vector<48x8xf32> to vector<16x8xf32>
      %1104 = vector.extract_strided_slice %977 {offsets = [25, 0], sizes = [1, 8], strides = [1, 1]} : vector<27x8xf32> to vector<1x8xf32>
      %1105 = vector.broadcast %1104 : vector<1x8xf32> to vector<16x8xf32>
      %1106 = arith.mulf %1103, %1105 : vector<16x8xf32>
      %1107 = arith.addf %1102, %1106 : vector<16x8xf32>
      %1108 = vector.extract_strided_slice %76 {offsets = [29, 0], sizes = [16, 8], strides = [1, 1]} : vector<48x8xf32> to vector<16x8xf32>
      %1109 = vector.extract_strided_slice %977 {offsets = [26, 0], sizes = [1, 8], strides = [1, 1]} : vector<27x8xf32> to vector<1x8xf32>
      %1110 = vector.broadcast %1109 : vector<1x8xf32> to vector<16x8xf32>
      %1111 = arith.mulf %1108, %1110 : vector<16x8xf32>
      %1112 = arith.addf %1107, %1111 : vector<16x8xf32>
      %c7_i32 = arith.constant 7 : i32
      %1113 = arith.subi %arg11, %c7_i32 : i32
      %c0_i32_66 = arith.constant 0 : i32
      %1114 = arith.cmpi sge, %1113, %c0_i32_66 : i32
      %c27_i32_67 = arith.constant 27 : i32
      %1115 = arith.cmpi slt, %1113, %c27_i32_67 : i32
      %1116 = arith.andi %1114, %1115 : i1
      %1117 = arith.extui %1116 : i1 to i32
      %1118 = arith.sitofp %1117 : i32 to f32
      %c0_i32_68 = arith.constant 0 : i32
      %c26_i32_69 = arith.constant 26 : i32
      %1119 = arith.maxsi %c0_i32_68, %1113 : i32
      %1120 = arith.minsi %c26_i32_69, %1119 : i32
      %1121 = arith.index_cast %1120 : i32 to index
      %c0_70 = arith.constant 0 : index
      %c0_71 = arith.constant 0 : index
      %1122 = vector.load %arg5[%1121, %c0_70, %c0_71] : memref<27x27x8xf32, #tpu.memory_space<vmem>>, vector<1x27x8xf32>
      %1123 = vector.shape_cast %1122 : vector<1x27x8xf32> to vector<27x8xf32>
      %1124 = vector.broadcast %1118 : f32 to vector<27x8xf32>
      %1125 = arith.mulf %1123, %1124 : vector<27x8xf32>
      %1126 = vector.extract_strided_slice %76 {offsets = [3, 0], sizes = [16, 8], strides = [1, 1]} : vector<48x8xf32> to vector<16x8xf32>
      %1127 = vector.extract_strided_slice %1125 {offsets = [0, 0], sizes = [1, 8], strides = [1, 1]} : vector<27x8xf32> to vector<1x8xf32>
      %1128 = vector.broadcast %1127 : vector<1x8xf32> to vector<16x8xf32>
      %1129 = arith.mulf %1126, %1128 : vector<16x8xf32>
      %1130 = arith.addf %arg19, %1129 : vector<16x8xf32>
      %1131 = vector.extract_strided_slice %76 {offsets = [4, 0], sizes = [16, 8], strides = [1, 1]} : vector<48x8xf32> to vector<16x8xf32>
      %1132 = vector.extract_strided_slice %1125 {offsets = [1, 0], sizes = [1, 8], strides = [1, 1]} : vector<27x8xf32> to vector<1x8xf32>
      %1133 = vector.broadcast %1132 : vector<1x8xf32> to vector<16x8xf32>
      %1134 = arith.mulf %1131, %1133 : vector<16x8xf32>
      %1135 = arith.addf %1130, %1134 : vector<16x8xf32>
      %1136 = vector.extract_strided_slice %76 {offsets = [5, 0], sizes = [16, 8], strides = [1, 1]} : vector<48x8xf32> to vector<16x8xf32>
      %1137 = vector.extract_strided_slice %1125 {offsets = [2, 0], sizes = [1, 8], strides = [1, 1]} : vector<27x8xf32> to vector<1x8xf32>
      %1138 = vector.broadcast %1137 : vector<1x8xf32> to vector<16x8xf32>
      %1139 = arith.mulf %1136, %1138 : vector<16x8xf32>
      %1140 = arith.addf %1135, %1139 : vector<16x8xf32>
      %1141 = vector.extract_strided_slice %76 {offsets = [6, 0], sizes = [16, 8], strides = [1, 1]} : vector<48x8xf32> to vector<16x8xf32>
      %1142 = vector.extract_strided_slice %1125 {offsets = [3, 0], sizes = [1, 8], strides = [1, 1]} : vector<27x8xf32> to vector<1x8xf32>
      %1143 = vector.broadcast %1142 : vector<1x8xf32> to vector<16x8xf32>
      %1144 = arith.mulf %1141, %1143 : vector<16x8xf32>
      %1145 = arith.addf %1140, %1144 : vector<16x8xf32>
      %1146 = vector.extract_strided_slice %76 {offsets = [7, 0], sizes = [16, 8], strides = [1, 1]} : vector<48x8xf32> to vector<16x8xf32>
      %1147 = vector.extract_strided_slice %1125 {offsets = [4, 0], sizes = [1, 8], strides = [1, 1]} : vector<27x8xf32> to vector<1x8xf32>
      %1148 = vector.broadcast %1147 : vector<1x8xf32> to vector<16x8xf32>
      %1149 = arith.mulf %1146, %1148 : vector<16x8xf32>
      %1150 = arith.addf %1145, %1149 : vector<16x8xf32>
      %1151 = vector.extract_strided_slice %76 {offsets = [8, 0], sizes = [16, 8], strides = [1, 1]} : vector<48x8xf32> to vector<16x8xf32>
      %1152 = vector.extract_strided_slice %1125 {offsets = [5, 0], sizes = [1, 8], strides = [1, 1]} : vector<27x8xf32> to vector<1x8xf32>
      %1153 = vector.broadcast %1152 : vector<1x8xf32> to vector<16x8xf32>
      %1154 = arith.mulf %1151, %1153 : vector<16x8xf32>
      %1155 = arith.addf %1150, %1154 : vector<16x8xf32>
      %1156 = vector.extract_strided_slice %76 {offsets = [9, 0], sizes = [16, 8], strides = [1, 1]} : vector<48x8xf32> to vector<16x8xf32>
      %1157 = vector.extract_strided_slice %1125 {offsets = [6, 0], sizes = [1, 8], strides = [1, 1]} : vector<27x8xf32> to vector<1x8xf32>
      %1158 = vector.broadcast %1157 : vector<1x8xf32> to vector<16x8xf32>
      %1159 = arith.mulf %1156, %1158 : vector<16x8xf32>
      %1160 = arith.addf %1155, %1159 : vector<16x8xf32>
      %1161 = vector.extract_strided_slice %76 {offsets = [10, 0], sizes = [16, 8], strides = [1, 1]} : vector<48x8xf32> to vector<16x8xf32>
      %1162 = vector.extract_strided_slice %1125 {offsets = [7, 0], sizes = [1, 8], strides = [1, 1]} : vector<27x8xf32> to vector<1x8xf32>
      %1163 = vector.broadcast %1162 : vector<1x8xf32> to vector<16x8xf32>
      %1164 = arith.mulf %1161, %1163 : vector<16x8xf32>
      %1165 = arith.addf %1160, %1164 : vector<16x8xf32>
      %1166 = vector.extract_strided_slice %76 {offsets = [11, 0], sizes = [16, 8], strides = [1, 1]} : vector<48x8xf32> to vector<16x8xf32>
      %1167 = vector.extract_strided_slice %1125 {offsets = [8, 0], sizes = [1, 8], strides = [1, 1]} : vector<27x8xf32> to vector<1x8xf32>
      %1168 = vector.broadcast %1167 : vector<1x8xf32> to vector<16x8xf32>
      %1169 = arith.mulf %1166, %1168 : vector<16x8xf32>
      %1170 = arith.addf %1165, %1169 : vector<16x8xf32>
      %1171 = vector.extract_strided_slice %76 {offsets = [12, 0], sizes = [16, 8], strides = [1, 1]} : vector<48x8xf32> to vector<16x8xf32>
      %1172 = vector.extract_strided_slice %1125 {offsets = [9, 0], sizes = [1, 8], strides = [1, 1]} : vector<27x8xf32> to vector<1x8xf32>
      %1173 = vector.broadcast %1172 : vector<1x8xf32> to vector<16x8xf32>
      %1174 = arith.mulf %1171, %1173 : vector<16x8xf32>
      %1175 = arith.addf %1170, %1174 : vector<16x8xf32>
      %1176 = vector.extract_strided_slice %76 {offsets = [13, 0], sizes = [16, 8], strides = [1, 1]} : vector<48x8xf32> to vector<16x8xf32>
      %1177 = vector.extract_strided_slice %1125 {offsets = [10, 0], sizes = [1, 8], strides = [1, 1]} : vector<27x8xf32> to vector<1x8xf32>
      %1178 = vector.broadcast %1177 : vector<1x8xf32> to vector<16x8xf32>
      %1179 = arith.mulf %1176, %1178 : vector<16x8xf32>
      %1180 = arith.addf %1175, %1179 : vector<16x8xf32>
      %1181 = vector.extract_strided_slice %76 {offsets = [14, 0], sizes = [16, 8], strides = [1, 1]} : vector<48x8xf32> to vector<16x8xf32>
      %1182 = vector.extract_strided_slice %1125 {offsets = [11, 0], sizes = [1, 8], strides = [1, 1]} : vector<27x8xf32> to vector<1x8xf32>
      %1183 = vector.broadcast %1182 : vector<1x8xf32> to vector<16x8xf32>
      %1184 = arith.mulf %1181, %1183 : vector<16x8xf32>
      %1185 = arith.addf %1180, %1184 : vector<16x8xf32>
      %1186 = vector.extract_strided_slice %76 {offsets = [15, 0], sizes = [16, 8], strides = [1, 1]} : vector<48x8xf32> to vector<16x8xf32>
      %1187 = vector.extract_strided_slice %1125 {offsets = [12, 0], sizes = [1, 8], strides = [1, 1]} : vector<27x8xf32> to vector<1x8xf32>
      %1188 = vector.broadcast %1187 : vector<1x8xf32> to vector<16x8xf32>
      %1189 = arith.mulf %1186, %1188 : vector<16x8xf32>
      %1190 = arith.addf %1185, %1189 : vector<16x8xf32>
      %1191 = vector.extract_strided_slice %76 {offsets = [16, 0], sizes = [16, 8], strides = [1, 1]} : vector<48x8xf32> to vector<16x8xf32>
      %1192 = vector.extract_strided_slice %1125 {offsets = [13, 0], sizes = [1, 8], strides = [1, 1]} : vector<27x8xf32> to vector<1x8xf32>
      %1193 = vector.broadcast %1192 : vector<1x8xf32> to vector<16x8xf32>
      %1194 = arith.mulf %1191, %1193 : vector<16x8xf32>
      %1195 = arith.addf %1190, %1194 : vector<16x8xf32>
      %1196 = vector.extract_strided_slice %76 {offsets = [17, 0], sizes = [16, 8], strides = [1, 1]} : vector<48x8xf32> to vector<16x8xf32>
      %1197 = vector.extract_strided_slice %1125 {offsets = [14, 0], sizes = [1, 8], strides = [1, 1]} : vector<27x8xf32> to vector<1x8xf32>
      %1198 = vector.broadcast %1197 : vector<1x8xf32> to vector<16x8xf32>
      %1199 = arith.mulf %1196, %1198 : vector<16x8xf32>
      %1200 = arith.addf %1195, %1199 : vector<16x8xf32>
      %1201 = vector.extract_strided_slice %76 {offsets = [18, 0], sizes = [16, 8], strides = [1, 1]} : vector<48x8xf32> to vector<16x8xf32>
      %1202 = vector.extract_strided_slice %1125 {offsets = [15, 0], sizes = [1, 8], strides = [1, 1]} : vector<27x8xf32> to vector<1x8xf32>
      %1203 = vector.broadcast %1202 : vector<1x8xf32> to vector<16x8xf32>
      %1204 = arith.mulf %1201, %1203 : vector<16x8xf32>
      %1205 = arith.addf %1200, %1204 : vector<16x8xf32>
      %1206 = vector.extract_strided_slice %76 {offsets = [19, 0], sizes = [16, 8], strides = [1, 1]} : vector<48x8xf32> to vector<16x8xf32>
      %1207 = vector.extract_strided_slice %1125 {offsets = [16, 0], sizes = [1, 8], strides = [1, 1]} : vector<27x8xf32> to vector<1x8xf32>
      %1208 = vector.broadcast %1207 : vector<1x8xf32> to vector<16x8xf32>
      %1209 = arith.mulf %1206, %1208 : vector<16x8xf32>
      %1210 = arith.addf %1205, %1209 : vector<16x8xf32>
      %1211 = vector.extract_strided_slice %76 {offsets = [20, 0], sizes = [16, 8], strides = [1, 1]} : vector<48x8xf32> to vector<16x8xf32>
      %1212 = vector.extract_strided_slice %1125 {offsets = [17, 0], sizes = [1, 8], strides = [1, 1]} : vector<27x8xf32> to vector<1x8xf32>
      %1213 = vector.broadcast %1212 : vector<1x8xf32> to vector<16x8xf32>
      %1214 = arith.mulf %1211, %1213 : vector<16x8xf32>
      %1215 = arith.addf %1210, %1214 : vector<16x8xf32>
      %1216 = vector.extract_strided_slice %76 {offsets = [21, 0], sizes = [16, 8], strides = [1, 1]} : vector<48x8xf32> to vector<16x8xf32>
      %1217 = vector.extract_strided_slice %1125 {offsets = [18, 0], sizes = [1, 8], strides = [1, 1]} : vector<27x8xf32> to vector<1x8xf32>
      %1218 = vector.broadcast %1217 : vector<1x8xf32> to vector<16x8xf32>
      %1219 = arith.mulf %1216, %1218 : vector<16x8xf32>
      %1220 = arith.addf %1215, %1219 : vector<16x8xf32>
      %1221 = vector.extract_strided_slice %76 {offsets = [22, 0], sizes = [16, 8], strides = [1, 1]} : vector<48x8xf32> to vector<16x8xf32>
      %1222 = vector.extract_strided_slice %1125 {offsets = [19, 0], sizes = [1, 8], strides = [1, 1]} : vector<27x8xf32> to vector<1x8xf32>
      %1223 = vector.broadcast %1222 : vector<1x8xf32> to vector<16x8xf32>
      %1224 = arith.mulf %1221, %1223 : vector<16x8xf32>
      %1225 = arith.addf %1220, %1224 : vector<16x8xf32>
      %1226 = vector.extract_strided_slice %76 {offsets = [23, 0], sizes = [16, 8], strides = [1, 1]} : vector<48x8xf32> to vector<16x8xf32>
      %1227 = vector.extract_strided_slice %1125 {offsets = [20, 0], sizes = [1, 8], strides = [1, 1]} : vector<27x8xf32> to vector<1x8xf32>
      %1228 = vector.broadcast %1227 : vector<1x8xf32> to vector<16x8xf32>
      %1229 = arith.mulf %1226, %1228 : vector<16x8xf32>
      %1230 = arith.addf %1225, %1229 : vector<16x8xf32>
      %1231 = vector.extract_strided_slice %76 {offsets = [24, 0], sizes = [16, 8], strides = [1, 1]} : vector<48x8xf32> to vector<16x8xf32>
      %1232 = vector.extract_strided_slice %1125 {offsets = [21, 0], sizes = [1, 8], strides = [1, 1]} : vector<27x8xf32> to vector<1x8xf32>
      %1233 = vector.broadcast %1232 : vector<1x8xf32> to vector<16x8xf32>
      %1234 = arith.mulf %1231, %1233 : vector<16x8xf32>
      %1235 = arith.addf %1230, %1234 : vector<16x8xf32>
      %1236 = vector.extract_strided_slice %76 {offsets = [25, 0], sizes = [16, 8], strides = [1, 1]} : vector<48x8xf32> to vector<16x8xf32>
      %1237 = vector.extract_strided_slice %1125 {offsets = [22, 0], sizes = [1, 8], strides = [1, 1]} : vector<27x8xf32> to vector<1x8xf32>
      %1238 = vector.broadcast %1237 : vector<1x8xf32> to vector<16x8xf32>
      %1239 = arith.mulf %1236, %1238 : vector<16x8xf32>
      %1240 = arith.addf %1235, %1239 : vector<16x8xf32>
      %1241 = vector.extract_strided_slice %76 {offsets = [26, 0], sizes = [16, 8], strides = [1, 1]} : vector<48x8xf32> to vector<16x8xf32>
      %1242 = vector.extract_strided_slice %1125 {offsets = [23, 0], sizes = [1, 8], strides = [1, 1]} : vector<27x8xf32> to vector<1x8xf32>
      %1243 = vector.broadcast %1242 : vector<1x8xf32> to vector<16x8xf32>
      %1244 = arith.mulf %1241, %1243 : vector<16x8xf32>
      %1245 = arith.addf %1240, %1244 : vector<16x8xf32>
      %1246 = vector.extract_strided_slice %76 {offsets = [27, 0], sizes = [16, 8], strides = [1, 1]} : vector<48x8xf32> to vector<16x8xf32>
      %1247 = vector.extract_strided_slice %1125 {offsets = [24, 0], sizes = [1, 8], strides = [1, 1]} : vector<27x8xf32> to vector<1x8xf32>
      %1248 = vector.broadcast %1247 : vector<1x8xf32> to vector<16x8xf32>
      %1249 = arith.mulf %1246, %1248 : vector<16x8xf32>
      %1250 = arith.addf %1245, %1249 : vector<16x8xf32>
      %1251 = vector.extract_strided_slice %76 {offsets = [28, 0], sizes = [16, 8], strides = [1, 1]} : vector<48x8xf32> to vector<16x8xf32>
      %1252 = vector.extract_strided_slice %1125 {offsets = [25, 0], sizes = [1, 8], strides = [1, 1]} : vector<27x8xf32> to vector<1x8xf32>
      %1253 = vector.broadcast %1252 : vector<1x8xf32> to vector<16x8xf32>
      %1254 = arith.mulf %1251, %1253 : vector<16x8xf32>
      %1255 = arith.addf %1250, %1254 : vector<16x8xf32>
      %1256 = vector.extract_strided_slice %76 {offsets = [29, 0], sizes = [16, 8], strides = [1, 1]} : vector<48x8xf32> to vector<16x8xf32>
      %1257 = vector.extract_strided_slice %1125 {offsets = [26, 0], sizes = [1, 8], strides = [1, 1]} : vector<27x8xf32> to vector<1x8xf32>
      %1258 = vector.broadcast %1257 : vector<1x8xf32> to vector<16x8xf32>
      %1259 = arith.mulf %1256, %1258 : vector<16x8xf32>
      %1260 = arith.addf %1255, %1259 : vector<16x8xf32>
      scf.yield %224, %372, %520, %668, %816, %964, %1112, %1260 : vector<16x8xf32>, vector<16x8xf32>, vector<16x8xf32>, vector<16x8xf32>, vector<16x8xf32>, vector<16x8xf32>, vector<16x8xf32>, vector<16x8xf32>
    }
    %c34_i32_3 = arith.constant 34 : i32
    %10 = tpu.concatenate %9#0, %9#1, %9#2, %9#3, %9#4, %9#5, %9#6, %9#7 in 0 : vector<16x8xf32>, vector<16x8xf32>, vector<16x8xf32>, vector<16x8xf32>, vector<16x8xf32>, vector<16x8xf32>, vector<16x8xf32>, vector<16x8xf32> -> vector<128x8xf32>
    %cst = arith.constant 0.000000e+00 : f32
    %11 = vector.broadcast %cst : f32 to vector<128x8xf32>
    %12 = arith.maximumf %10, %11 : vector<128x8xf32>
    %c0_4 = arith.constant 0 : index
    %13 = arith.index_cast %4 : i32 to index
    %c0_5 = arith.constant 0 : index
    %c0_6 = arith.constant 0 : index
    %14 = vector.load %arg2[%c0_4, %13, %c0_5, %c0_6] : memref<1x16x16x4xf32, #tpu.memory_space<vmem>>, vector<1x8x16x4xf32>
    %15 = vector.shape_cast %14 : vector<1x8x16x4xf32> to vector<8x16x4xf32>
    %16 = vector.shape_cast %15 : vector<8x16x4xf32> to vector<128x4xf32>
    %c0_7 = arith.constant 0 : index
    %c0_8 = arith.constant 0 : index
    %17 = vector.load %arg8[%c0_7, %c0_8] : memref<1x4xf32, #tpu.memory_space<vmem>>, vector<1x4xf32>
    %18 = vector.shape_cast %17 : vector<1x4xf32> to vector<1x4xf32>
    %19 = vector.broadcast %18 : vector<1x4xf32> to vector<128x4xf32>
    %20 = vector.extract_strided_slice %12 {offsets = [0, 0], sizes = [128, 1], strides = [1, 1]} : vector<128x8xf32> to vector<128x1xf32>
    %c0_9 = arith.constant 0 : index
    %c0_10 = arith.constant 0 : index
    %21 = vector.load %arg7[%c0_9, %c0_10] : memref<8x4xf32, #tpu.memory_space<vmem>>, vector<1x4xf32>
    %22 = vector.broadcast %20 : vector<128x1xf32> to vector<128x4xf32>
    %23 = vector.broadcast %21 : vector<1x4xf32> to vector<128x4xf32>
    %24 = arith.mulf %22, %23 : vector<128x4xf32>
    %25 = arith.addf %19, %24 : vector<128x4xf32>
    %26 = vector.extract_strided_slice %12 {offsets = [0, 1], sizes = [128, 1], strides = [1, 1]} : vector<128x8xf32> to vector<128x1xf32>
    %c1 = arith.constant 1 : index
    %c0_11 = arith.constant 0 : index
    %27 = vector.load %arg7[%c1, %c0_11] : memref<8x4xf32, #tpu.memory_space<vmem>>, vector<1x4xf32>
    %28 = vector.broadcast %26 : vector<128x1xf32> to vector<128x4xf32>
    %29 = vector.broadcast %27 : vector<1x4xf32> to vector<128x4xf32>
    %30 = arith.mulf %28, %29 : vector<128x4xf32>
    %31 = arith.addf %25, %30 : vector<128x4xf32>
    %32 = vector.extract_strided_slice %12 {offsets = [0, 2], sizes = [128, 1], strides = [1, 1]} : vector<128x8xf32> to vector<128x1xf32>
    %c2 = arith.constant 2 : index
    %c0_12 = arith.constant 0 : index
    %33 = vector.load %arg7[%c2, %c0_12] : memref<8x4xf32, #tpu.memory_space<vmem>>, vector<1x4xf32>
    %34 = vector.broadcast %32 : vector<128x1xf32> to vector<128x4xf32>
    %35 = vector.broadcast %33 : vector<1x4xf32> to vector<128x4xf32>
    %36 = arith.mulf %34, %35 : vector<128x4xf32>
    %37 = arith.addf %31, %36 : vector<128x4xf32>
    %38 = vector.extract_strided_slice %12 {offsets = [0, 3], sizes = [128, 1], strides = [1, 1]} : vector<128x8xf32> to vector<128x1xf32>
    %c3 = arith.constant 3 : index
    %c0_13 = arith.constant 0 : index
    %39 = vector.load %arg7[%c3, %c0_13] : memref<8x4xf32, #tpu.memory_space<vmem>>, vector<1x4xf32>
    %40 = vector.broadcast %38 : vector<128x1xf32> to vector<128x4xf32>
    %41 = vector.broadcast %39 : vector<1x4xf32> to vector<128x4xf32>
    %42 = arith.mulf %40, %41 : vector<128x4xf32>
    %43 = arith.addf %37, %42 : vector<128x4xf32>
    %44 = vector.extract_strided_slice %12 {offsets = [0, 4], sizes = [128, 1], strides = [1, 1]} : vector<128x8xf32> to vector<128x1xf32>
    %c4 = arith.constant 4 : index
    %c0_14 = arith.constant 0 : index
    %45 = vector.load %arg7[%c4, %c0_14] : memref<8x4xf32, #tpu.memory_space<vmem>>, vector<1x4xf32>
    %46 = vector.broadcast %44 : vector<128x1xf32> to vector<128x4xf32>
    %47 = vector.broadcast %45 : vector<1x4xf32> to vector<128x4xf32>
    %48 = arith.mulf %46, %47 : vector<128x4xf32>
    %49 = arith.addf %43, %48 : vector<128x4xf32>
    %50 = vector.extract_strided_slice %12 {offsets = [0, 5], sizes = [128, 1], strides = [1, 1]} : vector<128x8xf32> to vector<128x1xf32>
    %c5 = arith.constant 5 : index
    %c0_15 = arith.constant 0 : index
    %51 = vector.load %arg7[%c5, %c0_15] : memref<8x4xf32, #tpu.memory_space<vmem>>, vector<1x4xf32>
    %52 = vector.broadcast %50 : vector<128x1xf32> to vector<128x4xf32>
    %53 = vector.broadcast %51 : vector<1x4xf32> to vector<128x4xf32>
    %54 = arith.mulf %52, %53 : vector<128x4xf32>
    %55 = arith.addf %49, %54 : vector<128x4xf32>
    %56 = vector.extract_strided_slice %12 {offsets = [0, 6], sizes = [128, 1], strides = [1, 1]} : vector<128x8xf32> to vector<128x1xf32>
    %c6 = arith.constant 6 : index
    %c0_16 = arith.constant 0 : index
    %57 = vector.load %arg7[%c6, %c0_16] : memref<8x4xf32, #tpu.memory_space<vmem>>, vector<1x4xf32>
    %58 = vector.broadcast %56 : vector<128x1xf32> to vector<128x4xf32>
    %59 = vector.broadcast %57 : vector<1x4xf32> to vector<128x4xf32>
    %60 = arith.mulf %58, %59 : vector<128x4xf32>
    %61 = arith.addf %55, %60 : vector<128x4xf32>
    %62 = vector.extract_strided_slice %12 {offsets = [0, 7], sizes = [128, 1], strides = [1, 1]} : vector<128x8xf32> to vector<128x1xf32>
    %c7 = arith.constant 7 : index
    %c0_17 = arith.constant 0 : index
    %63 = vector.load %arg7[%c7, %c0_17] : memref<8x4xf32, #tpu.memory_space<vmem>>, vector<1x4xf32>
    %64 = vector.broadcast %62 : vector<128x1xf32> to vector<128x4xf32>
    %65 = vector.broadcast %63 : vector<1x4xf32> to vector<128x4xf32>
    %66 = arith.mulf %64, %65 : vector<128x4xf32>
    %67 = arith.addf %61, %66 : vector<128x4xf32>
    %68 = arith.addf %16, %67 : vector<128x4xf32>
    %69 = vector.shape_cast %68 : vector<128x4xf32> to vector<8x16x4xf32>
    %c0_18 = arith.constant 0 : index
    %c0_19 = arith.constant 0 : index
    %c0_20 = arith.constant 0 : index
    %c0_21 = arith.constant 0 : index
    %70 = vector.load %arg9[%c0_18, %c0_19, %c0_20, %c0_21] : memref<1x8x16x4xf32, #tpu.memory_space<vmem>>, vector<1x8x16x4xf32>
    %71 = vector.shape_cast %70 : vector<1x8x16x4xf32> to vector<8x16x4xf32>
    %72 = vector.shape_cast %69 : vector<8x16x4xf32> to vector<1x8x16x4xf32>
    tpu.vector_store %arg9[%c0_18, %c0_19, %c0_20, %c0_21], %72 {strides = array<i32>} : memref<1x8x16x4xf32, #tpu.memory_space<vmem>>, vector<1x8x16x4xf32>,
    return
  }
  func.func @transform_0(%arg0: i32, %arg1: i32) -> (i32, i32, i32, i32) {
    %c0_i32 = arith.constant 0 : i32
    %c0_i32_0 = arith.constant 0 : i32
    %c0_i32_1 = arith.constant 0 : i32
    %c0_i32_2 = arith.constant 0 : i32
    return %arg0, %c0_i32, %c0_i32_0, %c0_i32_1 : i32, i32, i32, i32
  }
  func.func @transform_1(%arg0: i32, %arg1: i32) -> (i32, i32) {
    %c0_i32 = arith.constant 0 : i32
    %c0_i32_0 = arith.constant 0 : i32
    %c0_i32_1 = arith.constant 0 : i32
    return %c0_i32, %c0_i32_0 : i32, i32
  }
  func.func @transform_2(%arg0: i32, %arg1: i32) -> (i32, i32) {
    %c0_i32 = arith.constant 0 : i32
    %c0_i32_0 = arith.constant 0 : i32
    %c0_i32_1 = arith.constant 0 : i32
    return %c0_i32, %c0_i32_0 : i32, i32
  }
  func.func @transform_3(%arg0: i32, %arg1: i32) -> (i32, i32, i32) {
    %c0_i32 = arith.constant 0 : i32
    %c0_i32_0 = arith.constant 0 : i32
    %c0_i32_1 = arith.constant 0 : i32
    %c0_i32_2 = arith.constant 0 : i32
    return %c0_i32, %c0_i32_0, %c0_i32_1 : i32, i32, i32
  }
  func.func @transform_4(%arg0: i32, %arg1: i32) -> (i32, i32) {
    %c0_i32 = arith.constant 0 : i32
    %c0_i32_0 = arith.constant 0 : i32
    %c0_i32_1 = arith.constant 0 : i32
    return %c0_i32, %c0_i32_0 : i32, i32
  }
  func.func @transform_5(%arg0: i32, %arg1: i32) -> (i32, i32) {
    %c0_i32 = arith.constant 0 : i32
    %c0_i32_0 = arith.constant 0 : i32
    %c0_i32_1 = arith.constant 0 : i32
    return %c0_i32, %c0_i32_0 : i32, i32
  }
  func.func @transform_6(%arg0: i32, %arg1: i32) -> (i32, i32) {
    %c0_i32 = arith.constant 0 : i32
    %c0_i32_0 = arith.constant 0 : i32
    %c0_i32_1 = arith.constant 0 : i32
    return %c0_i32, %c0_i32_0 : i32, i32
  }
  func.func @transform_7(%arg0: i32, %arg1: i32) -> (i32, i32, i32, i32) {
    %c0_i32 = arith.constant 0 : i32
    %c0_i32_0 = arith.constant 0 : i32
    %c0_i32_1 = arith.constant 0 : i32
    return %arg0, %arg1, %c0_i32, %c0_i32_0 : i32, i32, i32, i32
  }
}

</mosaic_0001>

<llo_original>
// kernel: _lambda_.1
$region0: #{_lambda_.1}
  #allocation0 [shape = 'u32[]', space=smem, size = 0x4, offset = 0x4, fixed_abs, tag = 'smem constant byte address 0x4 - core index']
  #allocation1 [shape = 'u32[144,128]{1,0:T(1,128)}', space=vmem, size = 0x12000, scoped, tag = 'internal scratch']
  #allocation2 [shape = 'f32[42,48,8]{2,1,0:T(8,128)}', space=vmem, size = 0xfc000, scoped, tag = 'scratch operand']
  %s0 = inlined_call_operand.vmem [shape: f32[2,16,16,4], index: 0, kind: input, shape index: {}]
  %s1 = inlined_call_operand.vmem [shape: f32[4,8], index: 1, kind: input, shape index: {}]
  %s2 = inlined_call_operand.vmem [shape: f32[1,8], index: 2, kind: input, shape index: {}]
  %s3 = inlined_call_operand.hbm [shape: f32[27,27,8], index: 3, kind: input, shape index: {}]
  %s4 = inlined_call_operand.vmem [shape: f32[1,8], index: 4, kind: input, shape index: {}]
  %s5 = inlined_call_operand.vmem [shape: f32[8,4], index: 5, kind: input, shape index: {}]
  %s6 = inlined_call_operand.vmem [shape: f32[1,4], index: 6, kind: input, shape index: {}]
  %s7 = inlined_call_operand.vmem [shape: f32[2,16,16,4], index: 7, kind: output, shape index: {}]
  %s8 = sld [smem:[#allocation0]]
  $region76: #{_lambda_.1} parent=0
    _
  %s10 = ssub.s32 1, %s8
  %s11 = scalar_select 0, %s10, %s8
  $region1: #{_lambda_.1} parent=0
    #allocation3 [shape = 'u8[442368]{0}', space=vmem, size = 0x6c000, scoped, tag = 'input window, operand 3, single buffered']
    #allocation4 [shape = 's32[2]{0}', space=sflag, size = 0x8, scoped, tag = 'scoped memory for _lambda_.1']
    %12 = vsyncpa [#allocation4], 0
    loop: start=0, step=1, limit=6
    $region2: #{_lambda_.1} parent=1 // loop_pre_header
      _
    $region3: #{_lambda_.1} parent=1 // loop_header
      %s14 = sphi 0, %s18
      %p15 = scmp.ge.s32.totalorder %s14, 6
      %s21 = sphi 0, %s33
      %s22 = sphi 0, %s29
      %s23 = sphi 0, %s21
      %s24 = sphi 0, %s22
      %s25 = sphi 0, %s23
      %s26 = sphi 0, %s24
      %s36 = sphi 0, %s38
      %s39 = sphi 0, %s36
      %s40 = sphi 0, %s39
      %s56 = sphi 0, %s40
      %s60 = sphi 0, %s60
      %s62 = sphi 0, %s60
      %s63 = sphi 0, %s62
      %s77 = sphi 0, %s63
      %s81 = sphi 0, %s81
      %s83 = sphi 0, %s81
      %s84 = sphi 0, %s83
      %s98 = sphi 0, %s84
      %s102 = sphi 0, %s102
      %s104 = sphi 0, %s102
      %s105 = sphi 0, %s104
      %s119 = sphi 0, %s105
      %s123 = sphi 0, %s123
      %s125 = sphi 0, %s123
      %s126 = sphi 0, %s125
      %s140 = sphi 0, %s126
      %s144 = sphi 0, %s144
      %s146 = sphi 0, %s144
      %s147 = sphi 0, %s146
      %s161 = sphi 0, %s147
      %s165 = sphi 0, %s165
      %s167 = sphi 0, %s165
      %s168 = sphi 0, %s167
      %s182 = sphi 0, %s168
      %s190 = sphi 0, %s192
      %s193 = sphi 0, %s190
      %s194 = sphi 0, %s193
      %s210 = sphi 0, %s194
    $region4: #{_lambda_.1} parent=1 // loop_header_branch
      %17 = sbr.rel (%p15) target = $region8
    $region5: #{_lambda_.1} parent=1 // loop_body
      %s19 = ssub.s32 %s14, 1
      %s20 = ssub.s32 %s14, 2
      %s27 = sadd.s32 1, %s22
      %p28 = scmp.ge.s32.totalorder %s27, 2
      %s29 = scalar_select %p28, 0, %s27
      %s30 = sadd.s32 1, %s21
      %s31 = scalar_select %p28, %s30, %s21
      %p32 = scmp.ge.s32.totalorder %s31, 2
      %s33 = scalar_select %p32, 0, %s31
      %s34 = ssub.s32 %s21, %s33
      %p35 = scmp.eq.s32.totalorder %s34, 0
      %s37 = sadd.s32 %s36, 1
      %s38 = scalar_select %p35, %s36, %s37
      %p41 = pneg %p35
      %p42 = scmp.eq.s32.totalorder %s14, 3
      %p43 = por %p41, %p42
      %p44 = scmp.ne.s32.totalorder %s36, %s39
      %p45 = scmp.eq.s32.totalorder %s14, 0
      %p46 = por %p44, %p45
      %p47 = scmp.ne.s32.totalorder %s36, %s39
      %p48 = scmp.eq.s32.totalorder %s19, 3
      %p49 = por %p47, %p48
      %p50 = scmp.ne.s32.totalorder %s39, %s40
      %p51 = scmp.eq.s32.totalorder %s19, 0
      %p52 = por %p50, %p51
      %p53 = scmp.ne.s32.totalorder %s39, %s40
      %p54 = scmp.eq.s32.totalorder %s20, 3
      %p55 = por %p53, %p54
      %p57 = scmp.ne.s32.totalorder %s40, %s56
      %p58 = scmp.eq.s32.totalorder %s20, 0
      %p59 = por %p57, %p58
      %s61 = sadd.s32 %s60, 1
      %p64 = scmp.eq.s32.totalorder %s14, 3
      %p65 = scmp.ne.s32.totalorder %s60, %s62
      %p66 = scmp.eq.s32.totalorder %s14, 0
      %p67 = por %p65, %p66
      %p68 = scmp.ne.s32.totalorder %s60, %s62
      %p69 = scmp.eq.s32.totalorder %s19, 3
      %p70 = por %p68, %p69
      %p71 = scmp.ne.s32.totalorder %s62, %s63
      %p72 = scmp.eq.s32.totalorder %s19, 0
      %p73 = por %p71, %p72
      %p74 = scmp.ne.s32.totalorder %s62, %s63
      %p75 = scmp.eq.s32.totalorder %s20, 3
      %p76 = por %p74, %p75
      %p78 = scmp.ne.s32.totalorder %s63, %s77
      %p79 = scmp.eq.s32.totalorder %s20, 0
      %p80 = por %p78, %p79
      %s82 = sadd.s32 %s81, 1
      %p85 = scmp.eq.s32.totalorder %s14, 3
      %p86 = scmp.ne.s32.totalorder %s81, %s83
      %p87 = scmp.eq.s32.totalorder %s14, 0
      %p88 = por %p86, %p87
      %p89 = scmp.ne.s32.totalorder %s81, %s83
      %p90 = scmp.eq.s32.totalorder %s19, 3
      %p91 = por %p89, %p90
      %p92 = scmp.ne.s32.totalorder %s83, %s84
      %p93 = scmp.eq.s32.totalorder %s19, 0
      %p94 = por %p92, %p93
      %p95 = scmp.ne.s32.totalorder %s83, %s84
      %p96 = scmp.eq.s32.totalorder %s20, 3
      %p97 = por %p95, %p96
      %p99 = scmp.ne.s32.totalorder %s84, %s98
      %p100 = scmp.eq.s32.totalorder %s20, 0
      %p101 = por %p99, %p100
      %s103 = sadd.s32 %s102, 1
      %p106 = scmp.eq.s32.totalorder %s14, 3
      %p107 = scmp.ne.s32.totalorder %s102, %s104
      %p108 = scmp.eq.s32.totalorder %s14, 0
      %p109 = por %p107, %p108
      %p110 = scmp.ne.s32.totalorder %s102, %s104
      %p111 = scmp.eq.s32.totalorder %s19, 3
      %p112 = por %p110, %p111
      %p113 = scmp.ne.s32.totalorder %s104, %s105
      %p114 = scmp.eq.s32.totalorder %s19, 0
      %p115 = por %p113, %p114
      %p116 = scmp.ne.s32.totalorder %s104, %s105
      %p117 = scmp.eq.s32.totalorder %s20, 3
      %p118 = por %p116, %p117
      %p120 = scmp.ne.s32.totalorder %s105, %s119
      %p121 = scmp.eq.s32.totalorder %s20, 0
      %p122 = por %p120, %p121
      %s124 = sadd.s32 %s123, 1
      %p127 = scmp.eq.s32.totalorder %s14, 3
      %p128 = scmp.ne.s32.totalorder %s123, %s125
      %p129 = scmp.eq.s32.totalorder %s14, 0
      %p130 = por %p128, %p129
      %p131 = scmp.ne.s32.totalorder %s123, %s125
      %p132 = scmp.eq.s32.totalorder %s19, 3
      %p133 = por %p131, %p132
      %p134 = scmp.ne.s32.totalorder %s125, %s126
      %p135 = scmp.eq.s32.totalorder %s19, 0
      %p136 = por %p134, %p135
      %p137 = scmp.ne.s32.totalorder %s125, %s126
      %p138 = scmp.eq.s32.totalorder %s20, 3
      %p139 = por %p137, %p138
      %p141 = scmp.ne.s32.totalorder %s126, %s140
      %p142 = scmp.eq.s32.totalorder %s20, 0
      %p143 = por %p141, %p142
      %s145 = sadd.s32 %s144, 1
      %p148 = scmp.eq.s32.totalorder %s14, 3
      %p149 = scmp.ne.s32.totalorder %s144, %s146
      %p150 = scmp.eq.s32.totalorder %s14, 0
      %p151 = por %p149, %p150
      %p152 = scmp.ne.s32.totalorder %s144, %s146
      %p153 = scmp.eq.s32.totalorder %s19, 3
      %p154 = por %p152, %p153
      %p155 = scmp.ne.s32.totalorder %s146, %s147
      %p156 = scmp.eq.s32.totalorder %s19, 0
      %p157 = por %p155, %p156
      %p158 = scmp.ne.s32.totalorder %s146, %s147
      %p159 = scmp.eq.s32.totalorder %s20, 3
      %p160 = por %p158, %p159
      %p162 = scmp.ne.s32.totalorder %s147, %s161
      %p163 = scmp.eq.s32.totalorder %s20, 0
      %p164 = por %p162, %p163
      %s166 = sadd.s32 %s165, 1
      %p169 = scmp.eq.s32.totalorder %s14, 3
      %p170 = scmp.ne.s32.totalorder %s165, %s167
      %p171 = scmp.eq.s32.totalorder %s14, 0
      %p172 = por %p170, %p171
      %p173 = scmp.ne.s32.totalorder %s165, %s167
      %p174 = scmp.eq.s32.totalorder %s19, 3
      %p175 = por %p173, %p174
      %p176 = scmp.ne.s32.totalorder %s167, %s168
      %p177 = scmp.eq.s32.totalorder %s19, 0
      %p178 = por %p176, %p177
      %p179 = scmp.ne.s32.totalorder %s167, %s168
      %p180 = scmp.eq.s32.totalorder %s20, 3
      %p181 = por %p179, %p180
      %p183 = scmp.ne.s32.totalorder %s168, %s182
      %p184 = scmp.eq.s32.totalorder %s20, 0
      %p185 = por %p183, %p184
      %s186 = ssub.s32 %s21, %s33
      %s187 = ssub.s32 %s22, %s29
      %s188 = sor.u32 %s186, %s187
      %p189 = scmp.eq.s32.totalorder %s188, 0
      %s191 = sadd.s32 %s190, 1
      %s192 = scalar_select %p189, %s190, %s191
      %p195 = pneg %p189
      %p196 = scmp.eq.s32.totalorder %s14, 3
      %p197 = por %p195, %p196
      %p198 = scmp.ne.s32.totalorder %s190, %s193
      %p199 = scmp.eq.s32.totalorder %s14, 0
      %p200 = por %p198, %p199
      %p201 = scmp.ne.s32.totalorder %s190, %s193
      %p202 = scmp.eq.s32.totalorder %s19, 3
      %p203 = por %p201, %p202
      %p204 = scmp.ne.s32.totalorder %s193, %s194
      %p205 = scmp.eq.s32.totalorder %s19, 0
      %p206 = por %p204, %p205
      %p207 = scmp.ne.s32.totalorder %s193, %s194
      %p208 = scmp.eq.s32.totalorder %s20, 3
      %p209 = por %p207, %p208
      %p211 = scmp.ne.s32.totalorder %s194, %s210
      %p212 = scmp.eq.s32.totalorder %s20, 0
      %p213 = por %p211, %p212
      %p214 = scmp.le.s32.totalorder 1, %s14
      %p215 = scmp.lt.s32.totalorder %s14, 5
      %p216 = pnand %p214, %p215
      %p217 = pneg %p216
      // Predicated region
      $region9: #{_lambda_.1} parent=5 // pred_check
        _
      $region10: #{_lambda_.1} parent=5 // pred_check_branch
        %219 = sbr.rel (%p216) target = $region12
      $region11: #{_lambda_.1} parent=5 // pred_region
        %s220 = ssub.s32 %s14, 1
        // Predicated region
        $region13: #{_lambda_.1} parent=11 // pred_check
          %p221 = pneg %p73
        $region14: #{_lambda_.1} parent=11 // pred_check_branch
          %223 = sbr.rel (%p221) target = $region16
        $region15: #{_lambda_.1} parent=11 // pred_region
          _
        $region16: #{_lambda_.1} parent=11 // pred_fallthru
          _
        // Predicated region
        $region17: #{_lambda_.1} parent=11 // pred_check
          %p224 = pneg %p94
        $region18: #{_lambda_.1} parent=11 // pred_check_branch
          %226 = sbr.rel (%p224) target = $region20
        $region19: #{_lambda_.1} parent=11 // pred_region
          _
        $region20: #{_lambda_.1} parent=11 // pred_fallthru
          _
        // Predicated region
        $region21: #{_lambda_.1} parent=11 // pred_check
          %p227 = pneg %p115
        $region22: #{_lambda_.1} parent=11 // pred_check_branch
          %229 = sbr.rel (%p227) target = $region24
        $region23: #{_lambda_.1} parent=11 // pred_region
          %s231 = ssub.s32 13824, 13824
          %232 = vsyncadd [#allocation4], %s231
          %s233 = sshll.u32 [#allocation3], 4
          %s234 = int_to_ptr.vmem [resolvable:$true] %s233
          %239 = dma.hbm_to_vmem [thread:$0]  %s3, 13824, %s234, [#allocation4], 128, 128, 8
        $region24: #{_lambda_.1} parent=11 // pred_fallthru
          _
        // Predicated region
        $region25: #{_lambda_.1} parent=11 // pred_check
          %p240 = pneg %p136
        $region26: #{_lambda_.1} parent=11 // pred_check_branch
          %242 = sbr.rel (%p240) target = $region28
        $region27: #{_lambda_.1} parent=11 // pred_region
          _
        $region28: #{_lambda_.1} parent=11 // pred_fallthru
          _
        // Predicated region
        $region29: #{_lambda_.1} parent=11 // pred_check
          %p243 = pneg %p157
        $region30: #{_lambda_.1} parent=11 // pred_check_branch
          %245 = sbr.rel (%p243) target = $region32
        $region31: #{_lambda_.1} parent=11 // pred_region
          _
        $region32: #{_lambda_.1} parent=11 // pred_fallthru
          _
        // Predicated region
        $region33: #{_lambda_.1} parent=11 // pred_check
          %p246 = pneg %p178
        $region34: #{_lambda_.1} parent=11 // pred_check_branch
          %248 = sbr.rel (%p246) target = $region36
        $region35: #{_lambda_.1} parent=11 // pred_region
          _
        $region36: #{_lambda_.1} parent=11 // pred_fallthru
          _
      $region12: #{_lambda_.1} parent=5 // pred_fallthru
        _
      %p249 = scmp.lt.s32.totalorder %s14, 4
      // Predicated region
      $region37: #{_lambda_.1} parent=5 // pred_check
        %p250 = pneg %p249
      $region38: #{_lambda_.1} parent=5 // pred_check_branch
        %252 = sbr.rel (%p250) target = $region40
      $region39: #{_lambda_.1} parent=5 // pred_region
        // Predicated region
        $region41: #{_lambda_.1} parent=39 // pred_check
          %p253 = pneg %p46
        $region42: #{_lambda_.1} parent=39 // pred_check_branch
          %255 = sbr.rel (%p253) target = $region44
        $region43: #{_lambda_.1} parent=39 // pred_region
          %p256 = scmp.lt.s32.totalorder %s21, 1
          %s257 = scalar_select %p256, %s21, 1
          %s258 = smul.addr %s257, 32
          %s259 = smul.addr %s258, 8
          %s260 = scalar_lea.vmem %s0, %s259
        $region44: #{_lambda_.1} parent=39 // pred_fallthru
          _
      $region40: #{_lambda_.1} parent=5 // pred_fallthru
        _
      %p261 = scmp.le.s32.totalorder 1, %s14
      %p262 = scmp.lt.s32.totalorder %s14, 5
      %p263 = pnand %p261, %p262
      %p264 = pneg %p263
      // Predicated region
      $region45: #{_lambda_.1} parent=5 // pred_check
        _
      $region46: #{_lambda_.1} parent=5 // pred_check_branch
        %266 = sbr.rel (%p263) target = $region48
      $region47: #{_lambda_.1} parent=5 // pred_region
        %s267 = ssub.s32 %s14, 1
        // Predicated region
        $region49: #{_lambda_.1} parent=47 // pred_check
          %p268 = pneg %p115
        $region50: #{_lambda_.1} parent=47 // pred_check_branch
          %270 = sbr.rel (%p268) target = $region52
        $region51: #{_lambda_.1} parent=47 // pred_region
          %271 = dma.done [#allocation4], 13824
        $region52: #{_lambda_.1} parent=47 // pred_fallthru
          _
        %p272 = scmp.lt.s32.totalorder %s23, 1
        %s273 = scalar_select %p272, %s23, 1
        %s274 = smul.addr %s273, 32
        %s275 = smul.addr %s274, 8
        %s276 = scalar_lea.vmem %s0, %s275
        %p277 = pneg %p52
        %p278 = pneg %p49
        %p279 = pneg %p73
        %p280 = pneg %p70
        %p281 = pneg %p94
        %p282 = pneg %p91
        %p283 = pneg %p115
        %p284 = pneg %p112
        %p285 = pneg %p136
        %p286 = pneg %p133
        %p287 = pneg %p157
        %p288 = pneg %p154
        %p289 = pneg %p178
        %p290 = pneg %p175
        %p291 = pneg %p206
        %p292 = pneg %p203
        %s293 = smul.u32 8, %s24
        %p294 = scmp.lt.s32.totalorder %s23, 1
        %s295 = scalar_select %p294, %s23, 1
        %p296 = scmp.lt.s32.totalorder %s293, 15
        %s297 = scalar_select %p296, %s293, 15
        %s298 = smul.addr %s297, 2
        %s299 = smul.addr %s295, 32
        %s300 = sadd.s32 %s298, %s299
        %s301 = smul.addr %s300, 8
        %s302 = scalar_lea.vmem %s7, %s301
        %p303 = scmp.lt.s32.totalorder %s23, 1
        %s304 = scalar_select %p303, %s23, 1
        %s305 = smul.addr %s304, 32
        %s306 = smul.addr %s305, 8
        %s307 = scalar_lea.vmem %s0, %s306
        %s308 = smul.u32 8, %s24
        %p309 = scmp.lt.s32.totalorder %s23, 1
        %s310 = scalar_select %p309, %s23, 1
        %p311 = scmp.lt.s32.totalorder %s308, 15
        %s312 = scalar_select %p311, %s308, 15
        %s313 = smul.addr %s312, 2
        %s314 = smul.addr %s310, 32
        %s315 = sadd.s32 %s313, %s314
        %s316 = smul.addr %s315, 8
        %s317 = scalar_lea.vmem %s7, %s316
        %s318 = smul.u32 8, %s24
        %p319 = scmp.eq.s32.totalorder %s24, 0
        // Predicated region
        $region53: #{_lambda_.1} parent=47 // pred_check
          %p320 = pneg %p319
        $region54: #{_lambda_.1} parent=47 // pred_check_branch
          %322 = sbr.rel (%p320) target = $region56
        $region55: #{_lambda_.1} parent=47 // pred_region
          %vm323 = vcmask 64512
          %324 = vst.msk [vmem:[#allocation2] sm:$0xff] %vm323, 0.0
          %325 = vst.msk [vmem:[#allocation2 + $0x8] sm:$0xff] %vm323, 0.0
          %326 = vst.msk [vmem:[#allocation2 + $0x10] sm:$0xff] %vm323, 0.0
          %327 = vst.msk [vmem:[#allocation2 + $0x18] sm:$0xff] %vm323, 0.0
          %328 = vst.msk [vmem:[#allocation2 + $0x20] sm:$0xff] %vm323, 0.0
          %329 = vst.msk [vmem:[#allocation2 + $0x28] sm:$0xff] %vm323, 0.0
          %330 = vst.msk [vmem:[#allocation2 + $0x30] sm:$0xff] %vm323, 0.0
          %331 = vst.msk [vmem:[#allocation2 + $0x38] sm:$0xff] %vm323, 0.0
          %332 = vst.msk [vmem:[#allocation2 + $0x40] sm:$0xff] %vm323, 0.0
          %333 = vst.msk [vmem:[#allocation2 + $0x48] sm:$0xff] %vm323, 0.0
          %334 = vst.msk [vmem:[#allocation2 + $0x50] sm:$0xff] %vm323, 0.0
          %335 = vst.msk [vmem:[#allocation2 + $0x58] sm:$0xff] %vm323, 0.0
          %336 = vst.msk [vmem:[#allocation2 + $0x60] sm:$0xff] %vm323, 0.0
          %337 = vst.msk [vmem:[#allocation2 + $0x68] sm:$0xff] %vm323, 0.0
          %338 = vst.msk [vmem:[#allocation2 + $0x70] sm:$0xff] %vm323, 0.0
          %339 = vst.msk [vmem:[#allocation2 + $0x78] sm:$0xff] %vm323, 0.0
          %340 = vst.msk [vmem:[#allocation2 + $0x80] sm:$0xff] %vm323, 0.0
          %341 = vst.msk [vmem:[#allocation2 + $0x88] sm:$0xff] %vm323, 0.0
          %342 = vst.msk [vmem:[#allocation2 + $0x90] sm:$0xff] %vm323, 0.0
          %343 = vst.msk [vmem:[#allocation2 + $0x98] sm:$0xff] %vm323, 0.0
          %344 = vst.msk [vmem:[#allocation2 + $0xa0] sm:$0xff] %vm323, 0.0
          %345 = vst.msk [vmem:[#allocation2 + $0xa8] sm:$0xff] %vm323, 0.0
          %346 = vst.msk [vmem:[#allocation2 + $0xb0] sm:$0xff] %vm323, 0.0
          %347 = vst.msk [vmem:[#allocation2 + $0xb8] sm:$0xff] %vm323, 0.0
          %348 = vst.msk [vmem:[#allocation2 + $0xc0] sm:$0xff] %vm323, 0.0
          %349 = vst.msk [vmem:[#allocation2 + $0xc8] sm:$0xff] %vm323, 0.0
          %350 = vst.msk [vmem:[#allocation2 + $0xd0] sm:$0xff] %vm323, 0.0
          %351 = vst.msk [vmem:[#allocation2 + $0xd8] sm:$0xff] %vm323, 0.0
          %352 = vst.msk [vmem:[#allocation2 + $0xe0] sm:$0xff] %vm323, 0.0
          %353 = vst.msk [vmem:[#allocation2 + $0xe8] sm:$0xff] %vm323, 0.0
          %354 = vst.msk [vmem:[#allocation2 + $0xf0] sm:$0xff] %vm323, 0.0
          %355 = vst.msk [vmem:[#allocation2 + $0xf8] sm:$0xff] %vm323, 0.0
          %356 = vst.msk [vmem:[#allocation2 + $0x100] sm:$0xff] %vm323, 0.0
          %357 = vst.msk [vmem:[#allocation2 + $0x108] sm:$0xff] %vm323, 0.0
          %358 = vst.msk [vmem:[#allocation2 + $0x110] sm:$0xff] %vm323, 0.0
          %359 = vst.msk [vmem:[#allocation2 + $0x118] sm:$0xff] %vm323, 0.0
          %360 = vst.msk [vmem:[#allocation2 + $0x120] sm:$0xff] %vm323, 0.0
          %361 = vst.msk [vmem:[#allocation2 + $0x128] sm:$0xff] %vm323, 0.0
          %362 = vst.msk [vmem:[#allocation2 + $0x130] sm:$0xff] %vm323, 0.0
          %363 = vst.msk [vmem:[#allocation2 + $0x138] sm:$0xff] %vm323, 0.0
          %364 = vst.msk [vmem:[#allocation2 + $0x140] sm:$0xff] %vm323, 0.0
          %365 = vst.msk [vmem:[#allocation2 + $0x148] sm:$0xff] %vm323, 0.0
          %366 = vst.msk [vmem:[#allocation2 + $0x150] sm:$0xff] %vm323, 0.0
          %367 = vst.msk [vmem:[#allocation2 + $0x158] sm:$0xff] %vm323, 0.0
          %368 = vst.msk [vmem:[#allocation2 + $0x160] sm:$0xff] %vm323, 0.0
          %369 = vst.msk [vmem:[#allocation2 + $0x168] sm:$0xff] %vm323, 0.0
          %370 = vst.msk [vmem:[#allocation2 + $0x170] sm:$0xff] %vm323, 0.0
          %371 = vst.msk [vmem:[#allocation2 + $0x178] sm:$0xff] %vm323, 0.0
          %372 = vst.msk [vmem:[#allocation2 + $0x180] sm:$0xff] %vm323, 0.0
          %373 = vst.msk [vmem:[#allocation2 + $0x188] sm:$0xff] %vm323, 0.0
          %374 = vst.msk [vmem:[#allocation2 + $0x190] sm:$0xff] %vm323, 0.0
          %375 = vst.msk [vmem:[#allocation2 + $0x198] sm:$0xff] %vm323, 0.0
          %376 = vst.msk [vmem:[#allocation2 + $0x1a0] sm:$0xff] %vm323, 0.0
          %377 = vst.msk [vmem:[#allocation2 + $0x1a8] sm:$0xff] %vm323, 0.0
          %378 = vst.msk [vmem:[#allocation2 + $0x1b0] sm:$0xff] %vm323, 0.0
          %379 = vst.msk [vmem:[#allocation2 + $0x1b8] sm:$0xff] %vm323, 0.0
          %380 = vst.msk [vmem:[#allocation2 + $0x1c0] sm:$0xff] %vm323, 0.0
          %381 = vst.msk [vmem:[#allocation2 + $0x1c8] sm:$0xff] %vm323, 0.0
          %382 = vst.msk [vmem:[#allocation2 + $0x1d0] sm:$0xff] %vm323, 0.0
          %383 = vst.msk [vmem:[#allocation2 + $0x1d8] sm:$0xff] %vm323, 0.0
          %384 = vst.msk [vmem:[#allocation2 + $0x1e0] sm:$0xff] %vm323, 0.0
          %385 = vst.msk [vmem:[#allocation2 + $0x1e8] sm:$0xff] %vm323, 0.0
          %386 = vst.msk [vmem:[#allocation2 + $0x1f0] sm:$0xff] %vm323, 0.0
          %387 = vst.msk [vmem:[#allocation2 + $0x1f8] sm:$0xff] %vm323, 0.0
          %388 = vst.msk [vmem:[#allocation2 + $0x200] sm:$0xff] %vm323, 0.0
          %389 = vst.msk [vmem:[#allocation2 + $0x208] sm:$0xff] %vm323, 0.0
          %390 = vst.msk [vmem:[#allocation2 + $0x210] sm:$0xff] %vm323, 0.0
          %391 = vst.msk [vmem:[#allocation2 + $0x218] sm:$0xff] %vm323, 0.0
          %392 = vst.msk [vmem:[#allocation2 + $0x220] sm:$0xff] %vm323, 0.0
          %393 = vst.msk [vmem:[#allocation2 + $0x228] sm:$0xff] %vm323, 0.0
          %394 = vst.msk [vmem:[#allocation2 + $0x230] sm:$0xff] %vm323, 0.0
          %395 = vst.msk [vmem:[#allocation2 + $0x238] sm:$0xff] %vm323, 0.0
          %396 = vst.msk [vmem:[#allocation2 + $0x240] sm:$0xff] %vm323, 0.0
          %397 = vst.msk [vmem:[#allocation2 + $0x248] sm:$0xff] %vm323, 0.0
          %398 = vst.msk [vmem:[#allocation2 + $0x250] sm:$0xff] %vm323, 0.0
          %399 = vst.msk [vmem:[#allocation2 + $0x258] sm:$0xff] %vm323, 0.0
          %400 = vst.msk [vmem:[#allocation2 + $0x260] sm:$0xff] %vm323, 0.0
          %401 = vst.msk [vmem:[#allocation2 + $0x268] sm:$0xff] %vm323, 0.0
          %s402 = scalar_lea.vmem [#allocation2], 1392
          %403 = vst.msk [vmem:[%s402] sm:$0xff] %vm323, 0.0
          %404 = vst.msk [vmem:[%s402 + $0x8] sm:$0xff] %vm323, 0.0
          %405 = vst.msk [vmem:[%s402 + $0x10] sm:$0xff] %vm323, 0.0
          %406 = vst.msk [vmem:[%s402 + $0x18] sm:$0xff] %vm323, 0.0
          %407 = vst.msk [vmem:[%s402 + $0x20] sm:$0xff] %vm323, 0.0
          %408 = vst.msk [vmem:[%s402 + $0x28] sm:$0xff] %vm323, 0.0
          %409 = vst.msk [vmem:[%s402 + $0x30] sm:$0xff] %vm323, 0.0
          %410 = vst.msk [vmem:[%s402 + $0x38] sm:$0xff] %vm323, 0.0
          %411 = vst.msk [vmem:[%s402 + $0x40] sm:$0xff] %vm323, 0.0
          %412 = vst.msk [vmem:[%s402 + $0x48] sm:$0xff] %vm323, 0.0
          %413 = vst.msk [vmem:[%s402 + $0x50] sm:$0xff] %vm323, 0.0
          %414 = vst.msk [vmem:[%s402 + $0x58] sm:$0xff] %vm323, 0.0
          %415 = vst.msk [vmem:[%s402 + $0x60] sm:$0xff] %vm323, 0.0
          %416 = vst.msk [vmem:[%s402 + $0x68] sm:$0xff] %vm323, 0.0
          %417 = vst.msk [vmem:[%s402 + $0x70] sm:$0xff] %vm323, 0.0
          %418 = vst.msk [vmem:[%s402 + $0x78] sm:$0xff] %vm323, 0.0
          %419 = vst.msk [vmem:[%s402 + $0x80] sm:$0xff] %vm323, 0.0
          %420 = vst.msk [vmem:[%s402 + $0x88] sm:$0xff] %vm323, 0.0
          %421 = vst.msk [vmem:[%s402 + $0x90] sm:$0xff] %vm323, 0.0
          %422 = vst.msk [vmem:[%s402 + $0x98] sm:$0xff] %vm323, 0.0
          %423 = vst.msk [vmem:[%s402 + $0xa0] sm:$0xff] %vm323, 0.0
          %424 = vst.msk [vmem:[%s402 + $0xa8] sm:$0xff] %vm323, 0.0
          %425 = vst.msk [vmem:[%s402 + $0xb0] sm:$0xff] %vm323, 0.0
          %426 = vst.msk [vmem:[%s402 + $0xb8] sm:$0xff] %vm323, 0.0
          %427 = vst.msk [vmem:[%s402 + $0xc0] sm:$0xff] %vm323, 0.0
          %428 = vst.msk [vmem:[%s402 + $0xc8] sm:$0xff] %vm323, 0.0
          %429 = vst.msk [vmem:[%s402 + $0xd0] sm:$0xff] %vm323, 0.0
          %430 = vst.msk [vmem:[%s402 + $0xd8] sm:$0xff] %vm323, 0.0
          %431 = vst.msk [vmem:[%s402 + $0xe0] sm:$0xff] %vm323, 0.0
          %432 = vst.msk [vmem:[%s402 + $0xe8] sm:$0xff] %vm323, 0.0
          %433 = vst.msk [vmem:[%s402 + $0xf0] sm:$0xff] %vm323, 0.0
          %434 = vst.msk [vmem:[%s402 + $0xf8] sm:$0xff] %vm323, 0.0
          %435 = vst.msk [vmem:[%s402 + $0x100] sm:$0xff] %vm323, 0.0
          %436 = vst.msk [vmem:[%s402 + $0x108] sm:$0xff] %vm323, 0.0
          %437 = vst.msk [vmem:[%s402 + $0x110] sm:$0xff] %vm323, 0.0
          %438 = vst.msk [vmem:[%s402 + $0x118] sm:$0xff] %vm323, 0.0
          %439 = vst.msk [vmem:[%s402 + $0x120] sm:$0xff] %vm323, 0.0
          %440 = vst.msk [vmem:[%s402 + $0x128] sm:$0xff] %vm323, 0.0
          %441 = vst.msk [vmem:[%s402 + $0x130] sm:$0xff] %vm323, 0.0
          %442 = vst.msk [vmem:[%s402 + $0x138] sm:$0xff] %vm323, 0.0
          %443 = vst.msk [vmem:[%s402 + $0x140] sm:$0xff] %vm323, 0.0
          %444 = vst.msk [vmem:[%s402 + $0x148] sm:$0xff] %vm323, 0.0
          %445 = vst.msk [vmem:[%s402 + $0x150] sm:$0xff] %vm323, 0.0
          %446 = vst.msk [vmem:[%s402 + $0x158] sm:$0xff] %vm323, 0.0
          %447 = vst.msk [vmem:[%s402 + $0x160] sm:$0xff] %vm323, 0.0
          %448 = vst.msk [vmem:[%s402 + $0x168] sm:$0xff] %vm323, 0.0
          %449 = vst.msk [vmem:[%s402 + $0x170] sm:$0xff] %vm323, 0.0
          %450 = vst.msk [vmem:[%s402 + $0x178] sm:$0xff] %vm323, 0.0
          %451 = vst.msk [vmem:[%s402 + $0x180] sm:$0xff] %vm323, 0.0
          %452 = vst.msk [vmem:[%s402 + $0x188] sm:$0xff] %vm323, 0.0
          %453 = vst.msk [vmem:[%s402 + $0x190] sm:$0xff] %vm323, 0.0
          %454 = vst.msk [vmem:[%s402 + $0x198] sm:$0xff] %vm323, 0.0
          %455 = vst.msk [vmem:[%s402 + $0x1a0] sm:$0xff] %vm323, 0.0
          %456 = vst.msk [vmem:[%s402 + $0x1a8] sm:$0xff] %vm323, 0.0
          %457 = vst.msk [vmem:[%s402 + $0x1b0] sm:$0xff] %vm323, 0.0
          %458 = vst.msk [vmem:[%s402 + $0x1b8] sm:$0xff] %vm323, 0.0
          %459 = vst.msk [vmem:[%s402 + $0x1c0] sm:$0xff] %vm323, 0.0
          %460 = vst.msk [vmem:[%s402 + $0x1c8] sm:$0xff] %vm323, 0.0
          %461 = vst.msk [vmem:[%s402 + $0x1d0] sm:$0xff] %vm323, 0.0
          %462 = vst.msk [vmem:[%s402 + $0x1d8] sm:$0xff] %vm323, 0.0
          %463 = vst.msk [vmem:[%s402 + $0x1e0] sm:$0xff] %vm323, 0.0
          %464 = vst.msk [vmem:[%s402 + $0x1e8] sm:$0xff] %vm323, 0.0
          %465 = vst.msk [vmem:[%s402 + $0x1f0] sm:$0xff] %vm323, 0.0
          %466 = vst.msk [vmem:[%s402 + $0x1f8] sm:$0xff] %vm323, 0.0
          %467 = vst.msk [vmem:[%s402 + $0x200] sm:$0xff] %vm323, 0.0
          %468 = vst.msk [vmem:[%s402 + $0x208] sm:$0xff] %vm323, 0.0
          %469 = vst.msk [vmem:[%s402 + $0x210] sm:$0xff] %vm323, 0.0
          %470 = vst.msk [vmem:[%s402 + $0x218] sm:$0xff] %vm323, 0.0
          %471 = vst.msk [vmem:[%s402 + $0x220] sm:$0xff] %vm323, 0.0
          %472 = vst.msk [vmem:[%s402 + $0x228] sm:$0xff] %vm323, 0.0
          %473 = vst.msk [vmem:[%s402 + $0x230] sm:$0xff] %vm323, 0.0
          %474 = vst.msk [vmem:[%s402 + $0x238] sm:$0xff] %vm323, 0.0
          %475 = vst.msk [vmem:[%s402 + $0x240] sm:$0xff] %vm323, 0.0
          %476 = vst.msk [vmem:[%s402 + $0x248] sm:$0xff] %vm323, 0.0
          %477 = vst.msk [vmem:[%s402 + $0x250] sm:$0xff] %vm323, 0.0
          %478 = vst.msk [vmem:[%s402 + $0x258] sm:$0xff] %vm323, 0.0
          %479 = vst.msk [vmem:[%s402 + $0x260] sm:$0xff] %vm323, 0.0
          %480 = vst.msk [vmem:[%s402 + $0x268] sm:$0xff] %vm323, 0.0
          %s481 = scalar_lea.vmem [#allocation2], 624
          %482 = vst.msk [vmem:[%s481] sm:$0xff] %vm323, 0.0
          %483 = vst.msk [vmem:[%s481 + $0x8] sm:$0xff] %vm323, 0.0
          %484 = vst.msk [vmem:[%s481 + $0x30] sm:$0xff] %vm323, 0.0
          %485 = vst.msk [vmem:[%s481 + $0x38] sm:$0xff] %vm323, 0.0
          %486 = vst.msk [vmem:[%s481 + $0x60] sm:$0xff] %vm323, 0.0
          %487 = vst.msk [vmem:[%s481 + $0x68] sm:$0xff] %vm323, 0.0
          %488 = vst.msk [vmem:[%s481 + $0x90] sm:$0xff] %vm323, 0.0
          %489 = vst.msk [vmem:[%s481 + $0x98] sm:$0xff] %vm323, 0.0
          %490 = vst.msk [vmem:[%s481 + $0xc0] sm:$0xff] %vm323, 0.0
          %491 = vst.msk [vmem:[%s481 + $0xc8] sm:$0xff] %vm323, 0.0
          %492 = vst.msk [vmem:[%s481 + $0xf0] sm:$0xff] %vm323, 0.0
          %493 = vst.msk [vmem:[%s481 + $0xf8] sm:$0xff] %vm323, 0.0
          %494 = vst.msk [vmem:[%s481 + $0x120] sm:$0xff] %vm323, 0.0
          %495 = vst.msk [vmem:[%s481 + $0x128] sm:$0xff] %vm323, 0.0
          %496 = vst.msk [vmem:[%s481 + $0x150] sm:$0xff] %vm323, 0.0
          %497 = vst.msk [vmem:[%s481 + $0x158] sm:$0xff] %vm323, 0.0
          %498 = vst.msk [vmem:[%s481 + $0x180] sm:$0xff] %vm323, 0.0
          %499 = vst.msk [vmem:[%s481 + $0x188] sm:$0xff] %vm323, 0.0
          %500 = vst.msk [vmem:[%s481 + $0x1b0] sm:$0xff] %vm323, 0.0
          %501 = vst.msk [vmem:[%s481 + $0x1b8] sm:$0xff] %vm323, 0.0
          %502 = vst.msk [vmem:[%s481 + $0x1e0] sm:$0xff] %vm323, 0.0
          %503 = vst.msk [vmem:[%s481 + $0x1e8] sm:$0xff] %vm323, 0.0
          %504 = vst.msk [vmem:[%s481 + $0x210] sm:$0xff] %vm323, 0.0
          %505 = vst.msk [vmem:[%s481 + $0x218] sm:$0xff] %vm323, 0.0
          %506 = vst.msk [vmem:[%s481 + $0x240] sm:$0xff] %vm323, 0.0
          %507 = vst.msk [vmem:[%s481 + $0x248] sm:$0xff] %vm323, 0.0
          %508 = vst.msk [vmem:[%s481 + $0x270] sm:$0xff] %vm323, 0.0
          %509 = vst.msk [vmem:[%s481 + $0x278] sm:$0xff] %vm323, 0.0
          %510 = vst.msk [vmem:[%s481 + $0x2a0] sm:$0xff] %vm323, 0.0
          %511 = vst.msk [vmem:[%s481 + $0x2a8] sm:$0xff] %vm323, 0.0
          %512 = vst.msk [vmem:[%s481 + $0x2d0] sm:$0xff] %vm323, 0.0
          %513 = vst.msk [vmem:[%s481 + $0x2d8] sm:$0xff] %vm323, 0.0
          %514 = vst.msk [vmem:[%s481 + $0x20] sm:$0xff] %vm323, 0.0
          %515 = vst.msk [vmem:[%s481 + $0x28] sm:$0xff] %vm323, 0.0
          %516 = vst.msk [vmem:[%s481 + $0x50] sm:$0xff] %vm323, 0.0
          %517 = vst.msk [vmem:[%s481 + $0x58] sm:$0xff] %vm323, 0.0
          %518 = vst.msk [vmem:[%s481 + $0x80] sm:$0xff] %vm323, 0.0
          %519 = vst.msk [vmem:[%s481 + $0x88] sm:$0xff] %vm323, 0.0
          %520 = vst.msk [vmem:[%s481 + $0xb0] sm:$0xff] %vm323, 0.0
          %521 = vst.msk [vmem:[%s481 + $0xb8] sm:$0xff] %vm323, 0.0
          %522 = vst.msk [vmem:[%s481 + $0xe0] sm:$0xff] %vm323, 0.0
          %523 = vst.msk [vmem:[%s481 + $0xe8] sm:$0xff] %vm323, 0.0
          %524 = vst.msk [vmem:[%s481 + $0x110] sm:$0xff] %vm323, 0.0
          %525 = vst.msk [vmem:[%s481 + $0x118] sm:$0xff] %vm323, 0.0
          %526 = vst.msk [vmem:[%s481 + $0x140] sm:$0xff] %vm323, 0.0
          %527 = vst.msk [vmem:[%s481 + $0x148] sm:$0xff] %vm323, 0.0
          %528 = vst.msk [vmem:[%s481 + $0x170] sm:$0xff] %vm323, 0.0
          %529 = vst.msk [vmem:[%s481 + $0x178] sm:$0xff] %vm323, 0.0
          %530 = vst.msk [vmem:[%s481 + $0x1a0] sm:$0xff] %vm323, 0.0
          %531 = vst.msk [vmem:[%s481 + $0x1a8] sm:$0xff] %vm323, 0.0
          %532 = vst.msk [vmem:[%s481 + $0x1d0] sm:$0xff] %vm323, 0.0
          %533 = vst.msk [vmem:[%s481 + $0x1d8] sm:$0xff] %vm323, 0.0
          %534 = vst.msk [vmem:[%s481 + $0x200] sm:$0xff] %vm323, 0.0
          %535 = vst.msk [vmem:[%s481 + $0x208] sm:$0xff] %vm323, 0.0
          %536 = vst.msk [vmem:[%s481 + $0x230] sm:$0xff] %vm323, 0.0
          %537 = vst.msk [vmem:[%s481 + $0x238] sm:$0xff] %vm323, 0.0
          %538 = vst.msk [vmem:[%s481 + $0x260] sm:$0xff] %vm323, 0.0
          %539 = vst.msk [vmem:[%s481 + $0x268] sm:$0xff] %vm323, 0.0
          %540 = vst.msk [vmem:[%s481 + $0x290] sm:$0xff] %vm323, 0.0
          %541 = vst.msk [vmem:[%s481 + $0x298] sm:$0xff] %vm323, 0.0
          %542 = vst.msk [vmem:[%s481 + $0x2c0] sm:$0xff] %vm323, 0.0
          %543 = vst.msk [vmem:[%s481 + $0x2c8] sm:$0xff] %vm323, 0.0
          %544 = vst.msk [vmem:[%s481 + $0x2f0] sm:$0xff] %vm323, 0.0
          %545 = vst.msk [vmem:[%s481 + $0x2f8] sm:$0xff] %vm323, 0.0
          %v546 = vld [vmem:[%s307] sm:$0xff]
          %v547 = vld [vmem:[%s307 + $0x8] sm:$0xff]
          %v548 = vld [vmem:[%s307 + $0x10] sm:$0xff]
          %v549 = vld [vmem:[%s307 + $0x18] sm:$0xff]
          %v550 = vld [vmem:[%s307 + $0x20] sm:$0xff]
          %v551 = vld [vmem:[%s307 + $0x28] sm:$0xff]
          %v552 = vld [vmem:[%s307 + $0x30] sm:$0xff]
          %v553 = vld [vmem:[%s307 + $0x38] sm:$0xff]
          %v554 = vld [vmem:[%s307 + $0x40] sm:$0xff]
          %v555 = vld [vmem:[%s307 + $0x48] sm:$0xff]
          %v556 = vld [vmem:[%s307 + $0x50] sm:$0xff]
          %v557 = vld [vmem:[%s307 + $0x58] sm:$0xff]
          %v558 = vld [vmem:[%s307 + $0x60] sm:$0xff]
          %v559 = vld [vmem:[%s307 + $0x68] sm:$0xff]
          %v560 = vld [vmem:[%s307 + $0x70] sm:$0xff]
          %v561 = vld [vmem:[%s307 + $0x78] sm:$0xff]
          %v562 = vld [vmem:[%s307 + $0x80] sm:$0xff]
          %v563 = vld [vmem:[%s307 + $0x88] sm:$0xff]
          %v564 = vld [vmem:[%s307 + $0x90] sm:$0xff]
          %v565 = vld [vmem:[%s307 + $0x98] sm:$0xff]
          %v566 = vld [vmem:[%s307 + $0xa0] sm:$0xff]
          %v567 = vld [vmem:[%s307 + $0xa8] sm:$0xff]
          %v568 = vld [vmem:[%s307 + $0xb0] sm:$0xff]
          %v569 = vld [vmem:[%s307 + $0xb8] sm:$0xff]
          %v570 = vld [vmem:[%s307 + $0xc0] sm:$0xff]
          %v571 = vld [vmem:[%s307 + $0xc8] sm:$0xff]
          %v572 = vld [vmem:[%s307 + $0xd0] sm:$0xff]
          %v573 = vld [vmem:[%s307 + $0xd8] sm:$0xff]
          %v574 = vld [vmem:[%s307 + $0xe0] sm:$0xff]
          %v575 = vld [vmem:[%s307 + $0xe8] sm:$0xff]
          %v576 = vld [vmem:[%s307 + $0xf0] sm:$0xff]
          %v577 = vld [vmem:[%s307 + $0xf8] sm:$0xff]
          %v578 = vld [vmem:[%s2] sm:$0x1]
          %v580 = vlaneseq
          %v581 = vshrl.u32 %v580, 7
          %v582 = vsub.s32 0, %v581
          %v583 = vrot.slane %v578, %v582
          %v585 = vld [vmem:[%s1] sm:$0x1]
          %587 = vset.pattern.permute.xlu0 0
          %588 = vperm.xlu0 %587, %v546
          %v589 = vpop.permute.xlu0 %588
          %592 = vset.pattern.permute.xlu0 0
          %593 = vperm.xlu0 %592, %v547
          %v594 = vpop.permute.xlu0 %593
          %597 = vset.pattern.permute.xlu0 0
          %598 = vperm.xlu0 %597, %v548
          %v599 = vpop.permute.xlu0 %598
          %602 = vset.pattern.permute.xlu0 0
          %603 = vperm.xlu0 %602, %v549
          %v604 = vpop.permute.xlu0 %603
          %607 = vset.pattern.permute.xlu0 0
          %608 = vperm.xlu0 %607, %v550
          %v609 = vpop.permute.xlu0 %608
          %612 = vset.pattern.permute.xlu0 0
          %613 = vperm.xlu0 %612, %v551
          %v614 = vpop.permute.xlu0 %613
          %617 = vset.pattern.permute.xlu0 0
          %618 = vperm.xlu0 %617, %v552
          %v619 = vpop.permute.xlu0 %618
          %622 = vset.pattern.permute.xlu0 0
          %623 = vperm.xlu0 %622, %v553
          %v624 = vpop.permute.xlu0 %623
          %627 = vset.pattern.permute.xlu0 0
          %628 = vperm.xlu0 %627, %v554
          %v629 = vpop.permute.xlu0 %628
          %632 = vset.pattern.permute.xlu0 0
          %633 = vperm.xlu0 %632, %v555
          %v634 = vpop.permute.xlu0 %633
          %637 = vset.pattern.permute.xlu0 0
          %638 = vperm.xlu0 %637, %v556
          %v639 = vpop.permute.xlu0 %638
          %642 = vset.pattern.permute.xlu0 0
          %643 = vperm.xlu0 %642, %v557
          %v644 = vpop.permute.xlu0 %643
          %647 = vset.pattern.permute.xlu0 0
          %648 = vperm.xlu0 %647, %v558
          %v649 = vpop.permute.xlu0 %648
          %652 = vset.pattern.permute.xlu0 0
          %653 = vperm.xlu0 %652, %v559
          %v654 = vpop.permute.xlu0 %653
          %657 = vset.pattern.permute.xlu0 0
          %658 = vperm.xlu0 %657, %v560
          %v659 = vpop.permute.xlu0 %658
          %662 = vset.pattern.permute.xlu0 0
          %663 = vperm.xlu0 %662, %v561
          %v664 = vpop.permute.xlu0 %663
          %667 = vset.pattern.permute.xlu0 0
          %668 = vperm.xlu0 %667, %v562
          %v669 = vpop.permute.xlu0 %668
          %672 = vset.pattern.permute.xlu0 0
          %673 = vperm.xlu0 %672, %v563
          %v674 = vpop.permute.xlu0 %673
          %677 = vset.pattern.permute.xlu0 0
          %678 = vperm.xlu0 %677, %v564
          %v679 = vpop.permute.xlu0 %678
          %682 = vset.pattern.permute.xlu0 0
          %683 = vperm.xlu0 %682, %v565
          %v684 = vpop.permute.xlu0 %683
          %687 = vset.pattern.permute.xlu0 0
          %688 = vperm.xlu0 %687, %v566
          %v689 = vpop.permute.xlu0 %688
          %692 = vset.pattern.permute.xlu0 0
          %693 = vperm.xlu0 %692, %v567
          %v694 = vpop.permute.xlu0 %693
          %697 = vset.pattern.permute.xlu0 0
          %698 = vperm.xlu0 %697, %v568
          %v699 = vpop.permute.xlu0 %698
          %702 = vset.pattern.permute.xlu0 0
          %703 = vperm.xlu0 %702, %v569
          %v704 = vpop.permute.xlu0 %703
          %707 = vset.pattern.permute.xlu0 0
          %708 = vperm.xlu0 %707, %v570
          %v709 = vpop.permute.xlu0 %708
          %712 = vset.pattern.permute.xlu0 0
          %713 = vperm.xlu0 %712, %v571
          %v714 = vpop.permute.xlu0 %713
          %717 = vset.pattern.permute.xlu0 0
          %718 = vperm.xlu0 %717, %v572
          %v719 = vpop.permute.xlu0 %718
          %722 = vset.pattern.permute.xlu0 0
          %723 = vperm.xlu0 %722, %v573
          %v724 = vpop.permute.xlu0 %723
          %727 = vset.pattern.permute.xlu0 0
          %728 = vperm.xlu0 %727, %v574
          %v729 = vpop.permute.xlu0 %728
          %732 = vset.pattern.permute.xlu0 0
          %733 = vperm.xlu0 %732, %v575
          %v734 = vpop.permute.xlu0 %733
          %737 = vset.pattern.permute.xlu0 0
          %738 = vperm.xlu0 %737, %v576
          %v739 = vpop.permute.xlu0 %738
          %742 = vset.pattern.permute.xlu0 0
          %743 = vperm.xlu0 %742, %v577
          %v744 = vpop.permute.xlu0 %743
          %v746 = vlaneseq
          %v747 = vshrl.u32 %v746, 7
          %v748 = vsub.s32 0, %v747
          %v749 = vrot.slane %v585, %v748
          %v750 = vmul.f32 %v589, %v749
          %v751 = vmul.f32 %v594, %v749
          %v752 = vmul.f32 %v599, %v749
          %v753 = vmul.f32 %v604, %v749
          %v754 = vmul.f32 %v609, %v749
          %v755 = vmul.f32 %v614, %v749
          %v756 = vmul.f32 %v619, %v749
          %v757 = vmul.f32 %v624, %v749
          %v758 = vmul.f32 %v629, %v749
          %v759 = vmul.f32 %v634, %v749
          %v760 = vmul.f32 %v639, %v749
          %v761 = vmul.f32 %v644, %v749
          %v762 = vmul.f32 %v649, %v749
          %v763 = vmul.f32 %v654, %v749
          %v764 = vmul.f32 %v659, %v749
          %v765 = vmul.f32 %v664, %v749
          %v766 = vmul.f32 %v669, %v749
          %v767 = vmul.f32 %v674, %v749
          %v768 = vmul.f32 %v679, %v749
          %v769 = vmul.f32 %v684, %v749
          %v770 = vmul.f32 %v689, %v749
          %v771 = vmul.f32 %v694, %v749
          %v772 = vmul.f32 %v699, %v749
          %v773 = vmul.f32 %v704, %v749
          %v774 = vmul.f32 %v709, %v749
          %v775 = vmul.f32 %v714, %v749
          %v776 = vmul.f32 %v719, %v749
          %v777 = vmul.f32 %v724, %v749
          %v778 = vmul.f32 %v729, %v749
          %v779 = vmul.f32 %v734, %v749
          %v780 = vmul.f32 %v739, %v749
          %v781 = vmul.f32 %v744, %v749
          %v782 = vadd.f32 %v583, %v750
          %v783 = vadd.f32 %v583, %v751
          %v784 = vadd.f32 %v583, %v752
          %v785 = vadd.f32 %v583, %v753
          %v786 = vadd.f32 %v583, %v754
          %v787 = vadd.f32 %v583, %v755
          %v788 = vadd.f32 %v583, %v756
          %v789 = vadd.f32 %v583, %v757
          %v790 = vadd.f32 %v583, %v758
          %v791 = vadd.f32 %v583, %v759
          %v792 = vadd.f32 %v583, %v760
          %v793 = vadd.f32 %v583, %v761
          %v794 = vadd.f32 %v583, %v762
          %v795 = vadd.f32 %v583, %v763
          %v796 = vadd.f32 %v583, %v764
          %v797 = vadd.f32 %v583, %v765
          %v798 = vadd.f32 %v583, %v766
          %v799 = vadd.f32 %v583, %v767
          %v800 = vadd.f32 %v583, %v768
          %v801 = vadd.f32 %v583, %v769
          %v802 = vadd.f32 %v583, %v770
          %v803 = vadd.f32 %v583, %v771
          %v804 = vadd.f32 %v583, %v772
          %v805 = vadd.f32 %v583, %v773
          %v806 = vadd.f32 %v583, %v774
          %v807 = vadd.f32 %v583, %v775
          %v808 = vadd.f32 %v583, %v776
          %v809 = vadd.f32 %v583, %v777
          %v810 = vadd.f32 %v583, %v778
          %v811 = vadd.f32 %v583, %v779
          %v812 = vadd.f32 %v583, %v780
          %v813 = vadd.f32 %v583, %v781
          %v814 = vld [vmem:[%s1 + $0x1] sm:$0x1]
          %815 = vset.pattern.permute.xlu0 1
          %816 = vperm.xlu0 %815, %v546
          %v817 = vpop.permute.xlu0 %816
          %819 = vset.pattern.permute.xlu0 1
          %820 = vperm.xlu0 %819, %v547
          %v821 = vpop.permute.xlu0 %820
          %823 = vset.pattern.permute.xlu0 1
          %824 = vperm.xlu0 %823, %v548
          %v825 = vpop.permute.xlu0 %824
          %827 = vset.pattern.permute.xlu0 1
          %828 = vperm.xlu0 %827, %v549
          %v829 = vpop.permute.xlu0 %828
          %831 = vset.pattern.permute.xlu0 1
          %832 = vperm.xlu0 %831, %v550
          %v833 = vpop.permute.xlu0 %832
          %835 = vset.pattern.permute.xlu0 1
          %836 = vperm.xlu0 %835, %v551
          %v837 = vpop.permute.xlu0 %836
          %839 = vset.pattern.permute.xlu0 1
          %840 = vperm.xlu0 %839, %v552
          %v841 = vpop.permute.xlu0 %840
          %843 = vset.pattern.permute.xlu0 1
          %844 = vperm.xlu0 %843, %v553
          %v845 = vpop.permute.xlu0 %844
          %847 = vset.pattern.permute.xlu0 1
          %848 = vperm.xlu0 %847, %v554
          %v849 = vpop.permute.xlu0 %848
          %851 = vset.pattern.permute.xlu0 1
          %852 = vperm.xlu0 %851, %v555
          %v853 = vpop.permute.xlu0 %852
          %855 = vset.pattern.permute.xlu0 1
          %856 = vperm.xlu0 %855, %v556
          %v857 = vpop.permute.xlu0 %856
          %859 = vset.pattern.permute.xlu0 1
          %860 = vperm.xlu0 %859, %v557
          %v861 = vpop.permute.xlu0 %860
          %863 = vset.pattern.permute.xlu0 1
          %864 = vperm.xlu0 %863, %v558
          %v865 = vpop.permute.xlu0 %864
          %867 = vset.pattern.permute.xlu0 1
          %868 = vperm.xlu0 %867, %v559
          %v869 = vpop.permute.xlu0 %868
          %871 = vset.pattern.permute.xlu0 1
          %872 = vperm.xlu0 %871, %v560
          %v873 = vpop.permute.xlu0 %872
          %875 = vset.pattern.permute.xlu0 1
          %876 = vperm.xlu0 %875, %v561
          %v877 = vpop.permute.xlu0 %876
          %879 = vset.pattern.permute.xlu0 1
          %880 = vperm.xlu0 %879, %v562
          %v881 = vpop.permute.xlu0 %880
          %883 = vset.pattern.permute.xlu0 1
          %884 = vperm.xlu0 %883, %v563
          %v885 = vpop.permute.xlu0 %884
          %887 = vset.pattern.permute.xlu0 1
          %888 = vperm.xlu0 %887, %v564
          %v889 = vpop.permute.xlu0 %888
          %891 = vset.pattern.permute.xlu0 1
          %892 = vperm.xlu0 %891, %v565
          %v893 = vpop.permute.xlu0 %892
          %895 = vset.pattern.permute.xlu0 1
          %896 = vperm.xlu0 %895, %v566
          %v897 = vpop.permute.xlu0 %896
          %899 = vset.pattern.permute.xlu0 1
          %900 = vperm.xlu0 %899, %v567
          %v901 = vpop.permute.xlu0 %900
          %903 = vset.pattern.permute.xlu0 1
          %904 = vperm.xlu0 %903, %v568
          %v905 = vpop.permute.xlu0 %904
          %907 = vset.pattern.permute.xlu0 1
          %908 = vperm.xlu0 %907, %v569
          %v909 = vpop.permute.xlu0 %908
          %911 = vset.pattern.permute.xlu0 1
          %912 = vperm.xlu0 %911, %v570
          %v913 = vpop.permute.xlu0 %912
          %915 = vset.pattern.permute.xlu0 1
          %916 = vperm.xlu0 %915, %v571
          %v917 = vpop.permute.xlu0 %916
          %919 = vset.pattern.permute.xlu0 1
          %920 = vperm.xlu0 %919, %v572
          %v921 = vpop.permute.xlu0 %920
          %923 = vset.pattern.permute.xlu0 1
          %924 = vperm.xlu0 %923, %v573
          %v925 = vpop.permute.xlu0 %924
          %927 = vset.pattern.permute.xlu0 1
          %928 = vperm.xlu0 %927, %v574
          %v929 = vpop.permute.xlu0 %928
          %931 = vset.pattern.permute.xlu0 1
          %932 = vperm.xlu0 %931, %v575
          %v933 = vpop.permute.xlu0 %932
          %935 = vset.pattern.permute.xlu0 1
          %936 = vperm.xlu0 %935, %v576
          %v937 = vpop.permute.xlu0 %936
          %939 = vset.pattern.permute.xlu0 1
          %940 = vperm.xlu0 %939, %v577
          %v941 = vpop.permute.xlu0 %940
          %v943 = vlaneseq
          %v944 = vshrl.u32 %v943, 7
          %v945 = vsub.s32 0, %v944
          %v946 = vrot.slane %v814, %v945
          %v947 = vmul.f32 %v817, %v946
          %v948 = vmul.f32 %v821, %v946
          %v949 = vmul.f32 %v825, %v946
          %v950 = vmul.f32 %v829, %v946
          %v951 = vmul.f32 %v833, %v946
          %v952 = vmul.f32 %v837, %v946
          %v953 = vmul.f32 %v841, %v946
          %v954 = vmul.f32 %v845, %v946
          %v955 = vmul.f32 %v849, %v946
          %v956 = vmul.f32 %v853, %v946
          %v957 = vmul.f32 %v857, %v946
          %v958 = vmul.f32 %v861, %v946
          %v959 = vmul.f32 %v865, %v946
          %v960 = vmul.f32 %v869, %v946
          %v961 = vmul.f32 %v873, %v946
          %v962 = vmul.f32 %v877, %v946
          %v963 = vmul.f32 %v881, %v946
          %v964 = vmul.f32 %v885, %v946
          %v965 = vmul.f32 %v889, %v946
          %v966 = vmul.f32 %v893, %v946
          %v967 = vmul.f32 %v897, %v946
          %v968 = vmul.f32 %v901, %v946
          %v969 = vmul.f32 %v905, %v946
          %v970 = vmul.f32 %v909, %v946
          %v971 = vmul.f32 %v913, %v946
          %v972 = vmul.f32 %v917, %v946
          %v973 = vmul.f32 %v921, %v946
          %v974 = vmul.f32 %v925, %v946
          %v975 = vmul.f32 %v929, %v946
          %v976 = vmul.f32 %v933, %v946
          %v977 = vmul.f32 %v937, %v946
          %v978 = vmul.f32 %v941, %v946
          %v979 = vadd.f32 %v782, %v947
          %v980 = vadd.f32 %v783, %v948
          %v981 = vadd.f32 %v784, %v949
          %v982 = vadd.f32 %v785, %v950
          %v983 = vadd.f32 %v786, %v951
          %v984 = vadd.f32 %v787, %v952
          %v985 = vadd.f32 %v788, %v953
          %v986 = vadd.f32 %v789, %v954
          %v987 = vadd.f32 %v790, %v955
          %v988 = vadd.f32 %v791, %v956
          %v989 = vadd.f32 %v792, %v957
          %v990 = vadd.f32 %v793, %v958
          %v991 = vadd.f32 %v794, %v959
          %v992 = vadd.f32 %v795, %v960
          %v993 = vadd.f32 %v796, %v961
          %v994 = vadd.f32 %v797, %v962
          %v995 = vadd.f32 %v798, %v963
          %v996 = vadd.f32 %v799, %v964
          %v997 = vadd.f32 %v800, %v965
          %v998 = vadd.f32 %v801, %v966
          %v999 = vadd.f32 %v802, %v967
          %v1000 = vadd.f32 %v803, %v968
          %v1001 = vadd.f32 %v804, %v969
          %v1002 = vadd.f32 %v805, %v970
          %v1003 = vadd.f32 %v806, %v971
          %v1004 = vadd.f32 %v807, %v972
          %v1005 = vadd.f32 %v808, %v973
          %v1006 = vadd.f32 %v809, %v974
          %v1007 = vadd.f32 %v810, %v975
          %v1008 = vadd.f32 %v811, %v976
          %v1009 = vadd.f32 %v812, %v977
          %v1010 = vadd.f32 %v813, %v978
          %v1011 = vld [vmem:[%s1 + $0x2] sm:$0x1]
          %1012 = vset.pattern.permute.xlu0 2
          %1013 = vperm.xlu0 %1012, %v546
          %v1014 = vpop.permute.xlu0 %1013
          %1016 = vset.pattern.permute.xlu0 2
          %1017 = vperm.xlu0 %1016, %v547
          %v1018 = vpop.permute.xlu0 %1017
          %1020 = vset.pattern.permute.xlu0 2
          %1021 = vperm.xlu0 %1020, %v548
          %v1022 = vpop.permute.xlu0 %1021
          %1024 = vset.pattern.permute.xlu0 2
          %1025 = vperm.xlu0 %1024, %v549
          %v1026 = vpop.permute.xlu0 %1025
          %1028 = vset.pattern.permute.xlu0 2
          %1029 = vperm.xlu0 %1028, %v550
          %v1030 = vpop.permute.xlu0 %1029
          %1032 = vset.pattern.permute.xlu0 2
          %1033 = vperm.xlu0 %1032, %v551
          %v1034 = vpop.permute.xlu0 %1033
          %1036 = vset.pattern.permute.xlu0 2
          %1037 = vperm.xlu0 %1036, %v552
          %v1038 = vpop.permute.xlu0 %1037
          %1040 = vset.pattern.permute.xlu0 2
          %1041 = vperm.xlu0 %1040, %v553
          %v1042 = vpop.permute.xlu0 %1041
          %1044 = vset.pattern.permute.xlu0 2
          %1045 = vperm.xlu0 %1044, %v554
          %v1046 = vpop.permute.xlu0 %1045
          %1048 = vset.pattern.permute.xlu0 2
          %1049 = vperm.xlu0 %1048, %v555
          %v1050 = vpop.permute.xlu0 %1049
          %1052 = vset.pattern.permute.xlu0 2
          %1053 = vperm.xlu0 %1052, %v556
          %v1054 = vpop.permute.xlu0 %1053
          %1056 = vset.pattern.permute.xlu0 2
          %1057 = vperm.xlu0 %1056, %v557
          %v1058 = vpop.permute.xlu0 %1057
          %1060 = vset.pattern.permute.xlu0 2
          %1061 = vperm.xlu0 %1060, %v558
          %v1062 = vpop.permute.xlu0 %1061
          %1064 = vset.pattern.permute.xlu0 2
          %1065 = vperm.xlu0 %1064, %v559
          %v1066 = vpop.permute.xlu0 %1065
          %1068 = vset.pattern.permute.xlu0 2
          %1069 = vperm.xlu0 %1068, %v560
          %v1070 = vpop.permute.xlu0 %1069
          %1072 = vset.pattern.permute.xlu0 2
          %1073 = vperm.xlu0 %1072, %v561
          %v1074 = vpop.permute.xlu0 %1073
          %1076 = vset.pattern.permute.xlu0 2
          %1077 = vperm.xlu0 %1076, %v562
          %v1078 = vpop.permute.xlu0 %1077
          %1080 = vset.pattern.permute.xlu0 2
          %1081 = vperm.xlu0 %1080, %v563
          %v1082 = vpop.permute.xlu0 %1081
          %1084 = vset.pattern.permute.xlu0 2
          %1085 = vperm.xlu0 %1084, %v564
          %v1086 = vpop.permute.xlu0 %1085
          %1088 = vset.pattern.permute.xlu0 2
          %1089 = vperm.xlu0 %1088, %v565
          %v1090 = vpop.permute.xlu0 %1089
          %1092 = vset.pattern.permute.xlu0 2
          %1093 = vperm.xlu0 %1092, %v566
          %v1094 = vpop.permute.xlu0 %1093
          %1096 = vset.pattern.permute.xlu0 2
          %1097 = vperm.xlu0 %1096, %v567
          %v1098 = vpop.permute.xlu0 %1097
          %1100 = vset.pattern.permute.xlu0 2
          %1101 = vperm.xlu0 %1100, %v568
          %v1102 = vpop.permute.xlu0 %1101
          %1104 = vset.pattern.permute.xlu0 2
          %1105 = vperm.xlu0 %1104, %v569
          %v1106 = vpop.permute.xlu0 %1105
          %1108 = vset.pattern.permute.xlu0 2
          %1109 = vperm.xlu0 %1108, %v570
          %v1110 = vpop.permute.xlu0 %1109
          %1112 = vset.pattern.permute.xlu0 2
          %1113 = vperm.xlu0 %1112, %v571
          %v1114 = vpop.permute.xlu0 %1113
          %1116 = vset.pattern.permute.xlu0 2
          %1117 = vperm.xlu0 %1116, %v572
          %v1118 = vpop.permute.xlu0 %1117
          %1120 = vset.pattern.permute.xlu0 2
          %1121 = vperm.xlu0 %1120, %v573
          %v1122 = vpop.permute.xlu0 %1121
          %1124 = vset.pattern.permute.xlu0 2
          %1125 = vperm.xlu0 %1124, %v574
          %v1126 = vpop.permute.xlu0 %1125
          %1128 = vset.pattern.permute.xlu0 2
          %1129 = vperm.xlu0 %1128, %v575
          %v1130 = vpop.permute.xlu0 %1129
          %1132 = vset.pattern.permute.xlu0 2
          %1133 = vperm.xlu0 %1132, %v576
          %v1134 = vpop.permute.xlu0 %1133
          %1136 = vset.pattern.permute.xlu0 2
          %1137 = vperm.xlu0 %1136, %v577
          %v1138 = vpop.permute.xlu0 %1137
          %v1140 = vlaneseq
          %v1141 = vshrl.u32 %v1140, 7
          %v1142 = vsub.s32 0, %v1141
          %v1143 = vrot.slane %v1011, %v1142
          %v1144 = vmul.f32 %v1014, %v1143
          %v1145 = vmul.f32 %v1018, %v1143
          %v1146 = vmul.f32 %v1022, %v1143
          %v1147 = vmul.f32 %v1026, %v1143
          %v1148 = vmul.f32 %v1030, %v1143
          %v1149 = vmul.f32 %v1034, %v1143
          %v1150 = vmul.f32 %v1038, %v1143
          %v1151 = vmul.f32 %v1042, %v1143
          %v1152 = vmul.f32 %v1046, %v1143
          %v1153 = vmul.f32 %v1050, %v1143
          %v1154 = vmul.f32 %v1054, %v1143
          %v1155 = vmul.f32 %v1058, %v1143
          %v1156 = vmul.f32 %v1062, %v1143
          %v1157 = vmul.f32 %v1066, %v1143
          %v1158 = vmul.f32 %v1070, %v1143
          %v1159 = vmul.f32 %v1074, %v1143
          %v1160 = vmul.f32 %v1078, %v1143
          %v1161 = vmul.f32 %v1082, %v1143
          %v1162 = vmul.f32 %v1086, %v1143
          %v1163 = vmul.f32 %v1090, %v1143
          %v1164 = vmul.f32 %v1094, %v1143
          %v1165 = vmul.f32 %v1098, %v1143
          %v1166 = vmul.f32 %v1102, %v1143
          %v1167 = vmul.f32 %v1106, %v1143
          %v1168 = vmul.f32 %v1110, %v1143
          %v1169 = vmul.f32 %v1114, %v1143
          %v1170 = vmul.f32 %v1118, %v1143
          %v1171 = vmul.f32 %v1122, %v1143
          %v1172 = vmul.f32 %v1126, %v1143
          %v1173 = vmul.f32 %v1130, %v1143
          %v1174 = vmul.f32 %v1134, %v1143
          %v1175 = vmul.f32 %v1138, %v1143
          %v1176 = vadd.f32 %v979, %v1144
          %v1177 = vadd.f32 %v980, %v1145
          %v1178 = vadd.f32 %v981, %v1146
          %v1179 = vadd.f32 %v982, %v1147
          %v1180 = vadd.f32 %v983, %v1148
          %v1181 = vadd.f32 %v984, %v1149
          %v1182 = vadd.f32 %v985, %v1150
          %v1183 = vadd.f32 %v986, %v1151
          %v1184 = vadd.f32 %v987, %v1152
          %v1185 = vadd.f32 %v988, %v1153
          %v1186 = vadd.f32 %v989, %v1154
          %v1187 = vadd.f32 %v990, %v1155
          %v1188 = vadd.f32 %v991, %v1156
          %v1189 = vadd.f32 %v992, %v1157
          %v1190 = vadd.f32 %v993, %v1158
          %v1191 = vadd.f32 %v994, %v1159
          %v1192 = vadd.f32 %v995, %v1160
          %v1193 = vadd.f32 %v996, %v1161
          %v1194 = vadd.f32 %v997, %v1162
          %v1195 = vadd.f32 %v998, %v1163
          %v1196 = vadd.f32 %v999, %v1164
          %v1197 = vadd.f32 %v1000, %v1165
          %v1198 = vadd.f32 %v1001, %v1166
          %v1199 = vadd.f32 %v1002, %v1167
          %v1200 = vadd.f32 %v1003, %v1168
          %v1201 = vadd.f32 %v1004, %v1169
          %v1202 = vadd.f32 %v1005, %v1170
          %v1203 = vadd.f32 %v1006, %v1171
          %v1204 = vadd.f32 %v1007, %v1172
          %v1205 = vadd.f32 %v1008, %v1173
          %v1206 = vadd.f32 %v1009, %v1174
          %v1207 = vadd.f32 %v1010, %v1175
          %v1208 = vld [vmem:[%s1 + $0x3] sm:$0x1]
          %1209 = vset.pattern.permute.xlu0 3
          %1210 = vperm.xlu0 %1209, %v546
          %v1211 = vpop.permute.xlu0 %1210
          %1213 = vset.pattern.permute.xlu0 3
          %1214 = vperm.xlu0 %1213, %v547
          %v1215 = vpop.permute.xlu0 %1214
          %1217 = vset.pattern.permute.xlu0 3
          %1218 = vperm.xlu0 %1217, %v548
          %v1219 = vpop.permute.xlu0 %1218
          %1221 = vset.pattern.permute.xlu0 3
          %1222 = vperm.xlu0 %1221, %v549
          %v1223 = vpop.permute.xlu0 %1222
          %1225 = vset.pattern.permute.xlu0 3
          %1226 = vperm.xlu0 %1225, %v550
          %v1227 = vpop.permute.xlu0 %1226
          %1229 = vset.pattern.permute.xlu0 3
          %1230 = vperm.xlu0 %1229, %v551
          %v1231 = vpop.permute.xlu0 %1230
          %1233 = vset.pattern.permute.xlu0 3
          %1234 = vperm.xlu0 %1233, %v552
          %v1235 = vpop.permute.xlu0 %1234
          %1237 = vset.pattern.permute.xlu0 3
          %1238 = vperm.xlu0 %1237, %v553
          %v1239 = vpop.permute.xlu0 %1238
          %1241 = vset.pattern.permute.xlu0 3
          %1242 = vperm.xlu0 %1241, %v554
          %v1243 = vpop.permute.xlu0 %1242
          %1245 = vset.pattern.permute.xlu0 3
          %1246 = vperm.xlu0 %1245, %v555
          %v1247 = vpop.permute.xlu0 %1246
          %1249 = vset.pattern.permute.xlu0 3
          %1250 = vperm.xlu0 %1249, %v556
          %v1251 = vpop.permute.xlu0 %1250
          %1253 = vset.pattern.permute.xlu0 3
          %1254 = vperm.xlu0 %1253, %v557
          %v1255 = vpop.permute.xlu0 %1254
          %1257 = vset.pattern.permute.xlu0 3
          %1258 = vperm.xlu0 %1257, %v558
          %v1259 = vpop.permute.xlu0 %1258
          %1261 = vset.pattern.permute.xlu0 3
          %1262 = vperm.xlu0 %1261, %v559
          %v1263 = vpop.permute.xlu0 %1262
          %1265 = vset.pattern.permute.xlu0 3
          %1266 = vperm.xlu0 %1265, %v560
          %v1267 = vpop.permute.xlu0 %1266
          %1269 = vset.pattern.permute.xlu0 3
          %1270 = vperm.xlu0 %1269, %v561
          %v1271 = vpop.permute.xlu0 %1270
          %1273 = vset.pattern.permute.xlu0 3
          %1274 = vperm.xlu0 %1273, %v562
          %v1275 = vpop.permute.xlu0 %1274
          %1277 = vset.pattern.permute.xlu0 3
          %1278 = vperm.xlu0 %1277, %v563
          %v1279 = vpop.permute.xlu0 %1278
          %1281 = vset.pattern.permute.xlu0 3
          %1282 = vperm.xlu0 %1281, %v564
          %v1283 = vpop.permute.xlu0 %1282
          %1285 = vset.pattern.permute.xlu0 3
          %1286 = vperm.xlu0 %1285, %v565
          %v1287 = vpop.permute.xlu0 %1286
          %1289 = vset.pattern.permute.xlu0 3
          %1290 = vperm.xlu0 %1289, %v566
          %v1291 = vpop.permute.xlu0 %1290
          %1293 = vset.pattern.permute.xlu0 3
          %1294 = vperm.xlu0 %1293, %v567
          %v1295 = vpop.permute.xlu0 %1294
          %1297 = vset.pattern.permute.xlu0 3
          %1298 = vperm.xlu0 %1297, %v568
          %v1299 = vpop.permute.xlu0 %1298
          %1301 = vset.pattern.permute.xlu0 3
          %1302 = vperm.xlu0 %1301, %v569
          %v1303 = vpop.permute.xlu0 %1302
          %1305 = vset.pattern.permute.xlu0 3
          %1306 = vperm.xlu0 %1305, %v570
          %v1307 = vpop.permute.xlu0 %1306
          %1309 = vset.pattern.permute.xlu0 3
          %1310 = vperm.xlu0 %1309, %v571
          %v1311 = vpop.permute.xlu0 %1310
          %1313 = vset.pattern.permute.xlu0 3
          %1314 = vperm.xlu0 %1313, %v572
          %v1315 = vpop.permute.xlu0 %1314
          %1317 = vset.pattern.permute.xlu0 3
          %1318 = vperm.xlu0 %1317, %v573
          %v1319 = vpop.permute.xlu0 %1318
          %1321 = vset.pattern.permute.xlu0 3
          %1322 = vperm.xlu0 %1321, %v574
          %v1323 = vpop.permute.xlu0 %1322
          %1325 = vset.pattern.permute.xlu0 3
          %1326 = vperm.xlu0 %1325, %v575
          %v1327 = vpop.permute.xlu0 %1326
          %1329 = vset.pattern.permute.xlu0 3
          %1330 = vperm.xlu0 %1329, %v576
          %v1331 = vpop.permute.xlu0 %1330
          %1333 = vset.pattern.permute.xlu0 3
          %1334 = vperm.xlu0 %1333, %v577
          %v1335 = vpop.permute.xlu0 %1334
          %v1337 = vlaneseq
          %v1338 = vshrl.u32 %v1337, 7
          %v1339 = vsub.s32 0, %v1338
          %v1340 = vrot.slane %v1208, %v1339
          %v1341 = vmul.f32 %v1211, %v1340
          %v1342 = vmul.f32 %v1215, %v1340
          %v1343 = vmul.f32 %v1219, %v1340
          %v1344 = vmul.f32 %v1223, %v1340
          %v1345 = vmul.f32 %v1227, %v1340
          %v1346 = vmul.f32 %v1231, %v1340
          %v1347 = vmul.f32 %v1235, %v1340
          %v1348 = vmul.f32 %v1239, %v1340
          %v1349 = vmul.f32 %v1243, %v1340
          %v1350 = vmul.f32 %v1247, %v1340
          %v1351 = vmul.f32 %v1251, %v1340
          %v1352 = vmul.f32 %v1255, %v1340
          %v1353 = vmul.f32 %v1259, %v1340
          %v1354 = vmul.f32 %v1263, %v1340
          %v1355 = vmul.f32 %v1267, %v1340
          %v1356 = vmul.f32 %v1271, %v1340
          %v1357 = vmul.f32 %v1275, %v1340
          %v1358 = vmul.f32 %v1279, %v1340
          %v1359 = vmul.f32 %v1283, %v1340
          %v1360 = vmul.f32 %v1287, %v1340
          %v1361 = vmul.f32 %v1291, %v1340
          %v1362 = vmul.f32 %v1295, %v1340
          %v1363 = vmul.f32 %v1299, %v1340
          %v1364 = vmul.f32 %v1303, %v1340
          %v1365 = vmul.f32 %v1307, %v1340
          %v1366 = vmul.f32 %v1311, %v1340
          %v1367 = vmul.f32 %v1315, %v1340
          %v1368 = vmul.f32 %v1319, %v1340
          %v1369 = vmul.f32 %v1323, %v1340
          %v1370 = vmul.f32 %v1327, %v1340
          %v1371 = vmul.f32 %v1331, %v1340
          %v1372 = vmul.f32 %v1335, %v1340
          %v1373 = vadd.f32 %v1176, %v1341
          %v1374 = vadd.f32 %v1177, %v1342
          %v1375 = vadd.f32 %v1178, %v1343
          %v1376 = vadd.f32 %v1179, %v1344
          %v1377 = vadd.f32 %v1180, %v1345
          %v1378 = vadd.f32 %v1181, %v1346
          %v1379 = vadd.f32 %v1182, %v1347
          %v1380 = vadd.f32 %v1183, %v1348
          %v1381 = vadd.f32 %v1184, %v1349
          %v1382 = vadd.f32 %v1185, %v1350
          %v1383 = vadd.f32 %v1186, %v1351
          %v1384 = vadd.f32 %v1187, %v1352
          %v1385 = vadd.f32 %v1188, %v1353
          %v1386 = vadd.f32 %v1189, %v1354
          %v1387 = vadd.f32 %v1190, %v1355
          %v1388 = vadd.f32 %v1191, %v1356
          %v1389 = vadd.f32 %v1192, %v1357
          %v1390 = vadd.f32 %v1193, %v1358
          %v1391 = vadd.f32 %v1194, %v1359
          %v1392 = vadd.f32 %v1195, %v1360
          %v1393 = vadd.f32 %v1196, %v1361
          %v1394 = vadd.f32 %v1197, %v1362
          %v1395 = vadd.f32 %v1198, %v1363
          %v1396 = vadd.f32 %v1199, %v1364
          %v1397 = vadd.f32 %v1200, %v1365
          %v1398 = vadd.f32 %v1201, %v1366
          %v1399 = vadd.f32 %v1202, %v1367
          %v1400 = vadd.f32 %v1203, %v1368
          %v1401 = vadd.f32 %v1204, %v1369
          %v1402 = vadd.f32 %v1205, %v1370
          %v1403 = vadd.f32 %v1206, %v1371
          %v1404 = vadd.f32 %v1207, %v1372
          %v1405 = vmax.f32 %v1373, 0.0
          %v1406 = vmax.f32 %v1374, 0.0
          %v1407 = vmax.f32 %v1375, 0.0
          %v1408 = vmax.f32 %v1376, 0.0
          %v1409 = vmax.f32 %v1377, 0.0
          %v1410 = vmax.f32 %v1378, 0.0
          %v1411 = vmax.f32 %v1379, 0.0
          %v1412 = vmax.f32 %v1380, 0.0
          %v1413 = vmax.f32 %v1381, 0.0
          %v1414 = vmax.f32 %v1382, 0.0
          %v1415 = vmax.f32 %v1383, 0.0
          %v1416 = vmax.f32 %v1384, 0.0
          %v1417 = vmax.f32 %v1385, 0.0
          %v1418 = vmax.f32 %v1386, 0.0
          %v1419 = vmax.f32 %v1387, 0.0
          %v1420 = vmax.f32 %v1388, 0.0
          %v1421 = vmax.f32 %v1389, 0.0
          %v1422 = vmax.f32 %v1390, 0.0
          %v1423 = vmax.f32 %v1391, 0.0
          %v1424 = vmax.f32 %v1392, 0.0
          %v1425 = vmax.f32 %v1393, 0.0
          %v1426 = vmax.f32 %v1394, 0.0
          %v1427 = vmax.f32 %v1395, 0.0
          %v1428 = vmax.f32 %v1396, 0.0
          %v1429 = vmax.f32 %v1397, 0.0
          %v1430 = vmax.f32 %v1398, 0.0
          %v1431 = vmax.f32 %v1399, 0.0
          %v1432 = vmax.f32 %v1400, 0.0
          %v1433 = vmax.f32 %v1401, 0.0
          %v1434 = vmax.f32 %v1402, 0.0
          %v1435 = vmax.f32 %v1403, 0.0
          %v1436 = vmax.f32 %v1404, 0.0
          %1437 = vst.msk [vmem:[%s481 + $0x10] sm:$0xff] %vm323, %v1405
          %1438 = vst.msk [vmem:[%s481 + $0x18] sm:$0xff] %vm323, %v1406
          %1439 = vst.msk [vmem:[%s481 + $0x40] sm:$0xff] %vm323, %v1407
          %1440 = vst.msk [vmem:[%s481 + $0x48] sm:$0xff] %vm323, %v1408
          %1441 = vst.msk [vmem:[%s481 + $0x70] sm:$0xff] %vm323, %v1409
          %1442 = vst.msk [vmem:[%s481 + $0x78] sm:$0xff] %vm323, %v1410
          %1443 = vst.msk [vmem:[%s481 + $0xa0] sm:$0xff] %vm323, %v1411
          %1444 = vst.msk [vmem:[%s481 + $0xa8] sm:$0xff] %vm323, %v1412
          %1445 = vst.msk [vmem:[%s481 + $0xd0] sm:$0xff] %vm323, %v1413
          %1446 = vst.msk [vmem:[%s481 + $0xd8] sm:$0xff] %vm323, %v1414
          %1447 = vst.msk [vmem:[%s481 + $0x100] sm:$0xff] %vm323, %v1415
          %1448 = vst.msk [vmem:[%s481 + $0x108] sm:$0xff] %vm323, %v1416
          %1449 = vst.msk [vmem:[%s481 + $0x130] sm:$0xff] %vm323, %v1417
          %1450 = vst.msk [vmem:[%s481 + $0x138] sm:$0xff] %vm323, %v1418
          %1451 = vst.msk [vmem:[%s481 + $0x160] sm:$0xff] %vm323, %v1419
          %1452 = vst.msk [vmem:[%s481 + $0x168] sm:$0xff] %vm323, %v1420
          %1453 = vst.msk [vmem:[%s481 + $0x190] sm:$0xff] %vm323, %v1421
          %1454 = vst.msk [vmem:[%s481 + $0x198] sm:$0xff] %vm323, %v1422
          %1455 = vst.msk [vmem:[%s481 + $0x1c0] sm:$0xff] %vm323, %v1423
          %1456 = vst.msk [vmem:[%s481 + $0x1c8] sm:$0xff] %vm323, %v1424
          %1457 = vst.msk [vmem:[%s481 + $0x1f0] sm:$0xff] %vm323, %v1425
          %1458 = vst.msk [vmem:[%s481 + $0x1f8] sm:$0xff] %vm323, %v1426
          %1459 = vst.msk [vmem:[%s481 + $0x220] sm:$0xff] %vm323, %v1427
          %1460 = vst.msk [vmem:[%s481 + $0x228] sm:$0xff] %vm323, %v1428
          %1461 = vst.msk [vmem:[%s481 + $0x250] sm:$0xff] %vm323, %v1429
          %1462 = vst.msk [vmem:[%s481 + $0x258] sm:$0xff] %vm323, %v1430
          %1463 = vst.msk [vmem:[%s481 + $0x280] sm:$0xff] %vm323, %v1431
          %1464 = vst.msk [vmem:[%s481 + $0x288] sm:$0xff] %vm323, %v1432
          %1465 = vst.msk [vmem:[%s481 + $0x2b0] sm:$0xff] %vm323, %v1433
          %1466 = vst.msk [vmem:[%s481 + $0x2b8] sm:$0xff] %vm323, %v1434
          %1467 = vst.msk [vmem:[%s481 + $0x2e0] sm:$0xff] %vm323, %v1435
          %1468 = vst.msk [vmem:[%s481 + $0x2e8] sm:$0xff] %vm323, %v1436
        $region56: #{_lambda_.1} parent=47 // pred_fallthru
          _
        %s1469 = smul.u32 %s24, 8
        %v1470 = vld [vmem:[%s4] sm:$0x1]
        %v1472 = vlaneseq
        %v1473 = vshrl.u32 %v1472, 7
        %v1474 = vsub.s32 0, %v1473
        %v1475 = vrot.slane %v1470, %v1474
        loop: start=0, step=1, limit=34
        $region57: #{_lambda_.1} parent=47 // loop_pre_header
          _
        $region58: #{_lambda_.1} parent=47 // loop_header
          %s1478 = sphi 0, %s1482
          %p1479 = scmp.ge.s32.totalorder %s1478, 34
          %v1483 = vphi %v1475, %v2052
          %v1484 = vphi %v1475, %v2053
          %v1485 = vphi %v1475, %v2054
          %v1486 = vphi %v1475, %v2585
          %v1487 = vphi %v1475, %v2586
          %v1488 = vphi %v1475, %v2587
          %v1489 = vphi %v1475, %v3118
          %v1490 = vphi %v1475, %v3119
          %v1491 = vphi %v1475, %v3120
          %v1492 = vphi %v1475, %v3651
          %v1493 = vphi %v1475, %v3652
          %v1494 = vphi %v1475, %v3653
          %v1495 = vphi %v1475, %v4184
          %v1496 = vphi %v1475, %v4185
          %v1497 = vphi %v1475, %v4186
          %v1498 = vphi %v1475, %v4717
          %v1499 = vphi %v1475, %v4718
          %v1500 = vphi %v1475, %v4719
          %v1501 = vphi %v1475, %v5250
          %v1502 = vphi %v1475, %v5251
          %v1503 = vphi %v1475, %v5252
          %v1504 = vphi %v1475, %v5783
          %v1505 = vphi %v1475, %v5784
          %v1506 = vphi %v1475, %v5785
        $region59: #{_lambda_.1} parent=47 // loop_header_branch
          %1481 = sbr.rel (%p1479) target = $region63
        $region60: #{_lambda_.1} parent=47 // loop_body
          %s1507 = sadd.s32 %s1469, %s1478
          %s1508 = smul.u32 %s1507, 48
          %s1509 = scalar_lea.vmem [#allocation2], %s1508
          %v1510 = vld [vmem:[%s1509] sm:$0xff]
          %v1511 = vld [vmem:[%s1509 + $0x8] sm:$0xff]
          %v1512 = vld [vmem:[%s1509 + $0x10] sm:$0xff]
          %v1513 = vld [vmem:[%s1509 + $0x18] sm:$0xff]
          %v1514 = vld [vmem:[%s1509 + $0x20] sm:$0xff]
          %v1515 = vld [vmem:[%s1509 + $0x28] sm:$0xff]
          %p1516 = scmp.ge.s32.totalorder %s1478, 0
          %p1517 = scmp.lt.s32.totalorder %s1478, 27
          %p1518 = pnand %p1516, %p1517
          %p1519 = pneg %p1518
          %s1520 = scalar_select %p1519, 1, 0
          %s1521 = scvt.s32.f32 %s1520
          %p1522 = scmp.gt.s32.totalorder %s1478, 0
          %s1523 = scalar_select %p1522, %s1478, 0
          %p1524 = scmp.lt.s32.totalorder %s1523, 26
          %s1525 = scalar_select %p1524, %s1523, 26
          %s1526 = smul.u32 %s1525, 32
          %s1527 = scalar_lea.vmem [#allocation3], %s1526
          %v1528 = vld [vmem:[%s1527] sm:$0xff]
          %v1529 = vld [vmem:[%s1527 + $0x8] sm:$0xff]
          %v1530 = vld [vmem:[%s1527 + $0x10] sm:$0xff]
          %v1531 = vld [vmem:[%s1527 + $0x18] sm:$0x7]
          %v1532 = vstv %s1521
          %v1533 = vmul.f32 %v1528, %v1532
          %v1534 = vmul.f32 %v1529, %v1532
          %v1535 = vmul.f32 %v1530, %v1532
          %v1536 = vmul.f32 %v1531, %v1532
          %v1537 = vlaneseq
          %v1538 = vshrl.u32 %v1537, 7
          %v1539 = vsub.s32 0, %v1538
          %v1540 = vrot.slane %v1533, %v1539
          %v1541 = vmul.f32 %v1510, %v1540
          %v1542 = vmul.f32 %v1511, %v1540
          %v1543 = vmul.f32 %v1512, %v1540
          %v1544 = vadd.f32 %v1483, %v1541
          %v1545 = vadd.f32 %v1484, %v1542
          %v1546 = vadd.f32 %v1485, %v1543
          %v1547 = vlaneseq
          %v1548 = vshrl.u32 %v1547, 7
          %v1549 = vsub.s32 1, %v1548
          %v1550 = vrot.slane %v1533, %v1549
          %v1551 = vmul.f32 %v1510, %v1550
          %v1552 = vmul.f32 %v1511, %v1550
          %v1553 = vmul.f32 %v1512, %v1550
          %vm1557 = vcmask 1046528
          %v1558 = vrot.slane %v1551, 1
          %v1559 = vrot.slane %v1552, 1
          %v1560 = vsel %vm1557, %v1558, %v1559
          %v1561 = vrot.slane %v1553, 1
          %v1562 = vsel %vm1557, %v1559, %v1561
          %v1566 = vadd.f32 %v1544, %v1560
          %v1567 = vadd.f32 %v1545, %v1562
          %v1568 = vadd.f32 %v1546, %v1561
          %v1569 = vlaneseq
          %v1570 = vshrl.u32 %v1569, 7
          %v1571 = vsub.s32 2, %v1570
          %v1572 = vrot.slane %v1533, %v1571
          %v1573 = vmul.f32 %v1510, %v1572
          %v1574 = vmul.f32 %v1511, %v1572
          %v1575 = vmul.f32 %v1512, %v1572
          %vm1579 = vcmask 1045504
          %v1580 = vrot.slane %v1573, 2
          %v1581 = vrot.slane %v1574, 2
          %v1582 = vsel %vm1579, %v1580, %v1581
          %v1583 = vrot.slane %v1575, 2
          %v1584 = vsel %vm1579, %v1581, %v1583
          %v1588 = vadd.f32 %v1566, %v1582
          %v1589 = vadd.f32 %v1567, %v1584
          %v1590 = vadd.f32 %v1568, %v1583
          %v1591 = vlaneseq
          %v1592 = vshrl.u32 %v1591, 7
          %v1593 = vsub.s32 3, %v1592
          %v1594 = vrot.slane %v1533, %v1593
          %v1595 = vmul.f32 %v1510, %v1594
          %v1596 = vmul.f32 %v1511, %v1594
          %v1597 = vmul.f32 %v1512, %v1594
          %vm1601 = vcmask 1044480
          %v1602 = vrot.slane %v1595, 3
          %v1603 = vrot.slane %v1596, 3
          %v1604 = vsel %vm1601, %v1602, %v1603
          %v1605 = vrot.slane %v1597, 3
          %v1606 = vsel %vm1601, %v1603, %v1605
          %v1610 = vadd.f32 %v1588, %v1604
          %v1611 = vadd.f32 %v1589, %v1606
          %v1612 = vadd.f32 %v1590, %v1605
          %v1613 = vlaneseq
          %v1614 = vshrl.u32 %v1613, 7
          %v1615 = vsub.s32 4, %v1614
          %v1616 = vrot.slane %v1533, %v1615
          %v1617 = vmul.f32 %v1510, %v1616
          %v1618 = vmul.f32 %v1511, %v1616
          %v1619 = vmul.f32 %v1512, %v1616
          %vm1623 = vcmask 1043456
          %v1624 = vrot.slane %v1617, 4
          %v1625 = vrot.slane %v1618, 4
          %v1626 = vsel %vm1623, %v1624, %v1625
          %v1627 = vrot.slane %v1619, 4
          %v1628 = vsel %vm1623, %v1625, %v1627
          %v1632 = vadd.f32 %v1610, %v1626
          %v1633 = vadd.f32 %v1611, %v1628
          %v1634 = vadd.f32 %v1612, %v1627
          %v1635 = vlaneseq
          %v1636 = vshrl.u32 %v1635, 7
          %v1637 = vsub.s32 5, %v1636
          %v1638 = vrot.slane %v1533, %v1637
          %v1639 = vmul.f32 %v1511, %v1638
          %v1640 = vmul.f32 %v1512, %v1638
          %vm1643 = vcmask 1042432
          %v1644 = vrot.slane %v1639, 5
          %v1645 = vrot.slane %v1640, 5
          %v1646 = vsel %vm1643, %v1644, %v1645
          %v1650 = vadd.f32 %v1632, %v1644
          %v1651 = vadd.f32 %v1633, %v1646
          %v1652 = vadd.f32 %v1634, %v1645
          %v1653 = vlaneseq
          %v1654 = vshrl.u32 %v1653, 7
          %v1655 = vsub.s32 6, %v1654
          %v1656 = vrot.slane %v1533, %v1655
          %v1657 = vmul.f32 %v1511, %v1656
          %v1658 = vmul.f32 %v1512, %v1656
          %v1659 = vmul.f32 %v1513, %v1656
          %vm1663 = vcmask 1041408
          %v1664 = vrot.slane %v1657, 6
          %v1665 = vrot.slane %v1658, 6
          %v1666 = vsel %vm1663, %v1664, %v1665
          %v1667 = vrot.slane %v1659, 6
          %v1668 = vsel %vm1663, %v1665, %v1667
          %v1672 = vadd.f32 %v1650, %v1664
          %v1673 = vadd.f32 %v1651, %v1666
          %v1674 = vadd.f32 %v1652, %v1668
          %v1675 = vlaneseq
          %v1676 = vshrl.u32 %v1675, 7
          %v1677 = vsub.s32 7, %v1676
          %v1678 = vrot.slane %v1533, %v1677
          %v1679 = vmul.f32 %v1511, %v1678
          %v1680 = vmul.f32 %v1512, %v1678
          %v1681 = vmul.f32 %v1513, %v1678
          %vm1685 = vcmask 1040384
          %v1686 = vrot.slane %v1679, 7
          %v1687 = vrot.slane %v1680, 7
          %v1688 = vsel %vm1685, %v1686, %v1687
          %v1689 = vrot.slane %v1681, 7
          %v1690 = vsel %vm1685, %v1687, %v1689
          %v1694 = vadd.f32 %v1672, %v1686
          %v1695 = vadd.f32 %v1673, %v1688
          %v1696 = vadd.f32 %v1674, %v1690
          %v1697 = vlaneseq
          %v1698 = vshrl.u32 %v1697, 7
          %v1699 = vsub.s32 0, %v1698
          %v1700 = vrot.slane %v1534, %v1699
          %v1701 = vmul.f32 %v1511, %v1700
          %v1702 = vmul.f32 %v1512, %v1700
          %v1703 = vmul.f32 %v1513, %v1700
          %v1704 = vadd.f32 %v1694, %v1701
          %v1705 = vadd.f32 %v1695, %v1702
          %v1706 = vadd.f32 %v1696, %v1703
          %v1707 = vlaneseq
          %v1708 = vshrl.u32 %v1707, 7
          %v1709 = vsub.s32 1, %v1708
          %v1710 = vrot.slane %v1534, %v1709
          %v1711 = vmul.f32 %v1511, %v1710
          %v1712 = vmul.f32 %v1512, %v1710
          %v1713 = vmul.f32 %v1513, %v1710
          %v1717 = vrot.slane %v1711, 1
          %v1718 = vrot.slane %v1712, 1
          %v1719 = vsel %vm1557, %v1717, %v1718
          %v1720 = vrot.slane %v1713, 1
          %v1721 = vsel %vm1557, %v1718, %v1720
          %v1725 = vadd.f32 %v1704, %v1719
          %v1726 = vadd.f32 %v1705, %v1721
          %v1727 = vadd.f32 %v1706, %v1720
          %v1728 = vlaneseq
          %v1729 = vshrl.u32 %v1728, 7
          %v1730 = vsub.s32 2, %v1729
          %v1731 = vrot.slane %v1534, %v1730
          %v1732 = vmul.f32 %v1511, %v1731
          %v1733 = vmul.f32 %v1512, %v1731
          %v1734 = vmul.f32 %v1513, %v1731
          %v1738 = vrot.slane %v1732, 2
          %v1739 = vrot.slane %v1733, 2
          %v1740 = vsel %vm1579, %v1738, %v1739
          %v1741 = vrot.slane %v1734, 2
          %v1742 = vsel %vm1579, %v1739, %v1741
          %v1746 = vadd.f32 %v1725, %v1740
          %v1747 = vadd.f32 %v1726, %v1742
          %v1748 = vadd.f32 %v1727, %v1741
          %v1749 = vlaneseq
          %v1750 = vshrl.u32 %v1749, 7
          %v1751 = vsub.s32 3, %v1750
          %v1752 = vrot.slane %v1534, %v1751
          %v1753 = vmul.f32 %v1511, %v1752
          %v1754 = vmul.f32 %v1512, %v1752
          %v1755 = vmul.f32 %v1513, %v1752
          %v1759 = vrot.slane %v1753, 3
          %v1760 = vrot.slane %v1754, 3
          %v1761 = vsel %vm1601, %v1759, %v1760
          %v1762 = vrot.slane %v1755, 3
          %v1763 = vsel %vm1601, %v1760, %v1762
          %v1767 = vadd.f32 %v1746, %v1761
          %v1768 = vadd.f32 %v1747, %v1763
          %v1769 = vadd.f32 %v1748, %v1762
          %v1770 = vlaneseq
          %v1771 = vshrl.u32 %v1770, 7
          %v1772 = vsub.s32 4, %v1771
          %v1773 = vrot.slane %v1534, %v1772
          %v1774 = vmul.f32 %v1511, %v1773
          %v1775 = vmul.f32 %v1512, %v1773
          %v1776 = vmul.f32 %v1513, %v1773
          %v1780 = vrot.slane %v1774, 4
          %v1781 = vrot.slane %v1775, 4
          %v1782 = vsel %vm1623, %v1780, %v1781
          %v1783 = vrot.slane %v1776, 4
          %v1784 = vsel %vm1623, %v1781, %v1783
          %v1788 = vadd.f32 %v1767, %v1782
          %v1789 = vadd.f32 %v1768, %v1784
          %v1790 = vadd.f32 %v1769, %v1783
          %v1791 = vlaneseq
          %v1792 = vshrl.u32 %v1791, 7
          %v1793 = vsub.s32 5, %v1792
          %v1794 = vrot.slane %v1534, %v1793
          %v1795 = vmul.f32 %v1512, %v1794
          %v1796 = vmul.f32 %v1513, %v1794
          %v1799 = vrot.slane %v1795, 5
          %v1800 = vrot.slane %v1796, 5
          %v1801 = vsel %vm1643, %v1799, %v1800
          %v1805 = vadd.f32 %v1788, %v1799
          %v1806 = vadd.f32 %v1789, %v1801
          %v1807 = vadd.f32 %v1790, %v1800
          %v1808 = vlaneseq
          %v1809 = vshrl.u32 %v1808, 7
          %v1810 = vsub.s32 6, %v1809
          %v1811 = vrot.slane %v1534, %v1810
          %v1812 = vmul.f32 %v1512, %v1811
          %v1813 = vmul.f32 %v1513, %v1811
          %v1814 = vmul.f32 %v1514, %v1811
          %v1818 = vrot.slane %v1812, 6
          %v1819 = vrot.slane %v1813, 6
          %v1820 = vsel %vm1663, %v1818, %v1819
          %v1821 = vrot.slane %v1814, 6
          %v1822 = vsel %vm1663, %v1819, %v1821
          %v1826 = vadd.f32 %v1805, %v1818
          %v1827 = vadd.f32 %v1806, %v1820
          %v1828 = vadd.f32 %v1807, %v1822
          %v1829 = vlaneseq
          %v1830 = vshrl.u32 %v1829, 7
          %v1831 = vsub.s32 7, %v1830
          %v1832 = vrot.slane %v1534, %v1831
          %v1833 = vmul.f32 %v1512, %v1832
          %v1834 = vmul.f32 %v1513, %v1832
          %v1835 = vmul.f32 %v1514, %v1832
          %v1839 = vrot.slane %v1833, 7
          %v1840 = vrot.slane %v1834, 7
          %v1841 = vsel %vm1685, %v1839, %v1840
          %v1842 = vrot.slane %v1835, 7
          %v1843 = vsel %vm1685, %v1840, %v1842
          %v1847 = vadd.f32 %v1826, %v1839
          %v1848 = vadd.f32 %v1827, %v1841
          %v1849 = vadd.f32 %v1828, %v1843
          %v1850 = vlaneseq
          %v1851 = vshrl.u32 %v1850, 7
          %v1852 = vsub.s32 0, %v1851
          %v1853 = vrot.slane %v1535, %v1852
          %v1854 = vmul.f32 %v1512, %v1853
          %v1855 = vmul.f32 %v1513, %v1853
          %v1856 = vmul.f32 %v1514, %v1853
          %v1857 = vadd.f32 %v1847, %v1854
          %v1858 = vadd.f32 %v1848, %v1855
          %v1859 = vadd.f32 %v1849, %v1856
          %v1860 = vlaneseq
          %v1861 = vshrl.u32 %v1860, 7
          %v1862 = vsub.s32 1, %v1861
          %v1863 = vrot.slane %v1535, %v1862
          %v1864 = vmul.f32 %v1512, %v1863
          %v1865 = vmul.f32 %v1513, %v1863
          %v1866 = vmul.f32 %v1514, %v1863
          %v1870 = vrot.slane %v1864, 1
          %v1871 = vrot.slane %v1865, 1
          %v1872 = vsel %vm1557, %v1870, %v1871
          %v1873 = vrot.slane %v1866, 1
          %v1874 = vsel %vm1557, %v1871, %v1873
          %v1878 = vadd.f32 %v1857, %v1872
          %v1879 = vadd.f32 %v1858, %v1874
          %v1880 = vadd.f32 %v1859, %v1873
          %v1881 = vlaneseq
          %v1882 = vshrl.u32 %v1881, 7
          %v1883 = vsub.s32 2, %v1882
          %v1884 = vrot.slane %v1535, %v1883
          %v1885 = vmul.f32 %v1512, %v1884
          %v1886 = vmul.f32 %v1513, %v1884
          %v1887 = vmul.f32 %v1514, %v1884
          %v1891 = vrot.slane %v1885, 2
          %v1892 = vrot.slane %v1886, 2
          %v1893 = vsel %vm1579, %v1891, %v1892
          %v1894 = vrot.slane %v1887, 2
          %v1895 = vsel %vm1579, %v1892, %v1894
          %v1899 = vadd.f32 %v1878, %v1893
          %v1900 = vadd.f32 %v1879, %v1895
          %v1901 = vadd.f32 %v1880, %v1894
          %v1902 = vlaneseq
          %v1903 = vshrl.u32 %v1902, 7
          %v1904 = vsub.s32 3, %v1903
          %v1905 = vrot.slane %v1535, %v1904
          %v1906 = vmul.f32 %v1512, %v1905
          %v1907 = vmul.f32 %v1513, %v1905
          %v1908 = vmul.f32 %v1514, %v1905
          %v1912 = vrot.slane %v1906, 3
          %v1913 = vrot.slane %v1907, 3
          %v1914 = vsel %vm1601, %v1912, %v1913
          %v1915 = vrot.slane %v1908, 3
          %v1916 = vsel %vm1601, %v1913, %v1915
          %v1920 = vadd.f32 %v1899, %v1914
          %v1921 = vadd.f32 %v1900, %v1916
          %v1922 = vadd.f32 %v1901, %v1915
          %v1923 = vlaneseq
          %v1924 = vshrl.u32 %v1923, 7
          %v1925 = vsub.s32 4, %v1924
          %v1926 = vrot.slane %v1535, %v1925
          %v1927 = vmul.f32 %v1512, %v1926
          %v1928 = vmul.f32 %v1513, %v1926
          %v1929 = vmul.f32 %v1514, %v1926
          %v1933 = vrot.slane %v1927, 4
          %v1934 = vrot.slane %v1928, 4
          %v1935 = vsel %vm1623, %v1933, %v1934
          %v1936 = vrot.slane %v1929, 4
          %v1937 = vsel %vm1623, %v1934, %v1936
          %v1941 = vadd.f32 %v1920, %v1935
          %v1942 = vadd.f32 %v1921, %v1937
          %v1943 = vadd.f32 %v1922, %v1936
          %v1944 = vlaneseq
          %v1945 = vshrl.u32 %v1944, 7
          %v1946 = vsub.s32 5, %v1945
          %v1947 = vrot.slane %v1535, %v1946
          %v1948 = vmul.f32 %v1513, %v1947
          %v1949 = vmul.f32 %v1514, %v1947
          %v1952 = vrot.slane %v1948, 5
          %v1953 = vrot.slane %v1949, 5
          %v1954 = vsel %vm1643, %v1952, %v1953
          %v1958 = vadd.f32 %v1941, %v1952
          %v1959 = vadd.f32 %v1942, %v1954
          %v1960 = vadd.f32 %v1943, %v1953
          %v1961 = vlaneseq
          %v1962 = vshrl.u32 %v1961, 7
          %v1963 = vsub.s32 6, %v1962
          %v1964 = vrot.slane %v1535, %v1963
          %v1965 = vmul.f32 %v1513, %v1964
          %v1966 = vmul.f32 %v1514, %v1964
          %v1967 = vmul.f32 %v1515, %v1964
          %v1971 = vrot.slane %v1965, 6
          %v1972 = vrot.slane %v1966, 6
          %v1973 = vsel %vm1663, %v1971, %v1972
          %v1974 = vrot.slane %v1967, 6
          %v1975 = vsel %vm1663, %v1972, %v1974
          %v1979 = vadd.f32 %v1958, %v1971
          %v1980 = vadd.f32 %v1959, %v1973
          %v1981 = vadd.f32 %v1960, %v1975
          %v1982 = vlaneseq
          %v1983 = vshrl.u32 %v1982, 7
          %v1984 = vsub.s32 7, %v1983
          %v1985 = vrot.slane %v1535, %v1984
          %v1986 = vmul.f32 %v1513, %v1985
          %v1987 = vmul.f32 %v1514, %v1985
          %v1988 = vmul.f32 %v1515, %v1985
          %v1992 = vrot.slane %v1986, 7
          %v1993 = vrot.slane %v1987, 7
          %v1994 = vsel %vm1685, %v1992, %v1993
          %v1995 = vrot.slane %v1988, 7
          %v1996 = vsel %vm1685, %v1993, %v1995
          %v2000 = vadd.f32 %v1979, %v1992
          %v2001 = vadd.f32 %v1980, %v1994
          %v2002 = vadd.f32 %v1981, %v1996
          %v2003 = vlaneseq
          %v2004 = vshrl.u32 %v2003, 7
          %v2005 = vsub.s32 0, %v2004
          %v2006 = vrot.slane %v1536, %v2005
          %v2007 = vmul.f32 %v1513, %v2006
          %v2008 = vmul.f32 %v1514, %v2006
          %v2009 = vmul.f32 %v1515, %v2006
          %v2010 = vadd.f32 %v2000, %v2007
          %v2011 = vadd.f32 %v2001, %v2008
          %v2012 = vadd.f32 %v2002, %v2009
          %v2013 = vlaneseq
          %v2014 = vshrl.u32 %v2013, 7
          %v2015 = vsub.s32 1, %v2014
          %v2016 = vrot.slane %v1536, %v2015
          %v2017 = vmul.f32 %v1513, %v2016
          %v2018 = vmul.f32 %v1514, %v2016
          %v2019 = vmul.f32 %v1515, %v2016
          %v2023 = vrot.slane %v2017, 1
          %v2024 = vrot.slane %v2018, 1
          %v2025 = vsel %vm1557, %v2023, %v2024
          %v2026 = vrot.slane %v2019, 1
          %v2027 = vsel %vm1557, %v2024, %v2026
          %v2031 = vadd.f32 %v2010, %v2025
          %v2032 = vadd.f32 %v2011, %v2027
          %v2033 = vadd.f32 %v2012, %v2026
          %v2034 = vlaneseq
          %v2035 = vshrl.u32 %v2034, 7
          %v2036 = vsub.s32 2, %v2035
          %v2037 = vrot.slane %v1536, %v2036
          %v2038 = vmul.f32 %v1513, %v2037
          %v2039 = vmul.f32 %v1514, %v2037
          %v2040 = vmul.f32 %v1515, %v2037
          %v2044 = vrot.slane %v2038, 2
          %v2045 = vrot.slane %v2039, 2
          %v2046 = vsel %vm1579, %v2044, %v2045
          %v2047 = vrot.slane %v2040, 2
          %v2048 = vsel %vm1579, %v2045, %v2047
          %v2052 = vadd.f32 %v2031, %v2046
          %v2053 = vadd.f32 %v2032, %v2048
          %v2054 = vadd.f32 %v2033, %v2047
          %s2055 = ssub.s32 %s1478, 1
          %p2056 = scmp.ge.s32.totalorder %s2055, 0
          %p2057 = scmp.lt.s32.totalorder %s2055, 27
          %p2058 = pnand %p2056, %p2057
          %p2059 = pneg %p2058
          %s2060 = scalar_select %p2059, 1, 0
          %s2061 = scvt.s32.f32 %s2060
          %p2062 = scmp.gt.s32.totalorder %s2055, 0
          %s2063 = scalar_select %p2062, %s2055, 0
          %p2064 = scmp.lt.s32.totalorder %s2063, 26
          %s2065 = scalar_select %p2064, %s2063, 26
          %s2066 = smul.u32 %s2065, 32
          %s2067 = scalar_lea.vmem [#allocation3], %s2066
          %v2068 = vld [vmem:[%s2067] sm:$0xff]
          %v2069 = vld [vmem:[%s2067 + $0x8] sm:$0xff]
          %v2070 = vld [vmem:[%s2067 + $0x10] sm:$0xff]
          %v2071 = vld [vmem:[%s2067 + $0x18] sm:$0x7]
          %v2072 = vstv %s2061
          %v2073 = vmul.f32 %v2068, %v2072
          %v2074 = vmul.f32 %v2069, %v2072
          %v2075 = vmul.f32 %v2070, %v2072
          %v2076 = vmul.f32 %v2071, %v2072
          %v2077 = vlaneseq
          %v2078 = vshrl.u32 %v2077, 7
          %v2079 = vsub.s32 0, %v2078
          %v2080 = vrot.slane %v2073, %v2079
          %v2081 = vmul.f32 %v1510, %v2080
          %v2082 = vmul.f32 %v1511, %v2080
          %v2083 = vmul.f32 %v1512, %v2080
          %v2084 = vadd.f32 %v1486, %v2081
          %v2085 = vadd.f32 %v1487, %v2082
          %v2086 = vadd.f32 %v1488, %v2083
          %v2087 = vlaneseq
          %v2088 = vshrl.u32 %v2087, 7
          %v2089 = vsub.s32 1, %v2088
          %v2090 = vrot.slane %v2073, %v2089
          %v2091 = vmul.f32 %v1510, %v2090
          %v2092 = vmul.f32 %v1511, %v2090
          %v2093 = vmul.f32 %v1512, %v2090
          %v2097 = vrot.slane %v2091, 1
          %v2098 = vrot.slane %v2092, 1
          %v2099 = vsel %vm1557, %v2097, %v2098
          %v2100 = vrot.slane %v2093, 1
          %v2101 = vsel %vm1557, %v2098, %v2100
          %v2105 = vadd.f32 %v2084, %v2099
          %v2106 = vadd.f32 %v2085, %v2101
          %v2107 = vadd.f32 %v2086, %v2100
          %v2108 = vlaneseq
          %v2109 = vshrl.u32 %v2108, 7
          %v2110 = vsub.s32 2, %v2109
          %v2111 = vrot.slane %v2073, %v2110
          %v2112 = vmul.f32 %v1510, %v2111
          %v2113 = vmul.f32 %v1511, %v2111
          %v2114 = vmul.f32 %v1512, %v2111
          %v2118 = vrot.slane %v2112, 2
          %v2119 = vrot.slane %v2113, 2
          %v2120 = vsel %vm1579, %v2118, %v2119
          %v2121 = vrot.slane %v2114, 2
          %v2122 = vsel %vm1579, %v2119, %v2121
          %v2126 = vadd.f32 %v2105, %v2120
          %v2127 = vadd.f32 %v2106, %v2122
          %v2128 = vadd.f32 %v2107, %v2121
          %v2129 = vlaneseq
          %v2130 = vshrl.u32 %v2129, 7
          %v2131 = vsub.s32 3, %v2130
          %v2132 = vrot.slane %v2073, %v2131
          %v2133 = vmul.f32 %v1510, %v2132
          %v2134 = vmul.f32 %v1511, %v2132
          %v2135 = vmul.f32 %v1512, %v2132
          %v2139 = vrot.slane %v2133, 3
          %v2140 = vrot.slane %v2134, 3
          %v2141 = vsel %vm1601, %v2139, %v2140
          %v2142 = vrot.slane %v2135, 3
          %v2143 = vsel %vm1601, %v2140, %v2142
          %v2147 = vadd.f32 %v2126, %v2141
          %v2148 = vadd.f32 %v2127, %v2143
          %v2149 = vadd.f32 %v2128, %v2142
          %v2150 = vlaneseq
          %v2151 = vshrl.u32 %v2150, 7
          %v2152 = vsub.s32 4, %v2151
          %v2153 = vrot.slane %v2073, %v2152
          %v2154 = vmul.f32 %v1510, %v2153
          %v2155 = vmul.f32 %v1511, %v2153
          %v2156 = vmul.f32 %v1512, %v2153
          %v2160 = vrot.slane %v2154, 4
          %v2161 = vrot.slane %v2155, 4
          %v2162 = vsel %vm1623, %v2160, %v2161
          %v2163 = vrot.slane %v2156, 4
          %v2164 = vsel %vm1623, %v2161, %v2163
          %v2168 = vadd.f32 %v2147, %v2162
          %v2169 = vadd.f32 %v2148, %v2164
          %v2170 = vadd.f32 %v2149, %v2163
          %v2171 = vlaneseq
          %v2172 = vshrl.u32 %v2171, 7
          %v2173 = vsub.s32 5, %v2172
          %v2174 = vrot.slane %v2073, %v2173
          %v2175 = vmul.f32 %v1511, %v2174
          %v2176 = vmul.f32 %v1512, %v2174
          %v2179 = vrot.slane %v2175, 5
          %v2180 = vrot.slane %v2176, 5
          %v2181 = vsel %vm1643, %v2179, %v2180
          %v2185 = vadd.f32 %v2168, %v2179
          %v2186 = vadd.f32 %v2169, %v2181
          %v2187 = vadd.f32 %v2170, %v2180
          %v2188 = vlaneseq
          %v2189 = vshrl.u32 %v2188, 7
          %v2190 = vsub.s32 6, %v2189
          %v2191 = vrot.slane %v2073, %v2190
          %v2192 = vmul.f32 %v1511, %v2191
          %v2193 = vmul.f32 %v1512, %v2191
          %v2194 = vmul.f32 %v1513, %v2191
          %v2198 = vrot.slane %v2192, 6
          %v2199 = vrot.slane %v2193, 6
          %v2200 = vsel %vm1663, %v2198, %v2199
          %v2201 = vrot.slane %v2194, 6
          %v2202 = vsel %vm1663, %v2199, %v2201
          %v2206 = vadd.f32 %v2185, %v2198
          %v2207 = vadd.f32 %v2186, %v2200
          %v2208 = vadd.f32 %v2187, %v2202
          %v2209 = vlaneseq
          %v2210 = vshrl.u32 %v2209, 7
          %v2211 = vsub.s32 7, %v2210
          %v2212 = vrot.slane %v2073, %v2211
          %v2213 = vmul.f32 %v1511, %v2212
          %v2214 = vmul.f32 %v1512, %v2212
          %v2215 = vmul.f32 %v1513, %v2212
          %v2219 = vrot.slane %v2213, 7
          %v2220 = vrot.slane %v2214, 7
          %v2221 = vsel %vm1685, %v2219, %v2220
          %v2222 = vrot.slane %v2215, 7
          %v2223 = vsel %vm1685, %v2220, %v2222
          %v2227 = vadd.f32 %v2206, %v2219
          %v2228 = vadd.f32 %v2207, %v2221
          %v2229 = vadd.f32 %v2208, %v2223
          %v2230 = vlaneseq
          %v2231 = vshrl.u32 %v2230, 7
          %v2232 = vsub.s32 0, %v2231
          %v2233 = vrot.slane %v2074, %v2232
          %v2234 = vmul.f32 %v1511, %v2233
          %v2235 = vmul.f32 %v1512, %v2233
          %v2236 = vmul.f32 %v1513, %v2233
          %v2237 = vadd.f32 %v2227, %v2234
          %v2238 = vadd.f32 %v2228, %v2235
          %v2239 = vadd.f32 %v2229, %v2236
          %v2240 = vlaneseq
          %v2241 = vshrl.u32 %v2240, 7
          %v2242 = vsub.s32 1, %v2241
          %v2243 = vrot.slane %v2074, %v2242
          %v2244 = vmul.f32 %v1511, %v2243
          %v2245 = vmul.f32 %v1512, %v2243
          %v2246 = vmul.f32 %v1513, %v2243
          %v2250 = vrot.slane %v2244, 1
          %v2251 = vrot.slane %v2245, 1
          %v2252 = vsel %vm1557, %v2250, %v2251
          %v2253 = vrot.slane %v2246, 1
          %v2254 = vsel %vm1557, %v2251, %v2253
          %v2258 = vadd.f32 %v2237, %v2252
          %v2259 = vadd.f32 %v2238, %v2254
          %v2260 = vadd.f32 %v2239, %v2253
          %v2261 = vlaneseq
          %v2262 = vshrl.u32 %v2261, 7
          %v2263 = vsub.s32 2, %v2262
          %v2264 = vrot.slane %v2074, %v2263
          %v2265 = vmul.f32 %v1511, %v2264
          %v2266 = vmul.f32 %v1512, %v2264
          %v2267 = vmul.f32 %v1513, %v2264
          %v2271 = vrot.slane %v2265, 2
          %v2272 = vrot.slane %v2266, 2
          %v2273 = vsel %vm1579, %v2271, %v2272
          %v2274 = vrot.slane %v2267, 2
          %v2275 = vsel %vm1579, %v2272, %v2274
          %v2279 = vadd.f32 %v2258, %v2273
          %v2280 = vadd.f32 %v2259, %v2275
          %v2281 = vadd.f32 %v2260, %v2274
          %v2282 = vlaneseq
          %v2283 = vshrl.u32 %v2282, 7
          %v2284 = vsub.s32 3, %v2283
          %v2285 = vrot.slane %v2074, %v2284
          %v2286 = vmul.f32 %v1511, %v2285
          %v2287 = vmul.f32 %v1512, %v2285
          %v2288 = vmul.f32 %v1513, %v2285
          %v2292 = vrot.slane %v2286, 3
          %v2293 = vrot.slane %v2287, 3
          %v2294 = vsel %vm1601, %v2292, %v2293
          %v2295 = vrot.slane %v2288, 3
          %v2296 = vsel %vm1601, %v2293, %v2295
          %v2300 = vadd.f32 %v2279, %v2294
          %v2301 = vadd.f32 %v2280, %v2296
          %v2302 = vadd.f32 %v2281, %v2295
          %v2303 = vlaneseq
          %v2304 = vshrl.u32 %v2303, 7
          %v2305 = vsub.s32 4, %v2304
          %v2306 = vrot.slane %v2074, %v2305
          %v2307 = vmul.f32 %v1511, %v2306
          %v2308 = vmul.f32 %v1512, %v2306
          %v2309 = vmul.f32 %v1513, %v2306
          %v2313 = vrot.slane %v2307, 4
          %v2314 = vrot.slane %v2308, 4
          %v2315 = vsel %vm1623, %v2313, %v2314
          %v2316 = vrot.slane %v2309, 4
          %v2317 = vsel %vm1623, %v2314, %v2316
          %v2321 = vadd.f32 %v2300, %v2315
          %v2322 = vadd.f32 %v2301, %v2317
          %v2323 = vadd.f32 %v2302, %v2316
          %v2324 = vlaneseq
          %v2325 = vshrl.u32 %v2324, 7
          %v2326 = vsub.s32 5, %v2325
          %v2327 = vrot.slane %v2074, %v2326
          %v2328 = vmul.f32 %v1512, %v2327
          %v2329 = vmul.f32 %v1513, %v2327
          %v2332 = vrot.slane %v2328, 5
          %v2333 = vrot.slane %v2329, 5
          %v2334 = vsel %vm1643, %v2332, %v2333
          %v2338 = vadd.f32 %v2321, %v2332
          %v2339 = vadd.f32 %v2322, %v2334
          %v2340 = vadd.f32 %v2323, %v2333
          %v2341 = vlaneseq
          %v2342 = vshrl.u32 %v2341, 7
          %v2343 = vsub.s32 6, %v2342
          %v2344 = vrot.slane %v2074, %v2343
          %v2345 = vmul.f32 %v1512, %v2344
          %v2346 = vmul.f32 %v1513, %v2344
          %v2347 = vmul.f32 %v1514, %v2344
          %v2351 = vrot.slane %v2345, 6
          %v2352 = vrot.slane %v2346, 6
          %v2353 = vsel %vm1663, %v2351, %v2352
          %v2354 = vrot.slane %v2347, 6
          %v2355 = vsel %vm1663, %v2352, %v2354
          %v2359 = vadd.f32 %v2338, %v2351
          %v2360 = vadd.f32 %v2339, %v2353
          %v2361 = vadd.f32 %v2340, %v2355
          %v2362 = vlaneseq
          %v2363 = vshrl.u32 %v2362, 7
          %v2364 = vsub.s32 7, %v2363
          %v2365 = vrot.slane %v2074, %v2364
          %v2366 = vmul.f32 %v1512, %v2365
          %v2367 = vmul.f32 %v1513, %v2365
          %v2368 = vmul.f32 %v1514, %v2365
          %v2372 = vrot.slane %v2366, 7
          %v2373 = vrot.slane %v2367, 7
          %v2374 = vsel %vm1685, %v2372, %v2373
          %v2375 = vrot.slane %v2368, 7
          %v2376 = vsel %vm1685, %v2373, %v2375
          %v2380 = vadd.f32 %v2359, %v2372
          %v2381 = vadd.f32 %v2360, %v2374
          %v2382 = vadd.f32 %v2361, %v2376
          %v2383 = vlaneseq
          %v2384 = vshrl.u32 %v2383, 7
          %v2385 = vsub.s32 0, %v2384
          %v2386 = vrot.slane %v2075, %v2385
          %v2387 = vmul.f32 %v1512, %v2386
          %v2388 = vmul.f32 %v1513, %v2386
          %v2389 = vmul.f32 %v1514, %v2386
          %v2390 = vadd.f32 %v2380, %v2387
          %v2391 = vadd.f32 %v2381, %v2388
          %v2392 = vadd.f32 %v2382, %v2389
          %v2393 = vlaneseq
          %v2394 = vshrl.u32 %v2393, 7
          %v2395 = vsub.s32 1, %v2394
          %v2396 = vrot.slane %v2075, %v2395
          %v2397 = vmul.f32 %v1512, %v2396
          %v2398 = vmul.f32 %v1513, %v2396
          %v2399 = vmul.f32 %v1514, %v2396
          %v2403 = vrot.slane %v2397, 1
          %v2404 = vrot.slane %v2398, 1
          %v2405 = vsel %vm1557, %v2403, %v2404
          %v2406 = vrot.slane %v2399, 1
          %v2407 = vsel %vm1557, %v2404, %v2406
          %v2411 = vadd.f32 %v2390, %v2405
          %v2412 = vadd.f32 %v2391, %v2407
          %v2413 = vadd.f32 %v2392, %v2406
          %v2414 = vlaneseq
          %v2415 = vshrl.u32 %v2414, 7
          %v2416 = vsub.s32 2, %v2415
          %v2417 = vrot.slane %v2075, %v2416
          %v2418 = vmul.f32 %v1512, %v2417
          %v2419 = vmul.f32 %v1513, %v2417
          %v2420 = vmul.f32 %v1514, %v2417
          %v2424 = vrot.slane %v2418, 2
          %v2425 = vrot.slane %v2419, 2
          %v2426 = vsel %vm1579, %v2424, %v2425
          %v2427 = vrot.slane %v2420, 2
          %v2428 = vsel %vm1579, %v2425, %v2427
          %v2432 = vadd.f32 %v2411, %v2426
          %v2433 = vadd.f32 %v2412, %v2428
          %v2434 = vadd.f32 %v2413, %v2427
          %v2435 = vlaneseq
          %v2436 = vshrl.u32 %v2435, 7
          %v2437 = vsub.s32 3, %v2436
          %v2438 = vrot.slane %v2075, %v2437
          %v2439 = vmul.f32 %v1512, %v2438
          %v2440 = vmul.f32 %v1513, %v2438
          %v2441 = vmul.f32 %v1514, %v2438
          %v2445 = vrot.slane %v2439, 3
          %v2446 = vrot.slane %v2440, 3
          %v2447 = vsel %vm1601, %v2445, %v2446
          %v2448 = vrot.slane %v2441, 3
          %v2449 = vsel %vm1601, %v2446, %v2448
          %v2453 = vadd.f32 %v2432, %v2447
          %v2454 = vadd.f32 %v2433, %v2449
          %v2455 = vadd.f32 %v2434, %v2448
          %v2456 = vlaneseq
          %v2457 = vshrl.u32 %v2456, 7
          %v2458 = vsub.s32 4, %v2457
          %v2459 = vrot.slane %v2075, %v2458
          %v2460 = vmul.f32 %v1512, %v2459
          %v2461 = vmul.f32 %v1513, %v2459
          %v2462 = vmul.f32 %v1514, %v2459
          %v2466 = vrot.slane %v2460, 4
          %v2467 = vrot.slane %v2461, 4
          %v2468 = vsel %vm1623, %v2466, %v2467
          %v2469 = vrot.slane %v2462, 4
          %v2470 = vsel %vm1623, %v2467, %v2469
          %v2474 = vadd.f32 %v2453, %v2468
          %v2475 = vadd.f32 %v2454, %v2470
          %v2476 = vadd.f32 %v2455, %v2469
          %v2477 = vlaneseq
          %v2478 = vshrl.u32 %v2477, 7
          %v2479 = vsub.s32 5, %v2478
          %v2480 = vrot.slane %v2075, %v2479
          %v2481 = vmul.f32 %v1513, %v2480
          %v2482 = vmul.f32 %v1514, %v2480
          %v2485 = vrot.slane %v2481, 5
          %v2486 = vrot.slane %v2482, 5
          %v2487 = vsel %vm1643, %v2485, %v2486
          %v2491 = vadd.f32 %v2474, %v2485
          %v2492 = vadd.f32 %v2475, %v2487
          %v2493 = vadd.f32 %v2476, %v2486
          %v2494 = vlaneseq
          %v2495 = vshrl.u32 %v2494, 7
          %v2496 = vsub.s32 6, %v2495
          %v2497 = vrot.slane %v2075, %v2496
          %v2498 = vmul.f32 %v1513, %v2497
          %v2499 = vmul.f32 %v1514, %v2497
          %v2500 = vmul.f32 %v1515, %v2497
          %v2504 = vrot.slane %v2498, 6
          %v2505 = vrot.slane %v2499, 6
          %v2506 = vsel %vm1663, %v2504, %v2505
          %v2507 = vrot.slane %v2500, 6
          %v2508 = vsel %vm1663, %v2505, %v2507
          %v2512 = vadd.f32 %v2491, %v2504
          %v2513 = vadd.f32 %v2492, %v2506
          %v2514 = vadd.f32 %v2493, %v2508
          %v2515 = vlaneseq
          %v2516 = vshrl.u32 %v2515, 7
          %v2517 = vsub.s32 7, %v2516
          %v2518 = vrot.slane %v2075, %v2517
          %v2519 = vmul.f32 %v1513, %v2518
          %v2520 = vmul.f32 %v1514, %v2518
          %v2521 = vmul.f32 %v1515, %v2518
          %v2525 = vrot.slane %v2519, 7
          %v2526 = vrot.slane %v2520, 7
          %v2527 = vsel %vm1685, %v2525, %v2526
          %v2528 = vrot.slane %v2521, 7
          %v2529 = vsel %vm1685, %v2526, %v2528
          %v2533 = vadd.f32 %v2512, %v2525
          %v2534 = vadd.f32 %v2513, %v2527
          %v2535 = vadd.f32 %v2514, %v2529
          %v2536 = vlaneseq
          %v2537 = vshrl.u32 %v2536, 7
          %v2538 = vsub.s32 0, %v2537
          %v2539 = vrot.slane %v2076, %v2538
          %v2540 = vmul.f32 %v1513, %v2539
          %v2541 = vmul.f32 %v1514, %v2539
          %v2542 = vmul.f32 %v1515, %v2539
          %v2543 = vadd.f32 %v2533, %v2540
          %v2544 = vadd.f32 %v2534, %v2541
          %v2545 = vadd.f32 %v2535, %v2542
          %v2546 = vlaneseq
          %v2547 = vshrl.u32 %v2546, 7
          %v2548 = vsub.s32 1, %v2547
          %v2549 = vrot.slane %v2076, %v2548
          %v2550 = vmul.f32 %v1513, %v2549
          %v2551 = vmul.f32 %v1514, %v2549
          %v2552 = vmul.f32 %v1515, %v2549
          %v2556 = vrot.slane %v2550, 1
          %v2557 = vrot.slane %v2551, 1
          %v2558 = vsel %vm1557, %v2556, %v2557
          %v2559 = vrot.slane %v2552, 1
          %v2560 = vsel %vm1557, %v2557, %v2559
          %v2564 = vadd.f32 %v2543, %v2558
          %v2565 = vadd.f32 %v2544, %v2560
          %v2566 = vadd.f32 %v2545, %v2559
          %v2567 = vlaneseq
          %v2568 = vshrl.u32 %v2567, 7
          %v2569 = vsub.s32 2, %v2568
          %v2570 = vrot.slane %v2076, %v2569
          %v2571 = vmul.f32 %v1513, %v2570
          %v2572 = vmul.f32 %v1514, %v2570
          %v2573 = vmul.f32 %v1515, %v2570
          %v2577 = vrot.slane %v2571, 2
          %v2578 = vrot.slane %v2572, 2
          %v2579 = vsel %vm1579, %v2577, %v2578
          %v2580 = vrot.slane %v2573, 2
          %v2581 = vsel %vm1579, %v2578, %v2580
          %v2585 = vadd.f32 %v2564, %v2579
          %v2586 = vadd.f32 %v2565, %v2581
          %v2587 = vadd.f32 %v2566, %v2580
          %s2588 = ssub.s32 %s1478, 2
          %p2589 = scmp.ge.s32.totalorder %s2588, 0
          %p2590 = scmp.lt.s32.totalorder %s2588, 27
          %p2591 = pnand %p2589, %p2590
          %p2592 = pneg %p2591
          %s2593 = scalar_select %p2592, 1, 0
          %s2594 = scvt.s32.f32 %s2593
          %p2595 = scmp.gt.s32.totalorder %s2588, 0
          %s2596 = scalar_select %p2595, %s2588, 0
          %p2597 = scmp.lt.s32.totalorder %s2596, 26
          %s2598 = scalar_select %p2597, %s2596, 26
          %s2599 = smul.u32 %s2598, 32
          %s2600 = scalar_lea.vmem [#allocation3], %s2599
          %v2601 = vld [vmem:[%s2600] sm:$0xff]
          %v2602 = vld [vmem:[%s2600 + $0x8] sm:$0xff]
          %v2603 = vld [vmem:[%s2600 + $0x10] sm:$0xff]
          %v2604 = vld [vmem:[%s2600 + $0x18] sm:$0x7]
          %v2605 = vstv %s2594
          %v2606 = vmul.f32 %v2601, %v2605
          %v2607 = vmul.f32 %v2602, %v2605
          %v2608 = vmul.f32 %v2603, %v2605
          %v2609 = vmul.f32 %v2604, %v2605
          %v2610 = vlaneseq
          %v2611 = vshrl.u32 %v2610, 7
          %v2612 = vsub.s32 0, %v2611
          %v2613 = vrot.slane %v2606, %v2612
          %v2614 = vmul.f32 %v1510, %v2613
          %v2615 = vmul.f32 %v1511, %v2613
          %v2616 = vmul.f32 %v1512, %v2613
          %v2617 = vadd.f32 %v1489, %v2614
          %v2618 = vadd.f32 %v1490, %v2615
          %v2619 = vadd.f32 %v1491, %v2616
          %v2620 = vlaneseq
          %v2621 = vshrl.u32 %v2620, 7
          %v2622 = vsub.s32 1, %v2621
          %v2623 = vrot.slane %v2606, %v2622
          %v2624 = vmul.f32 %v1510, %v2623
          %v2625 = vmul.f32 %v1511, %v2623
          %v2626 = vmul.f32 %v1512, %v2623
          %v2630 = vrot.slane %v2624, 1
          %v2631 = vrot.slane %v2625, 1
          %v2632 = vsel %vm1557, %v2630, %v2631
          %v2633 = vrot.slane %v2626, 1
          %v2634 = vsel %vm1557, %v2631, %v2633
          %v2638 = vadd.f32 %v2617, %v2632
          %v2639 = vadd.f32 %v2618, %v2634
          %v2640 = vadd.f32 %v2619, %v2633
          %v2641 = vlaneseq
          %v2642 = vshrl.u32 %v2641, 7
          %v2643 = vsub.s32 2, %v2642
          %v2644 = vrot.slane %v2606, %v2643
          %v2645 = vmul.f32 %v1510, %v2644
          %v2646 = vmul.f32 %v1511, %v2644
          %v2647 = vmul.f32 %v1512, %v2644
          %v2651 = vrot.slane %v2645, 2
          %v2652 = vrot.slane %v2646, 2
          %v2653 = vsel %vm1579, %v2651, %v2652
          %v2654 = vrot.slane %v2647, 2
          %v2655 = vsel %vm1579, %v2652, %v2654
          %v2659 = vadd.f32 %v2638, %v2653
          %v2660 = vadd.f32 %v2639, %v2655
          %v2661 = vadd.f32 %v2640, %v2654
          %v2662 = vlaneseq
          %v2663 = vshrl.u32 %v2662, 7
          %v2664 = vsub.s32 3, %v2663
          %v2665 = vrot.slane %v2606, %v2664
          %v2666 = vmul.f32 %v1510, %v2665
          %v2667 = vmul.f32 %v1511, %v2665
          %v2668 = vmul.f32 %v1512, %v2665
          %v2672 = vrot.slane %v2666, 3
          %v2673 = vrot.slane %v2667, 3
          %v2674 = vsel %vm1601, %v2672, %v2673
          %v2675 = vrot.slane %v2668, 3
          %v2676 = vsel %vm1601, %v2673, %v2675
          %v2680 = vadd.f32 %v2659, %v2674
          %v2681 = vadd.f32 %v2660, %v2676
          %v2682 = vadd.f32 %v2661, %v2675
          %v2683 = vlaneseq
          %v2684 = vshrl.u32 %v2683, 7
          %v2685 = vsub.s32 4, %v2684
          %v2686 = vrot.slane %v2606, %v2685
          %v2687 = vmul.f32 %v1510, %v2686
          %v2688 = vmul.f32 %v1511, %v2686
          %v2689 = vmul.f32 %v1512, %v2686
          %v2693 = vrot.slane %v2687, 4
          %v2694 = vrot.slane %v2688, 4
          %v2695 = vsel %vm1623, %v2693, %v2694
          %v2696 = vrot.slane %v2689, 4
          %v2697 = vsel %vm1623, %v2694, %v2696
          %v2701 = vadd.f32 %v2680, %v2695
          %v2702 = vadd.f32 %v2681, %v2697
          %v2703 = vadd.f32 %v2682, %v2696
          %v2704 = vlaneseq
          %v2705 = vshrl.u32 %v2704, 7
          %v2706 = vsub.s32 5, %v2705
          %v2707 = vrot.slane %v2606, %v2706
          %v2708 = vmul.f32 %v1511, %v2707
          %v2709 = vmul.f32 %v1512, %v2707
          %v2712 = vrot.slane %v2708, 5
          %v2713 = vrot.slane %v2709, 5
          %v2714 = vsel %vm1643, %v2712, %v2713
          %v2718 = vadd.f32 %v2701, %v2712
          %v2719 = vadd.f32 %v2702, %v2714
          %v2720 = vadd.f32 %v2703, %v2713
          %v2721 = vlaneseq
          %v2722 = vshrl.u32 %v2721, 7
          %v2723 = vsub.s32 6, %v2722
          %v2724 = vrot.slane %v2606, %v2723
          %v2725 = vmul.f32 %v1511, %v2724
          %v2726 = vmul.f32 %v1512, %v2724
          %v2727 = vmul.f32 %v1513, %v2724
          %v2731 = vrot.slane %v2725, 6
          %v2732 = vrot.slane %v2726, 6
          %v2733 = vsel %vm1663, %v2731, %v2732
          %v2734 = vrot.slane %v2727, 6
          %v2735 = vsel %vm1663, %v2732, %v2734
          %v2739 = vadd.f32 %v2718, %v2731
          %v2740 = vadd.f32 %v2719, %v2733
          %v2741 = vadd.f32 %v2720, %v2735
          %v2742 = vlaneseq
          %v2743 = vshrl.u32 %v2742, 7
          %v2744 = vsub.s32 7, %v2743
          %v2745 = vrot.slane %v2606, %v2744
          %v2746 = vmul.f32 %v1511, %v2745
          %v2747 = vmul.f32 %v1512, %v2745
          %v2748 = vmul.f32 %v1513, %v2745
          %v2752 = vrot.slane %v2746, 7
          %v2753 = vrot.slane %v2747, 7
          %v2754 = vsel %vm1685, %v2752, %v2753
          %v2755 = vrot.slane %v2748, 7
          %v2756 = vsel %vm1685, %v2753, %v2755
          %v2760 = vadd.f32 %v2739, %v2752
          %v2761 = vadd.f32 %v2740, %v2754
          %v2762 = vadd.f32 %v2741, %v2756
          %v2763 = vlaneseq
          %v2764 = vshrl.u32 %v2763, 7
          %v2765 = vsub.s32 0, %v2764
          %v2766 = vrot.slane %v2607, %v2765
          %v2767 = vmul.f32 %v1511, %v2766
          %v2768 = vmul.f32 %v1512, %v2766
          %v2769 = vmul.f32 %v1513, %v2766
          %v2770 = vadd.f32 %v2760, %v2767
          %v2771 = vadd.f32 %v2761, %v2768
          %v2772 = vadd.f32 %v2762, %v2769
          %v2773 = vlaneseq
          %v2774 = vshrl.u32 %v2773, 7
          %v2775 = vsub.s32 1, %v2774
          %v2776 = vrot.slane %v2607, %v2775
          %v2777 = vmul.f32 %v1511, %v2776
          %v2778 = vmul.f32 %v1512, %v2776
          %v2779 = vmul.f32 %v1513, %v2776
          %v2783 = vrot.slane %v2777, 1
          %v2784 = vrot.slane %v2778, 1
          %v2785 = vsel %vm1557, %v2783, %v2784
          %v2786 = vrot.slane %v2779, 1
          %v2787 = vsel %vm1557, %v2784, %v2786
          %v2791 = vadd.f32 %v2770, %v2785
          %v2792 = vadd.f32 %v2771, %v2787
          %v2793 = vadd.f32 %v2772, %v2786
          %v2794 = vlaneseq
          %v2795 = vshrl.u32 %v2794, 7
          %v2796 = vsub.s32 2, %v2795
          %v2797 = vrot.slane %v2607, %v2796
          %v2798 = vmul.f32 %v1511, %v2797
          %v2799 = vmul.f32 %v1512, %v2797
          %v2800 = vmul.f32 %v1513, %v2797
          %v2804 = vrot.slane %v2798, 2
          %v2805 = vrot.slane %v2799, 2
          %v2806 = vsel %vm1579, %v2804, %v2805
          %v2807 = vrot.slane %v2800, 2
          %v2808 = vsel %vm1579, %v2805, %v2807
          %v2812 = vadd.f32 %v2791, %v2806
          %v2813 = vadd.f32 %v2792, %v2808
          %v2814 = vadd.f32 %v2793, %v2807
          %v2815 = vlaneseq
          %v2816 = vshrl.u32 %v2815, 7
          %v2817 = vsub.s32 3, %v2816
          %v2818 = vrot.slane %v2607, %v2817
          %v2819 = vmul.f32 %v1511, %v2818
          %v2820 = vmul.f32 %v1512, %v2818
          %v2821 = vmul.f32 %v1513, %v2818
          %v2825 = vrot.slane %v2819, 3
          %v2826 = vrot.slane %v2820, 3
          %v2827 = vsel %vm1601, %v2825, %v2826
          %v2828 = vrot.slane %v2821, 3
          %v2829 = vsel %vm1601, %v2826, %v2828
          %v2833 = vadd.f32 %v2812, %v2827
          %v2834 = vadd.f32 %v2813, %v2829
          %v2835 = vadd.f32 %v2814, %v2828
          %v2836 = vlaneseq
          %v2837 = vshrl.u32 %v2836, 7
          %v2838 = vsub.s32 4, %v2837
          %v2839 = vrot.slane %v2607, %v2838
          %v2840 = vmul.f32 %v1511, %v2839
          %v2841 = vmul.f32 %v1512, %v2839
          %v2842 = vmul.f32 %v1513, %v2839
          %v2846 = vrot.slane %v2840, 4
          %v2847 = vrot.slane %v2841, 4
          %v2848 = vsel %vm1623, %v2846, %v2847
          %v2849 = vrot.slane %v2842, 4
          %v2850 = vsel %vm1623, %v2847, %v2849
          %v2854 = vadd.f32 %v2833, %v2848
          %v2855 = vadd.f32 %v2834, %v2850
          %v2856 = vadd.f32 %v2835, %v2849
          %v2857 = vlaneseq
          %v2858 = vshrl.u32 %v2857, 7
          %v2859 = vsub.s32 5, %v2858
          %v2860 = vrot.slane %v2607, %v2859
          %v2861 = vmul.f32 %v1512, %v2860
          %v2862 = vmul.f32 %v1513, %v2860
          %v2865 = vrot.slane %v2861, 5
          %v2866 = vrot.slane %v2862, 5
          %v2867 = vsel %vm1643, %v2865, %v2866
          %v2871 = vadd.f32 %v2854, %v2865
          %v2872 = vadd.f32 %v2855, %v2867
          %v2873 = vadd.f32 %v2856, %v2866
          %v2874 = vlaneseq
          %v2875 = vshrl.u32 %v2874, 7
          %v2876 = vsub.s32 6, %v2875
          %v2877 = vrot.slane %v2607, %v2876
          %v2878 = vmul.f32 %v1512, %v2877
          %v2879 = vmul.f32 %v1513, %v2877
          %v2880 = vmul.f32 %v1514, %v2877
          %v2884 = vrot.slane %v2878, 6
          %v2885 = vrot.slane %v2879, 6
          %v2886 = vsel %vm1663, %v2884, %v2885
          %v2887 = vrot.slane %v2880, 6
          %v2888 = vsel %vm1663, %v2885, %v2887
          %v2892 = vadd.f32 %v2871, %v2884
          %v2893 = vadd.f32 %v2872, %v2886
          %v2894 = vadd.f32 %v2873, %v2888
          %v2895 = vlaneseq
          %v2896 = vshrl.u32 %v2895, 7
          %v2897 = vsub.s32 7, %v2896
          %v2898 = vrot.slane %v2607, %v2897
          %v2899 = vmul.f32 %v1512, %v2898
          %v2900 = vmul.f32 %v1513, %v2898
          %v2901 = vmul.f32 %v1514, %v2898
          %v2905 = vrot.slane %v2899, 7
          %v2906 = vrot.slane %v2900, 7
          %v2907 = vsel %vm1685, %v2905, %v2906
          %v2908 = vrot.slane %v2901, 7
          %v2909 = vsel %vm1685, %v2906, %v2908
          %v2913 = vadd.f32 %v2892, %v2905
          %v2914 = vadd.f32 %v2893, %v2907
          %v2915 = vadd.f32 %v2894, %v2909
          %v2916 = vlaneseq
          %v2917 = vshrl.u32 %v2916, 7
          %v2918 = vsub.s32 0, %v2917
          %v2919 = vrot.slane %v2608, %v2918
          %v2920 = vmul.f32 %v1512, %v2919
          %v2921 = vmul.f32 %v1513, %v2919
          %v2922 = vmul.f32 %v1514, %v2919
          %v2923 = vadd.f32 %v2913, %v2920
          %v2924 = vadd.f32 %v2914, %v2921
          %v2925 = vadd.f32 %v2915, %v2922
          %v2926 = vlaneseq
          %v2927 = vshrl.u32 %v2926, 7
          %v2928 = vsub.s32 1, %v2927
          %v2929 = vrot.slane %v2608, %v2928
          %v2930 = vmul.f32 %v1512, %v2929
          %v2931 = vmul.f32 %v1513, %v2929
          %v2932 = vmul.f32 %v1514, %v2929
          %v2936 = vrot.slane %v2930, 1
          %v2937 = vrot.slane %v2931, 1
          %v2938 = vsel %vm1557, %v2936, %v2937
          %v2939 = vrot.slane %v2932, 1
          %v2940 = vsel %vm1557, %v2937, %v2939
          %v2944 = vadd.f32 %v2923, %v2938
          %v2945 = vadd.f32 %v2924, %v2940
          %v2946 = vadd.f32 %v2925, %v2939
          %v2947 = vlaneseq
          %v2948 = vshrl.u32 %v2947, 7
          %v2949 = vsub.s32 2, %v2948
          %v2950 = vrot.slane %v2608, %v2949
          %v2951 = vmul.f32 %v1512, %v2950
          %v2952 = vmul.f32 %v1513, %v2950
          %v2953 = vmul.f32 %v1514, %v2950
          %v2957 = vrot.slane %v2951, 2
          %v2958 = vrot.slane %v2952, 2
          %v2959 = vsel %vm1579, %v2957, %v2958
          %v2960 = vrot.slane %v2953, 2
          %v2961 = vsel %vm1579, %v2958, %v2960
          %v2965 = vadd.f32 %v2944, %v2959
          %v2966 = vadd.f32 %v2945, %v2961
          %v2967 = vadd.f32 %v2946, %v2960
          %v2968 = vlaneseq
          %v2969 = vshrl.u32 %v2968, 7
          %v2970 = vsub.s32 3, %v2969
          %v2971 = vrot.slane %v2608, %v2970
          %v2972 = vmul.f32 %v1512, %v2971
          %v2973 = vmul.f32 %v1513, %v2971
          %v2974 = vmul.f32 %v1514, %v2971
          %v2978 = vrot.slane %v2972, 3
          %v2979 = vrot.slane %v2973, 3
          %v2980 = vsel %vm1601, %v2978, %v2979
          %v2981 = vrot.slane %v2974, 3
          %v2982 = vsel %vm1601, %v2979, %v2981
          %v2986 = vadd.f32 %v2965, %v2980
          %v2987 = vadd.f32 %v2966, %v2982
          %v2988 = vadd.f32 %v2967, %v2981
          %v2989 = vlaneseq
          %v2990 = vshrl.u32 %v2989, 7
          %v2991 = vsub.s32 4, %v2990
          %v2992 = vrot.slane %v2608, %v2991
          %v2993 = vmul.f32 %v1512, %v2992
          %v2994 = vmul.f32 %v1513, %v2992
          %v2995 = vmul.f32 %v1514, %v2992
          %v2999 = vrot.slane %v2993, 4
          %v3000 = vrot.slane %v2994, 4
          %v3001 = vsel %vm1623, %v2999, %v3000
          %v3002 = vrot.slane %v2995, 4
          %v3003 = vsel %vm1623, %v3000, %v3002
          %v3007 = vadd.f32 %v2986, %v3001
          %v3008 = vadd.f32 %v2987, %v3003
          %v3009 = vadd.f32 %v2988, %v3002
          %v3010 = vlaneseq
          %v3011 = vshrl.u32 %v3010, 7
          %v3012 = vsub.s32 5, %v3011
          %v3013 = vrot.slane %v2608, %v3012
          %v3014 = vmul.f32 %v1513, %v3013
          %v3015 = vmul.f32 %v1514, %v3013
          %v3018 = vrot.slane %v3014, 5
          %v3019 = vrot.slane %v3015, 5
          %v3020 = vsel %vm1643, %v3018, %v3019
          %v3024 = vadd.f32 %v3007, %v3018
          %v3025 = vadd.f32 %v3008, %v3020
          %v3026 = vadd.f32 %v3009, %v3019
          %v3027 = vlaneseq
          %v3028 = vshrl.u32 %v3027, 7
          %v3029 = vsub.s32 6, %v3028
          %v3030 = vrot.slane %v2608, %v3029
          %v3031 = vmul.f32 %v1513, %v3030
          %v3032 = vmul.f32 %v1514, %v3030
          %v3033 = vmul.f32 %v1515, %v3030
          %v3037 = vrot.slane %v3031, 6
          %v3038 = vrot.slane %v3032, 6
          %v3039 = vsel %vm1663, %v3037, %v3038
          %v3040 = vrot.slane %v3033, 6
          %v3041 = vsel %vm1663, %v3038, %v3040
          %v3045 = vadd.f32 %v3024, %v3037
          %v3046 = vadd.f32 %v3025, %v3039
          %v3047 = vadd.f32 %v3026, %v3041
          %v3048 = vlaneseq
          %v3049 = vshrl.u32 %v3048, 7
          %v3050 = vsub.s32 7, %v3049
          %v3051 = vrot.slane %v2608, %v3050
          %v3052 = vmul.f32 %v1513, %v3051
          %v3053 = vmul.f32 %v1514, %v3051
          %v3054 = vmul.f32 %v1515, %v3051
          %v3058 = vrot.slane %v3052, 7
          %v3059 = vrot.slane %v3053, 7
          %v3060 = vsel %vm1685, %v3058, %v3059
          %v3061 = vrot.slane %v3054, 7
          %v3062 = vsel %vm1685, %v3059, %v3061
          %v3066 = vadd.f32 %v3045, %v3058
          %v3067 = vadd.f32 %v3046, %v3060
          %v3068 = vadd.f32 %v3047, %v3062
          %v3069 = vlaneseq
          %v3070 = vshrl.u32 %v3069, 7
          %v3071 = vsub.s32 0, %v3070
          %v3072 = vrot.slane %v2609, %v3071
          %v3073 = vmul.f32 %v1513, %v3072
          %v3074 = vmul.f32 %v1514, %v3072
          %v3075 = vmul.f32 %v1515, %v3072
          %v3076 = vadd.f32 %v3066, %v3073
          %v3077 = vadd.f32 %v3067, %v3074
          %v3078 = vadd.f32 %v3068, %v3075
          %v3079 = vlaneseq
          %v3080 = vshrl.u32 %v3079, 7
          %v3081 = vsub.s32 1, %v3080
          %v3082 = vrot.slane %v2609, %v3081
          %v3083 = vmul.f32 %v1513, %v3082
          %v3084 = vmul.f32 %v1514, %v3082
          %v3085 = vmul.f32 %v1515, %v3082
          %v3089 = vrot.slane %v3083, 1
          %v3090 = vrot.slane %v3084, 1
          %v3091 = vsel %vm1557, %v3089, %v3090
          %v3092 = vrot.slane %v3085, 1
          %v3093 = vsel %vm1557, %v3090, %v3092
          %v3097 = vadd.f32 %v3076, %v3091
          %v3098 = vadd.f32 %v3077, %v3093
          %v3099 = vadd.f32 %v3078, %v3092
          %v3100 = vlaneseq
          %v3101 = vshrl.u32 %v3100, 7
          %v3102 = vsub.s32 2, %v3101
          %v3103 = vrot.slane %v2609, %v3102
          %v3104 = vmul.f32 %v1513, %v3103
          %v3105 = vmul.f32 %v1514, %v3103
          %v3106 = vmul.f32 %v1515, %v3103
          %v3110 = vrot.slane %v3104, 2
          %v3111 = vrot.slane %v3105, 2
          %v3112 = vsel %vm1579, %v3110, %v3111
          %v3113 = vrot.slane %v3106, 2
          %v3114 = vsel %vm1579, %v3111, %v3113
          %v3118 = vadd.f32 %v3097, %v3112
          %v3119 = vadd.f32 %v3098, %v3114
          %v3120 = vadd.f32 %v3099, %v3113
          %s3121 = ssub.s32 %s1478, 3
          %p3122 = scmp.ge.s32.totalorder %s3121, 0
          %p3123 = scmp.lt.s32.totalorder %s3121, 27
          %p3124 = pnand %p3122, %p3123
          %p3125 = pneg %p3124
          %s3126 = scalar_select %p3125, 1, 0
          %s3127 = scvt.s32.f32 %s3126
          %p3128 = scmp.gt.s32.totalorder %s3121, 0
          %s3129 = scalar_select %p3128, %s3121, 0
          %p3130 = scmp.lt.s32.totalorder %s3129, 26
          %s3131 = scalar_select %p3130, %s3129, 26
          %s3132 = smul.u32 %s3131, 32
          %s3133 = scalar_lea.vmem [#allocation3], %s3132
          %v3134 = vld [vmem:[%s3133] sm:$0xff]
          %v3135 = vld [vmem:[%s3133 + $0x8] sm:$0xff]
          %v3136 = vld [vmem:[%s3133 + $0x10] sm:$0xff]
          %v3137 = vld [vmem:[%s3133 + $0x18] sm:$0x7]
          %v3138 = vstv %s3127
          %v3139 = vmul.f32 %v3134, %v3138
          %v3140 = vmul.f32 %v3135, %v3138
          %v3141 = vmul.f32 %v3136, %v3138
          %v3142 = vmul.f32 %v3137, %v3138
          %v3143 = vlaneseq
          %v3144 = vshrl.u32 %v3143, 7
          %v3145 = vsub.s32 0, %v3144
          %v3146 = vrot.slane %v3139, %v3145
          %v3147 = vmul.f32 %v1510, %v3146
          %v3148 = vmul.f32 %v1511, %v3146
          %v3149 = vmul.f32 %v1512, %v3146
          %v3150 = vadd.f32 %v1492, %v3147
          %v3151 = vadd.f32 %v1493, %v3148
          %v3152 = vadd.f32 %v1494, %v3149
          %v3153 = vlaneseq
          %v3154 = vshrl.u32 %v3153, 7
          %v3155 = vsub.s32 1, %v3154
          %v3156 = vrot.slane %v3139, %v3155
          %v3157 = vmul.f32 %v1510, %v3156
          %v3158 = vmul.f32 %v1511, %v3156
          %v3159 = vmul.f32 %v1512, %v3156
          %v3163 = vrot.slane %v3157, 1
          %v3164 = vrot.slane %v3158, 1
          %v3165 = vsel %vm1557, %v3163, %v3164
          %v3166 = vrot.slane %v3159, 1
          %v3167 = vsel %vm1557, %v3164, %v3166
          %v3171 = vadd.f32 %v3150, %v3165
          %v3172 = vadd.f32 %v3151, %v3167
          %v3173 = vadd.f32 %v3152, %v3166
          %v3174 = vlaneseq
          %v3175 = vshrl.u32 %v3174, 7
          %v3176 = vsub.s32 2, %v3175
          %v3177 = vrot.slane %v3139, %v3176
          %v3178 = vmul.f32 %v1510, %v3177
          %v3179 = vmul.f32 %v1511, %v3177
          %v3180 = vmul.f32 %v1512, %v3177
          %v3184 = vrot.slane %v3178, 2
          %v3185 = vrot.slane %v3179, 2
          %v3186 = vsel %vm1579, %v3184, %v3185
          %v3187 = vrot.slane %v3180, 2
          %v3188 = vsel %vm1579, %v3185, %v3187
          %v3192 = vadd.f32 %v3171, %v3186
          %v3193 = vadd.f32 %v3172, %v3188
          %v3194 = vadd.f32 %v3173, %v3187
          %v3195 = vlaneseq
          %v3196 = vshrl.u32 %v3195, 7
          %v3197 = vsub.s32 3, %v3196
          %v3198 = vrot.slane %v3139, %v3197
          %v3199 = vmul.f32 %v1510, %v3198
          %v3200 = vmul.f32 %v1511, %v3198
          %v3201 = vmul.f32 %v1512, %v3198
          %v3205 = vrot.slane %v3199, 3
          %v3206 = vrot.slane %v3200, 3
          %v3207 = vsel %vm1601, %v3205, %v3206
          %v3208 = vrot.slane %v3201, 3
          %v3209 = vsel %vm1601, %v3206, %v3208
          %v3213 = vadd.f32 %v3192, %v3207
          %v3214 = vadd.f32 %v3193, %v3209
          %v3215 = vadd.f32 %v3194, %v3208
          %v3216 = vlaneseq
          %v3217 = vshrl.u32 %v3216, 7
          %v3218 = vsub.s32 4, %v3217
          %v3219 = vrot.slane %v3139, %v3218
          %v3220 = vmul.f32 %v1510, %v3219
          %v3221 = vmul.f32 %v1511, %v3219
          %v3222 = vmul.f32 %v1512, %v3219
          %v3226 = vrot.slane %v3220, 4
          %v3227 = vrot.slane %v3221, 4
          %v3228 = vsel %vm1623, %v3226, %v3227
          %v3229 = vrot.slane %v3222, 4
          %v3230 = vsel %vm1623, %v3227, %v3229
          %v3234 = vadd.f32 %v3213, %v3228
          %v3235 = vadd.f32 %v3214, %v3230
          %v3236 = vadd.f32 %v3215, %v3229
          %v3237 = vlaneseq
          %v3238 = vshrl.u32 %v3237, 7
          %v3239 = vsub.s32 5, %v3238
          %v3240 = vrot.slane %v3139, %v3239
          %v3241 = vmul.f32 %v1511, %v3240
          %v3242 = vmul.f32 %v1512, %v3240
          %v3245 = vrot.slane %v3241, 5
          %v3246 = vrot.slane %v3242, 5
          %v3247 = vsel %vm1643, %v3245, %v3246
          %v3251 = vadd.f32 %v3234, %v3245
          %v3252 = vadd.f32 %v3235, %v3247
          %v3253 = vadd.f32 %v3236, %v3246
          %v3254 = vlaneseq
          %v3255 = vshrl.u32 %v3254, 7
          %v3256 = vsub.s32 6, %v3255
          %v3257 = vrot.slane %v3139, %v3256
          %v3258 = vmul.f32 %v1511, %v3257
          %v3259 = vmul.f32 %v1512, %v3257
          %v3260 = vmul.f32 %v1513, %v3257
          %v3264 = vrot.slane %v3258, 6
          %v3265 = vrot.slane %v3259, 6
          %v3266 = vsel %vm1663, %v3264, %v3265
          %v3267 = vrot.slane %v3260, 6
          %v3268 = vsel %vm1663, %v3265, %v3267
          %v3272 = vadd.f32 %v3251, %v3264
          %v3273 = vadd.f32 %v3252, %v3266
          %v3274 = vadd.f32 %v3253, %v3268
          %v3275 = vlaneseq
          %v3276 = vshrl.u32 %v3275, 7
          %v3277 = vsub.s32 7, %v3276
          %v3278 = vrot.slane %v3139, %v3277
          %v3279 = vmul.f32 %v1511, %v3278
          %v3280 = vmul.f32 %v1512, %v3278
          %v3281 = vmul.f32 %v1513, %v3278
          %v3285 = vrot.slane %v3279, 7
          %v3286 = vrot.slane %v3280, 7
          %v3287 = vsel %vm1685, %v3285, %v3286
          %v3288 = vrot.slane %v3281, 7
          %v3289 = vsel %vm1685, %v3286, %v3288
          %v3293 = vadd.f32 %v3272, %v3285
          %v3294 = vadd.f32 %v3273, %v3287
          %v3295 = vadd.f32 %v3274, %v3289
          %v3296 = vlaneseq
          %v3297 = vshrl.u32 %v3296, 7
          %v3298 = vsub.s32 0, %v3297
          %v3299 = vrot.slane %v3140, %v3298
          %v3300 = vmul.f32 %v1511, %v3299
          %v3301 = vmul.f32 %v1512, %v3299
          %v3302 = vmul.f32 %v1513, %v3299
          %v3303 = vadd.f32 %v3293, %v3300
          %v3304 = vadd.f32 %v3294, %v3301
          %v3305 = vadd.f32 %v3295, %v3302
          %v3306 = vlaneseq
          %v3307 = vshrl.u32 %v3306, 7
          %v3308 = vsub.s32 1, %v3307
          %v3309 = vrot.slane %v3140, %v3308
          %v3310 = vmul.f32 %v1511, %v3309
          %v3311 = vmul.f32 %v1512, %v3309
          %v3312 = vmul.f32 %v1513, %v3309
          %v3316 = vrot.slane %v3310, 1
          %v3317 = vrot.slane %v3311, 1
          %v3318 = vsel %vm1557, %v3316, %v3317
          %v3319 = vrot.slane %v3312, 1
          %v3320 = vsel %vm1557, %v3317, %v3319
          %v3324 = vadd.f32 %v3303, %v3318
          %v3325 = vadd.f32 %v3304, %v3320
          %v3326 = vadd.f32 %v3305, %v3319
          %v3327 = vlaneseq
          %v3328 = vshrl.u32 %v3327, 7
          %v3329 = vsub.s32 2, %v3328
          %v3330 = vrot.slane %v3140, %v3329
          %v3331 = vmul.f32 %v1511, %v3330
          %v3332 = vmul.f32 %v1512, %v3330
          %v3333 = vmul.f32 %v1513, %v3330
          %v3337 = vrot.slane %v3331, 2
          %v3338 = vrot.slane %v3332, 2
          %v3339 = vsel %vm1579, %v3337, %v3338
          %v3340 = vrot.slane %v3333, 2
          %v3341 = vsel %vm1579, %v3338, %v3340
          %v3345 = vadd.f32 %v3324, %v3339
          %v3346 = vadd.f32 %v3325, %v3341
          %v3347 = vadd.f32 %v3326, %v3340
          %v3348 = vlaneseq
          %v3349 = vshrl.u32 %v3348, 7
          %v3350 = vsub.s32 3, %v3349
          %v3351 = vrot.slane %v3140, %v3350
          %v3352 = vmul.f32 %v1511, %v3351
          %v3353 = vmul.f32 %v1512, %v3351
          %v3354 = vmul.f32 %v1513, %v3351
          %v3358 = vrot.slane %v3352, 3
          %v3359 = vrot.slane %v3353, 3
          %v3360 = vsel %vm1601, %v3358, %v3359
          %v3361 = vrot.slane %v3354, 3
          %v3362 = vsel %vm1601, %v3359, %v3361
          %v3366 = vadd.f32 %v3345, %v3360
          %v3367 = vadd.f32 %v3346, %v3362
          %v3368 = vadd.f32 %v3347, %v3361
          %v3369 = vlaneseq
          %v3370 = vshrl.u32 %v3369, 7
          %v3371 = vsub.s32 4, %v3370
          %v3372 = vrot.slane %v3140, %v3371
          %v3373 = vmul.f32 %v1511, %v3372
          %v3374 = vmul.f32 %v1512, %v3372
          %v3375 = vmul.f32 %v1513, %v3372
          %v3379 = vrot.slane %v3373, 4
          %v3380 = vrot.slane %v3374, 4
          %v3381 = vsel %vm1623, %v3379, %v3380
          %v3382 = vrot.slane %v3375, 4
          %v3383 = vsel %vm1623, %v3380, %v3382
          %v3387 = vadd.f32 %v3366, %v3381
          %v3388 = vadd.f32 %v3367, %v3383
          %v3389 = vadd.f32 %v3368, %v3382
          %v3390 = vlaneseq
          %v3391 = vshrl.u32 %v3390, 7
          %v3392 = vsub.s32 5, %v3391
          %v3393 = vrot.slane %v3140, %v3392
          %v3394 = vmul.f32 %v1512, %v3393
          %v3395 = vmul.f32 %v1513, %v3393
          %v3398 = vrot.slane %v3394, 5
          %v3399 = vrot.slane %v3395, 5
          %v3400 = vsel %vm1643, %v3398, %v3399
          %v3404 = vadd.f32 %v3387, %v3398
          %v3405 = vadd.f32 %v3388, %v3400
          %v3406 = vadd.f32 %v3389, %v3399
          %v3407 = vlaneseq
          %v3408 = vshrl.u32 %v3407, 7
          %v3409 = vsub.s32 6, %v3408
          %v3410 = vrot.slane %v3140, %v3409
          %v3411 = vmul.f32 %v1512, %v3410
          %v3412 = vmul.f32 %v1513, %v3410
          %v3413 = vmul.f32 %v1514, %v3410
          %v3417 = vrot.slane %v3411, 6
          %v3418 = vrot.slane %v3412, 6
          %v3419 = vsel %vm1663, %v3417, %v3418
          %v3420 = vrot.slane %v3413, 6
          %v3421 = vsel %vm1663, %v3418, %v3420
          %v3425 = vadd.f32 %v3404, %v3417
          %v3426 = vadd.f32 %v3405, %v3419
          %v3427 = vadd.f32 %v3406, %v3421
          %v3428 = vlaneseq
          %v3429 = vshrl.u32 %v3428, 7
          %v3430 = vsub.s32 7, %v3429
          %v3431 = vrot.slane %v3140, %v3430
          %v3432 = vmul.f32 %v1512, %v3431
          %v3433 = vmul.f32 %v1513, %v3431
          %v3434 = vmul.f32 %v1514, %v3431
          %v3438 = vrot.slane %v3432, 7
          %v3439 = vrot.slane %v3433, 7
          %v3440 = vsel %vm1685, %v3438, %v3439
          %v3441 = vrot.slane %v3434, 7
          %v3442 = vsel %vm1685, %v3439, %v3441
          %v3446 = vadd.f32 %v3425, %v3438
          %v3447 = vadd.f32 %v3426, %v3440
          %v3448 = vadd.f32 %v3427, %v3442
          %v3449 = vlaneseq
          %v3450 = vshrl.u32 %v3449, 7
          %v3451 = vsub.s32 0, %v3450
          %v3452 = vrot.slane %v3141, %v3451
          %v3453 = vmul.f32 %v1512, %v3452
          %v3454 = vmul.f32 %v1513, %v3452
          %v3455 = vmul.f32 %v1514, %v3452
          %v3456 = vadd.f32 %v3446, %v3453
          %v3457 = vadd.f32 %v3447, %v3454
          %v3458 = vadd.f32 %v3448, %v3455
          %v3459 = vlaneseq
          %v3460 = vshrl.u32 %v3459, 7
          %v3461 = vsub.s32 1, %v3460
          %v3462 = vrot.slane %v3141, %v3461
          %v3463 = vmul.f32 %v1512, %v3462
          %v3464 = vmul.f32 %v1513, %v3462
          %v3465 = vmul.f32 %v1514, %v3462
          %v3469 = vrot.slane %v3463, 1
          %v3470 = vrot.slane %v3464, 1
          %v3471 = vsel %vm1557, %v3469, %v3470
          %v3472 = vrot.slane %v3465, 1
          %v3473 = vsel %vm1557, %v3470, %v3472
          %v3477 = vadd.f32 %v3456, %v3471
          %v3478 = vadd.f32 %v3457, %v3473
          %v3479 = vadd.f32 %v3458, %v3472
          %v3480 = vlaneseq
          %v3481 = vshrl.u32 %v3480, 7
          %v3482 = vsub.s32 2, %v3481
          %v3483 = vrot.slane %v3141, %v3482
          %v3484 = vmul.f32 %v1512, %v3483
          %v3485 = vmul.f32 %v1513, %v3483
          %v3486 = vmul.f32 %v1514, %v3483
          %v3490 = vrot.slane %v3484, 2
          %v3491 = vrot.slane %v3485, 2
          %v3492 = vsel %vm1579, %v3490, %v3491
          %v3493 = vrot.slane %v3486, 2
          %v3494 = vsel %vm1579, %v3491, %v3493
          %v3498 = vadd.f32 %v3477, %v3492
          %v3499 = vadd.f32 %v3478, %v3494
          %v3500 = vadd.f32 %v3479, %v3493
          %v3501 = vlaneseq
          %v3502 = vshrl.u32 %v3501, 7
          %v3503 = vsub.s32 3, %v3502
          %v3504 = vrot.slane %v3141, %v3503
          %v3505 = vmul.f32 %v1512, %v3504
          %v3506 = vmul.f32 %v1513, %v3504
          %v3507 = vmul.f32 %v1514, %v3504
          %v3511 = vrot.slane %v3505, 3
          %v3512 = vrot.slane %v3506, 3
          %v3513 = vsel %vm1601, %v3511, %v3512
          %v3514 = vrot.slane %v3507, 3
          %v3515 = vsel %vm1601, %v3512, %v3514
          %v3519 = vadd.f32 %v3498, %v3513
          %v3520 = vadd.f32 %v3499, %v3515
          %v3521 = vadd.f32 %v3500, %v3514
          %v3522 = vlaneseq
          %v3523 = vshrl.u32 %v3522, 7
          %v3524 = vsub.s32 4, %v3523
          %v3525 = vrot.slane %v3141, %v3524
          %v3526 = vmul.f32 %v1512, %v3525
          %v3527 = vmul.f32 %v1513, %v3525
          %v3528 = vmul.f32 %v1514, %v3525
          %v3532 = vrot.slane %v3526, 4
          %v3533 = vrot.slane %v3527, 4
          %v3534 = vsel %vm1623, %v3532, %v3533
          %v3535 = vrot.slane %v3528, 4
          %v3536 = vsel %vm1623, %v3533, %v3535
          %v3540 = vadd.f32 %v3519, %v3534
          %v3541 = vadd.f32 %v3520, %v3536
          %v3542 = vadd.f32 %v3521, %v3535
          %v3543 = vlaneseq
          %v3544 = vshrl.u32 %v3543, 7
          %v3545 = vsub.s32 5, %v3544
          %v3546 = vrot.slane %v3141, %v3545
          %v3547 = vmul.f32 %v1513, %v3546
          %v3548 = vmul.f32 %v1514, %v3546
          %v3551 = vrot.slane %v3547, 5
          %v3552 = vrot.slane %v3548, 5
          %v3553 = vsel %vm1643, %v3551, %v3552
          %v3557 = vadd.f32 %v3540, %v3551
          %v3558 = vadd.f32 %v3541, %v3553
          %v3559 = vadd.f32 %v3542, %v3552
          %v3560 = vlaneseq
          %v3561 = vshrl.u32 %v3560, 7
          %v3562 = vsub.s32 6, %v3561
          %v3563 = vrot.slane %v3141, %v3562
          %v3564 = vmul.f32 %v1513, %v3563
          %v3565 = vmul.f32 %v1514, %v3563
          %v3566 = vmul.f32 %v1515, %v3563
          %v3570 = vrot.slane %v3564, 6
          %v3571 = vrot.slane %v3565, 6
          %v3572 = vsel %vm1663, %v3570, %v3571
          %v3573 = vrot.slane %v3566, 6
          %v3574 = vsel %vm1663, %v3571, %v3573
          %v3578 = vadd.f32 %v3557, %v3570
          %v3579 = vadd.f32 %v3558, %v3572
          %v3580 = vadd.f32 %v3559, %v3574
          %v3581 = vlaneseq
          %v3582 = vshrl.u32 %v3581, 7
          %v3583 = vsub.s32 7, %v3582
          %v3584 = vrot.slane %v3141, %v3583
          %v3585 = vmul.f32 %v1513, %v3584
          %v3586 = vmul.f32 %v1514, %v3584
          %v3587 = vmul.f32 %v1515, %v3584
          %v3591 = vrot.slane %v3585, 7
          %v3592 = vrot.slane %v3586, 7
          %v3593 = vsel %vm1685, %v3591, %v3592
          %v3594 = vrot.slane %v3587, 7
          %v3595 = vsel %vm1685, %v3592, %v3594
          %v3599 = vadd.f32 %v3578, %v3591
          %v3600 = vadd.f32 %v3579, %v3593
          %v3601 = vadd.f32 %v3580, %v3595
          %v3602 = vlaneseq
          %v3603 = vshrl.u32 %v3602, 7
          %v3604 = vsub.s32 0, %v3603
          %v3605 = vrot.slane %v3142, %v3604
          %v3606 = vmul.f32 %v1513, %v3605
          %v3607 = vmul.f32 %v1514, %v3605
          %v3608 = vmul.f32 %v1515, %v3605
          %v3609 = vadd.f32 %v3599, %v3606
          %v3610 = vadd.f32 %v3600, %v3607
          %v3611 = vadd.f32 %v3601, %v3608
          %v3612 = vlaneseq
          %v3613 = vshrl.u32 %v3612, 7
          %v3614 = vsub.s32 1, %v3613
          %v3615 = vrot.slane %v3142, %v3614
          %v3616 = vmul.f32 %v1513, %v3615
          %v3617 = vmul.f32 %v1514, %v3615
          %v3618 = vmul.f32 %v1515, %v3615
          %v3622 = vrot.slane %v3616, 1
          %v3623 = vrot.slane %v3617, 1
          %v3624 = vsel %vm1557, %v3622, %v3623
          %v3625 = vrot.slane %v3618, 1
          %v3626 = vsel %vm1557, %v3623, %v3625
          %v3630 = vadd.f32 %v3609, %v3624
          %v3631 = vadd.f32 %v3610, %v3626
          %v3632 = vadd.f32 %v3611, %v3625
          %v3633 = vlaneseq
          %v3634 = vshrl.u32 %v3633, 7
          %v3635 = vsub.s32 2, %v3634
          %v3636 = vrot.slane %v3142, %v3635
          %v3637 = vmul.f32 %v1513, %v3636
          %v3638 = vmul.f32 %v1514, %v3636
          %v3639 = vmul.f32 %v1515, %v3636
          %v3643 = vrot.slane %v3637, 2
          %v3644 = vrot.slane %v3638, 2
          %v3645 = vsel %vm1579, %v3643, %v3644
          %v3646 = vrot.slane %v3639, 2
          %v3647 = vsel %vm1579, %v3644, %v3646
          %v3651 = vadd.f32 %v3630, %v3645
          %v3652 = vadd.f32 %v3631, %v3647
          %v3653 = vadd.f32 %v3632, %v3646
          %s3654 = ssub.s32 %s1478, 4
          %p3655 = scmp.ge.s32.totalorder %s3654, 0
          %p3656 = scmp.lt.s32.totalorder %s3654, 27
          %p3657 = pnand %p3655, %p3656
          %p3658 = pneg %p3657
          %s3659 = scalar_select %p3658, 1, 0
          %s3660 = scvt.s32.f32 %s3659
          %p3661 = scmp.gt.s32.totalorder %s3654, 0
          %s3662 = scalar_select %p3661, %s3654, 0
          %p3663 = scmp.lt.s32.totalorder %s3662, 26
          %s3664 = scalar_select %p3663, %s3662, 26
          %s3665 = smul.u32 %s3664, 32
          %s3666 = scalar_lea.vmem [#allocation3], %s3665
          %v3667 = vld [vmem:[%s3666] sm:$0xff]
          %v3668 = vld [vmem:[%s3666 + $0x8] sm:$0xff]
          %v3669 = vld [vmem:[%s3666 + $0x10] sm:$0xff]
          %v3670 = vld [vmem:[%s3666 + $0x18] sm:$0x7]
          %v3671 = vstv %s3660
          %v3672 = vmul.f32 %v3667, %v3671
          %v3673 = vmul.f32 %v3668, %v3671
          %v3674 = vmul.f32 %v3669, %v3671
          %v3675 = vmul.f32 %v3670, %v3671
          %v3676 = vlaneseq
          %v3677 = vshrl.u32 %v3676, 7
          %v3678 = vsub.s32 0, %v3677
          %v3679 = vrot.slane %v3672, %v3678
          %v3680 = vmul.f32 %v1510, %v3679
          %v3681 = vmul.f32 %v1511, %v3679
          %v3682 = vmul.f32 %v1512, %v3679
          %v3683 = vadd.f32 %v1495, %v3680
          %v3684 = vadd.f32 %v1496, %v3681
          %v3685 = vadd.f32 %v1497, %v3682
          %v3686 = vlaneseq
          %v3687 = vshrl.u32 %v3686, 7
          %v3688 = vsub.s32 1, %v3687
          %v3689 = vrot.slane %v3672, %v3688
          %v3690 = vmul.f32 %v1510, %v3689
          %v3691 = vmul.f32 %v1511, %v3689
          %v3692 = vmul.f32 %v1512, %v3689
          %v3696 = vrot.slane %v3690, 1
          %v3697 = vrot.slane %v3691, 1
          %v3698 = vsel %vm1557, %v3696, %v3697
          %v3699 = vrot.slane %v3692, 1
          %v3700 = vsel %vm1557, %v3697, %v3699
          %v3704 = vadd.f32 %v3683, %v3698
          %v3705 = vadd.f32 %v3684, %v3700
          %v3706 = vadd.f32 %v3685, %v3699
          %v3707 = vlaneseq
          %v3708 = vshrl.u32 %v3707, 7
          %v3709 = vsub.s32 2, %v3708
          %v3710 = vrot.slane %v3672, %v3709
          %v3711 = vmul.f32 %v1510, %v3710
          %v3712 = vmul.f32 %v1511, %v3710
          %v3713 = vmul.f32 %v1512, %v3710
          %v3717 = vrot.slane %v3711, 2
          %v3718 = vrot.slane %v3712, 2
          %v3719 = vsel %vm1579, %v3717, %v3718
          %v3720 = vrot.slane %v3713, 2
          %v3721 = vsel %vm1579, %v3718, %v3720
          %v3725 = vadd.f32 %v3704, %v3719
          %v3726 = vadd.f32 %v3705, %v3721
          %v3727 = vadd.f32 %v3706, %v3720
          %v3728 = vlaneseq
          %v3729 = vshrl.u32 %v3728, 7
          %v3730 = vsub.s32 3, %v3729
          %v3731 = vrot.slane %v3672, %v3730
          %v3732 = vmul.f32 %v1510, %v3731
          %v3733 = vmul.f32 %v1511, %v3731
          %v3734 = vmul.f32 %v1512, %v3731
          %v3738 = vrot.slane %v3732, 3
          %v3739 = vrot.slane %v3733, 3
          %v3740 = vsel %vm1601, %v3738, %v3739
          %v3741 = vrot.slane %v3734, 3
          %v3742 = vsel %vm1601, %v3739, %v3741
          %v3746 = vadd.f32 %v3725, %v3740
          %v3747 = vadd.f32 %v3726, %v3742
          %v3748 = vadd.f32 %v3727, %v3741
          %v3749 = vlaneseq
          %v3750 = vshrl.u32 %v3749, 7
          %v3751 = vsub.s32 4, %v3750
          %v3752 = vrot.slane %v3672, %v3751
          %v3753 = vmul.f32 %v1510, %v3752
          %v3754 = vmul.f32 %v1511, %v3752
          %v3755 = vmul.f32 %v1512, %v3752
          %v3759 = vrot.slane %v3753, 4
          %v3760 = vrot.slane %v3754, 4
          %v3761 = vsel %vm1623, %v3759, %v3760
          %v3762 = vrot.slane %v3755, 4
          %v3763 = vsel %vm1623, %v3760, %v3762
          %v3767 = vadd.f32 %v3746, %v3761
          %v3768 = vadd.f32 %v3747, %v3763
          %v3769 = vadd.f32 %v3748, %v3762
          %v3770 = vlaneseq
          %v3771 = vshrl.u32 %v3770, 7
          %v3772 = vsub.s32 5, %v3771
          %v3773 = vrot.slane %v3672, %v3772
          %v3774 = vmul.f32 %v1511, %v3773
          %v3775 = vmul.f32 %v1512, %v3773
          %v3778 = vrot.slane %v3774, 5
          %v3779 = vrot.slane %v3775, 5
          %v3780 = vsel %vm1643, %v3778, %v3779
          %v3784 = vadd.f32 %v3767, %v3778
          %v3785 = vadd.f32 %v3768, %v3780
          %v3786 = vadd.f32 %v3769, %v3779
          %v3787 = vlaneseq
          %v3788 = vshrl.u32 %v3787, 7
          %v3789 = vsub.s32 6, %v3788
          %v3790 = vrot.slane %v3672, %v3789
          %v3791 = vmul.f32 %v1511, %v3790
          %v3792 = vmul.f32 %v1512, %v3790
          %v3793 = vmul.f32 %v1513, %v3790
          %v3797 = vrot.slane %v3791, 6
          %v3798 = vrot.slane %v3792, 6
          %v3799 = vsel %vm1663, %v3797, %v3798
          %v3800 = vrot.slane %v3793, 6
          %v3801 = vsel %vm1663, %v3798, %v3800
          %v3805 = vadd.f32 %v3784, %v3797
          %v3806 = vadd.f32 %v3785, %v3799
          %v3807 = vadd.f32 %v3786, %v3801
          %v3808 = vlaneseq
          %v3809 = vshrl.u32 %v3808, 7
          %v3810 = vsub.s32 7, %v3809
          %v3811 = vrot.slane %v3672, %v3810
          %v3812 = vmul.f32 %v1511, %v3811
          %v3813 = vmul.f32 %v1512, %v3811
          %v3814 = vmul.f32 %v1513, %v3811
          %v3818 = vrot.slane %v3812, 7
          %v3819 = vrot.slane %v3813, 7
          %v3820 = vsel %vm1685, %v3818, %v3819
          %v3821 = vrot.slane %v3814, 7
          %v3822 = vsel %vm1685, %v3819, %v3821
          %v3826 = vadd.f32 %v3805, %v3818
          %v3827 = vadd.f32 %v3806, %v3820
          %v3828 = vadd.f32 %v3807, %v3822
          %v3829 = vlaneseq
          %v3830 = vshrl.u32 %v3829, 7
          %v3831 = vsub.s32 0, %v3830
          %v3832 = vrot.slane %v3673, %v3831
          %v3833 = vmul.f32 %v1511, %v3832
          %v3834 = vmul.f32 %v1512, %v3832
          %v3835 = vmul.f32 %v1513, %v3832
          %v3836 = vadd.f32 %v3826, %v3833
          %v3837 = vadd.f32 %v3827, %v3834
          %v3838 = vadd.f32 %v3828, %v3835
          %v3839 = vlaneseq
          %v3840 = vshrl.u32 %v3839, 7
          %v3841 = vsub.s32 1, %v3840
          %v3842 = vrot.slane %v3673, %v3841
          %v3843 = vmul.f32 %v1511, %v3842
          %v3844 = vmul.f32 %v1512, %v3842
          %v3845 = vmul.f32 %v1513, %v3842
          %v3849 = vrot.slane %v3843, 1
          %v3850 = vrot.slane %v3844, 1
          %v3851 = vsel %vm1557, %v3849, %v3850
          %v3852 = vrot.slane %v3845, 1
          %v3853 = vsel %vm1557, %v3850, %v3852
          %v3857 = vadd.f32 %v3836, %v3851
          %v3858 = vadd.f32 %v3837, %v3853
          %v3859 = vadd.f32 %v3838, %v3852
          %v3860 = vlaneseq
          %v3861 = vshrl.u32 %v3860, 7
          %v3862 = vsub.s32 2, %v3861
          %v3863 = vrot.slane %v3673, %v3862
          %v3864 = vmul.f32 %v1511, %v3863
          %v3865 = vmul.f32 %v1512, %v3863
          %v3866 = vmul.f32 %v1513, %v3863
          %v3870 = vrot.slane %v3864, 2
          %v3871 = vrot.slane %v3865, 2
          %v3872 = vsel %vm1579, %v3870, %v3871
          %v3873 = vrot.slane %v3866, 2
          %v3874 = vsel %vm1579, %v3871, %v3873
          %v3878 = vadd.f32 %v3857, %v3872
          %v3879 = vadd.f32 %v3858, %v3874
          %v3880 = vadd.f32 %v3859, %v3873
          %v3881 = vlaneseq
          %v3882 = vshrl.u32 %v3881, 7
          %v3883 = vsub.s32 3, %v3882
          %v3884 = vrot.slane %v3673, %v3883
          %v3885 = vmul.f32 %v1511, %v3884
          %v3886 = vmul.f32 %v1512, %v3884
          %v3887 = vmul.f32 %v1513, %v3884
          %v3891 = vrot.slane %v3885, 3
          %v3892 = vrot.slane %v3886, 3
          %v3893 = vsel %vm1601, %v3891, %v3892
          %v3894 = vrot.slane %v3887, 3
          %v3895 = vsel %vm1601, %v3892, %v3894
          %v3899 = vadd.f32 %v3878, %v3893
          %v3900 = vadd.f32 %v3879, %v3895
          %v3901 = vadd.f32 %v3880, %v3894
          %v3902 = vlaneseq
          %v3903 = vshrl.u32 %v3902, 7
          %v3904 = vsub.s32 4, %v3903
          %v3905 = vrot.slane %v3673, %v3904
          %v3906 = vmul.f32 %v1511, %v3905
          %v3907 = vmul.f32 %v1512, %v3905
          %v3908 = vmul.f32 %v1513, %v3905
          %v3912 = vrot.slane %v3906, 4
          %v3913 = vrot.slane %v3907, 4
          %v3914 = vsel %vm1623, %v3912, %v3913
          %v3915 = vrot.slane %v3908, 4
          %v3916 = vsel %vm1623, %v3913, %v3915
          %v3920 = vadd.f32 %v3899, %v3914
          %v3921 = vadd.f32 %v3900, %v3916
          %v3922 = vadd.f32 %v3901, %v3915
          %v3923 = vlaneseq
          %v3924 = vshrl.u32 %v3923, 7
          %v3925 = vsub.s32 5, %v3924
          %v3926 = vrot.slane %v3673, %v3925
          %v3927 = vmul.f32 %v1512, %v3926
          %v3928 = vmul.f32 %v1513, %v3926
          %v3931 = vrot.slane %v3927, 5
          %v3932 = vrot.slane %v3928, 5
          %v3933 = vsel %vm1643, %v3931, %v3932
          %v3937 = vadd.f32 %v3920, %v3931
          %v3938 = vadd.f32 %v3921, %v3933
          %v3939 = vadd.f32 %v3922, %v3932
          %v3940 = vlaneseq
          %v3941 = vshrl.u32 %v3940, 7
          %v3942 = vsub.s32 6, %v3941
          %v3943 = vrot.slane %v3673, %v3942
          %v3944 = vmul.f32 %v1512, %v3943
          %v3945 = vmul.f32 %v1513, %v3943
          %v3946 = vmul.f32 %v1514, %v3943
          %v3950 = vrot.slane %v3944, 6
          %v3951 = vrot.slane %v3945, 6
          %v3952 = vsel %vm1663, %v3950, %v3951
          %v3953 = vrot.slane %v3946, 6
          %v3954 = vsel %vm1663, %v3951, %v3953
          %v3958 = vadd.f32 %v3937, %v3950
          %v3959 = vadd.f32 %v3938, %v3952
          %v3960 = vadd.f32 %v3939, %v3954
          %v3961 = vlaneseq
          %v3962 = vshrl.u32 %v3961, 7
          %v3963 = vsub.s32 7, %v3962
          %v3964 = vrot.slane %v3673, %v3963
          %v3965 = vmul.f32 %v1512, %v3964
          %v3966 = vmul.f32 %v1513, %v3964
          %v3967 = vmul.f32 %v1514, %v3964
          %v3971 = vrot.slane %v3965, 7
          %v3972 = vrot.slane %v3966, 7
          %v3973 = vsel %vm1685, %v3971, %v3972
          %v3974 = vrot.slane %v3967, 7
          %v3975 = vsel %vm1685, %v3972, %v3974
          %v3979 = vadd.f32 %v3958, %v3971
          %v3980 = vadd.f32 %v3959, %v3973
          %v3981 = vadd.f32 %v3960, %v3975
          %v3982 = vlaneseq
          %v3983 = vshrl.u32 %v3982, 7
          %v3984 = vsub.s32 0, %v3983
          %v3985 = vrot.slane %v3674, %v3984
          %v3986 = vmul.f32 %v1512, %v3985
          %v3987 = vmul.f32 %v1513, %v3985
          %v3988 = vmul.f32 %v1514, %v3985
          %v3989 = vadd.f32 %v3979, %v3986
          %v3990 = vadd.f32 %v3980, %v3987
          %v3991 = vadd.f32 %v3981, %v3988
          %v3992 = vlaneseq
          %v3993 = vshrl.u32 %v3992, 7
          %v3994 = vsub.s32 1, %v3993
          %v3995 = vrot.slane %v3674, %v3994
          %v3996 = vmul.f32 %v1512, %v3995
          %v3997 = vmul.f32 %v1513, %v3995
          %v3998 = vmul.f32 %v1514, %v3995
          %v4002 = vrot.slane %v3996, 1
          %v4003 = vrot.slane %v3997, 1
          %v4004 = vsel %vm1557, %v4002, %v4003
          %v4005 = vrot.slane %v3998, 1
          %v4006 = vsel %vm1557, %v4003, %v4005
          %v4010 = vadd.f32 %v3989, %v4004
          %v4011 = vadd.f32 %v3990, %v4006
          %v4012 = vadd.f32 %v3991, %v4005
          %v4013 = vlaneseq
          %v4014 = vshrl.u32 %v4013, 7
          %v4015 = vsub.s32 2, %v4014
          %v4016 = vrot.slane %v3674, %v4015
          %v4017 = vmul.f32 %v1512, %v4016
          %v4018 = vmul.f32 %v1513, %v4016
          %v4019 = vmul.f32 %v1514, %v4016
          %v4023 = vrot.slane %v4017, 2
          %v4024 = vrot.slane %v4018, 2
          %v4025 = vsel %vm1579, %v4023, %v4024
          %v4026 = vrot.slane %v4019, 2
          %v4027 = vsel %vm1579, %v4024, %v4026
          %v4031 = vadd.f32 %v4010, %v4025
          %v4032 = vadd.f32 %v4011, %v4027
          %v4033 = vadd.f32 %v4012, %v4026
          %v4034 = vlaneseq
          %v4035 = vshrl.u32 %v4034, 7
          %v4036 = vsub.s32 3, %v4035
          %v4037 = vrot.slane %v3674, %v4036
          %v4038 = vmul.f32 %v1512, %v4037
          %v4039 = vmul.f32 %v1513, %v4037
          %v4040 = vmul.f32 %v1514, %v4037
          %v4044 = vrot.slane %v4038, 3
          %v4045 = vrot.slane %v4039, 3
          %v4046 = vsel %vm1601, %v4044, %v4045
          %v4047 = vrot.slane %v4040, 3
          %v4048 = vsel %vm1601, %v4045, %v4047
          %v4052 = vadd.f32 %v4031, %v4046
          %v4053 = vadd.f32 %v4032, %v4048
          %v4054 = vadd.f32 %v4033, %v4047
          %v4055 = vlaneseq
          %v4056 = vshrl.u32 %v4055, 7
          %v4057 = vsub.s32 4, %v4056
          %v4058 = vrot.slane %v3674, %v4057
          %v4059 = vmul.f32 %v1512, %v4058
          %v4060 = vmul.f32 %v1513, %v4058
          %v4061 = vmul.f32 %v1514, %v4058
          %v4065 = vrot.slane %v4059, 4
          %v4066 = vrot.slane %v4060, 4
          %v4067 = vsel %vm1623, %v4065, %v4066
          %v4068 = vrot.slane %v4061, 4
          %v4069 = vsel %vm1623, %v4066, %v4068
          %v4073 = vadd.f32 %v4052, %v4067
          %v4074 = vadd.f32 %v4053, %v4069
          %v4075 = vadd.f32 %v4054, %v4068
          %v4076 = vlaneseq
          %v4077 = vshrl.u32 %v4076, 7
          %v4078 = vsub.s32 5, %v4077
          %v4079 = vrot.slane %v3674, %v4078
          %v4080 = vmul.f32 %v1513, %v4079
          %v4081 = vmul.f32 %v1514, %v4079
          %v4084 = vrot.slane %v4080, 5
          %v4085 = vrot.slane %v4081, 5
          %v4086 = vsel %vm1643, %v4084, %v4085
          %v4090 = vadd.f32 %v4073, %v4084
          %v4091 = vadd.f32 %v4074, %v4086
          %v4092 = vadd.f32 %v4075, %v4085
          %v4093 = vlaneseq
          %v4094 = vshrl.u32 %v4093, 7
          %v4095 = vsub.s32 6, %v4094
          %v4096 = vrot.slane %v3674, %v4095
          %v4097 = vmul.f32 %v1513, %v4096
          %v4098 = vmul.f32 %v1514, %v4096
          %v4099 = vmul.f32 %v1515, %v4096
          %v4103 = vrot.slane %v4097, 6
          %v4104 = vrot.slane %v4098, 6
          %v4105 = vsel %vm1663, %v4103, %v4104
          %v4106 = vrot.slane %v4099, 6
          %v4107 = vsel %vm1663, %v4104, %v4106
          %v4111 = vadd.f32 %v4090, %v4103
          %v4112 = vadd.f32 %v4091, %v4105
          %v4113 = vadd.f32 %v4092, %v4107
          %v4114 = vlaneseq
          %v4115 = vshrl.u32 %v4114, 7
          %v4116 = vsub.s32 7, %v4115
          %v4117 = vrot.slane %v3674, %v4116
          %v4118 = vmul.f32 %v1513, %v4117
          %v4119 = vmul.f32 %v1514, %v4117
          %v4120 = vmul.f32 %v1515, %v4117
          %v4124 = vrot.slane %v4118, 7
          %v4125 = vrot.slane %v4119, 7
          %v4126 = vsel %vm1685, %v4124, %v4125
          %v4127 = vrot.slane %v4120, 7
          %v4128 = vsel %vm1685, %v4125, %v4127
          %v4132 = vadd.f32 %v4111, %v4124
          %v4133 = vadd.f32 %v4112, %v4126
          %v4134 = vadd.f32 %v4113, %v4128
          %v4135 = vlaneseq
          %v4136 = vshrl.u32 %v4135, 7
          %v4137 = vsub.s32 0, %v4136
          %v4138 = vrot.slane %v3675, %v4137
          %v4139 = vmul.f32 %v1513, %v4138
          %v4140 = vmul.f32 %v1514, %v4138
          %v4141 = vmul.f32 %v1515, %v4138
          %v4142 = vadd.f32 %v4132, %v4139
          %v4143 = vadd.f32 %v4133, %v4140
          %v4144 = vadd.f32 %v4134, %v4141
          %v4145 = vlaneseq
          %v4146 = vshrl.u32 %v4145, 7
          %v4147 = vsub.s32 1, %v4146
          %v4148 = vrot.slane %v3675, %v4147
          %v4149 = vmul.f32 %v1513, %v4148
          %v4150 = vmul.f32 %v1514, %v4148
          %v4151 = vmul.f32 %v1515, %v4148
          %v4155 = vrot.slane %v4149, 1
          %v4156 = vrot.slane %v4150, 1
          %v4157 = vsel %vm1557, %v4155, %v4156
          %v4158 = vrot.slane %v4151, 1
          %v4159 = vsel %vm1557, %v4156, %v4158
          %v4163 = vadd.f32 %v4142, %v4157
          %v4164 = vadd.f32 %v4143, %v4159
          %v4165 = vadd.f32 %v4144, %v4158
          %v4166 = vlaneseq
          %v4167 = vshrl.u32 %v4166, 7
          %v4168 = vsub.s32 2, %v4167
          %v4169 = vrot.slane %v3675, %v4168
          %v4170 = vmul.f32 %v1513, %v4169
          %v4171 = vmul.f32 %v1514, %v4169
          %v4172 = vmul.f32 %v1515, %v4169
          %v4176 = vrot.slane %v4170, 2
          %v4177 = vrot.slane %v4171, 2
          %v4178 = vsel %vm1579, %v4176, %v4177
          %v4179 = vrot.slane %v4172, 2
          %v4180 = vsel %vm1579, %v4177, %v4179
          %v4184 = vadd.f32 %v4163, %v4178
          %v4185 = vadd.f32 %v4164, %v4180
          %v4186 = vadd.f32 %v4165, %v4179
          %s4187 = ssub.s32 %s1478, 5
          %p4188 = scmp.ge.s32.totalorder %s4187, 0
          %p4189 = scmp.lt.s32.totalorder %s4187, 27
          %p4190 = pnand %p4188, %p4189
          %p4191 = pneg %p4190
          %s4192 = scalar_select %p4191, 1, 0
          %s4193 = scvt.s32.f32 %s4192
          %p4194 = scmp.gt.s32.totalorder %s4187, 0
          %s4195 = scalar_select %p4194, %s4187, 0
          %p4196 = scmp.lt.s32.totalorder %s4195, 26
          %s4197 = scalar_select %p4196, %s4195, 26
          %s4198 = smul.u32 %s4197, 32
          %s4199 = scalar_lea.vmem [#allocation3], %s4198
          %v4200 = vld [vmem:[%s4199] sm:$0xff]
          %v4201 = vld [vmem:[%s4199 + $0x8] sm:$0xff]
          %v4202 = vld [vmem:[%s4199 + $0x10] sm:$0xff]
          %v4203 = vld [vmem:[%s4199 + $0x18] sm:$0x7]
          %v4204 = vstv %s4193
          %v4205 = vmul.f32 %v4200, %v4204
          %v4206 = vmul.f32 %v4201, %v4204
          %v4207 = vmul.f32 %v4202, %v4204
          %v4208 = vmul.f32 %v4203, %v4204
          %v4209 = vlaneseq
          %v4210 = vshrl.u32 %v4209, 7
          %v4211 = vsub.s32 0, %v4210
          %v4212 = vrot.slane %v4205, %v4211
          %v4213 = vmul.f32 %v1510, %v4212
          %v4214 = vmul.f32 %v1511, %v4212
          %v4215 = vmul.f32 %v1512, %v4212
          %v4216 = vadd.f32 %v1498, %v4213
          %v4217 = vadd.f32 %v1499, %v4214
          %v4218 = vadd.f32 %v1500, %v4215
          %v4219 = vlaneseq
          %v4220 = vshrl.u32 %v4219, 7
          %v4221 = vsub.s32 1, %v4220
          %v4222 = vrot.slane %v4205, %v4221
          %v4223 = vmul.f32 %v1510, %v4222
          %v4224 = vmul.f32 %v1511, %v4222
          %v4225 = vmul.f32 %v1512, %v4222
          %v4229 = vrot.slane %v4223, 1
          %v4230 = vrot.slane %v4224, 1
          %v4231 = vsel %vm1557, %v4229, %v4230
          %v4232 = vrot.slane %v4225, 1
          %v4233 = vsel %vm1557, %v4230, %v4232
          %v4237 = vadd.f32 %v4216, %v4231
          %v4238 = vadd.f32 %v4217, %v4233
          %v4239 = vadd.f32 %v4218, %v4232
          %v4240 = vlaneseq
          %v4241 = vshrl.u32 %v4240, 7
          %v4242 = vsub.s32 2, %v4241
          %v4243 = vrot.slane %v4205, %v4242
          %v4244 = vmul.f32 %v1510, %v4243
          %v4245 = vmul.f32 %v1511, %v4243
          %v4246 = vmul.f32 %v1512, %v4243
          %v4250 = vrot.slane %v4244, 2
          %v4251 = vrot.slane %v4245, 2
          %v4252 = vsel %vm1579, %v4250, %v4251
          %v4253 = vrot.slane %v4246, 2
          %v4254 = vsel %vm1579, %v4251, %v4253
          %v4258 = vadd.f32 %v4237, %v4252
          %v4259 = vadd.f32 %v4238, %v4254
          %v4260 = vadd.f32 %v4239, %v4253
          %v4261 = vlaneseq
          %v4262 = vshrl.u32 %v4261, 7
          %v4263 = vsub.s32 3, %v4262
          %v4264 = vrot.slane %v4205, %v4263
          %v4265 = vmul.f32 %v1510, %v4264
          %v4266 = vmul.f32 %v1511, %v4264
          %v4267 = vmul.f32 %v1512, %v4264
          %v4271 = vrot.slane %v4265, 3
          %v4272 = vrot.slane %v4266, 3
          %v4273 = vsel %vm1601, %v4271, %v4272
          %v4274 = vrot.slane %v4267, 3
          %v4275 = vsel %vm1601, %v4272, %v4274
          %v4279 = vadd.f32 %v4258, %v4273
          %v4280 = vadd.f32 %v4259, %v4275
          %v4281 = vadd.f32 %v4260, %v4274
          %v4282 = vlaneseq
          %v4283 = vshrl.u32 %v4282, 7
          %v4284 = vsub.s32 4, %v4283
          %v4285 = vrot.slane %v4205, %v4284
          %v4286 = vmul.f32 %v1510, %v4285
          %v4287 = vmul.f32 %v1511, %v4285
          %v4288 = vmul.f32 %v1512, %v4285
          %v4292 = vrot.slane %v4286, 4
          %v4293 = vrot.slane %v4287, 4
          %v4294 = vsel %vm1623, %v4292, %v4293
          %v4295 = vrot.slane %v4288, 4
          %v4296 = vsel %vm1623, %v4293, %v4295
          %v4300 = vadd.f32 %v4279, %v4294
          %v4301 = vadd.f32 %v4280, %v4296
          %v4302 = vadd.f32 %v4281, %v4295
          %v4303 = vlaneseq
          %v4304 = vshrl.u32 %v4303, 7
          %v4305 = vsub.s32 5, %v4304
          %v4306 = vrot.slane %v4205, %v4305
          %v4307 = vmul.f32 %v1511, %v4306
          %v4308 = vmul.f32 %v1512, %v4306
          %v4311 = vrot.slane %v4307, 5
          %v4312 = vrot.slane %v4308, 5
          %v4313 = vsel %vm1643, %v4311, %v4312
          %v4317 = vadd.f32 %v4300, %v4311
          %v4318 = vadd.f32 %v4301, %v4313
          %v4319 = vadd.f32 %v4302, %v4312
          %v4320 = vlaneseq
          %v4321 = vshrl.u32 %v4320, 7
          %v4322 = vsub.s32 6, %v4321
          %v4323 = vrot.slane %v4205, %v4322
          %v4324 = vmul.f32 %v1511, %v4323
          %v4325 = vmul.f32 %v1512, %v4323
          %v4326 = vmul.f32 %v1513, %v4323
          %v4330 = vrot.slane %v4324, 6
          %v4331 = vrot.slane %v4325, 6
          %v4332 = vsel %vm1663, %v4330, %v4331
          %v4333 = vrot.slane %v4326, 6
          %v4334 = vsel %vm1663, %v4331, %v4333
          %v4338 = vadd.f32 %v4317, %v4330
          %v4339 = vadd.f32 %v4318, %v4332
          %v4340 = vadd.f32 %v4319, %v4334
          %v4341 = vlaneseq
          %v4342 = vshrl.u32 %v4341, 7
          %v4343 = vsub.s32 7, %v4342
          %v4344 = vrot.slane %v4205, %v4343
          %v4345 = vmul.f32 %v1511, %v4344
          %v4346 = vmul.f32 %v1512, %v4344
          %v4347 = vmul.f32 %v1513, %v4344
          %v4351 = vrot.slane %v4345, 7
          %v4352 = vrot.slane %v4346, 7
          %v4353 = vsel %vm1685, %v4351, %v4352
          %v4354 = vrot.slane %v4347, 7
          %v4355 = vsel %vm1685, %v4352, %v4354
          %v4359 = vadd.f32 %v4338, %v4351
          %v4360 = vadd.f32 %v4339, %v4353
          %v4361 = vadd.f32 %v4340, %v4355
          %v4362 = vlaneseq
          %v4363 = vshrl.u32 %v4362, 7
          %v4364 = vsub.s32 0, %v4363
          %v4365 = vrot.slane %v4206, %v4364
          %v4366 = vmul.f32 %v1511, %v4365
          %v4367 = vmul.f32 %v1512, %v4365
          %v4368 = vmul.f32 %v1513, %v4365
          %v4369 = vadd.f32 %v4359, %v4366
          %v4370 = vadd.f32 %v4360, %v4367
          %v4371 = vadd.f32 %v4361, %v4368
          %v4372 = vlaneseq
          %v4373 = vshrl.u32 %v4372, 7
          %v4374 = vsub.s32 1, %v4373
          %v4375 = vrot.slane %v4206, %v4374
          %v4376 = vmul.f32 %v1511, %v4375
          %v4377 = vmul.f32 %v1512, %v4375
          %v4378 = vmul.f32 %v1513, %v4375
          %v4382 = vrot.slane %v4376, 1
          %v4383 = vrot.slane %v4377, 1
          %v4384 = vsel %vm1557, %v4382, %v4383
          %v4385 = vrot.slane %v4378, 1
          %v4386 = vsel %vm1557, %v4383, %v4385
          %v4390 = vadd.f32 %v4369, %v4384
          %v4391 = vadd.f32 %v4370, %v4386
          %v4392 = vadd.f32 %v4371, %v4385
          %v4393 = vlaneseq
          %v4394 = vshrl.u32 %v4393, 7
          %v4395 = vsub.s32 2, %v4394
          %v4396 = vrot.slane %v4206, %v4395
          %v4397 = vmul.f32 %v1511, %v4396
          %v4398 = vmul.f32 %v1512, %v4396
          %v4399 = vmul.f32 %v1513, %v4396
          %v4403 = vrot.slane %v4397, 2
          %v4404 = vrot.slane %v4398, 2
          %v4405 = vsel %vm1579, %v4403, %v4404
          %v4406 = vrot.slane %v4399, 2
          %v4407 = vsel %vm1579, %v4404, %v4406
          %v4411 = vadd.f32 %v4390, %v4405
          %v4412 = vadd.f32 %v4391, %v4407
          %v4413 = vadd.f32 %v4392, %v4406
          %v4414 = vlaneseq
          %v4415 = vshrl.u32 %v4414, 7
          %v4416 = vsub.s32 3, %v4415
          %v4417 = vrot.slane %v4206, %v4416
          %v4418 = vmul.f32 %v1511, %v4417
          %v4419 = vmul.f32 %v1512, %v4417
          %v4420 = vmul.f32 %v1513, %v4417
          %v4424 = vrot.slane %v4418, 3
          %v4425 = vrot.slane %v4419, 3
          %v4426 = vsel %vm1601, %v4424, %v4425
          %v4427 = vrot.slane %v4420, 3
          %v4428 = vsel %vm1601, %v4425, %v4427
          %v4432 = vadd.f32 %v4411, %v4426
          %v4433 = vadd.f32 %v4412, %v4428
          %v4434 = vadd.f32 %v4413, %v4427
          %v4435 = vlaneseq
          %v4436 = vshrl.u32 %v4435, 7
          %v4437 = vsub.s32 4, %v4436
          %v4438 = vrot.slane %v4206, %v4437
          %v4439 = vmul.f32 %v1511, %v4438
          %v4440 = vmul.f32 %v1512, %v4438
          %v4441 = vmul.f32 %v1513, %v4438
          %v4445 = vrot.slane %v4439, 4
          %v4446 = vrot.slane %v4440, 4
          %v4447 = vsel %vm1623, %v4445, %v4446
          %v4448 = vrot.slane %v4441, 4
          %v4449 = vsel %vm1623, %v4446, %v4448
          %v4453 = vadd.f32 %v4432, %v4447
          %v4454 = vadd.f32 %v4433, %v4449
          %v4455 = vadd.f32 %v4434, %v4448
          %v4456 = vlaneseq
          %v4457 = vshrl.u32 %v4456, 7
          %v4458 = vsub.s32 5, %v4457
          %v4459 = vrot.slane %v4206, %v4458
          %v4460 = vmul.f32 %v1512, %v4459
          %v4461 = vmul.f32 %v1513, %v4459
          %v4464 = vrot.slane %v4460, 5
          %v4465 = vrot.slane %v4461, 5
          %v4466 = vsel %vm1643, %v4464, %v4465
          %v4470 = vadd.f32 %v4453, %v4464
          %v4471 = vadd.f32 %v4454, %v4466
          %v4472 = vadd.f32 %v4455, %v4465
          %v4473 = vlaneseq
          %v4474 = vshrl.u32 %v4473, 7
          %v4475 = vsub.s32 6, %v4474
          %v4476 = vrot.slane %v4206, %v4475
          %v4477 = vmul.f32 %v1512, %v4476
          %v4478 = vmul.f32 %v1513, %v4476
          %v4479 = vmul.f32 %v1514, %v4476
          %v4483 = vrot.slane %v4477, 6
          %v4484 = vrot.slane %v4478, 6
          %v4485 = vsel %vm1663, %v4483, %v4484
          %v4486 = vrot.slane %v4479, 6
          %v4487 = vsel %vm1663, %v4484, %v4486
          %v4491 = vadd.f32 %v4470, %v4483
          %v4492 = vadd.f32 %v4471, %v4485
          %v4493 = vadd.f32 %v4472, %v4487
          %v4494 = vlaneseq
          %v4495 = vshrl.u32 %v4494, 7
          %v4496 = vsub.s32 7, %v4495
          %v4497 = vrot.slane %v4206, %v4496
          %v4498 = vmul.f32 %v1512, %v4497
          %v4499 = vmul.f32 %v1513, %v4497
          %v4500 = vmul.f32 %v1514, %v4497
          %v4504 = vrot.slane %v4498, 7
          %v4505 = vrot.slane %v4499, 7
          %v4506 = vsel %vm1685, %v4504, %v4505
          %v4507 = vrot.slane %v4500, 7
          %v4508 = vsel %vm1685, %v4505, %v4507
          %v4512 = vadd.f32 %v4491, %v4504
          %v4513 = vadd.f32 %v4492, %v4506
          %v4514 = vadd.f32 %v4493, %v4508
          %v4515 = vlaneseq
          %v4516 = vshrl.u32 %v4515, 7
          %v4517 = vsub.s32 0, %v4516
          %v4518 = vrot.slane %v4207, %v4517
          %v4519 = vmul.f32 %v1512, %v4518
          %v4520 = vmul.f32 %v1513, %v4518
          %v4521 = vmul.f32 %v1514, %v4518
          %v4522 = vadd.f32 %v4512, %v4519
          %v4523 = vadd.f32 %v4513, %v4520
          %v4524 = vadd.f32 %v4514, %v4521
          %v4525 = vlaneseq
          %v4526 = vshrl.u32 %v4525, 7
          %v4527 = vsub.s32 1, %v4526
          %v4528 = vrot.slane %v4207, %v4527
          %v4529 = vmul.f32 %v1512, %v4528
          %v4530 = vmul.f32 %v1513, %v4528
          %v4531 = vmul.f32 %v1514, %v4528
          %v4535 = vrot.slane %v4529, 1
          %v4536 = vrot.slane %v4530, 1
          %v4537 = vsel %vm1557, %v4535, %v4536
          %v4538 = vrot.slane %v4531, 1
          %v4539 = vsel %vm1557, %v4536, %v4538
          %v4543 = vadd.f32 %v4522, %v4537
          %v4544 = vadd.f32 %v4523, %v4539
          %v4545 = vadd.f32 %v4524, %v4538
          %v4546 = vlaneseq
          %v4547 = vshrl.u32 %v4546, 7
          %v4548 = vsub.s32 2, %v4547
          %v4549 = vrot.slane %v4207, %v4548
          %v4550 = vmul.f32 %v1512, %v4549
          %v4551 = vmul.f32 %v1513, %v4549
          %v4552 = vmul.f32 %v1514, %v4549
          %v4556 = vrot.slane %v4550, 2
          %v4557 = vrot.slane %v4551, 2
          %v4558 = vsel %vm1579, %v4556, %v4557
          %v4559 = vrot.slane %v4552, 2
          %v4560 = vsel %vm1579, %v4557, %v4559
          %v4564 = vadd.f32 %v4543, %v4558
          %v4565 = vadd.f32 %v4544, %v4560
          %v4566 = vadd.f32 %v4545, %v4559
          %v4567 = vlaneseq
          %v4568 = vshrl.u32 %v4567, 7
          %v4569 = vsub.s32 3, %v4568
          %v4570 = vrot.slane %v4207, %v4569
          %v4571 = vmul.f32 %v1512, %v4570
          %v4572 = vmul.f32 %v1513, %v4570
          %v4573 = vmul.f32 %v1514, %v4570
          %v4577 = vrot.slane %v4571, 3
          %v4578 = vrot.slane %v4572, 3
          %v4579 = vsel %vm1601, %v4577, %v4578
          %v4580 = vrot.slane %v4573, 3
          %v4581 = vsel %vm1601, %v4578, %v4580
          %v4585 = vadd.f32 %v4564, %v4579
          %v4586 = vadd.f32 %v4565, %v4581
          %v4587 = vadd.f32 %v4566, %v4580
          %v4588 = vlaneseq
          %v4589 = vshrl.u32 %v4588, 7
          %v4590 = vsub.s32 4, %v4589
          %v4591 = vrot.slane %v4207, %v4590
          %v4592 = vmul.f32 %v1512, %v4591
          %v4593 = vmul.f32 %v1513, %v4591
          %v4594 = vmul.f32 %v1514, %v4591
          %v4598 = vrot.slane %v4592, 4
          %v4599 = vrot.slane %v4593, 4
          %v4600 = vsel %vm1623, %v4598, %v4599
          %v4601 = vrot.slane %v4594, 4
          %v4602 = vsel %vm1623, %v4599, %v4601
          %v4606 = vadd.f32 %v4585, %v4600
          %v4607 = vadd.f32 %v4586, %v4602
          %v4608 = vadd.f32 %v4587, %v4601
          %v4609 = vlaneseq
          %v4610 = vshrl.u32 %v4609, 7
          %v4611 = vsub.s32 5, %v4610
          %v4612 = vrot.slane %v4207, %v4611
          %v4613 = vmul.f32 %v1513, %v4612
          %v4614 = vmul.f32 %v1514, %v4612
          %v4617 = vrot.slane %v4613, 5
          %v4618 = vrot.slane %v4614, 5
          %v4619 = vsel %vm1643, %v4617, %v4618
          %v4623 = vadd.f32 %v4606, %v4617
          %v4624 = vadd.f32 %v4607, %v4619
          %v4625 = vadd.f32 %v4608, %v4618
          %v4626 = vlaneseq
          %v4627 = vshrl.u32 %v4626, 7
          %v4628 = vsub.s32 6, %v4627
          %v4629 = vrot.slane %v4207, %v4628
          %v4630 = vmul.f32 %v1513, %v4629
          %v4631 = vmul.f32 %v1514, %v4629
          %v4632 = vmul.f32 %v1515, %v4629
          %v4636 = vrot.slane %v4630, 6
          %v4637 = vrot.slane %v4631, 6
          %v4638 = vsel %vm1663, %v4636, %v4637
          %v4639 = vrot.slane %v4632, 6
          %v4640 = vsel %vm1663, %v4637, %v4639
          %v4644 = vadd.f32 %v4623, %v4636
          %v4645 = vadd.f32 %v4624, %v4638
          %v4646 = vadd.f32 %v4625, %v4640
          %v4647 = vlaneseq
          %v4648 = vshrl.u32 %v4647, 7
          %v4649 = vsub.s32 7, %v4648
          %v4650 = vrot.slane %v4207, %v4649
          %v4651 = vmul.f32 %v1513, %v4650
          %v4652 = vmul.f32 %v1514, %v4650
          %v4653 = vmul.f32 %v1515, %v4650
          %v4657 = vrot.slane %v4651, 7
          %v4658 = vrot.slane %v4652, 7
          %v4659 = vsel %vm1685, %v4657, %v4658
          %v4660 = vrot.slane %v4653, 7
          %v4661 = vsel %vm1685, %v4658, %v4660
          %v4665 = vadd.f32 %v4644, %v4657
          %v4666 = vadd.f32 %v4645, %v4659
          %v4667 = vadd.f32 %v4646, %v4661
          %v4668 = vlaneseq
          %v4669 = vshrl.u32 %v4668, 7
          %v4670 = vsub.s32 0, %v4669
          %v4671 = vrot.slane %v4208, %v4670
          %v4672 = vmul.f32 %v1513, %v4671
          %v4673 = vmul.f32 %v1514, %v4671
          %v4674 = vmul.f32 %v1515, %v4671
          %v4675 = vadd.f32 %v4665, %v4672
          %v4676 = vadd.f32 %v4666, %v4673
          %v4677 = vadd.f32 %v4667, %v4674
          %v4678 = vlaneseq
          %v4679 = vshrl.u32 %v4678, 7
          %v4680 = vsub.s32 1, %v4679
          %v4681 = vrot.slane %v4208, %v4680
          %v4682 = vmul.f32 %v1513, %v4681
          %v4683 = vmul.f32 %v1514, %v4681
          %v4684 = vmul.f32 %v1515, %v4681
          %v4688 = vrot.slane %v4682, 1
          %v4689 = vrot.slane %v4683, 1
          %v4690 = vsel %vm1557, %v4688, %v4689
          %v4691 = vrot.slane %v4684, 1
          %v4692 = vsel %vm1557, %v4689, %v4691
          %v4696 = vadd.f32 %v4675, %v4690
          %v4697 = vadd.f32 %v4676, %v4692
          %v4698 = vadd.f32 %v4677, %v4691
          %v4699 = vlaneseq
          %v4700 = vshrl.u32 %v4699, 7
          %v4701 = vsub.s32 2, %v4700
          %v4702 = vrot.slane %v4208, %v4701
          %v4703 = vmul.f32 %v1513, %v4702
          %v4704 = vmul.f32 %v1514, %v4702
          %v4705 = vmul.f32 %v1515, %v4702
          %v4709 = vrot.slane %v4703, 2
          %v4710 = vrot.slane %v4704, 2
          %v4711 = vsel %vm1579, %v4709, %v4710
          %v4712 = vrot.slane %v4705, 2
          %v4713 = vsel %vm1579, %v4710, %v4712
          %v4717 = vadd.f32 %v4696, %v4711
          %v4718 = vadd.f32 %v4697, %v4713
          %v4719 = vadd.f32 %v4698, %v4712
          %s4720 = ssub.s32 %s1478, 6
          %p4721 = scmp.ge.s32.totalorder %s4720, 0
          %p4722 = scmp.lt.s32.totalorder %s4720, 27
          %p4723 = pnand %p4721, %p4722
          %p4724 = pneg %p4723
          %s4725 = scalar_select %p4724, 1, 0
          %s4726 = scvt.s32.f32 %s4725
          %p4727 = scmp.gt.s32.totalorder %s4720, 0
          %s4728 = scalar_select %p4727, %s4720, 0
          %p4729 = scmp.lt.s32.totalorder %s4728, 26
          %s4730 = scalar_select %p4729, %s4728, 26
          %s4731 = smul.u32 %s4730, 32
          %s4732 = scalar_lea.vmem [#allocation3], %s4731
          %v4733 = vld [vmem:[%s4732] sm:$0xff]
          %v4734 = vld [vmem:[%s4732 + $0x8] sm:$0xff]
          %v4735 = vld [vmem:[%s4732 + $0x10] sm:$0xff]
          %v4736 = vld [vmem:[%s4732 + $0x18] sm:$0x7]
          %v4737 = vstv %s4726
          %v4738 = vmul.f32 %v4733, %v4737
          %v4739 = vmul.f32 %v4734, %v4737
          %v4740 = vmul.f32 %v4735, %v4737
          %v4741 = vmul.f32 %v4736, %v4737
          %v4742 = vlaneseq
          %v4743 = vshrl.u32 %v4742, 7
          %v4744 = vsub.s32 0, %v4743
          %v4745 = vrot.slane %v4738, %v4744
          %v4746 = vmul.f32 %v1510, %v4745
          %v4747 = vmul.f32 %v1511, %v4745
          %v4748 = vmul.f32 %v1512, %v4745
          %v4749 = vadd.f32 %v1501, %v4746
          %v4750 = vadd.f32 %v1502, %v4747
          %v4751 = vadd.f32 %v1503, %v4748
          %v4752 = vlaneseq
          %v4753 = vshrl.u32 %v4752, 7
          %v4754 = vsub.s32 1, %v4753
          %v4755 = vrot.slane %v4738, %v4754
          %v4756 = vmul.f32 %v1510, %v4755
          %v4757 = vmul.f32 %v1511, %v4755
          %v4758 = vmul.f32 %v1512, %v4755
          %v4762 = vrot.slane %v4756, 1
          %v4763 = vrot.slane %v4757, 1
          %v4764 = vsel %vm1557, %v4762, %v4763
          %v4765 = vrot.slane %v4758, 1
          %v4766 = vsel %vm1557, %v4763, %v4765
          %v4770 = vadd.f32 %v4749, %v4764
          %v4771 = vadd.f32 %v4750, %v4766
          %v4772 = vadd.f32 %v4751, %v4765
          %v4773 = vlaneseq
          %v4774 = vshrl.u32 %v4773, 7
          %v4775 = vsub.s32 2, %v4774
          %v4776 = vrot.slane %v4738, %v4775
          %v4777 = vmul.f32 %v1510, %v4776
          %v4778 = vmul.f32 %v1511, %v4776
          %v4779 = vmul.f32 %v1512, %v4776
          %v4783 = vrot.slane %v4777, 2
          %v4784 = vrot.slane %v4778, 2
          %v4785 = vsel %vm1579, %v4783, %v4784
          %v4786 = vrot.slane %v4779, 2
          %v4787 = vsel %vm1579, %v4784, %v4786
          %v4791 = vadd.f32 %v4770, %v4785
          %v4792 = vadd.f32 %v4771, %v4787
          %v4793 = vadd.f32 %v4772, %v4786
          %v4794 = vlaneseq
          %v4795 = vshrl.u32 %v4794, 7
          %v4796 = vsub.s32 3, %v4795
          %v4797 = vrot.slane %v4738, %v4796
          %v4798 = vmul.f32 %v1510, %v4797
          %v4799 = vmul.f32 %v1511, %v4797
          %v4800 = vmul.f32 %v1512, %v4797
          %v4804 = vrot.slane %v4798, 3
          %v4805 = vrot.slane %v4799, 3
          %v4806 = vsel %vm1601, %v4804, %v4805
          %v4807 = vrot.slane %v4800, 3
          %v4808 = vsel %vm1601, %v4805, %v4807
          %v4812 = vadd.f32 %v4791, %v4806
          %v4813 = vadd.f32 %v4792, %v4808
          %v4814 = vadd.f32 %v4793, %v4807
          %v4815 = vlaneseq
          %v4816 = vshrl.u32 %v4815, 7
          %v4817 = vsub.s32 4, %v4816
          %v4818 = vrot.slane %v4738, %v4817
          %v4819 = vmul.f32 %v1510, %v4818
          %v4820 = vmul.f32 %v1511, %v4818
          %v4821 = vmul.f32 %v1512, %v4818
          %v4825 = vrot.slane %v4819, 4
          %v4826 = vrot.slane %v4820, 4
          %v4827 = vsel %vm1623, %v4825, %v4826
          %v4828 = vrot.slane %v4821, 4
          %v4829 = vsel %vm1623, %v4826, %v4828
          %v4833 = vadd.f32 %v4812, %v4827
          %v4834 = vadd.f32 %v4813, %v4829
          %v4835 = vadd.f32 %v4814, %v4828
          %v4836 = vlaneseq
          %v4837 = vshrl.u32 %v4836, 7
          %v4838 = vsub.s32 5, %v4837
          %v4839 = vrot.slane %v4738, %v4838
          %v4840 = vmul.f32 %v1511, %v4839
          %v4841 = vmul.f32 %v1512, %v4839
          %v4844 = vrot.slane %v4840, 5
          %v4845 = vrot.slane %v4841, 5
          %v4846 = vsel %vm1643, %v4844, %v4845
          %v4850 = vadd.f32 %v4833, %v4844
          %v4851 = vadd.f32 %v4834, %v4846
          %v4852 = vadd.f32 %v4835, %v4845
          %v4853 = vlaneseq
          %v4854 = vshrl.u32 %v4853, 7
          %v4855 = vsub.s32 6, %v4854
          %v4856 = vrot.slane %v4738, %v4855
          %v4857 = vmul.f32 %v1511, %v4856
          %v4858 = vmul.f32 %v1512, %v4856
          %v4859 = vmul.f32 %v1513, %v4856
          %v4863 = vrot.slane %v4857, 6
          %v4864 = vrot.slane %v4858, 6
          %v4865 = vsel %vm1663, %v4863, %v4864
          %v4866 = vrot.slane %v4859, 6
          %v4867 = vsel %vm1663, %v4864, %v4866
          %v4871 = vadd.f32 %v4850, %v4863
          %v4872 = vadd.f32 %v4851, %v4865
          %v4873 = vadd.f32 %v4852, %v4867
          %v4874 = vlaneseq
          %v4875 = vshrl.u32 %v4874, 7
          %v4876 = vsub.s32 7, %v4875
          %v4877 = vrot.slane %v4738, %v4876
          %v4878 = vmul.f32 %v1511, %v4877
          %v4879 = vmul.f32 %v1512, %v4877
          %v4880 = vmul.f32 %v1513, %v4877
          %v4884 = vrot.slane %v4878, 7
          %v4885 = vrot.slane %v4879, 7
          %v4886 = vsel %vm1685, %v4884, %v4885
          %v4887 = vrot.slane %v4880, 7
          %v4888 = vsel %vm1685, %v4885, %v4887
          %v4892 = vadd.f32 %v4871, %v4884
          %v4893 = vadd.f32 %v4872, %v4886
          %v4894 = vadd.f32 %v4873, %v4888
          %v4895 = vlaneseq
          %v4896 = vshrl.u32 %v4895, 7
          %v4897 = vsub.s32 0, %v4896
          %v4898 = vrot.slane %v4739, %v4897
          %v4899 = vmul.f32 %v1511, %v4898
          %v4900 = vmul.f32 %v1512, %v4898
          %v4901 = vmul.f32 %v1513, %v4898
          %v4902 = vadd.f32 %v4892, %v4899
          %v4903 = vadd.f32 %v4893, %v4900
          %v4904 = vadd.f32 %v4894, %v4901
          %v4905 = vlaneseq
          %v4906 = vshrl.u32 %v4905, 7
          %v4907 = vsub.s32 1, %v4906
          %v4908 = vrot.slane %v4739, %v4907
          %v4909 = vmul.f32 %v1511, %v4908
          %v4910 = vmul.f32 %v1512, %v4908
          %v4911 = vmul.f32 %v1513, %v4908
          %v4915 = vrot.slane %v4909, 1
          %v4916 = vrot.slane %v4910, 1
          %v4917 = vsel %vm1557, %v4915, %v4916
          %v4918 = vrot.slane %v4911, 1
          %v4919 = vsel %vm1557, %v4916, %v4918
          %v4923 = vadd.f32 %v4902, %v4917
          %v4924 = vadd.f32 %v4903, %v4919
          %v4925 = vadd.f32 %v4904, %v4918
          %v4926 = vlaneseq
          %v4927 = vshrl.u32 %v4926, 7
          %v4928 = vsub.s32 2, %v4927
          %v4929 = vrot.slane %v4739, %v4928
          %v4930 = vmul.f32 %v1511, %v4929
          %v4931 = vmul.f32 %v1512, %v4929
          %v4932 = vmul.f32 %v1513, %v4929
          %v4936 = vrot.slane %v4930, 2
          %v4937 = vrot.slane %v4931, 2
          %v4938 = vsel %vm1579, %v4936, %v4937
          %v4939 = vrot.slane %v4932, 2
          %v4940 = vsel %vm1579, %v4937, %v4939
          %v4944 = vadd.f32 %v4923, %v4938
          %v4945 = vadd.f32 %v4924, %v4940
          %v4946 = vadd.f32 %v4925, %v4939
          %v4947 = vlaneseq
          %v4948 = vshrl.u32 %v4947, 7
          %v4949 = vsub.s32 3, %v4948
          %v4950 = vrot.slane %v4739, %v4949
          %v4951 = vmul.f32 %v1511, %v4950
          %v4952 = vmul.f32 %v1512, %v4950
          %v4953 = vmul.f32 %v1513, %v4950
          %v4957 = vrot.slane %v4951, 3
          %v4958 = vrot.slane %v4952, 3
          %v4959 = vsel %vm1601, %v4957, %v4958
          %v4960 = vrot.slane %v4953, 3
          %v4961 = vsel %vm1601, %v4958, %v4960
          %v4965 = vadd.f32 %v4944, %v4959
          %v4966 = vadd.f32 %v4945, %v4961
          %v4967 = vadd.f32 %v4946, %v4960
          %v4968 = vlaneseq
          %v4969 = vshrl.u32 %v4968, 7
          %v4970 = vsub.s32 4, %v4969
          %v4971 = vrot.slane %v4739, %v4970
          %v4972 = vmul.f32 %v1511, %v4971
          %v4973 = vmul.f32 %v1512, %v4971
          %v4974 = vmul.f32 %v1513, %v4971
          %v4978 = vrot.slane %v4972, 4
          %v4979 = vrot.slane %v4973, 4
          %v4980 = vsel %vm1623, %v4978, %v4979
          %v4981 = vrot.slane %v4974, 4
          %v4982 = vsel %vm1623, %v4979, %v4981
          %v4986 = vadd.f32 %v4965, %v4980
          %v4987 = vadd.f32 %v4966, %v4982
          %v4988 = vadd.f32 %v4967, %v4981
          %v4989 = vlaneseq
          %v4990 = vshrl.u32 %v4989, 7
          %v4991 = vsub.s32 5, %v4990
          %v4992 = vrot.slane %v4739, %v4991
          %v4993 = vmul.f32 %v1512, %v4992
          %v4994 = vmul.f32 %v1513, %v4992
          %v4997 = vrot.slane %v4993, 5
          %v4998 = vrot.slane %v4994, 5
          %v4999 = vsel %vm1643, %v4997, %v4998
          %v5003 = vadd.f32 %v4986, %v4997
          %v5004 = vadd.f32 %v4987, %v4999
          %v5005 = vadd.f32 %v4988, %v4998
          %v5006 = vlaneseq
          %v5007 = vshrl.u32 %v5006, 7
          %v5008 = vsub.s32 6, %v5007
          %v5009 = vrot.slane %v4739, %v5008
          %v5010 = vmul.f32 %v1512, %v5009
          %v5011 = vmul.f32 %v1513, %v5009
          %v5012 = vmul.f32 %v1514, %v5009
          %v5016 = vrot.slane %v5010, 6
          %v5017 = vrot.slane %v5011, 6
          %v5018 = vsel %vm1663, %v5016, %v5017
          %v5019 = vrot.slane %v5012, 6
          %v5020 = vsel %vm1663, %v5017, %v5019
          %v5024 = vadd.f32 %v5003, %v5016
          %v5025 = vadd.f32 %v5004, %v5018
          %v5026 = vadd.f32 %v5005, %v5020
          %v5027 = vlaneseq
          %v5028 = vshrl.u32 %v5027, 7
          %v5029 = vsub.s32 7, %v5028
          %v5030 = vrot.slane %v4739, %v5029
          %v5031 = vmul.f32 %v1512, %v5030
          %v5032 = vmul.f32 %v1513, %v5030
          %v5033 = vmul.f32 %v1514, %v5030
          %v5037 = vrot.slane %v5031, 7
          %v5038 = vrot.slane %v5032, 7
          %v5039 = vsel %vm1685, %v5037, %v5038
          %v5040 = vrot.slane %v5033, 7
          %v5041 = vsel %vm1685, %v5038, %v5040
          %v5045 = vadd.f32 %v5024, %v5037
          %v5046 = vadd.f32 %v5025, %v5039
          %v5047 = vadd.f32 %v5026, %v5041
          %v5048 = vlaneseq
          %v5049 = vshrl.u32 %v5048, 7
          %v5050 = vsub.s32 0, %v5049
          %v5051 = vrot.slane %v4740, %v5050
          %v5052 = vmul.f32 %v1512, %v5051
          %v5053 = vmul.f32 %v1513, %v5051
          %v5054 = vmul.f32 %v1514, %v5051
          %v5055 = vadd.f32 %v5045, %v5052
          %v5056 = vadd.f32 %v5046, %v5053
          %v5057 = vadd.f32 %v5047, %v5054
          %v5058 = vlaneseq
          %v5059 = vshrl.u32 %v5058, 7
          %v5060 = vsub.s32 1, %v5059
          %v5061 = vrot.slane %v4740, %v5060
          %v5062 = vmul.f32 %v1512, %v5061
          %v5063 = vmul.f32 %v1513, %v5061
          %v5064 = vmul.f32 %v1514, %v5061
          %v5068 = vrot.slane %v5062, 1
          %v5069 = vrot.slane %v5063, 1
          %v5070 = vsel %vm1557, %v5068, %v5069
          %v5071 = vrot.slane %v5064, 1
          %v5072 = vsel %vm1557, %v5069, %v5071
          %v5076 = vadd.f32 %v5055, %v5070
          %v5077 = vadd.f32 %v5056, %v5072
          %v5078 = vadd.f32 %v5057, %v5071
          %v5079 = vlaneseq
          %v5080 = vshrl.u32 %v5079, 7
          %v5081 = vsub.s32 2, %v5080
          %v5082 = vrot.slane %v4740, %v5081
          %v5083 = vmul.f32 %v1512, %v5082
          %v5084 = vmul.f32 %v1513, %v5082
          %v5085 = vmul.f32 %v1514, %v5082
          %v5089 = vrot.slane %v5083, 2
          %v5090 = vrot.slane %v5084, 2
          %v5091 = vsel %vm1579, %v5089, %v5090
          %v5092 = vrot.slane %v5085, 2
          %v5093 = vsel %vm1579, %v5090, %v5092
          %v5097 = vadd.f32 %v5076, %v5091
          %v5098 = vadd.f32 %v5077, %v5093
          %v5099 = vadd.f32 %v5078, %v5092
          %v5100 = vlaneseq
          %v5101 = vshrl.u32 %v5100, 7
          %v5102 = vsub.s32 3, %v5101
          %v5103 = vrot.slane %v4740, %v5102
          %v5104 = vmul.f32 %v1512, %v5103
          %v5105 = vmul.f32 %v1513, %v5103
          %v5106 = vmul.f32 %v1514, %v5103
          %v5110 = vrot.slane %v5104, 3
          %v5111 = vrot.slane %v5105, 3
          %v5112 = vsel %vm1601, %v5110, %v5111
          %v5113 = vrot.slane %v5106, 3
          %v5114 = vsel %vm1601, %v5111, %v5113
          %v5118 = vadd.f32 %v5097, %v5112
          %v5119 = vadd.f32 %v5098, %v5114
          %v5120 = vadd.f32 %v5099, %v5113
          %v5121 = vlaneseq
          %v5122 = vshrl.u32 %v5121, 7
          %v5123 = vsub.s32 4, %v5122
          %v5124 = vrot.slane %v4740, %v5123
          %v5125 = vmul.f32 %v1512, %v5124
          %v5126 = vmul.f32 %v1513, %v5124
          %v5127 = vmul.f32 %v1514, %v5124
          %v5131 = vrot.slane %v5125, 4
          %v5132 = vrot.slane %v5126, 4
          %v5133 = vsel %vm1623, %v5131, %v5132
          %v5134 = vrot.slane %v5127, 4
          %v5135 = vsel %vm1623, %v5132, %v5134
          %v5139 = vadd.f32 %v5118, %v5133
          %v5140 = vadd.f32 %v5119, %v5135
          %v5141 = vadd.f32 %v5120, %v5134
          %v5142 = vlaneseq
          %v5143 = vshrl.u32 %v5142, 7
          %v5144 = vsub.s32 5, %v5143
          %v5145 = vrot.slane %v4740, %v5144
          %v5146 = vmul.f32 %v1513, %v5145
          %v5147 = vmul.f32 %v1514, %v5145
          %v5150 = vrot.slane %v5146, 5
          %v5151 = vrot.slane %v5147, 5
          %v5152 = vsel %vm1643, %v5150, %v5151
          %v5156 = vadd.f32 %v5139, %v5150
          %v5157 = vadd.f32 %v5140, %v5152
          %v5158 = vadd.f32 %v5141, %v5151
          %v5159 = vlaneseq
          %v5160 = vshrl.u32 %v5159, 7
          %v5161 = vsub.s32 6, %v5160
          %v5162 = vrot.slane %v4740, %v5161
          %v5163 = vmul.f32 %v1513, %v5162
          %v5164 = vmul.f32 %v1514, %v5162
          %v5165 = vmul.f32 %v1515, %v5162
          %v5169 = vrot.slane %v5163, 6
          %v5170 = vrot.slane %v5164, 6
          %v5171 = vsel %vm1663, %v5169, %v5170
          %v5172 = vrot.slane %v5165, 6
          %v5173 = vsel %vm1663, %v5170, %v5172
          %v5177 = vadd.f32 %v5156, %v5169
          %v5178 = vadd.f32 %v5157, %v5171
          %v5179 = vadd.f32 %v5158, %v5173
          %v5180 = vlaneseq
          %v5181 = vshrl.u32 %v5180, 7
          %v5182 = vsub.s32 7, %v5181
          %v5183 = vrot.slane %v4740, %v5182
          %v5184 = vmul.f32 %v1513, %v5183
          %v5185 = vmul.f32 %v1514, %v5183
          %v5186 = vmul.f32 %v1515, %v5183
          %v5190 = vrot.slane %v5184, 7
          %v5191 = vrot.slane %v5185, 7
          %v5192 = vsel %vm1685, %v5190, %v5191
          %v5193 = vrot.slane %v5186, 7
          %v5194 = vsel %vm1685, %v5191, %v5193
          %v5198 = vadd.f32 %v5177, %v5190
          %v5199 = vadd.f32 %v5178, %v5192
          %v5200 = vadd.f32 %v5179, %v5194
          %v5201 = vlaneseq
          %v5202 = vshrl.u32 %v5201, 7
          %v5203 = vsub.s32 0, %v5202
          %v5204 = vrot.slane %v4741, %v5203
          %v5205 = vmul.f32 %v1513, %v5204
          %v5206 = vmul.f32 %v1514, %v5204
          %v5207 = vmul.f32 %v1515, %v5204
          %v5208 = vadd.f32 %v5198, %v5205
          %v5209 = vadd.f32 %v5199, %v5206
          %v5210 = vadd.f32 %v5200, %v5207
          %v5211 = vlaneseq
          %v5212 = vshrl.u32 %v5211, 7
          %v5213 = vsub.s32 1, %v5212
          %v5214 = vrot.slane %v4741, %v5213
          %v5215 = vmul.f32 %v1513, %v5214
          %v5216 = vmul.f32 %v1514, %v5214
          %v5217 = vmul.f32 %v1515, %v5214
          %v5221 = vrot.slane %v5215, 1
          %v5222 = vrot.slane %v5216, 1
          %v5223 = vsel %vm1557, %v5221, %v5222
          %v5224 = vrot.slane %v5217, 1
          %v5225 = vsel %vm1557, %v5222, %v5224
          %v5229 = vadd.f32 %v5208, %v5223
          %v5230 = vadd.f32 %v5209, %v5225
          %v5231 = vadd.f32 %v5210, %v5224
          %v5232 = vlaneseq
          %v5233 = vshrl.u32 %v5232, 7
          %v5234 = vsub.s32 2, %v5233
          %v5235 = vrot.slane %v4741, %v5234
          %v5236 = vmul.f32 %v1513, %v5235
          %v5237 = vmul.f32 %v1514, %v5235
          %v5238 = vmul.f32 %v1515, %v5235
          %v5242 = vrot.slane %v5236, 2
          %v5243 = vrot.slane %v5237, 2
          %v5244 = vsel %vm1579, %v5242, %v5243
          %v5245 = vrot.slane %v5238, 2
          %v5246 = vsel %vm1579, %v5243, %v5245
          %v5250 = vadd.f32 %v5229, %v5244
          %v5251 = vadd.f32 %v5230, %v5246
          %v5252 = vadd.f32 %v5231, %v5245
          %s5253 = ssub.s32 %s1478, 7
          %p5254 = scmp.ge.s32.totalorder %s5253, 0
          %p5255 = scmp.lt.s32.totalorder %s5253, 27
          %p5256 = pnand %p5254, %p5255
          %p5257 = pneg %p5256
          %s5258 = scalar_select %p5257, 1, 0
          %s5259 = scvt.s32.f32 %s5258
          %p5260 = scmp.gt.s32.totalorder %s5253, 0
          %s5261 = scalar_select %p5260, %s5253, 0
          %p5262 = scmp.lt.s32.totalorder %s5261, 26
          %s5263 = scalar_select %p5262, %s5261, 26
          %s5264 = smul.u32 %s5263, 32
          %s5265 = scalar_lea.vmem [#allocation3], %s5264
          %v5266 = vld [vmem:[%s5265] sm:$0xff]
          %v5267 = vld [vmem:[%s5265 + $0x8] sm:$0xff]
          %v5268 = vld [vmem:[%s5265 + $0x10] sm:$0xff]
          %v5269 = vld [vmem:[%s5265 + $0x18] sm:$0x7]
          %v5270 = vstv %s5259
          %v5271 = vmul.f32 %v5266, %v5270
          %v5272 = vmul.f32 %v5267, %v5270
          %v5273 = vmul.f32 %v5268, %v5270
          %v5274 = vmul.f32 %v5269, %v5270
          %v5275 = vlaneseq
          %v5276 = vshrl.u32 %v5275, 7
          %v5277 = vsub.s32 0, %v5276
          %v5278 = vrot.slane %v5271, %v5277
          %v5279 = vmul.f32 %v1510, %v5278
          %v5280 = vmul.f32 %v1511, %v5278
          %v5281 = vmul.f32 %v1512, %v5278
          %v5282 = vadd.f32 %v1504, %v5279
          %v5283 = vadd.f32 %v1505, %v5280
          %v5284 = vadd.f32 %v1506, %v5281
          %v5285 = vlaneseq
          %v5286 = vshrl.u32 %v5285, 7
          %v5287 = vsub.s32 1, %v5286
          %v5288 = vrot.slane %v5271, %v5287
          %v5289 = vmul.f32 %v1510, %v5288
          %v5290 = vmul.f32 %v1511, %v5288
          %v5291 = vmul.f32 %v1512, %v5288
          %v5295 = vrot.slane %v5289, 1
          %v5296 = vrot.slane %v5290, 1
          %v5297 = vsel %vm1557, %v5295, %v5296
          %v5298 = vrot.slane %v5291, 1
          %v5299 = vsel %vm1557, %v5296, %v5298
          %v5303 = vadd.f32 %v5282, %v5297
          %v5304 = vadd.f32 %v5283, %v5299
          %v5305 = vadd.f32 %v5284, %v5298
          %v5306 = vlaneseq
          %v5307 = vshrl.u32 %v5306, 7
          %v5308 = vsub.s32 2, %v5307
          %v5309 = vrot.slane %v5271, %v5308
          %v5310 = vmul.f32 %v1510, %v5309
          %v5311 = vmul.f32 %v1511, %v5309
          %v5312 = vmul.f32 %v1512, %v5309
          %v5316 = vrot.slane %v5310, 2
          %v5317 = vrot.slane %v5311, 2
          %v5318 = vsel %vm1579, %v5316, %v5317
          %v5319 = vrot.slane %v5312, 2
          %v5320 = vsel %vm1579, %v5317, %v5319
          %v5324 = vadd.f32 %v5303, %v5318
          %v5325 = vadd.f32 %v5304, %v5320
          %v5326 = vadd.f32 %v5305, %v5319
          %v5327 = vlaneseq
          %v5328 = vshrl.u32 %v5327, 7
          %v5329 = vsub.s32 3, %v5328
          %v5330 = vrot.slane %v5271, %v5329
          %v5331 = vmul.f32 %v1510, %v5330
          %v5332 = vmul.f32 %v1511, %v5330
          %v5333 = vmul.f32 %v1512, %v5330
          %v5337 = vrot.slane %v5331, 3
          %v5338 = vrot.slane %v5332, 3
          %v5339 = vsel %vm1601, %v5337, %v5338
          %v5340 = vrot.slane %v5333, 3
          %v5341 = vsel %vm1601, %v5338, %v5340
          %v5345 = vadd.f32 %v5324, %v5339
          %v5346 = vadd.f32 %v5325, %v5341
          %v5347 = vadd.f32 %v5326, %v5340
          %v5348 = vlaneseq
          %v5349 = vshrl.u32 %v5348, 7
          %v5350 = vsub.s32 4, %v5349
          %v5351 = vrot.slane %v5271, %v5350
          %v5352 = vmul.f32 %v1510, %v5351
          %v5353 = vmul.f32 %v1511, %v5351
          %v5354 = vmul.f32 %v1512, %v5351
          %v5358 = vrot.slane %v5352, 4
          %v5359 = vrot.slane %v5353, 4
          %v5360 = vsel %vm1623, %v5358, %v5359
          %v5361 = vrot.slane %v5354, 4
          %v5362 = vsel %vm1623, %v5359, %v5361
          %v5366 = vadd.f32 %v5345, %v5360
          %v5367 = vadd.f32 %v5346, %v5362
          %v5368 = vadd.f32 %v5347, %v5361
          %v5369 = vlaneseq
          %v5370 = vshrl.u32 %v5369, 7
          %v5371 = vsub.s32 5, %v5370
          %v5372 = vrot.slane %v5271, %v5371
          %v5373 = vmul.f32 %v1511, %v5372
          %v5374 = vmul.f32 %v1512, %v5372
          %v5377 = vrot.slane %v5373, 5
          %v5378 = vrot.slane %v5374, 5
          %v5379 = vsel %vm1643, %v5377, %v5378
          %v5383 = vadd.f32 %v5366, %v5377
          %v5384 = vadd.f32 %v5367, %v5379
          %v5385 = vadd.f32 %v5368, %v5378
          %v5386 = vlaneseq
          %v5387 = vshrl.u32 %v5386, 7
          %v5388 = vsub.s32 6, %v5387
          %v5389 = vrot.slane %v5271, %v5388
          %v5390 = vmul.f32 %v1511, %v5389
          %v5391 = vmul.f32 %v1512, %v5389
          %v5392 = vmul.f32 %v1513, %v5389
          %v5396 = vrot.slane %v5390, 6
          %v5397 = vrot.slane %v5391, 6
          %v5398 = vsel %vm1663, %v5396, %v5397
          %v5399 = vrot.slane %v5392, 6
          %v5400 = vsel %vm1663, %v5397, %v5399
          %v5404 = vadd.f32 %v5383, %v5396
          %v5405 = vadd.f32 %v5384, %v5398
          %v5406 = vadd.f32 %v5385, %v5400
          %v5407 = vlaneseq
          %v5408 = vshrl.u32 %v5407, 7
          %v5409 = vsub.s32 7, %v5408
          %v5410 = vrot.slane %v5271, %v5409
          %v5411 = vmul.f32 %v1511, %v5410
          %v5412 = vmul.f32 %v1512, %v5410
          %v5413 = vmul.f32 %v1513, %v5410
          %v5417 = vrot.slane %v5411, 7
          %v5418 = vrot.slane %v5412, 7
          %v5419 = vsel %vm1685, %v5417, %v5418
          %v5420 = vrot.slane %v5413, 7
          %v5421 = vsel %vm1685, %v5418, %v5420
          %v5425 = vadd.f32 %v5404, %v5417
          %v5426 = vadd.f32 %v5405, %v5419
          %v5427 = vadd.f32 %v5406, %v5421
          %v5428 = vlaneseq
          %v5429 = vshrl.u32 %v5428, 7
          %v5430 = vsub.s32 0, %v5429
          %v5431 = vrot.slane %v5272, %v5430
          %v5432 = vmul.f32 %v1511, %v5431
          %v5433 = vmul.f32 %v1512, %v5431
          %v5434 = vmul.f32 %v1513, %v5431
          %v5435 = vadd.f32 %v5425, %v5432
          %v5436 = vadd.f32 %v5426, %v5433
          %v5437 = vadd.f32 %v5427, %v5434
          %v5438 = vlaneseq
          %v5439 = vshrl.u32 %v5438, 7
          %v5440 = vsub.s32 1, %v5439
          %v5441 = vrot.slane %v5272, %v5440
          %v5442 = vmul.f32 %v1511, %v5441
          %v5443 = vmul.f32 %v1512, %v5441
          %v5444 = vmul.f32 %v1513, %v5441
          %v5448 = vrot.slane %v5442, 1
          %v5449 = vrot.slane %v5443, 1
          %v5450 = vsel %vm1557, %v5448, %v5449
          %v5451 = vrot.slane %v5444, 1
          %v5452 = vsel %vm1557, %v5449, %v5451
          %v5456 = vadd.f32 %v5435, %v5450
          %v5457 = vadd.f32 %v5436, %v5452
          %v5458 = vadd.f32 %v5437, %v5451
          %v5459 = vlaneseq
          %v5460 = vshrl.u32 %v5459, 7
          %v5461 = vsub.s32 2, %v5460
          %v5462 = vrot.slane %v5272, %v5461
          %v5463 = vmul.f32 %v1511, %v5462
          %v5464 = vmul.f32 %v1512, %v5462
          %v5465 = vmul.f32 %v1513, %v5462
          %v5469 = vrot.slane %v5463, 2
          %v5470 = vrot.slane %v5464, 2
          %v5471 = vsel %vm1579, %v5469, %v5470
          %v5472 = vrot.slane %v5465, 2
          %v5473 = vsel %vm1579, %v5470, %v5472
          %v5477 = vadd.f32 %v5456, %v5471
          %v5478 = vadd.f32 %v5457, %v5473
          %v5479 = vadd.f32 %v5458, %v5472
          %v5480 = vlaneseq
          %v5481 = vshrl.u32 %v5480, 7
          %v5482 = vsub.s32 3, %v5481
          %v5483 = vrot.slane %v5272, %v5482
          %v5484 = vmul.f32 %v1511, %v5483
          %v5485 = vmul.f32 %v1512, %v5483
          %v5486 = vmul.f32 %v1513, %v5483
          %v5490 = vrot.slane %v5484, 3
          %v5491 = vrot.slane %v5485, 3
          %v5492 = vsel %vm1601, %v5490, %v5491
          %v5493 = vrot.slane %v5486, 3
          %v5494 = vsel %vm1601, %v5491, %v5493
          %v5498 = vadd.f32 %v5477, %v5492
          %v5499 = vadd.f32 %v5478, %v5494
          %v5500 = vadd.f32 %v5479, %v5493
          %v5501 = vlaneseq
          %v5502 = vshrl.u32 %v5501, 7
          %v5503 = vsub.s32 4, %v5502
          %v5504 = vrot.slane %v5272, %v5503
          %v5505 = vmul.f32 %v1511, %v5504
          %v5506 = vmul.f32 %v1512, %v5504
          %v5507 = vmul.f32 %v1513, %v5504
          %v5511 = vrot.slane %v5505, 4
          %v5512 = vrot.slane %v5506, 4
          %v5513 = vsel %vm1623, %v5511, %v5512
          %v5514 = vrot.slane %v5507, 4
          %v5515 = vsel %vm1623, %v5512, %v5514
          %v5519 = vadd.f32 %v5498, %v5513
          %v5520 = vadd.f32 %v5499, %v5515
          %v5521 = vadd.f32 %v5500, %v5514
          %v5522 = vlaneseq
          %v5523 = vshrl.u32 %v5522, 7
          %v5524 = vsub.s32 5, %v5523
          %v5525 = vrot.slane %v5272, %v5524
          %v5526 = vmul.f32 %v1512, %v5525
          %v5527 = vmul.f32 %v1513, %v5525
          %v5530 = vrot.slane %v5526, 5
          %v5531 = vrot.slane %v5527, 5
          %v5532 = vsel %vm1643, %v5530, %v5531
          %v5536 = vadd.f32 %v5519, %v5530
          %v5537 = vadd.f32 %v5520, %v5532
          %v5538 = vadd.f32 %v5521, %v5531
          %v5539 = vlaneseq
          %v5540 = vshrl.u32 %v5539, 7
          %v5541 = vsub.s32 6, %v5540
          %v5542 = vrot.slane %v5272, %v5541
          %v5543 = vmul.f32 %v1512, %v5542
          %v5544 = vmul.f32 %v1513, %v5542
          %v5545 = vmul.f32 %v1514, %v5542
          %v5549 = vrot.slane %v5543, 6
          %v5550 = vrot.slane %v5544, 6
          %v5551 = vsel %vm1663, %v5549, %v5550
          %v5552 = vrot.slane %v5545, 6
          %v5553 = vsel %vm1663, %v5550, %v5552
          %v5557 = vadd.f32 %v5536, %v5549
          %v5558 = vadd.f32 %v5537, %v5551
          %v5559 = vadd.f32 %v5538, %v5553
          %v5560 = vlaneseq
          %v5561 = vshrl.u32 %v5560, 7
          %v5562 = vsub.s32 7, %v5561
          %v5563 = vrot.slane %v5272, %v5562
          %v5564 = vmul.f32 %v1512, %v5563
          %v5565 = vmul.f32 %v1513, %v5563
          %v5566 = vmul.f32 %v1514, %v5563
          %v5570 = vrot.slane %v5564, 7
          %v5571 = vrot.slane %v5565, 7
          %v5572 = vsel %vm1685, %v5570, %v5571
          %v5573 = vrot.slane %v5566, 7
          %v5574 = vsel %vm1685, %v5571, %v5573
          %v5578 = vadd.f32 %v5557, %v5570
          %v5579 = vadd.f32 %v5558, %v5572
          %v5580 = vadd.f32 %v5559, %v5574
          %v5581 = vlaneseq
          %v5582 = vshrl.u32 %v5581, 7
          %v5583 = vsub.s32 0, %v5582
          %v5584 = vrot.slane %v5273, %v5583
          %v5585 = vmul.f32 %v1512, %v5584
          %v5586 = vmul.f32 %v1513, %v5584
          %v5587 = vmul.f32 %v1514, %v5584
          %v5588 = vadd.f32 %v5578, %v5585
          %v5589 = vadd.f32 %v5579, %v5586
          %v5590 = vadd.f32 %v5580, %v5587
          %v5591 = vlaneseq
          %v5592 = vshrl.u32 %v5591, 7
          %v5593 = vsub.s32 1, %v5592
          %v5594 = vrot.slane %v5273, %v5593
          %v5595 = vmul.f32 %v1512, %v5594
          %v5596 = vmul.f32 %v1513, %v5594
          %v5597 = vmul.f32 %v1514, %v5594
          %v5601 = vrot.slane %v5595, 1
          %v5602 = vrot.slane %v5596, 1
          %v5603 = vsel %vm1557, %v5601, %v5602
          %v5604 = vrot.slane %v5597, 1
          %v5605 = vsel %vm1557, %v5602, %v5604
          %v5609 = vadd.f32 %v5588, %v5603
          %v5610 = vadd.f32 %v5589, %v5605
          %v5611 = vadd.f32 %v5590, %v5604
          %v5612 = vlaneseq
          %v5613 = vshrl.u32 %v5612, 7
          %v5614 = vsub.s32 2, %v5613
          %v5615 = vrot.slane %v5273, %v5614
          %v5616 = vmul.f32 %v1512, %v5615
          %v5617 = vmul.f32 %v1513, %v5615
          %v5618 = vmul.f32 %v1514, %v5615
          %v5622 = vrot.slane %v5616, 2
          %v5623 = vrot.slane %v5617, 2
          %v5624 = vsel %vm1579, %v5622, %v5623
          %v5625 = vrot.slane %v5618, 2
          %v5626 = vsel %vm1579, %v5623, %v5625
          %v5630 = vadd.f32 %v5609, %v5624
          %v5631 = vadd.f32 %v5610, %v5626
          %v5632 = vadd.f32 %v5611, %v5625
          %v5633 = vlaneseq
          %v5634 = vshrl.u32 %v5633, 7
          %v5635 = vsub.s32 3, %v5634
          %v5636 = vrot.slane %v5273, %v5635
          %v5637 = vmul.f32 %v1512, %v5636
          %v5638 = vmul.f32 %v1513, %v5636
          %v5639 = vmul.f32 %v1514, %v5636
          %v5643 = vrot.slane %v5637, 3
          %v5644 = vrot.slane %v5638, 3
          %v5645 = vsel %vm1601, %v5643, %v5644
          %v5646 = vrot.slane %v5639, 3
          %v5647 = vsel %vm1601, %v5644, %v5646
          %v5651 = vadd.f32 %v5630, %v5645
          %v5652 = vadd.f32 %v5631, %v5647
          %v5653 = vadd.f32 %v5632, %v5646
          %v5654 = vlaneseq
          %v5655 = vshrl.u32 %v5654, 7
          %v5656 = vsub.s32 4, %v5655
          %v5657 = vrot.slane %v5273, %v5656
          %v5658 = vmul.f32 %v1512, %v5657
          %v5659 = vmul.f32 %v1513, %v5657
          %v5660 = vmul.f32 %v1514, %v5657
          %v5664 = vrot.slane %v5658, 4
          %v5665 = vrot.slane %v5659, 4
          %v5666 = vsel %vm1623, %v5664, %v5665
          %v5667 = vrot.slane %v5660, 4
          %v5668 = vsel %vm1623, %v5665, %v5667
          %v5672 = vadd.f32 %v5651, %v5666
          %v5673 = vadd.f32 %v5652, %v5668
          %v5674 = vadd.f32 %v5653, %v5667
          %v5675 = vlaneseq
          %v5676 = vshrl.u32 %v5675, 7
          %v5677 = vsub.s32 5, %v5676
          %v5678 = vrot.slane %v5273, %v5677
          %v5679 = vmul.f32 %v1513, %v5678
          %v5680 = vmul.f32 %v1514, %v5678
          %v5683 = vrot.slane %v5679, 5
          %v5684 = vrot.slane %v5680, 5
          %v5685 = vsel %vm1643, %v5683, %v5684
          %v5689 = vadd.f32 %v5672, %v5683
          %v5690 = vadd.f32 %v5673, %v5685
          %v5691 = vadd.f32 %v5674, %v5684
          %v5692 = vlaneseq
          %v5693 = vshrl.u32 %v5692, 7
          %v5694 = vsub.s32 6, %v5693
          %v5695 = vrot.slane %v5273, %v5694
          %v5696 = vmul.f32 %v1513, %v5695
          %v5697 = vmul.f32 %v1514, %v5695
          %v5698 = vmul.f32 %v1515, %v5695
          %v5702 = vrot.slane %v5696, 6
          %v5703 = vrot.slane %v5697, 6
          %v5704 = vsel %vm1663, %v5702, %v5703
          %v5705 = vrot.slane %v5698, 6
          %v5706 = vsel %vm1663, %v5703, %v5705
          %v5710 = vadd.f32 %v5689, %v5702
          %v5711 = vadd.f32 %v5690, %v5704
          %v5712 = vadd.f32 %v5691, %v5706
          %v5713 = vlaneseq
          %v5714 = vshrl.u32 %v5713, 7
          %v5715 = vsub.s32 7, %v5714
          %v5716 = vrot.slane %v5273, %v5715
          %v5717 = vmul.f32 %v1513, %v5716
          %v5718 = vmul.f32 %v1514, %v5716
          %v5719 = vmul.f32 %v1515, %v5716
          %v5723 = vrot.slane %v5717, 7
          %v5724 = vrot.slane %v5718, 7
          %v5725 = vsel %vm1685, %v5723, %v5724
          %v5726 = vrot.slane %v5719, 7
          %v5727 = vsel %vm1685, %v5724, %v5726
          %v5731 = vadd.f32 %v5710, %v5723
          %v5732 = vadd.f32 %v5711, %v5725
          %v5733 = vadd.f32 %v5712, %v5727
          %v5734 = vlaneseq
          %v5735 = vshrl.u32 %v5734, 7
          %v5736 = vsub.s32 0, %v5735
          %v5737 = vrot.slane %v5274, %v5736
          %v5738 = vmul.f32 %v1513, %v5737
          %v5739 = vmul.f32 %v1514, %v5737
          %v5740 = vmul.f32 %v1515, %v5737
          %v5741 = vadd.f32 %v5731, %v5738
          %v5742 = vadd.f32 %v5732, %v5739
          %v5743 = vadd.f32 %v5733, %v5740
          %v5744 = vlaneseq
          %v5745 = vshrl.u32 %v5744, 7
          %v5746 = vsub.s32 1, %v5745
          %v5747 = vrot.slane %v5274, %v5746
          %v5748 = vmul.f32 %v1513, %v5747
          %v5749 = vmul.f32 %v1514, %v5747
          %v5750 = vmul.f32 %v1515, %v5747
          %v5754 = vrot.slane %v5748, 1
          %v5755 = vrot.slane %v5749, 1
          %v5756 = vsel %vm1557, %v5754, %v5755
          %v5757 = vrot.slane %v5750, 1
          %v5758 = vsel %vm1557, %v5755, %v5757
          %v5762 = vadd.f32 %v5741, %v5756
          %v5763 = vadd.f32 %v5742, %v5758
          %v5764 = vadd.f32 %v5743, %v5757
          %v5765 = vlaneseq
          %v5766 = vshrl.u32 %v5765, 7
          %v5767 = vsub.s32 2, %v5766
          %v5768 = vrot.slane %v5274, %v5767
          %v5769 = vmul.f32 %v1513, %v5768
          %v5770 = vmul.f32 %v1514, %v5768
          %v5771 = vmul.f32 %v1515, %v5768
          %v5775 = vrot.slane %v5769, 2
          %v5776 = vrot.slane %v5770, 2
          %v5777 = vsel %vm1579, %v5775, %v5776
          %v5778 = vrot.slane %v5771, 2
          %v5779 = vsel %vm1579, %v5776, %v5778
          %v5783 = vadd.f32 %v5762, %v5777
          %v5784 = vadd.f32 %v5763, %v5779
          %v5785 = vadd.f32 %v5764, %v5778
        $region61: #{_lambda_.1} parent=47 // loop_footer
          %s1482 = sadd.s32 1, %s1478
        $region62: #{_lambda_.1} parent=47 // loop_footer_branch
          %1477 = sbr.rel target = $region58
        $region63: #{_lambda_.1} parent=47 // loop_exit
          _
        %vm5789 = vcmask 1044480
        %v5790 = vrot.slane %v1483, 3
        %v5791 = vrot.slane %v1484, 3
        %v5792 = vsel %vm5789, %v5790, %v5791
        %v5793 = vrot.slane %v1485, 3
        %v5794 = vsel %vm5789, %v5791, %v5793
        %v5800 = vrot.slane %v1486, 3
        %v5801 = vrot.slane %v1487, 3
        %v5802 = vsel %vm5789, %v5800, %v5801
        %v5803 = vrot.slane %v1488, 3
        %v5804 = vsel %vm5789, %v5801, %v5803
        %v5810 = vrot.slane %v1489, 3
        %v5811 = vrot.slane %v1490, 3
        %v5812 = vsel %vm5789, %v5810, %v5811
        %v5813 = vrot.slane %v1491, 3
        %v5814 = vsel %vm5789, %v5811, %v5813
        %v5820 = vrot.slane %v1492, 3
        %v5821 = vrot.slane %v1493, 3
        %v5822 = vsel %vm5789, %v5820, %v5821
        %v5823 = vrot.slane %v1494, 3
        %v5824 = vsel %vm5789, %v5821, %v5823
        %v5830 = vrot.slane %v1495, 3
        %v5831 = vrot.slane %v1496, 3
        %v5832 = vsel %vm5789, %v5830, %v5831
        %v5833 = vrot.slane %v1497, 3
        %v5834 = vsel %vm5789, %v5831, %v5833
        %v5840 = vrot.slane %v1498, 3
        %v5841 = vrot.slane %v1499, 3
        %v5842 = vsel %vm5789, %v5840, %v5841
        %v5843 = vrot.slane %v1500, 3
        %v5844 = vsel %vm5789, %v5841, %v5843
        %v5850 = vrot.slane %v1501, 3
        %v5851 = vrot.slane %v1502, 3
        %v5852 = vsel %vm5789, %v5850, %v5851
        %v5853 = vrot.slane %v1503, 3
        %v5854 = vsel %vm5789, %v5851, %v5853
        %v5860 = vrot.slane %v1504, 3
        %v5861 = vrot.slane %v1505, 3
        %v5862 = vsel %vm5789, %v5860, %v5861
        %v5863 = vrot.slane %v1506, 3
        %v5864 = vsel %vm5789, %v5861, %v5863
        %v5867 = vmax.f32 %v5792, 0.0
        %v5868 = vmax.f32 %v5794, 0.0
        %v5869 = vmax.f32 %v5802, 0.0
        %v5870 = vmax.f32 %v5804, 0.0
        %v5871 = vmax.f32 %v5812, 0.0
        %v5872 = vmax.f32 %v5814, 0.0
        %v5873 = vmax.f32 %v5822, 0.0
        %v5874 = vmax.f32 %v5824, 0.0
        %v5875 = vmax.f32 %v5832, 0.0
        %v5876 = vmax.f32 %v5834, 0.0
        %v5877 = vmax.f32 %v5842, 0.0
        %v5878 = vmax.f32 %v5844, 0.0
        %v5879 = vmax.f32 %v5852, 0.0
        %v5880 = vmax.f32 %v5854, 0.0
        %v5881 = vmax.f32 %v5862, 0.0
        %v5882 = vmax.f32 %v5864, 0.0
        %s5883 = smul.u32 %s1469, 16
        %s5884 = scalar_lea.vmem %s307, %s5883
        %v5885 = vld [vmem:[%s5884] sm:$0xff]
        %v5886 = vld [vmem:[%s5884 + $0x8] sm:$0xff]
        %v5887 = vld [vmem:[%s5884 + $0x10] sm:$0xff]
        %v5888 = vld [vmem:[%s5884 + $0x18] sm:$0xff]
        %v5889 = vld [vmem:[%s5884 + $0x20] sm:$0xff]
        %v5890 = vld [vmem:[%s5884 + $0x28] sm:$0xff]
        %v5891 = vld [vmem:[%s5884 + $0x30] sm:$0xff]
        %v5892 = vld [vmem:[%s5884 + $0x38] sm:$0xff]
        %v5893 = vld [vmem:[%s5884 + $0x40] sm:$0xff]
        %v5894 = vld [vmem:[%s5884 + $0x48] sm:$0xff]
        %v5895 = vld [vmem:[%s5884 + $0x50] sm:$0xff]
        %v5896 = vld [vmem:[%s5884 + $0x58] sm:$0xff]
        %v5897 = vld [vmem:[%s5884 + $0x60] sm:$0xff]
        %v5898 = vld [vmem:[%s5884 + $0x68] sm:$0xff]
        %v5899 = vld [vmem:[%s5884 + $0x70] sm:$0xff]
        %v5900 = vld [vmem:[%s5884 + $0x78] sm:$0xff]
        %v5901 = vld [vmem:[%s6] sm:$0x1]
        %v5903 = vlaneseq
        %v5904 = vshrl.u32 %v5903, 7
        %v5905 = vsub.s32 0, %v5904
        %v5906 = vrot.slane %v5901, %v5905
        %v5908 = vld [vmem:[%s5] sm:$0x1]
        %5910 = vset.pattern.permute.xlu0 0
        %5911 = vperm.xlu0 %5910, %v5867
        %v5912 = vpop.permute.xlu0 %5911
        %5915 = vset.pattern.permute.xlu0 0
        %5916 = vperm.xlu0 %5915, %v5868
        %v5917 = vpop.permute.xlu0 %5916
        %5920 = vset.pattern.permute.xlu0 0
        %5921 = vperm.xlu0 %5920, %v5869
        %v5922 = vpop.permute.xlu0 %5921
        %5925 = vset.pattern.permute.xlu0 0
        %5926 = vperm.xlu0 %5925, %v5870
        %v5927 = vpop.permute.xlu0 %5926
        %5930 = vset.pattern.permute.xlu0 0
        %5931 = vperm.xlu0 %5930, %v5871
        %v5932 = vpop.permute.xlu0 %5931
        %5935 = vset.pattern.permute.xlu0 0
        %5936 = vperm.xlu0 %5935, %v5872
        %v5937 = vpop.permute.xlu0 %5936
        %5940 = vset.pattern.permute.xlu0 0
        %5941 = vperm.xlu0 %5940, %v5873
        %v5942 = vpop.permute.xlu0 %5941
        %5945 = vset.pattern.permute.xlu0 0
        %5946 = vperm.xlu0 %5945, %v5874
        %v5947 = vpop.permute.xlu0 %5946
        %5950 = vset.pattern.permute.xlu0 0
        %5951 = vperm.xlu0 %5950, %v5875
        %v5952 = vpop.permute.xlu0 %5951
        %5955 = vset.pattern.permute.xlu0 0
        %5956 = vperm.xlu0 %5955, %v5876
        %v5957 = vpop.permute.xlu0 %5956
        %5960 = vset.pattern.permute.xlu0 0
        %5961 = vperm.xlu0 %5960, %v5877
        %v5962 = vpop.permute.xlu0 %5961
        %5965 = vset.pattern.permute.xlu0 0
        %5966 = vperm.xlu0 %5965, %v5878
        %v5967 = vpop.permute.xlu0 %5966
        %5970 = vset.pattern.permute.xlu0 0
        %5971 = vperm.xlu0 %5970, %v5879
        %v5972 = vpop.permute.xlu0 %5971
        %5975 = vset.pattern.permute.xlu0 0
        %5976 = vperm.xlu0 %5975, %v5880
        %v5977 = vpop.permute.xlu0 %5976
        %5980 = vset.pattern.permute.xlu0 0
        %5981 = vperm.xlu0 %5980, %v5881
        %v5982 = vpop.permute.xlu0 %5981
        %5985 = vset.pattern.permute.xlu0 0
        %5986 = vperm.xlu0 %5985, %v5882
        %v5987 = vpop.permute.xlu0 %5986
        %v5989 = vlaneseq
        %v5990 = vshrl.u32 %v5989, 7
        %v5991 = vsub.s32 0, %v5990
        %v5992 = vrot.slane %v5908, %v5991
        %v5993 = vmul.f32 %v5912, %v5992
        %v5994 = vmul.f32 %v5917, %v5992
        %v5995 = vmul.f32 %v5922, %v5992
        %v5996 = vmul.f32 %v5927, %v5992
        %v5997 = vmul.f32 %v5932, %v5992
        %v5998 = vmul.f32 %v5937, %v5992
        %v5999 = vmul.f32 %v5942, %v5992
        %v6000 = vmul.f32 %v5947, %v5992
        %v6001 = vmul.f32 %v5952, %v5992
        %v6002 = vmul.f32 %v5957, %v5992
        %v6003 = vmul.f32 %v5962, %v5992
        %v6004 = vmul.f32 %v5967, %v5992
        %v6005 = vmul.f32 %v5972, %v5992
        %v6006 = vmul.f32 %v5977, %v5992
        %v6007 = vmul.f32 %v5982, %v5992
        %v6008 = vmul.f32 %v5987, %v5992
        %v6009 = vadd.f32 %v5906, %v5993
        %v6010 = vadd.f32 %v5906, %v5994
        %v6011 = vadd.f32 %v5906, %v5995
        %v6012 = vadd.f32 %v5906, %v5996
        %v6013 = vadd.f32 %v5906, %v5997
        %v6014 = vadd.f32 %v5906, %v5998
        %v6015 = vadd.f32 %v5906, %v5999
        %v6016 = vadd.f32 %v5906, %v6000
        %v6017 = vadd.f32 %v5906, %v6001
        %v6018 = vadd.f32 %v5906, %v6002
        %v6019 = vadd.f32 %v5906, %v6003
        %v6020 = vadd.f32 %v5906, %v6004
        %v6021 = vadd.f32 %v5906, %v6005
        %v6022 = vadd.f32 %v5906, %v6006
        %v6023 = vadd.f32 %v5906, %v6007
        %v6024 = vadd.f32 %v5906, %v6008
        %v6025 = vld [vmem:[%s5 + $0x1] sm:$0x1]
        %6026 = vset.pattern.permute.xlu0 1
        %6027 = vperm.xlu0 %6026, %v5867
        %v6028 = vpop.permute.xlu0 %6027
        %6030 = vset.pattern.permute.xlu0 1
        %6031 = vperm.xlu0 %6030, %v5868
        %v6032 = vpop.permute.xlu0 %6031
        %6034 = vset.pattern.permute.xlu0 1
        %6035 = vperm.xlu0 %6034, %v5869
        %v6036 = vpop.permute.xlu0 %6035
        %6038 = vset.pattern.permute.xlu0 1
        %6039 = vperm.xlu0 %6038, %v5870
        %v6040 = vpop.permute.xlu0 %6039
        %6042 = vset.pattern.permute.xlu0 1
        %6043 = vperm.xlu0 %6042, %v5871
        %v6044 = vpop.permute.xlu0 %6043
        %6046 = vset.pattern.permute.xlu0 1
        %6047 = vperm.xlu0 %6046, %v5872
        %v6048 = vpop.permute.xlu0 %6047
        %6050 = vset.pattern.permute.xlu0 1
        %6051 = vperm.xlu0 %6050, %v5873
        %v6052 = vpop.permute.xlu0 %6051
        %6054 = vset.pattern.permute.xlu0 1
        %6055 = vperm.xlu0 %6054, %v5874
        %v6056 = vpop.permute.xlu0 %6055
        %6058 = vset.pattern.permute.xlu0 1
        %6059 = vperm.xlu0 %6058, %v5875
        %v6060 = vpop.permute.xlu0 %6059
        %6062 = vset.pattern.permute.xlu0 1
        %6063 = vperm.xlu0 %6062, %v5876
        %v6064 = vpop.permute.xlu0 %6063
        %6066 = vset.pattern.permute.xlu0 1
        %6067 = vperm.xlu0 %6066, %v5877
        %v6068 = vpop.permute.xlu0 %6067
        %6070 = vset.pattern.permute.xlu0 1
        %6071 = vperm.xlu0 %6070, %v5878
        %v6072 = vpop.permute.xlu0 %6071
        %6074 = vset.pattern.permute.xlu0 1
        %6075 = vperm.xlu0 %6074, %v5879
        %v6076 = vpop.permute.xlu0 %6075
        %6078 = vset.pattern.permute.xlu0 1
        %6079 = vperm.xlu0 %6078, %v5880
        %v6080 = vpop.permute.xlu0 %6079
        %6082 = vset.pattern.permute.xlu0 1
        %6083 = vperm.xlu0 %6082, %v5881
        %v6084 = vpop.permute.xlu0 %6083
        %6086 = vset.pattern.permute.xlu0 1
        %6087 = vperm.xlu0 %6086, %v5882
        %v6088 = vpop.permute.xlu0 %6087
        %v6090 = vlaneseq
        %v6091 = vshrl.u32 %v6090, 7
        %v6092 = vsub.s32 0, %v6091
        %v6093 = vrot.slane %v6025, %v6092
        %v6094 = vmul.f32 %v6028, %v6093
        %v6095 = vmul.f32 %v6032, %v6093
        %v6096 = vmul.f32 %v6036, %v6093
        %v6097 = vmul.f32 %v6040, %v6093
        %v6098 = vmul.f32 %v6044, %v6093
        %v6099 = vmul.f32 %v6048, %v6093
        %v6100 = vmul.f32 %v6052, %v6093
        %v6101 = vmul.f32 %v6056, %v6093
        %v6102 = vmul.f32 %v6060, %v6093
        %v6103 = vmul.f32 %v6064, %v6093
        %v6104 = vmul.f32 %v6068, %v6093
        %v6105 = vmul.f32 %v6072, %v6093
        %v6106 = vmul.f32 %v6076, %v6093
        %v6107 = vmul.f32 %v6080, %v6093
        %v6108 = vmul.f32 %v6084, %v6093
        %v6109 = vmul.f32 %v6088, %v6093
        %v6110 = vadd.f32 %v6009, %v6094
        %v6111 = vadd.f32 %v6010, %v6095
        %v6112 = vadd.f32 %v6011, %v6096
        %v6113 = vadd.f32 %v6012, %v6097
        %v6114 = vadd.f32 %v6013, %v6098
        %v6115 = vadd.f32 %v6014, %v6099
        %v6116 = vadd.f32 %v6015, %v6100
        %v6117 = vadd.f32 %v6016, %v6101
        %v6118 = vadd.f32 %v6017, %v6102
        %v6119 = vadd.f32 %v6018, %v6103
        %v6120 = vadd.f32 %v6019, %v6104
        %v6121 = vadd.f32 %v6020, %v6105
        %v6122 = vadd.f32 %v6021, %v6106
        %v6123 = vadd.f32 %v6022, %v6107
        %v6124 = vadd.f32 %v6023, %v6108
        %v6125 = vadd.f32 %v6024, %v6109
        %v6126 = vld [vmem:[%s5 + $0x2] sm:$0x1]
        %6127 = vset.pattern.permute.xlu0 2
        %6128 = vperm.xlu0 %6127, %v5867
        %v6129 = vpop.permute.xlu0 %6128
        %6131 = vset.pattern.permute.xlu0 2
        %6132 = vperm.xlu0 %6131, %v5868
        %v6133 = vpop.permute.xlu0 %6132
        %6135 = vset.pattern.permute.xlu0 2
        %6136 = vperm.xlu0 %6135, %v5869
        %v6137 = vpop.permute.xlu0 %6136
        %6139 = vset.pattern.permute.xlu0 2
        %6140 = vperm.xlu0 %6139, %v5870
        %v6141 = vpop.permute.xlu0 %6140
        %6143 = vset.pattern.permute.xlu0 2
        %6144 = vperm.xlu0 %6143, %v5871
        %v6145 = vpop.permute.xlu0 %6144
        %6147 = vset.pattern.permute.xlu0 2
        %6148 = vperm.xlu0 %6147, %v5872
        %v6149 = vpop.permute.xlu0 %6148
        %6151 = vset.pattern.permute.xlu0 2
        %6152 = vperm.xlu0 %6151, %v5873
        %v6153 = vpop.permute.xlu0 %6152
        %6155 = vset.pattern.permute.xlu0 2
        %6156 = vperm.xlu0 %6155, %v5874
        %v6157 = vpop.permute.xlu0 %6156
        %6159 = vset.pattern.permute.xlu0 2
        %6160 = vperm.xlu0 %6159, %v5875
        %v6161 = vpop.permute.xlu0 %6160
        %6163 = vset.pattern.permute.xlu0 2
        %6164 = vperm.xlu0 %6163, %v5876
        %v6165 = vpop.permute.xlu0 %6164
        %6167 = vset.pattern.permute.xlu0 2
        %6168 = vperm.xlu0 %6167, %v5877
        %v6169 = vpop.permute.xlu0 %6168
        %6171 = vset.pattern.permute.xlu0 2
        %6172 = vperm.xlu0 %6171, %v5878
        %v6173 = vpop.permute.xlu0 %6172
        %6175 = vset.pattern.permute.xlu0 2
        %6176 = vperm.xlu0 %6175, %v5879
        %v6177 = vpop.permute.xlu0 %6176
        %6179 = vset.pattern.permute.xlu0 2
        %6180 = vperm.xlu0 %6179, %v5880
        %v6181 = vpop.permute.xlu0 %6180
        %6183 = vset.pattern.permute.xlu0 2
        %6184 = vperm.xlu0 %6183, %v5881
        %v6185 = vpop.permute.xlu0 %6184
        %6187 = vset.pattern.permute.xlu0 2
        %6188 = vperm.xlu0 %6187, %v5882
        %v6189 = vpop.permute.xlu0 %6188
        %v6191 = vlaneseq
        %v6192 = vshrl.u32 %v6191, 7
        %v6193 = vsub.s32 0, %v6192
        %v6194 = vrot.slane %v6126, %v6193
        %v6195 = vmul.f32 %v6129, %v6194
        %v6196 = vmul.f32 %v6133, %v6194
        %v6197 = vmul.f32 %v6137, %v6194
        %v6198 = vmul.f32 %v6141, %v6194
        %v6199 = vmul.f32 %v6145, %v6194
        %v6200 = vmul.f32 %v6149, %v6194
        %v6201 = vmul.f32 %v6153, %v6194
        %v6202 = vmul.f32 %v6157, %v6194
        %v6203 = vmul.f32 %v6161, %v6194
        %v6204 = vmul.f32 %v6165, %v6194
        %v6205 = vmul.f32 %v6169, %v6194
        %v6206 = vmul.f32 %v6173, %v6194
        %v6207 = vmul.f32 %v6177, %v6194
        %v6208 = vmul.f32 %v6181, %v6194
        %v6209 = vmul.f32 %v6185, %v6194
        %v6210 = vmul.f32 %v6189, %v6194
        %v6211 = vadd.f32 %v6110, %v6195
        %v6212 = vadd.f32 %v6111, %v6196
        %v6213 = vadd.f32 %v6112, %v6197
        %v6214 = vadd.f32 %v6113, %v6198
        %v6215 = vadd.f32 %v6114, %v6199
        %v6216 = vadd.f32 %v6115, %v6200
        %v6217 = vadd.f32 %v6116, %v6201
        %v6218 = vadd.f32 %v6117, %v6202
        %v6219 = vadd.f32 %v6118, %v6203
        %v6220 = vadd.f32 %v6119, %v6204
        %v6221 = vadd.f32 %v6120, %v6205
        %v6222 = vadd.f32 %v6121, %v6206
        %v6223 = vadd.f32 %v6122, %v6207
        %v6224 = vadd.f32 %v6123, %v6208
        %v6225 = vadd.f32 %v6124, %v6209
        %v6226 = vadd.f32 %v6125, %v6210
        %v6227 = vld [vmem:[%s5 + $0x3] sm:$0x1]
        %6228 = vset.pattern.permute.xlu0 3
        %6229 = vperm.xlu0 %6228, %v5867
        %v6230 = vpop.permute.xlu0 %6229
        %6232 = vset.pattern.permute.xlu0 3
        %6233 = vperm.xlu0 %6232, %v5868
        %v6234 = vpop.permute.xlu0 %6233
        %6236 = vset.pattern.permute.xlu0 3
        %6237 = vperm.xlu0 %6236, %v5869
        %v6238 = vpop.permute.xlu0 %6237
        %6240 = vset.pattern.permute.xlu0 3
        %6241 = vperm.xlu0 %6240, %v5870
        %v6242 = vpop.permute.xlu0 %6241
        %6244 = vset.pattern.permute.xlu0 3
        %6245 = vperm.xlu0 %6244, %v5871
        %v6246 = vpop.permute.xlu0 %6245
        %6248 = vset.pattern.permute.xlu0 3
        %6249 = vperm.xlu0 %6248, %v5872
        %v6250 = vpop.permute.xlu0 %6249
        %6252 = vset.pattern.permute.xlu0 3
        %6253 = vperm.xlu0 %6252, %v5873
        %v6254 = vpop.permute.xlu0 %6253
        %6256 = vset.pattern.permute.xlu0 3
        %6257 = vperm.xlu0 %6256, %v5874
        %v6258 = vpop.permute.xlu0 %6257
        %6260 = vset.pattern.permute.xlu0 3
        %6261 = vperm.xlu0 %6260, %v5875
        %v6262 = vpop.permute.xlu0 %6261
        %6264 = vset.pattern.permute.xlu0 3
        %6265 = vperm.xlu0 %6264, %v5876
        %v6266 = vpop.permute.xlu0 %6265
        %6268 = vset.pattern.permute.xlu0 3
        %6269 = vperm.xlu0 %6268, %v5877
        %v6270 = vpop.permute.xlu0 %6269
        %6272 = vset.pattern.permute.xlu0 3
        %6273 = vperm.xlu0 %6272, %v5878
        %v6274 = vpop.permute.xlu0 %6273
        %6276 = vset.pattern.permute.xlu0 3
        %6277 = vperm.xlu0 %6276, %v5879
        %v6278 = vpop.permute.xlu0 %6277
        %6280 = vset.pattern.permute.xlu0 3
        %6281 = vperm.xlu0 %6280, %v5880
        %v6282 = vpop.permute.xlu0 %6281
        %6284 = vset.pattern.permute.xlu0 3
        %6285 = vperm.xlu0 %6284, %v5881
        %v6286 = vpop.permute.xlu0 %6285
        %6288 = vset.pattern.permute.xlu0 3
        %6289 = vperm.xlu0 %6288, %v5882
        %v6290 = vpop.permute.xlu0 %6289
        %v6292 = vlaneseq
        %v6293 = vshrl.u32 %v6292, 7
        %v6294 = vsub.s32 0, %v6293
        %v6295 = vrot.slane %v6227, %v6294
        %v6296 = vmul.f32 %v6230, %v6295
        %v6297 = vmul.f32 %v6234, %v6295
        %v6298 = vmul.f32 %v6238, %v6295
        %v6299 = vmul.f32 %v6242, %v6295
        %v6300 = vmul.f32 %v6246, %v6295
        %v6301 = vmul.f32 %v6250, %v6295
        %v6302 = vmul.f32 %v6254, %v6295
        %v6303 = vmul.f32 %v6258, %v6295
        %v6304 = vmul.f32 %v6262, %v6295
        %v6305 = vmul.f32 %v6266, %v6295
        %v6306 = vmul.f32 %v6270, %v6295
        %v6307 = vmul.f32 %v6274, %v6295
        %v6308 = vmul.f32 %v6278, %v6295
        %v6309 = vmul.f32 %v6282, %v6295
        %v6310 = vmul.f32 %v6286, %v6295
        %v6311 = vmul.f32 %v6290, %v6295
        %v6312 = vadd.f32 %v6211, %v6296
        %v6313 = vadd.f32 %v6212, %v6297
        %v6314 = vadd.f32 %v6213, %v6298
        %v6315 = vadd.f32 %v6214, %v6299
        %v6316 = vadd.f32 %v6215, %v6300
        %v6317 = vadd.f32 %v6216, %v6301
        %v6318 = vadd.f32 %v6217, %v6302
        %v6319 = vadd.f32 %v6218, %v6303
        %v6320 = vadd.f32 %v6219, %v6304
        %v6321 = vadd.f32 %v6220, %v6305
        %v6322 = vadd.f32 %v6221, %v6306
        %v6323 = vadd.f32 %v6222, %v6307
        %v6324 = vadd.f32 %v6223, %v6308
        %v6325 = vadd.f32 %v6224, %v6309
        %v6326 = vadd.f32 %v6225, %v6310
        %v6327 = vadd.f32 %v6226, %v6311
        %v6328 = vld [vmem:[%s5 + $0x4] sm:$0x1]
        %6329 = vset.pattern.permute.xlu0 4
        %6330 = vperm.xlu0 %6329, %v5867
        %v6331 = vpop.permute.xlu0 %6330
        %6333 = vset.pattern.permute.xlu0 4
        %6334 = vperm.xlu0 %6333, %v5868
        %v6335 = vpop.permute.xlu0 %6334
        %6337 = vset.pattern.permute.xlu0 4
        %6338 = vperm.xlu0 %6337, %v5869
        %v6339 = vpop.permute.xlu0 %6338
        %6341 = vset.pattern.permute.xlu0 4
        %6342 = vperm.xlu0 %6341, %v5870
        %v6343 = vpop.permute.xlu0 %6342
        %6345 = vset.pattern.permute.xlu0 4
        %6346 = vperm.xlu0 %6345, %v5871
        %v6347 = vpop.permute.xlu0 %6346
        %6349 = vset.pattern.permute.xlu0 4
        %6350 = vperm.xlu0 %6349, %v5872
        %v6351 = vpop.permute.xlu0 %6350
        %6353 = vset.pattern.permute.xlu0 4
        %6354 = vperm.xlu0 %6353, %v5873
        %v6355 = vpop.permute.xlu0 %6354
        %6357 = vset.pattern.permute.xlu0 4
        %6358 = vperm.xlu0 %6357, %v5874
        %v6359 = vpop.permute.xlu0 %6358
        %6361 = vset.pattern.permute.xlu0 4
        %6362 = vperm.xlu0 %6361, %v5875
        %v6363 = vpop.permute.xlu0 %6362
        %6365 = vset.pattern.permute.xlu0 4
        %6366 = vperm.xlu0 %6365, %v5876
        %v6367 = vpop.permute.xlu0 %6366
        %6369 = vset.pattern.permute.xlu0 4
        %6370 = vperm.xlu0 %6369, %v5877
        %v6371 = vpop.permute.xlu0 %6370
        %6373 = vset.pattern.permute.xlu0 4
        %6374 = vperm.xlu0 %6373, %v5878
        %v6375 = vpop.permute.xlu0 %6374
        %6377 = vset.pattern.permute.xlu0 4
        %6378 = vperm.xlu0 %6377, %v5879
        %v6379 = vpop.permute.xlu0 %6378
        %6381 = vset.pattern.permute.xlu0 4
        %6382 = vperm.xlu0 %6381, %v5880
        %v6383 = vpop.permute.xlu0 %6382
        %6385 = vset.pattern.permute.xlu0 4
        %6386 = vperm.xlu0 %6385, %v5881
        %v6387 = vpop.permute.xlu0 %6386
        %6389 = vset.pattern.permute.xlu0 4
        %6390 = vperm.xlu0 %6389, %v5882
        %v6391 = vpop.permute.xlu0 %6390
        %v6393 = vlaneseq
        %v6394 = vshrl.u32 %v6393, 7
        %v6395 = vsub.s32 0, %v6394
        %v6396 = vrot.slane %v6328, %v6395
        %v6397 = vmul.f32 %v6331, %v6396
        %v6398 = vmul.f32 %v6335, %v6396
        %v6399 = vmul.f32 %v6339, %v6396
        %v6400 = vmul.f32 %v6343, %v6396
        %v6401 = vmul.f32 %v6347, %v6396
        %v6402 = vmul.f32 %v6351, %v6396
        %v6403 = vmul.f32 %v6355, %v6396
        %v6404 = vmul.f32 %v6359, %v6396
        %v6405 = vmul.f32 %v6363, %v6396
        %v6406 = vmul.f32 %v6367, %v6396
        %v6407 = vmul.f32 %v6371, %v6396
        %v6408 = vmul.f32 %v6375, %v6396
        %v6409 = vmul.f32 %v6379, %v6396
        %v6410 = vmul.f32 %v6383, %v6396
        %v6411 = vmul.f32 %v6387, %v6396
        %v6412 = vmul.f32 %v6391, %v6396
        %v6413 = vadd.f32 %v6312, %v6397
        %v6414 = vadd.f32 %v6313, %v6398
        %v6415 = vadd.f32 %v6314, %v6399
        %v6416 = vadd.f32 %v6315, %v6400
        %v6417 = vadd.f32 %v6316, %v6401
        %v6418 = vadd.f32 %v6317, %v6402
        %v6419 = vadd.f32 %v6318, %v6403
        %v6420 = vadd.f32 %v6319, %v6404
        %v6421 = vadd.f32 %v6320, %v6405
        %v6422 = vadd.f32 %v6321, %v6406
        %v6423 = vadd.f32 %v6322, %v6407
        %v6424 = vadd.f32 %v6323, %v6408
        %v6425 = vadd.f32 %v6324, %v6409
        %v6426 = vadd.f32 %v6325, %v6410
        %v6427 = vadd.f32 %v6326, %v6411
        %v6428 = vadd.f32 %v6327, %v6412
        %v6429 = vld [vmem:[%s5 + $0x5] sm:$0x1]
        %6430 = vset.pattern.permute.xlu0 5
        %6431 = vperm.xlu0 %6430, %v5867
        %v6432 = vpop.permute.xlu0 %6431
        %6434 = vset.pattern.permute.xlu0 5
        %6435 = vperm.xlu0 %6434, %v5868
        %v6436 = vpop.permute.xlu0 %6435
        %6438 = vset.pattern.permute.xlu0 5
        %6439 = vperm.xlu0 %6438, %v5869
        %v6440 = vpop.permute.xlu0 %6439
        %6442 = vset.pattern.permute.xlu0 5
        %6443 = vperm.xlu0 %6442, %v5870
        %v6444 = vpop.permute.xlu0 %6443
        %6446 = vset.pattern.permute.xlu0 5
        %6447 = vperm.xlu0 %6446, %v5871
        %v6448 = vpop.permute.xlu0 %6447
        %6450 = vset.pattern.permute.xlu0 5
        %6451 = vperm.xlu0 %6450, %v5872
        %v6452 = vpop.permute.xlu0 %6451
        %6454 = vset.pattern.permute.xlu0 5
        %6455 = vperm.xlu0 %6454, %v5873
        %v6456 = vpop.permute.xlu0 %6455
        %6458 = vset.pattern.permute.xlu0 5
        %6459 = vperm.xlu0 %6458, %v5874
        %v6460 = vpop.permute.xlu0 %6459
        %6462 = vset.pattern.permute.xlu0 5
        %6463 = vperm.xlu0 %6462, %v5875
        %v6464 = vpop.permute.xlu0 %6463
        %6466 = vset.pattern.permute.xlu0 5
        %6467 = vperm.xlu0 %6466, %v5876
        %v6468 = vpop.permute.xlu0 %6467
        %6470 = vset.pattern.permute.xlu0 5
        %6471 = vperm.xlu0 %6470, %v5877
        %v6472 = vpop.permute.xlu0 %6471
        %6474 = vset.pattern.permute.xlu0 5
        %6475 = vperm.xlu0 %6474, %v5878
        %v6476 = vpop.permute.xlu0 %6475
        %6478 = vset.pattern.permute.xlu0 5
        %6479 = vperm.xlu0 %6478, %v5879
        %v6480 = vpop.permute.xlu0 %6479
        %6482 = vset.pattern.permute.xlu0 5
        %6483 = vperm.xlu0 %6482, %v5880
        %v6484 = vpop.permute.xlu0 %6483
        %6486 = vset.pattern.permute.xlu0 5
        %6487 = vperm.xlu0 %6486, %v5881
        %v6488 = vpop.permute.xlu0 %6487
        %6490 = vset.pattern.permute.xlu0 5
        %6491 = vperm.xlu0 %6490, %v5882
        %v6492 = vpop.permute.xlu0 %6491
        %v6494 = vlaneseq
        %v6495 = vshrl.u32 %v6494, 7
        %v6496 = vsub.s32 0, %v6495
        %v6497 = vrot.slane %v6429, %v6496
        %v6498 = vmul.f32 %v6432, %v6497
        %v6499 = vmul.f32 %v6436, %v6497
        %v6500 = vmul.f32 %v6440, %v6497
        %v6501 = vmul.f32 %v6444, %v6497
        %v6502 = vmul.f32 %v6448, %v6497
        %v6503 = vmul.f32 %v6452, %v6497
        %v6504 = vmul.f32 %v6456, %v6497
        %v6505 = vmul.f32 %v6460, %v6497
        %v6506 = vmul.f32 %v6464, %v6497
        %v6507 = vmul.f32 %v6468, %v6497
        %v6508 = vmul.f32 %v6472, %v6497
        %v6509 = vmul.f32 %v6476, %v6497
        %v6510 = vmul.f32 %v6480, %v6497
        %v6511 = vmul.f32 %v6484, %v6497
        %v6512 = vmul.f32 %v6488, %v6497
        %v6513 = vmul.f32 %v6492, %v6497
        %v6514 = vadd.f32 %v6413, %v6498
        %v6515 = vadd.f32 %v6414, %v6499
        %v6516 = vadd.f32 %v6415, %v6500
        %v6517 = vadd.f32 %v6416, %v6501
        %v6518 = vadd.f32 %v6417, %v6502
        %v6519 = vadd.f32 %v6418, %v6503
        %v6520 = vadd.f32 %v6419, %v6504
        %v6521 = vadd.f32 %v6420, %v6505
        %v6522 = vadd.f32 %v6421, %v6506
        %v6523 = vadd.f32 %v6422, %v6507
        %v6524 = vadd.f32 %v6423, %v6508
        %v6525 = vadd.f32 %v6424, %v6509
        %v6526 = vadd.f32 %v6425, %v6510
        %v6527 = vadd.f32 %v6426, %v6511
        %v6528 = vadd.f32 %v6427, %v6512
        %v6529 = vadd.f32 %v6428, %v6513
        %v6530 = vld [vmem:[%s5 + $0x6] sm:$0x1]
        %6531 = vset.pattern.permute.xlu0 6
        %6532 = vperm.xlu0 %6531, %v5867
        %v6533 = vpop.permute.xlu0 %6532
        %6535 = vset.pattern.permute.xlu0 6
        %6536 = vperm.xlu0 %6535, %v5868
        %v6537 = vpop.permute.xlu0 %6536
        %6539 = vset.pattern.permute.xlu0 6
        %6540 = vperm.xlu0 %6539, %v5869
        %v6541 = vpop.permute.xlu0 %6540
        %6543 = vset.pattern.permute.xlu0 6
        %6544 = vperm.xlu0 %6543, %v5870
        %v6545 = vpop.permute.xlu0 %6544
        %6547 = vset.pattern.permute.xlu0 6
        %6548 = vperm.xlu0 %6547, %v5871
        %v6549 = vpop.permute.xlu0 %6548
        %6551 = vset.pattern.permute.xlu0 6
        %6552 = vperm.xlu0 %6551, %v5872
        %v6553 = vpop.permute.xlu0 %6552
        %6555 = vset.pattern.permute.xlu0 6
        %6556 = vperm.xlu0 %6555, %v5873
        %v6557 = vpop.permute.xlu0 %6556
        %6559 = vset.pattern.permute.xlu0 6
        %6560 = vperm.xlu0 %6559, %v5874
        %v6561 = vpop.permute.xlu0 %6560
        %6563 = vset.pattern.permute.xlu0 6
        %6564 = vperm.xlu0 %6563, %v5875
        %v6565 = vpop.permute.xlu0 %6564
        %6567 = vset.pattern.permute.xlu0 6
        %6568 = vperm.xlu0 %6567, %v5876
        %v6569 = vpop.permute.xlu0 %6568
        %6571 = vset.pattern.permute.xlu0 6
        %6572 = vperm.xlu0 %6571, %v5877
        %v6573 = vpop.permute.xlu0 %6572
        %6575 = vset.pattern.permute.xlu0 6
        %6576 = vperm.xlu0 %6575, %v5878
        %v6577 = vpop.permute.xlu0 %6576
        %6579 = vset.pattern.permute.xlu0 6
        %6580 = vperm.xlu0 %6579, %v5879
        %v6581 = vpop.permute.xlu0 %6580
        %6583 = vset.pattern.permute.xlu0 6
        %6584 = vperm.xlu0 %6583, %v5880
        %v6585 = vpop.permute.xlu0 %6584
        %6587 = vset.pattern.permute.xlu0 6
        %6588 = vperm.xlu0 %6587, %v5881
        %v6589 = vpop.permute.xlu0 %6588
        %6591 = vset.pattern.permute.xlu0 6
        %6592 = vperm.xlu0 %6591, %v5882
        %v6593 = vpop.permute.xlu0 %6592
        %v6595 = vlaneseq
        %v6596 = vshrl.u32 %v6595, 7
        %v6597 = vsub.s32 0, %v6596
        %v6598 = vrot.slane %v6530, %v6597
        %v6599 = vmul.f32 %v6533, %v6598
        %v6600 = vmul.f32 %v6537, %v6598
        %v6601 = vmul.f32 %v6541, %v6598
        %v6602 = vmul.f32 %v6545, %v6598
        %v6603 = vmul.f32 %v6549, %v6598
        %v6604 = vmul.f32 %v6553, %v6598
        %v6605 = vmul.f32 %v6557, %v6598
        %v6606 = vmul.f32 %v6561, %v6598
        %v6607 = vmul.f32 %v6565, %v6598
        %v6608 = vmul.f32 %v6569, %v6598
        %v6609 = vmul.f32 %v6573, %v6598
        %v6610 = vmul.f32 %v6577, %v6598
        %v6611 = vmul.f32 %v6581, %v6598
        %v6612 = vmul.f32 %v6585, %v6598
        %v6613 = vmul.f32 %v6589, %v6598
        %v6614 = vmul.f32 %v6593, %v6598
        %v6615 = vadd.f32 %v6514, %v6599
        %v6616 = vadd.f32 %v6515, %v6600
        %v6617 = vadd.f32 %v6516, %v6601
        %v6618 = vadd.f32 %v6517, %v6602
        %v6619 = vadd.f32 %v6518, %v6603
        %v6620 = vadd.f32 %v6519, %v6604
        %v6621 = vadd.f32 %v6520, %v6605
        %v6622 = vadd.f32 %v6521, %v6606
        %v6623 = vadd.f32 %v6522, %v6607
        %v6624 = vadd.f32 %v6523, %v6608
        %v6625 = vadd.f32 %v6524, %v6609
        %v6626 = vadd.f32 %v6525, %v6610
        %v6627 = vadd.f32 %v6526, %v6611
        %v6628 = vadd.f32 %v6527, %v6612
        %v6629 = vadd.f32 %v6528, %v6613
        %v6630 = vadd.f32 %v6529, %v6614
        %v6631 = vld [vmem:[%s5 + $0x7] sm:$0x1]
        %6632 = vset.pattern.permute.xlu0 7
        %6633 = vperm.xlu0 %6632, %v5867
        %v6634 = vpop.permute.xlu0 %6633
        %6636 = vset.pattern.permute.xlu0 7
        %6637 = vperm.xlu0 %6636, %v5868
        %v6638 = vpop.permute.xlu0 %6637
        %6640 = vset.pattern.permute.xlu0 7
        %6641 = vperm.xlu0 %6640, %v5869
        %v6642 = vpop.permute.xlu0 %6641
        %6644 = vset.pattern.permute.xlu0 7
        %6645 = vperm.xlu0 %6644, %v5870
        %v6646 = vpop.permute.xlu0 %6645
        %6648 = vset.pattern.permute.xlu0 7
        %6649 = vperm.xlu0 %6648, %v5871
        %v6650 = vpop.permute.xlu0 %6649
        %6652 = vset.pattern.permute.xlu0 7
        %6653 = vperm.xlu0 %6652, %v5872
        %v6654 = vpop.permute.xlu0 %6653
        %6656 = vset.pattern.permute.xlu0 7
        %6657 = vperm.xlu0 %6656, %v5873
        %v6658 = vpop.permute.xlu0 %6657
        %6660 = vset.pattern.permute.xlu0 7
        %6661 = vperm.xlu0 %6660, %v5874
        %v6662 = vpop.permute.xlu0 %6661
        %6664 = vset.pattern.permute.xlu0 7
        %6665 = vperm.xlu0 %6664, %v5875
        %v6666 = vpop.permute.xlu0 %6665
        %6668 = vset.pattern.permute.xlu0 7
        %6669 = vperm.xlu0 %6668, %v5876
        %v6670 = vpop.permute.xlu0 %6669
        %6672 = vset.pattern.permute.xlu0 7
        %6673 = vperm.xlu0 %6672, %v5877
        %v6674 = vpop.permute.xlu0 %6673
        %6676 = vset.pattern.permute.xlu0 7
        %6677 = vperm.xlu0 %6676, %v5878
        %v6678 = vpop.permute.xlu0 %6677
        %6680 = vset.pattern.permute.xlu0 7
        %6681 = vperm.xlu0 %6680, %v5879
        %v6682 = vpop.permute.xlu0 %6681
        %6684 = vset.pattern.permute.xlu0 7
        %6685 = vperm.xlu0 %6684, %v5880
        %v6686 = vpop.permute.xlu0 %6685
        %6688 = vset.pattern.permute.xlu0 7
        %6689 = vperm.xlu0 %6688, %v5881
        %v6690 = vpop.permute.xlu0 %6689
        %6692 = vset.pattern.permute.xlu0 7
        %6693 = vperm.xlu0 %6692, %v5882
        %v6694 = vpop.permute.xlu0 %6693
        %v6696 = vlaneseq
        %v6697 = vshrl.u32 %v6696, 7
        %v6698 = vsub.s32 0, %v6697
        %v6699 = vrot.slane %v6631, %v6698
        %v6700 = vmul.f32 %v6634, %v6699
        %v6701 = vmul.f32 %v6638, %v6699
        %v6702 = vmul.f32 %v6642, %v6699
        %v6703 = vmul.f32 %v6646, %v6699
        %v6704 = vmul.f32 %v6650, %v6699
        %v6705 = vmul.f32 %v6654, %v6699
        %v6706 = vmul.f32 %v6658, %v6699
        %v6707 = vmul.f32 %v6662, %v6699
        %v6708 = vmul.f32 %v6666, %v6699
        %v6709 = vmul.f32 %v6670, %v6699
        %v6710 = vmul.f32 %v6674, %v6699
        %v6711 = vmul.f32 %v6678, %v6699
        %v6712 = vmul.f32 %v6682, %v6699
        %v6713 = vmul.f32 %v6686, %v6699
        %v6714 = vmul.f32 %v6690, %v6699
        %v6715 = vmul.f32 %v6694, %v6699
        %v6716 = vadd.f32 %v6615, %v6700
        %v6717 = vadd.f32 %v6616, %v6701
        %v6718 = vadd.f32 %v6617, %v6702
        %v6719 = vadd.f32 %v6618, %v6703
        %v6720 = vadd.f32 %v6619, %v6704
        %v6721 = vadd.f32 %v6620, %v6705
        %v6722 = vadd.f32 %v6621, %v6706
        %v6723 = vadd.f32 %v6622, %v6707
        %v6724 = vadd.f32 %v6623, %v6708
        %v6725 = vadd.f32 %v6624, %v6709
        %v6726 = vadd.f32 %v6625, %v6710
        %v6727 = vadd.f32 %v6626, %v6711
        %v6728 = vadd.f32 %v6627, %v6712
        %v6729 = vadd.f32 %v6628, %v6713
        %v6730 = vadd.f32 %v6629, %v6714
        %v6731 = vadd.f32 %v6630, %v6715
        %v6732 = vadd.f32 %v5885, %v6716
        %v6733 = vadd.f32 %v5886, %v6717
        %v6734 = vadd.f32 %v5887, %v6718
        %v6735 = vadd.f32 %v5888, %v6719
        %v6736 = vadd.f32 %v5889, %v6720
        %v6737 = vadd.f32 %v5890, %v6721
        %v6738 = vadd.f32 %v5891, %v6722
        %v6739 = vadd.f32 %v5892, %v6723
        %v6740 = vadd.f32 %v5893, %v6724
        %v6741 = vadd.f32 %v5894, %v6725
        %v6742 = vadd.f32 %v5895, %v6726
        %v6743 = vadd.f32 %v5896, %v6727
        %v6744 = vadd.f32 %v5897, %v6728
        %v6745 = vadd.f32 %v5898, %v6729
        %v6746 = vadd.f32 %v5899, %v6730
        %v6747 = vadd.f32 %v5900, %v6731
        %vm6748 = vcmask 31744
        %6749 = vst.msk [vmem:[%s317] sm:$0xff] %vm6748, %v6732
        %6750 = vst.msk [vmem:[%s317 + $0x8] sm:$0xff] %vm6748, %v6733
        %6751 = vst.msk [vmem:[%s317 + $0x10] sm:$0xff] %vm6748, %v6734
        %6752 = vst.msk [vmem:[%s317 + $0x18] sm:$0xff] %vm6748, %v6735
        %6753 = vst.msk [vmem:[%s317 + $0x20] sm:$0xff] %vm6748, %v6736
        %6754 = vst.msk [vmem:[%s317 + $0x28] sm:$0xff] %vm6748, %v6737
        %6755 = vst.msk [vmem:[%s317 + $0x30] sm:$0xff] %vm6748, %v6738
        %6756 = vst.msk [vmem:[%s317 + $0x38] sm:$0xff] %vm6748, %v6739
        %6757 = vst.msk [vmem:[%s317 + $0x40] sm:$0xff] %vm6748, %v6740
        %6758 = vst.msk [vmem:[%s317 + $0x48] sm:$0xff] %vm6748, %v6741
        %6759 = vst.msk [vmem:[%s317 + $0x50] sm:$0xff] %vm6748, %v6742
        %6760 = vst.msk [vmem:[%s317 + $0x58] sm:$0xff] %vm6748, %v6743
        %6761 = vst.msk [vmem:[%s317 + $0x60] sm:$0xff] %vm6748, %v6744
        %6762 = vst.msk [vmem:[%s317 + $0x68] sm:$0xff] %vm6748, %v6745
        %6763 = vst.msk [vmem:[%s317 + $0x70] sm:$0xff] %vm6748, %v6746
        %6764 = vst.msk [vmem:[%s317 + $0x78] sm:$0xff] %vm6748, %v6747
        %s6765 = smul.u32 8, %s24
        %p6766 = scmp.lt.s32.totalorder %s23, 1
        %s6767 = scalar_select %p6766, %s23, 1
        %p6768 = scmp.lt.s32.totalorder %s6765, 15
        %s6769 = scalar_select %p6768, %s6765, 15
        %s6770 = smul.addr %s6769, 2
        %s6771 = smul.addr %s6767, 32
        %s6772 = sadd.s32 %s6770, %s6771
        %s6773 = smul.addr %s6772, 8
        %s6774 = scalar_lea.vmem %s7, %s6773
        // Predicated region
        $region64: #{_lambda_.1} parent=47 // pred_check
          %p6775 = pneg %p203
        $region65: #{_lambda_.1} parent=47 // pred_check_branch
          %6777 = sbr.rel (%p6775) target = $region67
        $region66: #{_lambda_.1} parent=47 // pred_region
          %s6778 = smul.u32 8, %s24
        $region67: #{_lambda_.1} parent=47 // pred_fallthru
          _
      $region48: #{_lambda_.1} parent=5 // pred_fallthru
        _
      %p6779 = scmp.le.s32.totalorder 2, %s14
      // Predicated region
      $region68: #{_lambda_.1} parent=5 // pred_check
        %p6780 = pneg %p6779
      $region69: #{_lambda_.1} parent=5 // pred_check_branch
        %6782 = sbr.rel (%p6780) target = $region71
      $region70: #{_lambda_.1} parent=5 // pred_region
        %s6783 = ssub.s32 %s14, 2
        // Predicated region
        $region72: #{_lambda_.1} parent=70 // pred_check
          %p6784 = pneg %p209
        $region73: #{_lambda_.1} parent=70 // pred_check_branch
          %6786 = sbr.rel (%p6784) target = $region75
        $region74: #{_lambda_.1} parent=70 // pred_region
          %s6787 = smul.u32 8, %s26
          %p6788 = scmp.lt.s32.totalorder %s25, 1
          %s6789 = scalar_select %p6788, %s25, 1
          %p6790 = scmp.lt.s32.totalorder %s6787, 15
          %s6791 = scalar_select %p6790, %s6787, 15
          %s6792 = smul.addr %s6791, 2
          %s6793 = smul.addr %s6789, 32
          %s6794 = sadd.s32 %s6792, %s6793
          %s6795 = smul.addr %s6794, 8
          %s6796 = scalar_lea.vmem %s7, %s6795
        $region75: #{_lambda_.1} parent=70 // pred_fallthru
          _
      $region71: #{_lambda_.1} parent=5 // pred_fallthru
        _
    $region6: #{_lambda_.1} parent=1 // loop_footer
      %s18 = sadd.s32 1, %s14
    $region7: #{_lambda_.1} parent=1 // loop_footer_branch
      %13 = sbr.rel target = $region3
    $region8: #{_lambda_.1} parent=1 // loop_exit
      _
    %6797 = vsyncpa [#allocation4], 1
    %s6798 = scalar_lea.sflag [#allocation4], 1
    %6799 = vsyncpa %s6798, 1

</llo_original>
